<compile_context>
chip_gen: v6e
topology: v6e:2x2x1
jax: 0.10.0
libtpu: 0.0.40
codegen_flags: <defaults>
</compile_context>

<pallas_src>
import numpy as np
import jax
import jax.numpy as jnp
from jax.experimental import pallas as pl
from jax.experimental.pallas import tpu as pltpu


# ---------------------------------------------------------------------------
# Fused kernel: conv1(1x1)+ReLU -> 3x fused conv3x3-s2 matmul+ReLU -> mean+fc
# One grid step == one block of B samples (batch on sublanes, features on lanes)
# ---------------------------------------------------------------------------
def _simple_cnn_kernel(x_ref, w1_ref, b1_ref,
                       t2_ref, b2_ref, t3_ref, b3_ref, t4_ref, b4_ref,
                       fcw_ref, fcb_ref, o_ref, a1_ref):
    f32 = jnp.float32
    cin = w1_ref.shape[1]
    c1out = w1_ref.shape[0]              # 16
    hw = x_ref.shape[1] // cin           # H*W pixels per channel
    mxu_dtype = t2_ref.dtype

    # ---- conv1: 1x1 conv + ReLU on the VPU (per-pixel channel mix) -----------
    # feature layout of a1 is channel-major: feature = co*HW + m
    for co in range(c1out):
        acc = x_ref[:, 0:hw] * w1_ref[co, 0]
        for c in range(1, cin):
            acc = acc + x_ref[:, c * hw:(c + 1) * hw] * w1_ref[co, c]
        a1_ref[:, co * hw:(co + 1) * hw] = jnp.maximum(acc + b1_ref[co], 0.0)

    # ---- conv2/3/4: one fused (gather x weights) MXU matmul per layer --------
    def fused_conv(a, t_ref, b_ref):
        y = jnp.dot(a.astype(mxu_dtype), t_ref[...], preferred_element_type=f32)
        return jnp.maximum(y + b_ref[...], 0.0)

    a = fused_conv(a1_ref[...], t2_ref, b2_ref)     # (B, 8*49)
    a = fused_conv(a, t3_ref, b3_ref)               # (B, 8*9)
    a = fused_conv(a, t4_ref, b4_ref)               # (B, 8*M4)

    # ---- spatial mean + fc head (folded into one row), lane-dense (1, B) -----
    y = jnp.dot(fcw_ref[...], a.T, preferred_element_type=f32)   # (1, B)
    o_ref[...] = (y + fcb_ref[0]).reshape(o_ref.shape)


# ---------------------------------------------------------------------------
# Host-side constant construction (layout plumbing only)
# ---------------------------------------------------------------------------
def _round_up(x, m):
    return (x + m - 1) // m * m


def _tap_gather(h, w, k=3, stride=2):
    """0/1 gather tensor g[tap, h_in*W+w_in, oh*OW+ow] for a VALID strided conv."""
    oh = (h - k) // stride + 1
    ow = (w - k) // stride + 1
    assert oh >= 1 and ow >= 1, "input too small for three stride-2 3x3 convs"
    g = np.zeros((k * k, h * w, oh * ow), np.float32)
    for i in range(k):
        for j in range(k):
            t = i * k + j
            for a in range(oh):
                for b in range(ow):
                    g[t, (stride * a + i) * w + (stride * b + j), a * ow + b] = 1.0
    return g, oh, ow


def _fold_conv(w, g):
    """w: (Cout, Cin, 3, 3), g: (9, Min, Mout) -> T (Cin*Min, Cout*Mout).

    T[ci*Min+mi, co*Mout+mo] = sum_t w[co, ci, t] * g[t, mi, mo]
    """
    cout, cin = w.shape[0], w.shape[1]
    m_in, m_out = g.shape[1], g.shape[2]
    w9 = w.reshape(cout, cin, 9)
    t = jnp.einsum("oct,tmn->cmon", w9, jnp.asarray(g),
                   precision=jax.lax.Precision.HIGHEST)
    return t.reshape(cin * m_in, cout * m_out)


def simple_cnn_forward(x_nchw, params, *, block_batch=128, mxu_dtype=jnp.float32):
    n, cin, h, w = x_nchw.shape
    hw = h * w

    # ---- static conv geometry (valid 3x3, stride 2, three times) -------------
    g2, oh, ow = _tap_gather(h, w)
    g3, oh, ow = _tap_gather(oh, ow)
    g4, oh, ow = _tap_gather(oh, ow)
    m4 = oh * ow                                         # final spatial size (1 for 16x16)

    # ---- fold (im2col gather x conv weights) into one matrix per layer -------
    t2 = _fold_conv(params["w2"], g2).astype(mxu_dtype)  # (16*hw, 8*49)
    t3 = _fold_conv(params["w3"], g3).astype(mxu_dtype)  # (8*49, 8*9)
    t4 = _fold_conv(params["w4"], g4).astype(mxu_dtype)  # (8*9,  8*m4)
    b2 = jnp.repeat(params["b2"], g2.shape[2])[None, :].astype(jnp.float32)
    b3 = jnp.repeat(params["b3"], g3.shape[2])[None, :].astype(jnp.float32)
    b4 = jnp.repeat(params["b4"], g4.shape[2])[None, :].astype(jnp.float32)

    w1 = params["w1"][:, :, 0, 0].astype(jnp.float32)    # (16, cin) -> SMEM scalars
    b1 = params["b1"].astype(jnp.float32)                # (16,)     -> SMEM scalars
    # spatial mean (linear, after last ReLU) folded into the fc row vector
    fcw = jnp.repeat(params["fc_w"][0] / m4, m4)[None, :].astype(jnp.float32)  # (1, 8*m4)
    fcb = params["fc_b"].reshape(1).astype(jnp.float32)  # (1,) -> SMEM scalar

    # ---- batched grid: B samples per grid step --------------------------------
    bb = min(block_batch, _round_up(n, 8))
    if n >= 16 and _round_up(n, bb) // bb < 2:
        # keep >=2 grid steps so v7x's two TensorCores both get work
        bb = _round_up((n + 1) // 2, 8)
    n_pad = _round_up(n, bb)
    grid = n_pad // bb

    x2d = x_nchw.reshape(n, cin * hw)       # free dim-merge reshape, NO HBM transpose
    if n_pad != n:
        x2d = jnp.pad(x2d, ((0, n_pad - n), (0, 0)))

    def vmem_full(a):
        return pl.BlockSpec(a.shape, lambda i: (0,) * a.ndim)

    smem = pl.BlockSpec(memory_space=pltpu.MemorySpace.SMEM)

    out = pl.pallas_call(
        _simple_cnn_kernel,
        out_shape=jax.ShapeDtypeStruct((grid, 1, bb), jnp.float32),
        grid=(grid,),
        in_specs=[
            pl.BlockSpec((bb, cin * hw), lambda i: (i, 0)),   # per-step sample slab
            smem, smem,                                       # w1, b1 (scalars)
            vmem_full(t2), vmem_full(b2),
            vmem_full(t3), vmem_full(b3),
            vmem_full(t4), vmem_full(b4),
            vmem_full(fcw), smem,                             # fc row, fc bias
        ],
        out_specs=pl.BlockSpec((1, 1, bb), lambda i: (i, 0, 0)),
        scratch_shapes=[pltpu.VMEM((bb, 16 * hw), jnp.float32)],   # conv1 output slab
        compiler_params=pltpu.CompilerParams(
            dimension_semantics=("parallel",),
            vmem_limit_bytes=48 * 1024 * 1024),
    )(x2d, w1, b1, t2, b2, t3, b3, t4, b4, fcw, fcb)

    # torch.squeeze (+ ndim==0 guard) => always a 1-D vector of length N
    return out.reshape(n_pad)[:n]


# ---------------------------------------------------------------------------
# Parameter init (PyTorch layouts) and a plain-JAX reference for validation
# ---------------------------------------------------------------------------
def init_params(key, in_channels):
    ks = jax.random.split(key, 10)
    scale = 0.1
    return {
        "w1": jax.random.normal(ks[0], (16, in_channels, 1, 1), jnp.float32) * scale,
        "b1": jax.random.normal(ks[1], (16,), jnp.float32) * scale,
        "w2": jax.random.normal(ks[2], (8, 16, 3, 3), jnp.float32) * scale,
        "b2": jax.random.normal(ks[3], (8,), jnp.float32) * scale,
        "w3": jax.random.normal(ks[4], (8, 8, 3, 3), jnp.float32) * scale,
        "b3": jax.random.normal(ks[5], (8,), jnp.float32) * scale,
        "w4": jax.random.normal(ks[6], (8, 8, 3, 3), jnp.float32) * scale,
        "b4": jax.random.normal(ks[7], (8,), jnp.float32) * scale,
        "fc_w": jax.random.normal(ks[8], (1, 8), jnp.float32) * scale,
        "fc_b": jax.random.normal(ks[9], (1,), jnp.float32) * scale,
    }


def _reference_forward(x, params):
    dn = ("NCHW", "OIHW", "NCHW")
    hp = jax.lax.Precision.HIGHEST
    y = jax.lax.conv_general_dilated(x, params["w1"], (1, 1), "VALID",
                                     dimension_numbers=dn, precision=hp)
    y = jax.nn.relu(y + params["b1"][None, :, None, None])
    for wk, bk in (("w2", "b2"), ("w3", "b3"), ("w4", "b4")):
        y = jax.lax.conv_general_dilated(y, params[wk], (2, 2), "VALID",
                                         dimension_numbers=dn, precision=hp)
        y = jax.nn.relu(y + params[bk][None, :, None, None])
    y = y.mean(axis=(2, 3))
    out = jnp.dot(y, params["fc_w"].T, precision=hp) + params["fc_b"]
    return out.reshape(-1)


if __name__ == "__main__":
    key = jax.random.PRNGKey(0)
    k_params, k_x = jax.random.split(key)
    in_channels = 4
    params = init_params(k_params, in_channels)

    fwd = jax.jit(simple_cnn_forward)

    # small shape from the module spec: batch=2, channels=4, 16x16 images
    x = jax.random.normal(k_x, (2, in_channels, 16, 16), jnp.float32)
    out = jax.block_until_ready(fwd(x, params))
    assert out.shape == (2,), f"unexpected output shape {out.shape}"
    ref = _reference_forward(x, params)
    np.testing.assert_allclose(np.asarray(out), np.asarray(ref), rtol=1e-2, atol=2e-3)

    # also exercise the batched multi-step path (B=128 per step, grid=2, padded N)
    x_big = jax.random.normal(k_x, (160, in_channels, 16, 16), jnp.float32)
    out_big = jax.block_until_ready(fwd(x_big, params))
    assert out_big.shape == (160,), f"unexpected output shape {out_big.shape}"
    ref_big = _reference_forward(x_big, params)
    np.testing.assert_allclose(np.asarray(out_big), np.asarray(ref_big),
                               rtol=1e-2, atol=2e-3)

    print("KERNEL_OK")
</pallas_src>

<mosaic_0001>
module attributes {stable_mosaic.version = 11 : i64} {
  func.func @_simple_cnn_kernel(%arg0: i32, %arg1: memref<8x1024xf32, #tpu.memory_space<vmem>>, %arg2: memref<16x4xf32, #tpu.memory_space<smem>>, %arg3: memref<16xf32, #tpu.memory_space<smem>>, %arg4: memref<4096x392xf32, #tpu.memory_space<vmem>>, %arg5: memref<1x392xf32, #tpu.memory_space<vmem>>, %arg6: memref<392x72xf32, #tpu.memory_space<vmem>>, %arg7: memref<1x72xf32, #tpu.memory_space<vmem>>, %arg8: memref<72x8xf32, #tpu.memory_space<vmem>>, %arg9: memref<1x8xf32, #tpu.memory_space<vmem>>, %arg10: memref<1x8xf32, #tpu.memory_space<vmem>>, %arg11: memref<1xf32, #tpu.memory_space<smem>>, %arg12: memref<1x1x8xf32, #tpu.memory_space<vmem>>, %arg13: memref<8x4096xf32, #tpu.memory_space<vmem>>) attributes {dimension_semantics = [#tpu.dimension_semantics<parallel>], iteration_bounds = array<i64: 1>, scalar_prefetch = 0 : i64, scratch_operands = 1 : i64, tpu.core_type = #tpu.core_type<tc>, window_params = [{transform_indices = @transform_0, window_bounds = array<i64: 8, 1024>}, {transform_indices = @transform_1, window_bounds = array<i64: 16, 4>}, {transform_indices = @transform_2, window_bounds = array<i64: 16>}, {pipeline_mode = #tpu.pipeline_mode<synchronous>, transform_indices = @transform_3, window_bounds = array<i64: 4096, 392>}, {pipeline_mode = #tpu.pipeline_mode<synchronous>, transform_indices = @transform_4, window_bounds = array<i64: 1, 392>}, {pipeline_mode = #tpu.pipeline_mode<synchronous>, transform_indices = @transform_5, window_bounds = array<i64: 392, 72>}, {pipeline_mode = #tpu.pipeline_mode<synchronous>, transform_indices = @transform_6, window_bounds = array<i64: 1, 72>}, {pipeline_mode = #tpu.pipeline_mode<synchronous>, transform_indices = @transform_7, window_bounds = array<i64: 72, 8>}, {pipeline_mode = #tpu.pipeline_mode<synchronous>, transform_indices = @transform_8, window_bounds = array<i64: 1, 8>}, {pipeline_mode = #tpu.pipeline_mode<synchronous>, transform_indices = @transform_9, window_bounds = array<i64: 1, 8>}, {transform_indices = @transform_10, window_bounds = array<i64: 1>}, {transform_indices = @transform_11, window_bounds = array<i64: 1, 1, 8>}]} {
    %c0 = arith.constant 0 : index
    %c0_0 = arith.constant 0 : index
    %0 = vector.load %arg1[%c0, %c0_0] : memref<8x1024xf32, #tpu.memory_space<vmem>>, vector<8x256xf32>
    %c0_1 = arith.constant 0 : index
    %c0_2 = arith.constant 0 : index
    %1 = memref.load %arg2[%c0_1, %c0_2] : memref<16x4xf32, #tpu.memory_space<smem>>
    %2 = vector.broadcast %1 : f32 to vector<8x256xf32>
    %3 = arith.mulf %0, %2 : vector<8x256xf32>
    %c0_3 = arith.constant 0 : index
    %c256 = arith.constant 256 : index
    %4 = vector.load %arg1[%c0_3, %c256] : memref<8x1024xf32, #tpu.memory_space<vmem>>, vector<8x256xf32>
    %c0_4 = arith.constant 0 : index
    %c1 = arith.constant 1 : index
    %5 = memref.load %arg2[%c0_4, %c1] : memref<16x4xf32, #tpu.memory_space<smem>>
    %6 = vector.broadcast %5 : f32 to vector<8x256xf32>
    %7 = arith.mulf %4, %6 : vector<8x256xf32>
    %8 = arith.addf %3, %7 : vector<8x256xf32>
    %c0_5 = arith.constant 0 : index
    %c512 = arith.constant 512 : index
    %9 = vector.load %arg1[%c0_5, %c512] : memref<8x1024xf32, #tpu.memory_space<vmem>>, vector<8x256xf32>
    %c0_6 = arith.constant 0 : index
    %c2 = arith.constant 2 : index
    %10 = memref.load %arg2[%c0_6, %c2] : memref<16x4xf32, #tpu.memory_space<smem>>
    %11 = vector.broadcast %10 : f32 to vector<8x256xf32>
    %12 = arith.mulf %9, %11 : vector<8x256xf32>
    %13 = arith.addf %8, %12 : vector<8x256xf32>
    %c0_7 = arith.constant 0 : index
    %c768 = arith.constant 768 : index
    %14 = vector.load %arg1[%c0_7, %c768] : memref<8x1024xf32, #tpu.memory_space<vmem>>, vector<8x256xf32>
    %c0_8 = arith.constant 0 : index
    %c3 = arith.constant 3 : index
    %15 = memref.load %arg2[%c0_8, %c3] : memref<16x4xf32, #tpu.memory_space<smem>>
    %16 = vector.broadcast %15 : f32 to vector<8x256xf32>
    %17 = arith.mulf %14, %16 : vector<8x256xf32>
    %18 = arith.addf %13, %17 : vector<8x256xf32>
    %c0_9 = arith.constant 0 : index
    %19 = memref.load %arg3[%c0_9] : memref<16xf32, #tpu.memory_space<smem>>
    %20 = vector.broadcast %19 : f32 to vector<8x256xf32>
    %21 = arith.addf %18, %20 : vector<8x256xf32>
    %cst = arith.constant 0.000000e+00 : f32
    %22 = vector.broadcast %cst : f32 to vector<8x256xf32>
    %23 = arith.maximumf %21, %22 : vector<8x256xf32>
    %c0_10 = arith.constant 0 : index
    %c0_11 = arith.constant 0 : index
    %24 = vector.load %arg13[%c0_10, %c0_11] : memref<8x4096xf32, #tpu.memory_space<vmem>>, vector<8x256xf32>
    tpu.vector_store %arg13[%c0_10, %c0_11], %23 {strides = array<i32>} : memref<8x4096xf32, #tpu.memory_space<vmem>>, vector<8x256xf32>,
    %c0_12 = arith.constant 0 : index
    %c0_13 = arith.constant 0 : index
    %25 = vector.load %arg1[%c0_12, %c0_13] : memref<8x1024xf32, #tpu.memory_space<vmem>>, vector<8x256xf32>
    %c1_14 = arith.constant 1 : index
    %c0_15 = arith.constant 0 : index
    %26 = memref.load %arg2[%c1_14, %c0_15] : memref<16x4xf32, #tpu.memory_space<smem>>
    %27 = vector.broadcast %26 : f32 to vector<8x256xf32>
    %28 = arith.mulf %25, %27 : vector<8x256xf32>
    %c0_16 = arith.constant 0 : index
    %c256_17 = arith.constant 256 : index
    %29 = vector.load %arg1[%c0_16, %c256_17] : memref<8x1024xf32, #tpu.memory_space<vmem>>, vector<8x256xf32>
    %c1_18 = arith.constant 1 : index
    %c1_19 = arith.constant 1 : index
    %30 = memref.load %arg2[%c1_18, %c1_19] : memref<16x4xf32, #tpu.memory_space<smem>>
    %31 = vector.broadcast %30 : f32 to vector<8x256xf32>
    %32 = arith.mulf %29, %31 : vector<8x256xf32>
    %33 = arith.addf %28, %32 : vector<8x256xf32>
    %c0_20 = arith.constant 0 : index
    %c512_21 = arith.constant 512 : index
    %34 = vector.load %arg1[%c0_20, %c512_21] : memref<8x1024xf32, #tpu.memory_space<vmem>>, vector<8x256xf32>
    %c1_22 = arith.constant 1 : index
    %c2_23 = arith.constant 2 : index
    %35 = memref.load %arg2[%c1_22, %c2_23] : memref<16x4xf32, #tpu.memory_space<smem>>
    %36 = vector.broadcast %35 : f32 to vector<8x256xf32>
    %37 = arith.mulf %34, %36 : vector<8x256xf32>
    %38 = arith.addf %33, %37 : vector<8x256xf32>
    %c0_24 = arith.constant 0 : index
    %c768_25 = arith.constant 768 : index
    %39 = vector.load %arg1[%c0_24, %c768_25] : memref<8x1024xf32, #tpu.memory_space<vmem>>, vector<8x256xf32>
    %c1_26 = arith.constant 1 : index
    %c3_27 = arith.constant 3 : index
    %40 = memref.load %arg2[%c1_26, %c3_27] : memref<16x4xf32, #tpu.memory_space<smem>>
    %41 = vector.broadcast %40 : f32 to vector<8x256xf32>
    %42 = arith.mulf %39, %41 : vector<8x256xf32>
    %43 = arith.addf %38, %42 : vector<8x256xf32>
    %c1_28 = arith.constant 1 : index
    %44 = memref.load %arg3[%c1_28] : memref<16xf32, #tpu.memory_space<smem>>
    %45 = vector.broadcast %44 : f32 to vector<8x256xf32>
    %46 = arith.addf %43, %45 : vector<8x256xf32>
    %cst_29 = arith.constant 0.000000e+00 : f32
    %47 = vector.broadcast %cst_29 : f32 to vector<8x256xf32>
    %48 = arith.maximumf %46, %47 : vector<8x256xf32>
    %c0_30 = arith.constant 0 : index
    %c256_31 = arith.constant 256 : index
    %49 = vector.load %arg13[%c0_30, %c256_31] : memref<8x4096xf32, #tpu.memory_space<vmem>>, vector<8x256xf32>
    tpu.vector_store %arg13[%c0_30, %c256_31], %48 {strides = array<i32>} : memref<8x4096xf32, #tpu.memory_space<vmem>>, vector<8x256xf32>,
    %c0_32 = arith.constant 0 : index
    %c0_33 = arith.constant 0 : index
    %50 = vector.load %arg1[%c0_32, %c0_33] : memref<8x1024xf32, #tpu.memory_space<vmem>>, vector<8x256xf32>
    %c2_34 = arith.constant 2 : index
    %c0_35 = arith.constant 0 : index
    %51 = memref.load %arg2[%c2_34, %c0_35] : memref<16x4xf32, #tpu.memory_space<smem>>
    %52 = vector.broadcast %51 : f32 to vector<8x256xf32>
    %53 = arith.mulf %50, %52 : vector<8x256xf32>
    %c0_36 = arith.constant 0 : index
    %c256_37 = arith.constant 256 : index
    %54 = vector.load %arg1[%c0_36, %c256_37] : memref<8x1024xf32, #tpu.memory_space<vmem>>, vector<8x256xf32>
    %c2_38 = arith.constant 2 : index
    %c1_39 = arith.constant 1 : index
    %55 = memref.load %arg2[%c2_38, %c1_39] : memref<16x4xf32, #tpu.memory_space<smem>>
    %56 = vector.broadcast %55 : f32 to vector<8x256xf32>
    %57 = arith.mulf %54, %56 : vector<8x256xf32>
    %58 = arith.addf %53, %57 : vector<8x256xf32>
    %c0_40 = arith.constant 0 : index
    %c512_41 = arith.constant 512 : index
    %59 = vector.load %arg1[%c0_40, %c512_41] : memref<8x1024xf32, #tpu.memory_space<vmem>>, vector<8x256xf32>
    %c2_42 = arith.constant 2 : index
    %c2_43 = arith.constant 2 : index
    %60 = memref.load %arg2[%c2_42, %c2_43] : memref<16x4xf32, #tpu.memory_space<smem>>
    %61 = vector.broadcast %60 : f32 to vector<8x256xf32>
    %62 = arith.mulf %59, %61 : vector<8x256xf32>
    %63 = arith.addf %58, %62 : vector<8x256xf32>
    %c0_44 = arith.constant 0 : index
    %c768_45 = arith.constant 768 : index
    %64 = vector.load %arg1[%c0_44, %c768_45] : memref<8x1024xf32, #tpu.memory_space<vmem>>, vector<8x256xf32>
    %c2_46 = arith.constant 2 : index
    %c3_47 = arith.constant 3 : index
    %65 = memref.load %arg2[%c2_46, %c3_47] : memref<16x4xf32, #tpu.memory_space<smem>>
    %66 = vector.broadcast %65 : f32 to vector<8x256xf32>
    %67 = arith.mulf %64, %66 : vector<8x256xf32>
    %68 = arith.addf %63, %67 : vector<8x256xf32>
    %c2_48 = arith.constant 2 : index
    %69 = memref.load %arg3[%c2_48] : memref<16xf32, #tpu.memory_space<smem>>
    %70 = vector.broadcast %69 : f32 to vector<8x256xf32>
    %71 = arith.addf %68, %70 : vector<8x256xf32>
    %cst_49 = arith.constant 0.000000e+00 : f32
    %72 = vector.broadcast %cst_49 : f32 to vector<8x256xf32>
    %73 = arith.maximumf %71, %72 : vector<8x256xf32>
    %c0_50 = arith.constant 0 : index
    %c512_51 = arith.constant 512 : index
    %74 = vector.load %arg13[%c0_50, %c512_51] : memref<8x4096xf32, #tpu.memory_space<vmem>>, vector<8x256xf32>
    tpu.vector_store %arg13[%c0_50, %c512_51], %73 {strides = array<i32>} : memref<8x4096xf32, #tpu.memory_space<vmem>>, vector<8x256xf32>,
    %c0_52 = arith.constant 0 : index
    %c0_53 = arith.constant 0 : index
    %75 = vector.load %arg1[%c0_52, %c0_53] : memref<8x1024xf32, #tpu.memory_space<vmem>>, vector<8x256xf32>
    %c3_54 = arith.constant 3 : index
    %c0_55 = arith.constant 0 : index
    %76 = memref.load %arg2[%c3_54, %c0_55] : memref<16x4xf32, #tpu.memory_space<smem>>
    %77 = vector.broadcast %76 : f32 to vector<8x256xf32>
    %78 = arith.mulf %75, %77 : vector<8x256xf32>
    %c0_56 = arith.constant 0 : index
    %c256_57 = arith.constant 256 : index
    %79 = vector.load %arg1[%c0_56, %c256_57] : memref<8x1024xf32, #tpu.memory_space<vmem>>, vector<8x256xf32>
    %c3_58 = arith.constant 3 : index
    %c1_59 = arith.constant 1 : index
    %80 = memref.load %arg2[%c3_58, %c1_59] : memref<16x4xf32, #tpu.memory_space<smem>>
    %81 = vector.broadcast %80 : f32 to vector<8x256xf32>
    %82 = arith.mulf %79, %81 : vector<8x256xf32>
    %83 = arith.addf %78, %82 : vector<8x256xf32>
    %c0_60 = arith.constant 0 : index
    %c512_61 = arith.constant 512 : index
    %84 = vector.load %arg1[%c0_60, %c512_61] : memref<8x1024xf32, #tpu.memory_space<vmem>>, vector<8x256xf32>
    %c3_62 = arith.constant 3 : index
    %c2_63 = arith.constant 2 : index
    %85 = memref.load %arg2[%c3_62, %c2_63] : memref<16x4xf32, #tpu.memory_space<smem>>
    %86 = vector.broadcast %85 : f32 to vector<8x256xf32>
    %87 = arith.mulf %84, %86 : vector<8x256xf32>
    %88 = arith.addf %83, %87 : vector<8x256xf32>
    %c0_64 = arith.constant 0 : index
    %c768_65 = arith.constant 768 : index
    %89 = vector.load %arg1[%c0_64, %c768_65] : memref<8x1024xf32, #tpu.memory_space<vmem>>, vector<8x256xf32>
    %c3_66 = arith.constant 3 : index
    %c3_67 = arith.constant 3 : index
    %90 = memref.load %arg2[%c3_66, %c3_67] : memref<16x4xf32, #tpu.memory_space<smem>>
    %91 = vector.broadcast %90 : f32 to vector<8x256xf32>
    %92 = arith.mulf %89, %91 : vector<8x256xf32>
    %93 = arith.addf %88, %92 : vector<8x256xf32>
    %c3_68 = arith.constant 3 : index
    %94 = memref.load %arg3[%c3_68] : memref<16xf32, #tpu.memory_space<smem>>
    %95 = vector.broadcast %94 : f32 to vector<8x256xf32>
    %96 = arith.addf %93, %95 : vector<8x256xf32>
    %cst_69 = arith.constant 0.000000e+00 : f32
    %97 = vector.broadcast %cst_69 : f32 to vector<8x256xf32>
    %98 = arith.maximumf %96, %97 : vector<8x256xf32>
    %c0_70 = arith.constant 0 : index
    %c768_71 = arith.constant 768 : index
    %99 = vector.load %arg13[%c0_70, %c768_71] : memref<8x4096xf32, #tpu.memory_space<vmem>>, vector<8x256xf32>
    tpu.vector_store %arg13[%c0_70, %c768_71], %98 {strides = array<i32>} : memref<8x4096xf32, #tpu.memory_space<vmem>>, vector<8x256xf32>,
    %c0_72 = arith.constant 0 : index
    %c0_73 = arith.constant 0 : index
    %100 = vector.load %arg1[%c0_72, %c0_73] : memref<8x1024xf32, #tpu.memory_space<vmem>>, vector<8x256xf32>
    %c4 = arith.constant 4 : index
    %c0_74 = arith.constant 0 : index
    %101 = memref.load %arg2[%c4, %c0_74] : memref<16x4xf32, #tpu.memory_space<smem>>
    %102 = vector.broadcast %101 : f32 to vector<8x256xf32>
    %103 = arith.mulf %100, %102 : vector<8x256xf32>
    %c0_75 = arith.constant 0 : index
    %c256_76 = arith.constant 256 : index
    %104 = vector.load %arg1[%c0_75, %c256_76] : memref<8x1024xf32, #tpu.memory_space<vmem>>, vector<8x256xf32>
    %c4_77 = arith.constant 4 : index
    %c1_78 = arith.constant 1 : index
    %105 = memref.load %arg2[%c4_77, %c1_78] : memref<16x4xf32, #tpu.memory_space<smem>>
    %106 = vector.broadcast %105 : f32 to vector<8x256xf32>
    %107 = arith.mulf %104, %106 : vector<8x256xf32>
    %108 = arith.addf %103, %107 : vector<8x256xf32>
    %c0_79 = arith.constant 0 : index
    %c512_80 = arith.constant 512 : index
    %109 = vector.load %arg1[%c0_79, %c512_80] : memref<8x1024xf32, #tpu.memory_space<vmem>>, vector<8x256xf32>
    %c4_81 = arith.constant 4 : index
    %c2_82 = arith.constant 2 : index
    %110 = memref.load %arg2[%c4_81, %c2_82] : memref<16x4xf32, #tpu.memory_space<smem>>
    %111 = vector.broadcast %110 : f32 to vector<8x256xf32>
    %112 = arith.mulf %109, %111 : vector<8x256xf32>
    %113 = arith.addf %108, %112 : vector<8x256xf32>
    %c0_83 = arith.constant 0 : index
    %c768_84 = arith.constant 768 : index
    %114 = vector.load %arg1[%c0_83, %c768_84] : memref<8x1024xf32, #tpu.memory_space<vmem>>, vector<8x256xf32>
    %c4_85 = arith.constant 4 : index
    %c3_86 = arith.constant 3 : index
    %115 = memref.load %arg2[%c4_85, %c3_86] : memref<16x4xf32, #tpu.memory_space<smem>>
    %116 = vector.broadcast %115 : f32 to vector<8x256xf32>
    %117 = arith.mulf %114, %116 : vector<8x256xf32>
    %118 = arith.addf %113, %117 : vector<8x256xf32>
    %c4_87 = arith.constant 4 : index
    %119 = memref.load %arg3[%c4_87] : memref<16xf32, #tpu.memory_space<smem>>
    %120 = vector.broadcast %119 : f32 to vector<8x256xf32>
    %121 = arith.addf %118, %120 : vector<8x256xf32>
    %cst_88 = arith.constant 0.000000e+00 : f32
    %122 = vector.broadcast %cst_88 : f32 to vector<8x256xf32>
    %123 = arith.maximumf %121, %122 : vector<8x256xf32>
    %c0_89 = arith.constant 0 : index
    %c1024 = arith.constant 1024 : index
    %124 = vector.load %arg13[%c0_89, %c1024] : memref<8x4096xf32, #tpu.memory_space<vmem>>, vector<8x256xf32>
    tpu.vector_store %arg13[%c0_89, %c1024], %123 {strides = array<i32>} : memref<8x4096xf32, #tpu.memory_space<vmem>>, vector<8x256xf32>,
    %c0_90 = arith.constant 0 : index
    %c0_91 = arith.constant 0 : index
    %125 = vector.load %arg1[%c0_90, %c0_91] : memref<8x1024xf32, #tpu.memory_space<vmem>>, vector<8x256xf32>
    %c5 = arith.constant 5 : index
    %c0_92 = arith.constant 0 : index
    %126 = memref.load %arg2[%c5, %c0_92] : memref<16x4xf32, #tpu.memory_space<smem>>
    %127 = vector.broadcast %126 : f32 to vector<8x256xf32>
    %128 = arith.mulf %125, %127 : vector<8x256xf32>
    %c0_93 = arith.constant 0 : index
    %c256_94 = arith.constant 256 : index
    %129 = vector.load %arg1[%c0_93, %c256_94] : memref<8x1024xf32, #tpu.memory_space<vmem>>, vector<8x256xf32>
    %c5_95 = arith.constant 5 : index
    %c1_96 = arith.constant 1 : index
    %130 = memref.load %arg2[%c5_95, %c1_96] : memref<16x4xf32, #tpu.memory_space<smem>>
    %131 = vector.broadcast %130 : f32 to vector<8x256xf32>
    %132 = arith.mulf %129, %131 : vector<8x256xf32>
    %133 = arith.addf %128, %132 : vector<8x256xf32>
    %c0_97 = arith.constant 0 : index
    %c512_98 = arith.constant 512 : index
    %134 = vector.load %arg1[%c0_97, %c512_98] : memref<8x1024xf32, #tpu.memory_space<vmem>>, vector<8x256xf32>
    %c5_99 = arith.constant 5 : index
    %c2_100 = arith.constant 2 : index
    %135 = memref.load %arg2[%c5_99, %c2_100] : memref<16x4xf32, #tpu.memory_space<smem>>
    %136 = vector.broadcast %135 : f32 to vector<8x256xf32>
    %137 = arith.mulf %134, %136 : vector<8x256xf32>
    %138 = arith.addf %133, %137 : vector<8x256xf32>
    %c0_101 = arith.constant 0 : index
    %c768_102 = arith.constant 768 : index
    %139 = vector.load %arg1[%c0_101, %c768_102] : memref<8x1024xf32, #tpu.memory_space<vmem>>, vector<8x256xf32>
    %c5_103 = arith.constant 5 : index
    %c3_104 = arith.constant 3 : index
    %140 = memref.load %arg2[%c5_103, %c3_104] : memref<16x4xf32, #tpu.memory_space<smem>>
    %141 = vector.broadcast %140 : f32 to vector<8x256xf32>
    %142 = arith.mulf %139, %141 : vector<8x256xf32>
    %143 = arith.addf %138, %142 : vector<8x256xf32>
    %c5_105 = arith.constant 5 : index
    %144 = memref.load %arg3[%c5_105] : memref<16xf32, #tpu.memory_space<smem>>
    %145 = vector.broadcast %144 : f32 to vector<8x256xf32>
    %146 = arith.addf %143, %145 : vector<8x256xf32>
    %cst_106 = arith.constant 0.000000e+00 : f32
    %147 = vector.broadcast %cst_106 : f32 to vector<8x256xf32>
    %148 = arith.maximumf %146, %147 : vector<8x256xf32>
    %c0_107 = arith.constant 0 : index
    %c1280 = arith.constant 1280 : index
    %149 = vector.load %arg13[%c0_107, %c1280] : memref<8x4096xf32, #tpu.memory_space<vmem>>, vector<8x256xf32>
    tpu.vector_store %arg13[%c0_107, %c1280], %148 {strides = array<i32>} : memref<8x4096xf32, #tpu.memory_space<vmem>>, vector<8x256xf32>,
    %c0_108 = arith.constant 0 : index
    %c0_109 = arith.constant 0 : index
    %150 = vector.load %arg1[%c0_108, %c0_109] : memref<8x1024xf32, #tpu.memory_space<vmem>>, vector<8x256xf32>
    %c6 = arith.constant 6 : index
    %c0_110 = arith.constant 0 : index
    %151 = memref.load %arg2[%c6, %c0_110] : memref<16x4xf32, #tpu.memory_space<smem>>
    %152 = vector.broadcast %151 : f32 to vector<8x256xf32>
    %153 = arith.mulf %150, %152 : vector<8x256xf32>
    %c0_111 = arith.constant 0 : index
    %c256_112 = arith.constant 256 : index
    %154 = vector.load %arg1[%c0_111, %c256_112] : memref<8x1024xf32, #tpu.memory_space<vmem>>, vector<8x256xf32>
    %c6_113 = arith.constant 6 : index
    %c1_114 = arith.constant 1 : index
    %155 = memref.load %arg2[%c6_113, %c1_114] : memref<16x4xf32, #tpu.memory_space<smem>>
    %156 = vector.broadcast %155 : f32 to vector<8x256xf32>
    %157 = arith.mulf %154, %156 : vector<8x256xf32>
    %158 = arith.addf %153, %157 : vector<8x256xf32>
    %c0_115 = arith.constant 0 : index
    %c512_116 = arith.constant 512 : index
    %159 = vector.load %arg1[%c0_115, %c512_116] : memref<8x1024xf32, #tpu.memory_space<vmem>>, vector<8x256xf32>
    %c6_117 = arith.constant 6 : index
    %c2_118 = arith.constant 2 : index
    %160 = memref.load %arg2[%c6_117, %c2_118] : memref<16x4xf32, #tpu.memory_space<smem>>
    %161 = vector.broadcast %160 : f32 to vector<8x256xf32>
    %162 = arith.mulf %159, %161 : vector<8x256xf32>
    %163 = arith.addf %158, %162 : vector<8x256xf32>
    %c0_119 = arith.constant 0 : index
    %c768_120 = arith.constant 768 : index
    %164 = vector.load %arg1[%c0_119, %c768_120] : memref<8x1024xf32, #tpu.memory_space<vmem>>, vector<8x256xf32>
    %c6_121 = arith.constant 6 : index
    %c3_122 = arith.constant 3 : index
    %165 = memref.load %arg2[%c6_121, %c3_122] : memref<16x4xf32, #tpu.memory_space<smem>>
    %166 = vector.broadcast %165 : f32 to vector<8x256xf32>
    %167 = arith.mulf %164, %166 : vector<8x256xf32>
    %168 = arith.addf %163, %167 : vector<8x256xf32>
    %c6_123 = arith.constant 6 : index
    %169 = memref.load %arg3[%c6_123] : memref<16xf32, #tpu.memory_space<smem>>
    %170 = vector.broadcast %169 : f32 to vector<8x256xf32>
    %171 = arith.addf %168, %170 : vector<8x256xf32>
    %cst_124 = arith.constant 0.000000e+00 : f32
    %172 = vector.broadcast %cst_124 : f32 to vector<8x256xf32>
    %173 = arith.maximumf %171, %172 : vector<8x256xf32>
    %c0_125 = arith.constant 0 : index
    %c1536 = arith.constant 1536 : index
    %174 = vector.load %arg13[%c0_125, %c1536] : memref<8x4096xf32, #tpu.memory_space<vmem>>, vector<8x256xf32>
    tpu.vector_store %arg13[%c0_125, %c1536], %173 {strides = array<i32>} : memref<8x4096xf32, #tpu.memory_space<vmem>>, vector<8x256xf32>,
    %c0_126 = arith.constant 0 : index
    %c0_127 = arith.constant 0 : index
    %175 = vector.load %arg1[%c0_126, %c0_127] : memref<8x1024xf32, #tpu.memory_space<vmem>>, vector<8x256xf32>
    %c7 = arith.constant 7 : index
    %c0_128 = arith.constant 0 : index
    %176 = memref.load %arg2[%c7, %c0_128] : memref<16x4xf32, #tpu.memory_space<smem>>
    %177 = vector.broadcast %176 : f32 to vector<8x256xf32>
    %178 = arith.mulf %175, %177 : vector<8x256xf32>
    %c0_129 = arith.constant 0 : index
    %c256_130 = arith.constant 256 : index
    %179 = vector.load %arg1[%c0_129, %c256_130] : memref<8x1024xf32, #tpu.memory_space<vmem>>, vector<8x256xf32>
    %c7_131 = arith.constant 7 : index
    %c1_132 = arith.constant 1 : index
    %180 = memref.load %arg2[%c7_131, %c1_132] : memref<16x4xf32, #tpu.memory_space<smem>>
    %181 = vector.broadcast %180 : f32 to vector<8x256xf32>
    %182 = arith.mulf %179, %181 : vector<8x256xf32>
    %183 = arith.addf %178, %182 : vector<8x256xf32>
    %c0_133 = arith.constant 0 : index
    %c512_134 = arith.constant 512 : index
    %184 = vector.load %arg1[%c0_133, %c512_134] : memref<8x1024xf32, #tpu.memory_space<vmem>>, vector<8x256xf32>
    %c7_135 = arith.constant 7 : index
    %c2_136 = arith.constant 2 : index
    %185 = memref.load %arg2[%c7_135, %c2_136] : memref<16x4xf32, #tpu.memory_space<smem>>
    %186 = vector.broadcast %185 : f32 to vector<8x256xf32>
    %187 = arith.mulf %184, %186 : vector<8x256xf32>
    %188 = arith.addf %183, %187 : vector<8x256xf32>
    %c0_137 = arith.constant 0 : index
    %c768_138 = arith.constant 768 : index
    %189 = vector.load %arg1[%c0_137, %c768_138] : memref<8x1024xf32, #tpu.memory_space<vmem>>, vector<8x256xf32>
    %c7_139 = arith.constant 7 : index
    %c3_140 = arith.constant 3 : index
    %190 = memref.load %arg2[%c7_139, %c3_140] : memref<16x4xf32, #tpu.memory_space<smem>>
    %191 = vector.broadcast %190 : f32 to vector<8x256xf32>
    %192 = arith.mulf %189, %191 : vector<8x256xf32>
    %193 = arith.addf %188, %192 : vector<8x256xf32>
    %c7_141 = arith.constant 7 : index
    %194 = memref.load %arg3[%c7_141] : memref<16xf32, #tpu.memory_space<smem>>
    %195 = vector.broadcast %194 : f32 to vector<8x256xf32>
    %196 = arith.addf %193, %195 : vector<8x256xf32>
    %cst_142 = arith.constant 0.000000e+00 : f32
    %197 = vector.broadcast %cst_142 : f32 to vector<8x256xf32>
    %198 = arith.maximumf %196, %197 : vector<8x256xf32>
    %c0_143 = arith.constant 0 : index
    %c1792 = arith.constant 1792 : index
    %199 = vector.load %arg13[%c0_143, %c1792] : memref<8x4096xf32, #tpu.memory_space<vmem>>, vector<8x256xf32>
    tpu.vector_store %arg13[%c0_143, %c1792], %198 {strides = array<i32>} : memref<8x4096xf32, #tpu.memory_space<vmem>>, vector<8x256xf32>,
    %c0_144 = arith.constant 0 : index
    %c0_145 = arith.constant 0 : index
    %200 = vector.load %arg1[%c0_144, %c0_145] : memref<8x1024xf32, #tpu.memory_space<vmem>>, vector<8x256xf32>
    %c8 = arith.constant 8 : index
    %c0_146 = arith.constant 0 : index
    %201 = memref.load %arg2[%c8, %c0_146] : memref<16x4xf32, #tpu.memory_space<smem>>
    %202 = vector.broadcast %201 : f32 to vector<8x256xf32>
    %203 = arith.mulf %200, %202 : vector<8x256xf32>
    %c0_147 = arith.constant 0 : index
    %c256_148 = arith.constant 256 : index
    %204 = vector.load %arg1[%c0_147, %c256_148] : memref<8x1024xf32, #tpu.memory_space<vmem>>, vector<8x256xf32>
    %c8_149 = arith.constant 8 : index
    %c1_150 = arith.constant 1 : index
    %205 = memref.load %arg2[%c8_149, %c1_150] : memref<16x4xf32, #tpu.memory_space<smem>>
    %206 = vector.broadcast %205 : f32 to vector<8x256xf32>
    %207 = arith.mulf %204, %206 : vector<8x256xf32>
    %208 = arith.addf %203, %207 : vector<8x256xf32>
    %c0_151 = arith.constant 0 : index
    %c512_152 = arith.constant 512 : index
    %209 = vector.load %arg1[%c0_151, %c512_152] : memref<8x1024xf32, #tpu.memory_space<vmem>>, vector<8x256xf32>
    %c8_153 = arith.constant 8 : index
    %c2_154 = arith.constant 2 : index
    %210 = memref.load %arg2[%c8_153, %c2_154] : memref<16x4xf32, #tpu.memory_space<smem>>
    %211 = vector.broadcast %210 : f32 to vector<8x256xf32>
    %212 = arith.mulf %209, %211 : vector<8x256xf32>
    %213 = arith.addf %208, %212 : vector<8x256xf32>
    %c0_155 = arith.constant 0 : index
    %c768_156 = arith.constant 768 : index
    %214 = vector.load %arg1[%c0_155, %c768_156] : memref<8x1024xf32, #tpu.memory_space<vmem>>, vector<8x256xf32>
    %c8_157 = arith.constant 8 : index
    %c3_158 = arith.constant 3 : index
    %215 = memref.load %arg2[%c8_157, %c3_158] : memref<16x4xf32, #tpu.memory_space<smem>>
    %216 = vector.broadcast %215 : f32 to vector<8x256xf32>
    %217 = arith.mulf %214, %216 : vector<8x256xf32>
    %218 = arith.addf %213, %217 : vector<8x256xf32>
    %c8_159 = arith.constant 8 : index
    %219 = memref.load %arg3[%c8_159] : memref<16xf32, #tpu.memory_space<smem>>
    %220 = vector.broadcast %219 : f32 to vector<8x256xf32>
    %221 = arith.addf %218, %220 : vector<8x256xf32>
    %cst_160 = arith.constant 0.000000e+00 : f32
    %222 = vector.broadcast %cst_160 : f32 to vector<8x256xf32>
    %223 = arith.maximumf %221, %222 : vector<8x256xf32>
    %c0_161 = arith.constant 0 : index
    %c2048 = arith.constant 2048 : index
    %224 = vector.load %arg13[%c0_161, %c2048] : memref<8x4096xf32, #tpu.memory_space<vmem>>, vector<8x256xf32>
    tpu.vector_store %arg13[%c0_161, %c2048], %223 {strides = array<i32>} : memref<8x4096xf32, #tpu.memory_space<vmem>>, vector<8x256xf32>,
    %c0_162 = arith.constant 0 : index
    %c0_163 = arith.constant 0 : index
    %225 = vector.load %arg1[%c0_162, %c0_163] : memref<8x1024xf32, #tpu.memory_space<vmem>>, vector<8x256xf32>
    %c9 = arith.constant 9 : index
    %c0_164 = arith.constant 0 : index
    %226 = memref.load %arg2[%c9, %c0_164] : memref<16x4xf32, #tpu.memory_space<smem>>
    %227 = vector.broadcast %226 : f32 to vector<8x256xf32>
    %228 = arith.mulf %225, %227 : vector<8x256xf32>
    %c0_165 = arith.constant 0 : index
    %c256_166 = arith.constant 256 : index
    %229 = vector.load %arg1[%c0_165, %c256_166] : memref<8x1024xf32, #tpu.memory_space<vmem>>, vector<8x256xf32>
    %c9_167 = arith.constant 9 : index
    %c1_168 = arith.constant 1 : index
    %230 = memref.load %arg2[%c9_167, %c1_168] : memref<16x4xf32, #tpu.memory_space<smem>>
    %231 = vector.broadcast %230 : f32 to vector<8x256xf32>
    %232 = arith.mulf %229, %231 : vector<8x256xf32>
    %233 = arith.addf %228, %232 : vector<8x256xf32>
    %c0_169 = arith.constant 0 : index
    %c512_170 = arith.constant 512 : index
    %234 = vector.load %arg1[%c0_169, %c512_170] : memref<8x1024xf32, #tpu.memory_space<vmem>>, vector<8x256xf32>
    %c9_171 = arith.constant 9 : index
    %c2_172 = arith.constant 2 : index
    %235 = memref.load %arg2[%c9_171, %c2_172] : memref<16x4xf32, #tpu.memory_space<smem>>
    %236 = vector.broadcast %235 : f32 to vector<8x256xf32>
    %237 = arith.mulf %234, %236 : vector<8x256xf32>
    %238 = arith.addf %233, %237 : vector<8x256xf32>
    %c0_173 = arith.constant 0 : index
    %c768_174 = arith.constant 768 : index
    %239 = vector.load %arg1[%c0_173, %c768_174] : memref<8x1024xf32, #tpu.memory_space<vmem>>, vector<8x256xf32>
    %c9_175 = arith.constant 9 : index
    %c3_176 = arith.constant 3 : index
    %240 = memref.load %arg2[%c9_175, %c3_176] : memref<16x4xf32, #tpu.memory_space<smem>>
    %241 = vector.broadcast %240 : f32 to vector<8x256xf32>
    %242 = arith.mulf %239, %241 : vector<8x256xf32>
    %243 = arith.addf %238, %242 : vector<8x256xf32>
    %c9_177 = arith.constant 9 : index
    %244 = memref.load %arg3[%c9_177] : memref<16xf32, #tpu.memory_space<smem>>
    %245 = vector.broadcast %244 : f32 to vector<8x256xf32>
    %246 = arith.addf %243, %245 : vector<8x256xf32>
    %cst_178 = arith.constant 0.000000e+00 : f32
    %247 = vector.broadcast %cst_178 : f32 to vector<8x256xf32>
    %248 = arith.maximumf %246, %247 : vector<8x256xf32>
    %c0_179 = arith.constant 0 : index
    %c2304 = arith.constant 2304 : index
    %249 = vector.load %arg13[%c0_179, %c2304] : memref<8x4096xf32, #tpu.memory_space<vmem>>, vector<8x256xf32>
    tpu.vector_store %arg13[%c0_179, %c2304], %248 {strides = array<i32>} : memref<8x4096xf32, #tpu.memory_space<vmem>>, vector<8x256xf32>,
    %c0_180 = arith.constant 0 : index
    %c0_181 = arith.constant 0 : index
    %250 = vector.load %arg1[%c0_180, %c0_181] : memref<8x1024xf32, #tpu.memory_space<vmem>>, vector<8x256xf32>
    %c10 = arith.constant 10 : index
    %c0_182 = arith.constant 0 : index
    %251 = memref.load %arg2[%c10, %c0_182] : memref<16x4xf32, #tpu.memory_space<smem>>
    %252 = vector.broadcast %251 : f32 to vector<8x256xf32>
    %253 = arith.mulf %250, %252 : vector<8x256xf32>
    %c0_183 = arith.constant 0 : index
    %c256_184 = arith.constant 256 : index
    %254 = vector.load %arg1[%c0_183, %c256_184] : memref<8x1024xf32, #tpu.memory_space<vmem>>, vector<8x256xf32>
    %c10_185 = arith.constant 10 : index
    %c1_186 = arith.constant 1 : index
    %255 = memref.load %arg2[%c10_185, %c1_186] : memref<16x4xf32, #tpu.memory_space<smem>>
    %256 = vector.broadcast %255 : f32 to vector<8x256xf32>
    %257 = arith.mulf %254, %256 : vector<8x256xf32>
    %258 = arith.addf %253, %257 : vector<8x256xf32>
    %c0_187 = arith.constant 0 : index
    %c512_188 = arith.constant 512 : index
    %259 = vector.load %arg1[%c0_187, %c512_188] : memref<8x1024xf32, #tpu.memory_space<vmem>>, vector<8x256xf32>
    %c10_189 = arith.constant 10 : index
    %c2_190 = arith.constant 2 : index
    %260 = memref.load %arg2[%c10_189, %c2_190] : memref<16x4xf32, #tpu.memory_space<smem>>
    %261 = vector.broadcast %260 : f32 to vector<8x256xf32>
    %262 = arith.mulf %259, %261 : vector<8x256xf32>
    %263 = arith.addf %258, %262 : vector<8x256xf32>
    %c0_191 = arith.constant 0 : index
    %c768_192 = arith.constant 768 : index
    %264 = vector.load %arg1[%c0_191, %c768_192] : memref<8x1024xf32, #tpu.memory_space<vmem>>, vector<8x256xf32>
    %c10_193 = arith.constant 10 : index
    %c3_194 = arith.constant 3 : index
    %265 = memref.load %arg2[%c10_193, %c3_194] : memref<16x4xf32, #tpu.memory_space<smem>>
    %266 = vector.broadcast %265 : f32 to vector<8x256xf32>
    %267 = arith.mulf %264, %266 : vector<8x256xf32>
    %268 = arith.addf %263, %267 : vector<8x256xf32>
    %c10_195 = arith.constant 10 : index
    %269 = memref.load %arg3[%c10_195] : memref<16xf32, #tpu.memory_space<smem>>
    %270 = vector.broadcast %269 : f32 to vector<8x256xf32>
    %271 = arith.addf %268, %270 : vector<8x256xf32>
    %cst_196 = arith.constant 0.000000e+00 : f32
    %272 = vector.broadcast %cst_196 : f32 to vector<8x256xf32>
    %273 = arith.maximumf %271, %272 : vector<8x256xf32>
    %c0_197 = arith.constant 0 : index
    %c2560 = arith.constant 2560 : index
    %274 = vector.load %arg13[%c0_197, %c2560] : memref<8x4096xf32, #tpu.memory_space<vmem>>, vector<8x256xf32>
    tpu.vector_store %arg13[%c0_197, %c2560], %273 {strides = array<i32>} : memref<8x4096xf32, #tpu.memory_space<vmem>>, vector<8x256xf32>,
    %c0_198 = arith.constant 0 : index
    %c0_199 = arith.constant 0 : index
    %275 = vector.load %arg1[%c0_198, %c0_199] : memref<8x1024xf32, #tpu.memory_space<vmem>>, vector<8x256xf32>
    %c11 = arith.constant 11 : index
    %c0_200 = arith.constant 0 : index
    %276 = memref.load %arg2[%c11, %c0_200] : memref<16x4xf32, #tpu.memory_space<smem>>
    %277 = vector.broadcast %276 : f32 to vector<8x256xf32>
    %278 = arith.mulf %275, %277 : vector<8x256xf32>
    %c0_201 = arith.constant 0 : index
    %c256_202 = arith.constant 256 : index
    %279 = vector.load %arg1[%c0_201, %c256_202] : memref<8x1024xf32, #tpu.memory_space<vmem>>, vector<8x256xf32>
    %c11_203 = arith.constant 11 : index
    %c1_204 = arith.constant 1 : index
    %280 = memref.load %arg2[%c11_203, %c1_204] : memref<16x4xf32, #tpu.memory_space<smem>>
    %281 = vector.broadcast %280 : f32 to vector<8x256xf32>
    %282 = arith.mulf %279, %281 : vector<8x256xf32>
    %283 = arith.addf %278, %282 : vector<8x256xf32>
    %c0_205 = arith.constant 0 : index
    %c512_206 = arith.constant 512 : index
    %284 = vector.load %arg1[%c0_205, %c512_206] : memref<8x1024xf32, #tpu.memory_space<vmem>>, vector<8x256xf32>
    %c11_207 = arith.constant 11 : index
    %c2_208 = arith.constant 2 : index
    %285 = memref.load %arg2[%c11_207, %c2_208] : memref<16x4xf32, #tpu.memory_space<smem>>
    %286 = vector.broadcast %285 : f32 to vector<8x256xf32>
    %287 = arith.mulf %284, %286 : vector<8x256xf32>
    %288 = arith.addf %283, %287 : vector<8x256xf32>
    %c0_209 = arith.constant 0 : index
    %c768_210 = arith.constant 768 : index
    %289 = vector.load %arg1[%c0_209, %c768_210] : memref<8x1024xf32, #tpu.memory_space<vmem>>, vector<8x256xf32>
    %c11_211 = arith.constant 11 : index
    %c3_212 = arith.constant 3 : index
    %290 = memref.load %arg2[%c11_211, %c3_212] : memref<16x4xf32, #tpu.memory_space<smem>>
    %291 = vector.broadcast %290 : f32 to vector<8x256xf32>
    %292 = arith.mulf %289, %291 : vector<8x256xf32>
    %293 = arith.addf %288, %292 : vector<8x256xf32>
    %c11_213 = arith.constant 11 : index
    %294 = memref.load %arg3[%c11_213] : memref<16xf32, #tpu.memory_space<smem>>
    %295 = vector.broadcast %294 : f32 to vector<8x256xf32>
    %296 = arith.addf %293, %295 : vector<8x256xf32>
    %cst_214 = arith.constant 0.000000e+00 : f32
    %297 = vector.broadcast %cst_214 : f32 to vector<8x256xf32>
    %298 = arith.maximumf %296, %297 : vector<8x256xf32>
    %c0_215 = arith.constant 0 : index
    %c2816 = arith.constant 2816 : index
    %299 = vector.load %arg13[%c0_215, %c2816] : memref<8x4096xf32, #tpu.memory_space<vmem>>, vector<8x256xf32>
    tpu.vector_store %arg13[%c0_215, %c2816], %298 {strides = array<i32>} : memref<8x4096xf32, #tpu.memory_space<vmem>>, vector<8x256xf32>,
    %c0_216 = arith.constant 0 : index
    %c0_217 = arith.constant 0 : index
    %300 = vector.load %arg1[%c0_216, %c0_217] : memref<8x1024xf32, #tpu.memory_space<vmem>>, vector<8x256xf32>
    %c12 = arith.constant 12 : index
    %c0_218 = arith.constant 0 : index
    %301 = memref.load %arg2[%c12, %c0_218] : memref<16x4xf32, #tpu.memory_space<smem>>
    %302 = vector.broadcast %301 : f32 to vector<8x256xf32>
    %303 = arith.mulf %300, %302 : vector<8x256xf32>
    %c0_219 = arith.constant 0 : index
    %c256_220 = arith.constant 256 : index
    %304 = vector.load %arg1[%c0_219, %c256_220] : memref<8x1024xf32, #tpu.memory_space<vmem>>, vector<8x256xf32>
    %c12_221 = arith.constant 12 : index
    %c1_222 = arith.constant 1 : index
    %305 = memref.load %arg2[%c12_221, %c1_222] : memref<16x4xf32, #tpu.memory_space<smem>>
    %306 = vector.broadcast %305 : f32 to vector<8x256xf32>
    %307 = arith.mulf %304, %306 : vector<8x256xf32>
    %308 = arith.addf %303, %307 : vector<8x256xf32>
    %c0_223 = arith.constant 0 : index
    %c512_224 = arith.constant 512 : index
    %309 = vector.load %arg1[%c0_223, %c512_224] : memref<8x1024xf32, #tpu.memory_space<vmem>>, vector<8x256xf32>
    %c12_225 = arith.constant 12 : index
    %c2_226 = arith.constant 2 : index
    %310 = memref.load %arg2[%c12_225, %c2_226] : memref<16x4xf32, #tpu.memory_space<smem>>
    %311 = vector.broadcast %310 : f32 to vector<8x256xf32>
    %312 = arith.mulf %309, %311 : vector<8x256xf32>
    %313 = arith.addf %308, %312 : vector<8x256xf32>
    %c0_227 = arith.constant 0 : index
    %c768_228 = arith.constant 768 : index
    %314 = vector.load %arg1[%c0_227, %c768_228] : memref<8x1024xf32, #tpu.memory_space<vmem>>, vector<8x256xf32>
    %c12_229 = arith.constant 12 : index
    %c3_230 = arith.constant 3 : index
    %315 = memref.load %arg2[%c12_229, %c3_230] : memref<16x4xf32, #tpu.memory_space<smem>>
    %316 = vector.broadcast %315 : f32 to vector<8x256xf32>
    %317 = arith.mulf %314, %316 : vector<8x256xf32>
    %318 = arith.addf %313, %317 : vector<8x256xf32>
    %c12_231 = arith.constant 12 : index
    %319 = memref.load %arg3[%c12_231] : memref<16xf32, #tpu.memory_space<smem>>
    %320 = vector.broadcast %319 : f32 to vector<8x256xf32>
    %321 = arith.addf %318, %320 : vector<8x256xf32>
    %cst_232 = arith.constant 0.000000e+00 : f32
    %322 = vector.broadcast %cst_232 : f32 to vector<8x256xf32>
    %323 = arith.maximumf %321, %322 : vector<8x256xf32>
    %c0_233 = arith.constant 0 : index
    %c3072 = arith.constant 3072 : index
    %324 = vector.load %arg13[%c0_233, %c3072] : memref<8x4096xf32, #tpu.memory_space<vmem>>, vector<8x256xf32>
    tpu.vector_store %arg13[%c0_233, %c3072], %323 {strides = array<i32>} : memref<8x4096xf32, #tpu.memory_space<vmem>>, vector<8x256xf32>,
    %c0_234 = arith.constant 0 : index
    %c0_235 = arith.constant 0 : index
    %325 = vector.load %arg1[%c0_234, %c0_235] : memref<8x1024xf32, #tpu.memory_space<vmem>>, vector<8x256xf32>
    %c13 = arith.constant 13 : index
    %c0_236 = arith.constant 0 : index
    %326 = memref.load %arg2[%c13, %c0_236] : memref<16x4xf32, #tpu.memory_space<smem>>
    %327 = vector.broadcast %326 : f32 to vector<8x256xf32>
    %328 = arith.mulf %325, %327 : vector<8x256xf32>
    %c0_237 = arith.constant 0 : index
    %c256_238 = arith.constant 256 : index
    %329 = vector.load %arg1[%c0_237, %c256_238] : memref<8x1024xf32, #tpu.memory_space<vmem>>, vector<8x256xf32>
    %c13_239 = arith.constant 13 : index
    %c1_240 = arith.constant 1 : index
    %330 = memref.load %arg2[%c13_239, %c1_240] : memref<16x4xf32, #tpu.memory_space<smem>>
    %331 = vector.broadcast %330 : f32 to vector<8x256xf32>
    %332 = arith.mulf %329, %331 : vector<8x256xf32>
    %333 = arith.addf %328, %332 : vector<8x256xf32>
    %c0_241 = arith.constant 0 : index
    %c512_242 = arith.constant 512 : index
    %334 = vector.load %arg1[%c0_241, %c512_242] : memref<8x1024xf32, #tpu.memory_space<vmem>>, vector<8x256xf32>
    %c13_243 = arith.constant 13 : index
    %c2_244 = arith.constant 2 : index
    %335 = memref.load %arg2[%c13_243, %c2_244] : memref<16x4xf32, #tpu.memory_space<smem>>
    %336 = vector.broadcast %335 : f32 to vector<8x256xf32>
    %337 = arith.mulf %334, %336 : vector<8x256xf32>
    %338 = arith.addf %333, %337 : vector<8x256xf32>
    %c0_245 = arith.constant 0 : index
    %c768_246 = arith.constant 768 : index
    %339 = vector.load %arg1[%c0_245, %c768_246] : memref<8x1024xf32, #tpu.memory_space<vmem>>, vector<8x256xf32>
    %c13_247 = arith.constant 13 : index
    %c3_248 = arith.constant 3 : index
    %340 = memref.load %arg2[%c13_247, %c3_248] : memref<16x4xf32, #tpu.memory_space<smem>>
    %341 = vector.broadcast %340 : f32 to vector<8x256xf32>
    %342 = arith.mulf %339, %341 : vector<8x256xf32>
    %343 = arith.addf %338, %342 : vector<8x256xf32>
    %c13_249 = arith.constant 13 : index
    %344 = memref.load %arg3[%c13_249] : memref<16xf32, #tpu.memory_space<smem>>
    %345 = vector.broadcast %344 : f32 to vector<8x256xf32>
    %346 = arith.addf %343, %345 : vector<8x256xf32>
    %cst_250 = arith.constant 0.000000e+00 : f32
    %347 = vector.broadcast %cst_250 : f32 to vector<8x256xf32>
    %348 = arith.maximumf %346, %347 : vector<8x256xf32>
    %c0_251 = arith.constant 0 : index
    %c3328 = arith.constant 3328 : index
    %349 = vector.load %arg13[%c0_251, %c3328] : memref<8x4096xf32, #tpu.memory_space<vmem>>, vector<8x256xf32>
    tpu.vector_store %arg13[%c0_251, %c3328], %348 {strides = array<i32>} : memref<8x4096xf32, #tpu.memory_space<vmem>>, vector<8x256xf32>,
    %c0_252 = arith.constant 0 : index
    %c0_253 = arith.constant 0 : index
    %350 = vector.load %arg1[%c0_252, %c0_253] : memref<8x1024xf32, #tpu.memory_space<vmem>>, vector<8x256xf32>
    %c14 = arith.constant 14 : index
    %c0_254 = arith.constant 0 : index
    %351 = memref.load %arg2[%c14, %c0_254] : memref<16x4xf32, #tpu.memory_space<smem>>
    %352 = vector.broadcast %351 : f32 to vector<8x256xf32>
    %353 = arith.mulf %350, %352 : vector<8x256xf32>
    %c0_255 = arith.constant 0 : index
    %c256_256 = arith.constant 256 : index
    %354 = vector.load %arg1[%c0_255, %c256_256] : memref<8x1024xf32, #tpu.memory_space<vmem>>, vector<8x256xf32>
    %c14_257 = arith.constant 14 : index
    %c1_258 = arith.constant 1 : index
    %355 = memref.load %arg2[%c14_257, %c1_258] : memref<16x4xf32, #tpu.memory_space<smem>>
    %356 = vector.broadcast %355 : f32 to vector<8x256xf32>
    %357 = arith.mulf %354, %356 : vector<8x256xf32>
    %358 = arith.addf %353, %357 : vector<8x256xf32>
    %c0_259 = arith.constant 0 : index
    %c512_260 = arith.constant 512 : index
    %359 = vector.load %arg1[%c0_259, %c512_260] : memref<8x1024xf32, #tpu.memory_space<vmem>>, vector<8x256xf32>
    %c14_261 = arith.constant 14 : index
    %c2_262 = arith.constant 2 : index
    %360 = memref.load %arg2[%c14_261, %c2_262] : memref<16x4xf32, #tpu.memory_space<smem>>
    %361 = vector.broadcast %360 : f32 to vector<8x256xf32>
    %362 = arith.mulf %359, %361 : vector<8x256xf32>
    %363 = arith.addf %358, %362 : vector<8x256xf32>
    %c0_263 = arith.constant 0 : index
    %c768_264 = arith.constant 768 : index
    %364 = vector.load %arg1[%c0_263, %c768_264] : memref<8x1024xf32, #tpu.memory_space<vmem>>, vector<8x256xf32>
    %c14_265 = arith.constant 14 : index
    %c3_266 = arith.constant 3 : index
    %365 = memref.load %arg2[%c14_265, %c3_266] : memref<16x4xf32, #tpu.memory_space<smem>>
    %366 = vector.broadcast %365 : f32 to vector<8x256xf32>
    %367 = arith.mulf %364, %366 : vector<8x256xf32>
    %368 = arith.addf %363, %367 : vector<8x256xf32>
    %c14_267 = arith.constant 14 : index
    %369 = memref.load %arg3[%c14_267] : memref<16xf32, #tpu.memory_space<smem>>
    %370 = vector.broadcast %369 : f32 to vector<8x256xf32>
    %371 = arith.addf %368, %370 : vector<8x256xf32>
    %cst_268 = arith.constant 0.000000e+00 : f32
    %372 = vector.broadcast %cst_268 : f32 to vector<8x256xf32>
    %373 = arith.maximumf %371, %372 : vector<8x256xf32>
    %c0_269 = arith.constant 0 : index
    %c3584 = arith.constant 3584 : index
    %374 = vector.load %arg13[%c0_269, %c3584] : memref<8x4096xf32, #tpu.memory_space<vmem>>, vector<8x256xf32>
    tpu.vector_store %arg13[%c0_269, %c3584], %373 {strides = array<i32>} : memref<8x4096xf32, #tpu.memory_space<vmem>>, vector<8x256xf32>,
    %c0_270 = arith.constant 0 : index
    %c0_271 = arith.constant 0 : index
    %375 = vector.load %arg1[%c0_270, %c0_271] : memref<8x1024xf32, #tpu.memory_space<vmem>>, vector<8x256xf32>
    %c15 = arith.constant 15 : index
    %c0_272 = arith.constant 0 : index
    %376 = memref.load %arg2[%c15, %c0_272] : memref<16x4xf32, #tpu.memory_space<smem>>
    %377 = vector.broadcast %376 : f32 to vector<8x256xf32>
    %378 = arith.mulf %375, %377 : vector<8x256xf32>
    %c0_273 = arith.constant 0 : index
    %c256_274 = arith.constant 256 : index
    %379 = vector.load %arg1[%c0_273, %c256_274] : memref<8x1024xf32, #tpu.memory_space<vmem>>, vector<8x256xf32>
    %c15_275 = arith.constant 15 : index
    %c1_276 = arith.constant 1 : index
    %380 = memref.load %arg2[%c15_275, %c1_276] : memref<16x4xf32, #tpu.memory_space<smem>>
    %381 = vector.broadcast %380 : f32 to vector<8x256xf32>
    %382 = arith.mulf %379, %381 : vector<8x256xf32>
    %383 = arith.addf %378, %382 : vector<8x256xf32>
    %c0_277 = arith.constant 0 : index
    %c512_278 = arith.constant 512 : index
    %384 = vector.load %arg1[%c0_277, %c512_278] : memref<8x1024xf32, #tpu.memory_space<vmem>>, vector<8x256xf32>
    %c15_279 = arith.constant 15 : index
    %c2_280 = arith.constant 2 : index
    %385 = memref.load %arg2[%c15_279, %c2_280] : memref<16x4xf32, #tpu.memory_space<smem>>
    %386 = vector.broadcast %385 : f32 to vector<8x256xf32>
    %387 = arith.mulf %384, %386 : vector<8x256xf32>
    %388 = arith.addf %383, %387 : vector<8x256xf32>
    %c0_281 = arith.constant 0 : index
    %c768_282 = arith.constant 768 : index
    %389 = vector.load %arg1[%c0_281, %c768_282] : memref<8x1024xf32, #tpu.memory_space<vmem>>, vector<8x256xf32>
    %c15_283 = arith.constant 15 : index
    %c3_284 = arith.constant 3 : index
    %390 = memref.load %arg2[%c15_283, %c3_284] : memref<16x4xf32, #tpu.memory_space<smem>>
    %391 = vector.broadcast %390 : f32 to vector<8x256xf32>
    %392 = arith.mulf %389, %391 : vector<8x256xf32>
    %393 = arith.addf %388, %392 : vector<8x256xf32>
    %c15_285 = arith.constant 15 : index
    %394 = memref.load %arg3[%c15_285] : memref<16xf32, #tpu.memory_space<smem>>
    %395 = vector.broadcast %394 : f32 to vector<8x256xf32>
    %396 = arith.addf %393, %395 : vector<8x256xf32>
    %cst_286 = arith.constant 0.000000e+00 : f32
    %397 = vector.broadcast %cst_286 : f32 to vector<8x256xf32>
    %398 = arith.maximumf %396, %397 : vector<8x256xf32>
    %c0_287 = arith.constant 0 : index
    %c3840 = arith.constant 3840 : index
    %399 = vector.load %arg13[%c0_287, %c3840] : memref<8x4096xf32, #tpu.memory_space<vmem>>, vector<8x256xf32>
    tpu.vector_store %arg13[%c0_287, %c3840], %398 {strides = array<i32>} : memref<8x4096xf32, #tpu.memory_space<vmem>>, vector<8x256xf32>,
    %c0_288 = arith.constant 0 : index
    %c0_289 = arith.constant 0 : index
    %400 = vector.load %arg13[%c0_288, %c0_289] : memref<8x4096xf32, #tpu.memory_space<vmem>>, vector<8x4096xf32>
    %c0_290 = arith.constant 0 : index
    %c0_291 = arith.constant 0 : index
    %401 = vector.load %arg4[%c0_290, %c0_291] : memref<4096x392xf32, #tpu.memory_space<vmem>>, vector<4096x392xf32>
    %cst_292 = arith.constant dense<0.000000e+00> : vector<8x392xf32>
    %402 = tpu.matmul %400, %401, %cst_292 {dimension_numbers = #tpu.dot_dimension_numbers<[1], [0], [0], [1], [0, 0, 1, 1], [], []>} : vector<8x4096xf32>, vector<4096x392xf32>, vector<8x392xf32> -> vector<8x392xf32>
    %c0_293 = arith.constant 0 : index
    %c0_294 = arith.constant 0 : index
    %403 = vector.load %arg5[%c0_293, %c0_294] : memref<1x392xf32, #tpu.memory_space<vmem>>, vector<1x392xf32>
    %404 = vector.broadcast %403 : vector<1x392xf32> to vector<8x392xf32>
    %405 = arith.addf %402, %404 : vector<8x392xf32>
    %cst_295 = arith.constant 0.000000e+00 : f32
    %406 = vector.broadcast %cst_295 : f32 to vector<8x392xf32>
    %407 = arith.maximumf %405, %406 : vector<8x392xf32>
    %c0_296 = arith.constant 0 : index
    %c0_297 = arith.constant 0 : index
    %408 = vector.load %arg6[%c0_296, %c0_297] : memref<392x72xf32, #tpu.memory_space<vmem>>, vector<392x72xf32>
    %cst_298 = arith.constant dense<0.000000e+00> : vector<8x72xf32>
    %409 = tpu.matmul %407, %408, %cst_298 {dimension_numbers = #tpu.dot_dimension_numbers<[1], [0], [0], [1], [0, 0, 1, 1], [], []>} : vector<8x392xf32>, vector<392x72xf32>, vector<8x72xf32> -> vector<8x72xf32>
    %c0_299 = arith.constant 0 : index
    %c0_300 = arith.constant 0 : index
    %410 = vector.load %arg7[%c0_299, %c0_300] : memref<1x72xf32, #tpu.memory_space<vmem>>, vector<1x72xf32>
    %411 = vector.broadcast %410 : vector<1x72xf32> to vector<8x72xf32>
    %412 = arith.addf %409, %411 : vector<8x72xf32>
    %cst_301 = arith.constant 0.000000e+00 : f32
    %413 = vector.broadcast %cst_301 : f32 to vector<8x72xf32>
    %414 = arith.maximumf %412, %413 : vector<8x72xf32>
    %c0_302 = arith.constant 0 : index
    %c0_303 = arith.constant 0 : index
    %415 = vector.load %arg8[%c0_302, %c0_303] : memref<72x8xf32, #tpu.memory_space<vmem>>, vector<72x8xf32>
    %cst_304 = arith.constant dense<0.000000e+00> : vector<8x8xf32>
    %416 = tpu.matmul %414, %415, %cst_304 {dimension_numbers = #tpu.dot_dimension_numbers<[1], [0], [0], [1], [0, 0, 1, 1], [], []>} : vector<8x72xf32>, vector<72x8xf32>, vector<8x8xf32> -> vector<8x8xf32>
    %c0_305 = arith.constant 0 : index
    %c0_306 = arith.constant 0 : index
    %417 = vector.load %arg9[%c0_305, %c0_306] : memref<1x8xf32, #tpu.memory_space<vmem>>, vector<1x8xf32>
    %418 = vector.broadcast %417 : vector<1x8xf32> to vector<8x8xf32>
    %419 = arith.addf %416, %418 : vector<8x8xf32>
    %cst_307 = arith.constant 0.000000e+00 : f32
    %420 = vector.broadcast %cst_307 : f32 to vector<8x8xf32>
    %421 = arith.maximumf %419, %420 : vector<8x8xf32>
    %c0_308 = arith.constant 0 : index
    %c0_309 = arith.constant 0 : index
    %422 = vector.load %arg10[%c0_308, %c0_309] : memref<1x8xf32, #tpu.memory_space<vmem>>, vector<1x8xf32>
    %423 = tpu.transpose %421, [1, 0] : vector<8x8xf32> -> vector<8x8xf32>
    %cst_310 = arith.constant dense<0.000000e+00> : vector<1x8xf32>
    %424 = tpu.matmul %422, %423, %cst_310 {dimension_numbers = #tpu.dot_dimension_numbers<[1], [0], [0], [1], [0, 0, 1, 1], [], []>} : vector<1x8xf32>, vector<8x8xf32>, vector<1x8xf32> -> vector<1x8xf32>
    %c0_311 = arith.constant 0 : index
    %425 = memref.load %arg11[%c0_311] : memref<1xf32, #tpu.memory_space<smem>>
    %426 = vector.broadcast %425 : f32 to vector<1x8xf32>
    %427 = arith.addf %424, %426 : vector<1x8xf32>
    %428 = vector.shape_cast %427 : vector<1x8xf32> to vector<1x1x8xf32>
    %c0_312 = arith.constant 0 : index
    %c0_313 = arith.constant 0 : index
    %c0_314 = arith.constant 0 : index
    %429 = vector.load %arg12[%c0_312, %c0_313, %c0_314] : memref<1x1x8xf32, #tpu.memory_space<vmem>>, vector<1x1x8xf32>
    tpu.vector_store %arg12[%c0_312, %c0_313, %c0_314], %428 {strides = array<i32>} : memref<1x1x8xf32, #tpu.memory_space<vmem>>, vector<1x1x8xf32>,
    return
  }
  func.func @transform_0(%arg0: i32) -> (i32, i32) {
    %c0_i32 = arith.constant 0 : i32
    %c0_i32_0 = arith.constant 0 : i32
    return %arg0, %c0_i32 : i32, i32
  }
  func.func @transform_1(%arg0: i32) -> (i32, i32) {
    %c0_i32 = arith.constant 0 : i32
    %c0_i32_0 = arith.constant 0 : i32
    %c0_i32_1 = arith.constant 0 : i32
    return %c0_i32, %c0_i32_0 : i32, i32
  }
  func.func @transform_2(%arg0: i32) -> i32 {
    %c0_i32 = arith.constant 0 : i32
    %c0_i32_0 = arith.constant 0 : i32
    return %c0_i32 : i32
  }
  func.func @transform_3(%arg0: i32) -> (i32, i32) {
    %c0_i32 = arith.constant 0 : i32
    %c0_i32_0 = arith.constant 0 : i32
    %c0_i32_1 = arith.constant 0 : i32
    return %c0_i32, %c0_i32_0 : i32, i32
  }
  func.func @transform_4(%arg0: i32) -> (i32, i32) {
    %c0_i32 = arith.constant 0 : i32
    %c0_i32_0 = arith.constant 0 : i32
    %c0_i32_1 = arith.constant 0 : i32
    return %c0_i32, %c0_i32_0 : i32, i32
  }
  func.func @transform_5(%arg0: i32) -> (i32, i32) {
    %c0_i32 = arith.constant 0 : i32
    %c0_i32_0 = arith.constant 0 : i32
    %c0_i32_1 = arith.constant 0 : i32
    return %c0_i32, %c0_i32_0 : i32, i32
  }
  func.func @transform_6(%arg0: i32) -> (i32, i32) {
    %c0_i32 = arith.constant 0 : i32
    %c0_i32_0 = arith.constant 0 : i32
    %c0_i32_1 = arith.constant 0 : i32
    return %c0_i32, %c0_i32_0 : i32, i32
  }
  func.func @transform_7(%arg0: i32) -> (i32, i32) {
    %c0_i32 = arith.constant 0 : i32
    %c0_i32_0 = arith.constant 0 : i32
    %c0_i32_1 = arith.constant 0 : i32
    return %c0_i32, %c0_i32_0 : i32, i32
  }
  func.func @transform_8(%arg0: i32) -> (i32, i32) {
    %c0_i32 = arith.constant 0 : i32
    %c0_i32_0 = arith.constant 0 : i32
    %c0_i32_1 = arith.constant 0 : i32
    return %c0_i32, %c0_i32_0 : i32, i32
  }
  func.func @transform_9(%arg0: i32) -> (i32, i32) {
    %c0_i32 = arith.constant 0 : i32
    %c0_i32_0 = arith.constant 0 : i32
    %c0_i32_1 = arith.constant 0 : i32
    return %c0_i32, %c0_i32_0 : i32, i32
  }
  func.func @transform_10(%arg0: i32) -> i32 {
    %c0_i32 = arith.constant 0 : i32
    %c0_i32_0 = arith.constant 0 : i32
    return %c0_i32 : i32
  }
  func.func @transform_11(%arg0: i32) -> (i32, i32, i32) {
    %c0_i32 = arith.constant 0 : i32
    %c0_i32_0 = arith.constant 0 : i32
    %c0_i32_1 = arith.constant 0 : i32
    return %arg0, %c0_i32, %c0_i32_0 : i32, i32, i32
  }
}

</mosaic_0001>

<llo_original>
// kernel: simple_cnn_forward.1
$region0: #{simple_cnn_forward.1}
  #allocation0 [shape = 'u32[]', space=smem, size = 0x4, offset = 0x4, fixed_abs, tag = 'smem constant byte address 0x4 - core index']
  #allocation1 [shape = 'u32[144,128]{1,0:T(1,128)}', space=vmem, size = 0x12000, scoped, tag = 'internal scratch']
  #allocation2 [shape = 'f32[8,4096]{1,0:T(8,128)}', space=vmem, size = 0x20000, scoped, tag = 'scratch operand']
  #allocation3 [shape = 'f32[1]{0:T(128)S(6)}', space=smem, size = 0x200, scoped, tag = 'scoped memory for simple_cnn_forward.1']
  %s0 = inlined_call_operand.vmem [shape: f32[8,1024], index: 0, kind: input, shape index: {}]
  %s1 = inlined_call_operand.vmem [shape: f32[16,4], index: 1, kind: input, shape index: {}]
  %s2 = inlined_call_operand.vmem [shape: f32[16], index: 2, kind: input, shape index: {}]
  %s3 = inlined_call_operand.vmem [shape: f32[4096,392], index: 3, kind: input, shape index: {}]
  %s4 = inlined_call_operand.vmem [shape: f32[1,392], index: 4, kind: input, shape index: {}]
  %s5 = inlined_call_operand.vmem [shape: f32[392,72], index: 5, kind: input, shape index: {}]
  %s6 = inlined_call_operand.vmem [shape: f32[1,72], index: 6, kind: input, shape index: {}]
  %s7 = inlined_call_operand.vmem [shape: f32[72,8], index: 7, kind: input, shape index: {}]
  %s8 = inlined_call_operand.vmem [shape: f32[1,8], index: 8, kind: input, shape index: {}]
  %s9 = inlined_call_operand.vmem [shape: f32[1,8], index: 9, kind: input, shape index: {}]
  %s10 = inlined_call_operand.<no memory space> [shape: f32[1], index: 10, kind: input, shape index: {}]
  %s11 = inlined_call_operand.vmem [shape: f32[1,1,8], index: 11, kind: output, shape index: {}]
  %s12 = sld [smem:[#allocation0]]
  $region62: #{simple_cnn_forward.1} parent=0
    _
  %s14 = ssub.s32 1, %s12
  %s15 = scalar_select 0, %s14, %s12
  %16 = sst [smem:[#allocation3]] %s10
  $region1: #{simple_cnn_forward.1} parent=0
    #allocation4 [shape = 'u8[8192]{0}', space=smem, size = 0x2000, scoped, tag = 'input window, operand 1, single buffered']
    #allocation5 [shape = 's32[1]{0}', space=sflag, size = 0x4, scoped, tag = 'scoped memory for simple_cnn_forward.1']
    #allocation6 [shape = 'u8[512]{0}', space=smem, size = 0x200, scoped, tag = 'input window, operand 2, single buffered']
    #allocation7 [shape = 's32[1]{0}', space=sflag, size = 0x4, scoped, tag = 'scoped memory for simple_cnn_forward.1']
    %17 = vsyncpa [#allocation5], 0
    %18 = vsyncpa [#allocation7], 0
    // Predicated region
    $region2: #{simple_cnn_forward.1} parent=1 // pred_check
      _
    $region3: #{simple_cnn_forward.1} parent=1 // pred_check_branch
      %20 = sbr.rel (0) target = $region5
    $region4: #{simple_cnn_forward.1} parent=1 // pred_region
      _
    $region5: #{simple_cnn_forward.1} parent=1 // pred_fallthru
      _
    // Predicated region
    $region6: #{simple_cnn_forward.1} parent=1 // pred_check
      _
    $region7: #{simple_cnn_forward.1} parent=1 // pred_check_branch
      %22 = sbr.rel (0) target = $region9
    $region8: #{simple_cnn_forward.1} parent=1 // pred_region
      %s24 = ssub.s32 256, 256
      %25 = vsyncadd [#allocation5], %s24
      %s26 = sshll.u32 %s1, 4
      %s27 = int_to_ptr.vmem [resolvable:$true] %s26
      %32 = dma.vmem_to_smem %s27, 256, [#allocation4], [#allocation5], 128, 128, 8
    $region9: #{simple_cnn_forward.1} parent=1 // pred_fallthru
      _
    // Predicated region
    $region10: #{simple_cnn_forward.1} parent=1 // pred_check
      _
    $region11: #{simple_cnn_forward.1} parent=1 // pred_check_branch
      %34 = sbr.rel (0) target = $region13
    $region12: #{simple_cnn_forward.1} parent=1 // pred_region
      %s36 = ssub.s32 16, 16
      %37 = vsyncadd [#allocation7], %s36
      %s39 = sshll.u32 %s2, 4
      %s40 = int_to_ptr.vmem [resolvable:$true] %s39
      %42 = dma.vmem_to_smem %s40, 16, [#allocation6], [#allocation7]
    $region13: #{simple_cnn_forward.1} parent=1 // pred_fallthru
      _
    // Predicated region
    $region14: #{simple_cnn_forward.1} parent=1 // pred_check
      _
    $region15: #{simple_cnn_forward.1} parent=1 // pred_check_branch
      %44 = sbr.rel (0) target = $region17
    $region16: #{simple_cnn_forward.1} parent=1 // pred_region
      _
    $region17: #{simple_cnn_forward.1} parent=1 // pred_fallthru
      _
    // Predicated region
    $region18: #{simple_cnn_forward.1} parent=1 // pred_check
      _
    $region19: #{simple_cnn_forward.1} parent=1 // pred_check_branch
      %46 = sbr.rel (0) target = $region21
    $region20: #{simple_cnn_forward.1} parent=1 // pred_region
      _
    $region21: #{simple_cnn_forward.1} parent=1 // pred_fallthru
      _
    // Predicated region
    $region22: #{simple_cnn_forward.1} parent=1 // pred_check
      _
    $region23: #{simple_cnn_forward.1} parent=1 // pred_check_branch
      %48 = sbr.rel (0) target = $region25
    $region24: #{simple_cnn_forward.1} parent=1 // pred_region
      _
    $region25: #{simple_cnn_forward.1} parent=1 // pred_fallthru
      _
    // Predicated region
    $region26: #{simple_cnn_forward.1} parent=1 // pred_check
      _
    $region27: #{simple_cnn_forward.1} parent=1 // pred_check_branch
      %50 = sbr.rel (0) target = $region29
    $region28: #{simple_cnn_forward.1} parent=1 // pred_region
      _
    $region29: #{simple_cnn_forward.1} parent=1 // pred_fallthru
      _
    // Predicated region
    $region30: #{simple_cnn_forward.1} parent=1 // pred_check
      _
    $region31: #{simple_cnn_forward.1} parent=1 // pred_check_branch
      %52 = sbr.rel (0) target = $region33
    $region32: #{simple_cnn_forward.1} parent=1 // pred_region
      _
    $region33: #{simple_cnn_forward.1} parent=1 // pred_fallthru
      _
    // Predicated region
    $region34: #{simple_cnn_forward.1} parent=1 // pred_check
      _
    $region35: #{simple_cnn_forward.1} parent=1 // pred_check_branch
      %54 = sbr.rel (0) target = $region37
    $region36: #{simple_cnn_forward.1} parent=1 // pred_region
      _
    $region37: #{simple_cnn_forward.1} parent=1 // pred_fallthru
      _
    // Predicated region
    $region38: #{simple_cnn_forward.1} parent=1 // pred_check
      _
    $region39: #{simple_cnn_forward.1} parent=1 // pred_check_branch
      %56 = sbr.rel (0) target = $region41
    $region40: #{simple_cnn_forward.1} parent=1 // pred_region
      _
    $region41: #{simple_cnn_forward.1} parent=1 // pred_fallthru
      _
    // Predicated region
    $region42: #{simple_cnn_forward.1} parent=1 // pred_check
      _
    $region43: #{simple_cnn_forward.1} parent=1 // pred_check_branch
      %58 = sbr.rel (0) target = $region45
    $region44: #{simple_cnn_forward.1} parent=1 // pred_region
      _
    $region45: #{simple_cnn_forward.1} parent=1 // pred_fallthru
      _
    // Predicated region
    $region46: #{simple_cnn_forward.1} parent=1 // pred_check
      _
    $region47: #{simple_cnn_forward.1} parent=1 // pred_check_branch
      %60 = sbr.rel (0) target = $region49
    $region48: #{simple_cnn_forward.1} parent=1 // pred_region
      %61 = dma.done [#allocation5], 256
    $region49: #{simple_cnn_forward.1} parent=1 // pred_fallthru
      _
    // Predicated region
    $region50: #{simple_cnn_forward.1} parent=1 // pred_check
      _
    $region51: #{simple_cnn_forward.1} parent=1 // pred_check_branch
      %63 = sbr.rel (0) target = $region53
    $region52: #{simple_cnn_forward.1} parent=1 // pred_region
      %64 = dma.done [#allocation7], 16
    $region53: #{simple_cnn_forward.1} parent=1 // pred_fallthru
      _
    %65 = sfence
    %v66 = vld [vmem:[%s0] sm:$0xff]
    %v67 = vld [vmem:[%s0 + $0x8] sm:$0xff]
    %s68 = sld [smem:[#allocation4]]
    %v69 = vstv %s68
    %v70 = vmul.f32 %v66, %v69
    %v71 = vmul.f32 %v67, %v69
    %v72 = vld [vmem:[%s0 + $0x10] sm:$0xff]
    %v73 = vld [vmem:[%s0 + $0x18] sm:$0xff]
    %s74 = sld [smem:[#allocation4 + $0x1]]
    %v75 = vstv %s74
    %v76 = vmul.f32 %v72, %v75
    %v77 = vmul.f32 %v73, %v75
    %v78 = vadd.f32 %v70, %v76
    %v79 = vadd.f32 %v71, %v77
    %v80 = vld [vmem:[%s0 + $0x20] sm:$0xff]
    %v81 = vld [vmem:[%s0 + $0x28] sm:$0xff]
    %s82 = sld [smem:[#allocation4 + $0x2]]
    %v83 = vstv %s82
    %v84 = vmul.f32 %v80, %v83
    %v85 = vmul.f32 %v81, %v83
    %v86 = vadd.f32 %v78, %v84
    %v87 = vadd.f32 %v79, %v85
    %v88 = vld [vmem:[%s0 + $0x30] sm:$0xff]
    %v89 = vld [vmem:[%s0 + $0x38] sm:$0xff]
    %s90 = sld [smem:[#allocation4 + $0x3]]
    %v91 = vstv %s90
    %v92 = vmul.f32 %v88, %v91
    %v93 = vmul.f32 %v89, %v91
    %v94 = vadd.f32 %v86, %v92
    %v95 = vadd.f32 %v87, %v93
    %s96 = sld [smem:[#allocation6]]
    %v97 = vstv %s96
    %v98 = vadd.f32 %v94, %v97
    %v99 = vadd.f32 %v95, %v97
    %v100 = vmax.f32 %v98, 0.0
    %v101 = vmax.f32 %v99, 0.0
    %102 = vst [vmem:[#allocation2] sm:$0xff] %v100
    %103 = vst [vmem:[#allocation2 + $0x8] sm:$0xff] %v101
    %v104 = vld [vmem:[%s0] sm:$0xff]
    %v105 = vld [vmem:[%s0 + $0x8] sm:$0xff]
    %s106 = sld [smem:[#allocation4 + $0x80]]
    %v107 = vstv %s106
    %v108 = vmul.f32 %v104, %v107
    %v109 = vmul.f32 %v105, %v107
    %v110 = vld [vmem:[%s0 + $0x10] sm:$0xff]
    %v111 = vld [vmem:[%s0 + $0x18] sm:$0xff]
    %s112 = sld [smem:[#allocation4 + $0x81]]
    %v113 = vstv %s112
    %v114 = vmul.f32 %v110, %v113
    %v115 = vmul.f32 %v111, %v113
    %v116 = vadd.f32 %v108, %v114
    %v117 = vadd.f32 %v109, %v115
    %v118 = vld [vmem:[%s0 + $0x20] sm:$0xff]
    %v119 = vld [vmem:[%s0 + $0x28] sm:$0xff]
    %s120 = sld [smem:[#allocation4 + $0x82]]
    %v121 = vstv %s120
    %v122 = vmul.f32 %v118, %v121
    %v123 = vmul.f32 %v119, %v121
    %v124 = vadd.f32 %v116, %v122
    %v125 = vadd.f32 %v117, %v123
    %v126 = vld [vmem:[%s0 + $0x30] sm:$0xff]
    %v127 = vld [vmem:[%s0 + $0x38] sm:$0xff]
    %s128 = sld [smem:[#allocation4 + $0x83]]
    %v129 = vstv %s128
    %v130 = vmul.f32 %v126, %v129
    %v131 = vmul.f32 %v127, %v129
    %v132 = vadd.f32 %v124, %v130
    %v133 = vadd.f32 %v125, %v131
    %s134 = sld [smem:[#allocation6 + $0x1]]
    %v135 = vstv %s134
    %v136 = vadd.f32 %v132, %v135
    %v137 = vadd.f32 %v133, %v135
    %v138 = vmax.f32 %v136, 0.0
    %v139 = vmax.f32 %v137, 0.0
    %140 = vst [vmem:[#allocation2 + $0x10] sm:$0xff] %v138
    %141 = vst [vmem:[#allocation2 + $0x18] sm:$0xff] %v139
    %v142 = vld [vmem:[%s0] sm:$0xff]
    %v143 = vld [vmem:[%s0 + $0x8] sm:$0xff]
    %s144 = sld [smem:[#allocation4 + $0x100]]
    %v145 = vstv %s144
    %v146 = vmul.f32 %v142, %v145
    %v147 = vmul.f32 %v143, %v145
    %v148 = vld [vmem:[%s0 + $0x10] sm:$0xff]
    %v149 = vld [vmem:[%s0 + $0x18] sm:$0xff]
    %s150 = sld [smem:[#allocation4 + $0x101]]
    %v151 = vstv %s150
    %v152 = vmul.f32 %v148, %v151
    %v153 = vmul.f32 %v149, %v151
    %v154 = vadd.f32 %v146, %v152
    %v155 = vadd.f32 %v147, %v153
    %v156 = vld [vmem:[%s0 + $0x20] sm:$0xff]
    %v157 = vld [vmem:[%s0 + $0x28] sm:$0xff]
    %s158 = sld [smem:[#allocation4 + $0x102]]
    %v159 = vstv %s158
    %v160 = vmul.f32 %v156, %v159
    %v161 = vmul.f32 %v157, %v159
    %v162 = vadd.f32 %v154, %v160
    %v163 = vadd.f32 %v155, %v161
    %v164 = vld [vmem:[%s0 + $0x30] sm:$0xff]
    %v165 = vld [vmem:[%s0 + $0x38] sm:$0xff]
    %s166 = sld [smem:[#allocation4 + $0x103]]
    %v167 = vstv %s166
    %v168 = vmul.f32 %v164, %v167
    %v169 = vmul.f32 %v165, %v167
    %v170 = vadd.f32 %v162, %v168
    %v171 = vadd.f32 %v163, %v169
    %s172 = sld [smem:[#allocation6 + $0x2]]
    %v173 = vstv %s172
    %v174 = vadd.f32 %v170, %v173
    %v175 = vadd.f32 %v171, %v173
    %v176 = vmax.f32 %v174, 0.0
    %v177 = vmax.f32 %v175, 0.0
    %178 = vst [vmem:[#allocation2 + $0x20] sm:$0xff] %v176
    %179 = vst [vmem:[#allocation2 + $0x28] sm:$0xff] %v177
    %v180 = vld [vmem:[%s0] sm:$0xff]
    %v181 = vld [vmem:[%s0 + $0x8] sm:$0xff]
    %s182 = sld [smem:[#allocation4 + $0x180]]
    %v183 = vstv %s182
    %v184 = vmul.f32 %v180, %v183
    %v185 = vmul.f32 %v181, %v183
    %v186 = vld [vmem:[%s0 + $0x10] sm:$0xff]
    %v187 = vld [vmem:[%s0 + $0x18] sm:$0xff]
    %s188 = sld [smem:[#allocation4 + $0x181]]
    %v189 = vstv %s188
    %v190 = vmul.f32 %v186, %v189
    %v191 = vmul.f32 %v187, %v189
    %v192 = vadd.f32 %v184, %v190
    %v193 = vadd.f32 %v185, %v191
    %v194 = vld [vmem:[%s0 + $0x20] sm:$0xff]
    %v195 = vld [vmem:[%s0 + $0x28] sm:$0xff]
    %s196 = sld [smem:[#allocation4 + $0x182]]
    %v197 = vstv %s196
    %v198 = vmul.f32 %v194, %v197
    %v199 = vmul.f32 %v195, %v197
    %v200 = vadd.f32 %v192, %v198
    %v201 = vadd.f32 %v193, %v199
    %v202 = vld [vmem:[%s0 + $0x30] sm:$0xff]
    %v203 = vld [vmem:[%s0 + $0x38] sm:$0xff]
    %s204 = sld [smem:[#allocation4 + $0x183]]
    %v205 = vstv %s204
    %v206 = vmul.f32 %v202, %v205
    %v207 = vmul.f32 %v203, %v205
    %v208 = vadd.f32 %v200, %v206
    %v209 = vadd.f32 %v201, %v207
    %s210 = sld [smem:[#allocation6 + $0x3]]
    %v211 = vstv %s210
    %v212 = vadd.f32 %v208, %v211
    %v213 = vadd.f32 %v209, %v211
    %v214 = vmax.f32 %v212, 0.0
    %v215 = vmax.f32 %v213, 0.0
    %216 = vst [vmem:[#allocation2 + $0x30] sm:$0xff] %v214
    %217 = vst [vmem:[#allocation2 + $0x38] sm:$0xff] %v215
    %v218 = vld [vmem:[%s0] sm:$0xff]
    %v219 = vld [vmem:[%s0 + $0x8] sm:$0xff]
    %s220 = sld [smem:[#allocation4 + $0x200]]
    %v221 = vstv %s220
    %v222 = vmul.f32 %v218, %v221
    %v223 = vmul.f32 %v219, %v221
    %v224 = vld [vmem:[%s0 + $0x10] sm:$0xff]
    %v225 = vld [vmem:[%s0 + $0x18] sm:$0xff]
    %s226 = sld [smem:[#allocation4 + $0x201]]
    %v227 = vstv %s226
    %v228 = vmul.f32 %v224, %v227
    %v229 = vmul.f32 %v225, %v227
    %v230 = vadd.f32 %v222, %v228
    %v231 = vadd.f32 %v223, %v229
    %v232 = vld [vmem:[%s0 + $0x20] sm:$0xff]
    %v233 = vld [vmem:[%s0 + $0x28] sm:$0xff]
    %s234 = sld [smem:[#allocation4 + $0x202]]
    %v235 = vstv %s234
    %v236 = vmul.f32 %v232, %v235
    %v237 = vmul.f32 %v233, %v235
    %v238 = vadd.f32 %v230, %v236
    %v239 = vadd.f32 %v231, %v237
    %v240 = vld [vmem:[%s0 + $0x30] sm:$0xff]
    %v241 = vld [vmem:[%s0 + $0x38] sm:$0xff]
    %s242 = sld [smem:[#allocation4 + $0x203]]
    %v243 = vstv %s242
    %v244 = vmul.f32 %v240, %v243
    %v245 = vmul.f32 %v241, %v243
    %v246 = vadd.f32 %v238, %v244
    %v247 = vadd.f32 %v239, %v245
    %s248 = sld [smem:[#allocation6 + $0x4]]
    %v249 = vstv %s248
    %v250 = vadd.f32 %v246, %v249
    %v251 = vadd.f32 %v247, %v249
    %v252 = vmax.f32 %v250, 0.0
    %v253 = vmax.f32 %v251, 0.0
    %254 = vst [vmem:[#allocation2 + $0x40] sm:$0xff] %v252
    %255 = vst [vmem:[#allocation2 + $0x48] sm:$0xff] %v253
    %v256 = vld [vmem:[%s0] sm:$0xff]
    %v257 = vld [vmem:[%s0 + $0x8] sm:$0xff]
    %s258 = sld [smem:[#allocation4 + $0x280]]
    %v259 = vstv %s258
    %v260 = vmul.f32 %v256, %v259
    %v261 = vmul.f32 %v257, %v259
    %v262 = vld [vmem:[%s0 + $0x10] sm:$0xff]
    %v263 = vld [vmem:[%s0 + $0x18] sm:$0xff]
    %s264 = sld [smem:[#allocation4 + $0x281]]
    %v265 = vstv %s264
    %v266 = vmul.f32 %v262, %v265
    %v267 = vmul.f32 %v263, %v265
    %v268 = vadd.f32 %v260, %v266
    %v269 = vadd.f32 %v261, %v267
    %v270 = vld [vmem:[%s0 + $0x20] sm:$0xff]
    %v271 = vld [vmem:[%s0 + $0x28] sm:$0xff]
    %s272 = sld [smem:[#allocation4 + $0x282]]
    %v273 = vstv %s272
    %v274 = vmul.f32 %v270, %v273
    %v275 = vmul.f32 %v271, %v273
    %v276 = vadd.f32 %v268, %v274
    %v277 = vadd.f32 %v269, %v275
    %v278 = vld [vmem:[%s0 + $0x30] sm:$0xff]
    %v279 = vld [vmem:[%s0 + $0x38] sm:$0xff]
    %s280 = sld [smem:[#allocation4 + $0x283]]
    %v281 = vstv %s280
    %v282 = vmul.f32 %v278, %v281
    %v283 = vmul.f32 %v279, %v281
    %v284 = vadd.f32 %v276, %v282
    %v285 = vadd.f32 %v277, %v283
    %s286 = sld [smem:[#allocation6 + $0x5]]
    %v287 = vstv %s286
    %v288 = vadd.f32 %v284, %v287
    %v289 = vadd.f32 %v285, %v287
    %v290 = vmax.f32 %v288, 0.0
    %v291 = vmax.f32 %v289, 0.0
    %292 = vst [vmem:[#allocation2 + $0x50] sm:$0xff] %v290
    %293 = vst [vmem:[#allocation2 + $0x58] sm:$0xff] %v291
    %v294 = vld [vmem:[%s0] sm:$0xff]
    %v295 = vld [vmem:[%s0 + $0x8] sm:$0xff]
    %s296 = sld [smem:[#allocation4 + $0x300]]
    %v297 = vstv %s296
    %v298 = vmul.f32 %v294, %v297
    %v299 = vmul.f32 %v295, %v297
    %v300 = vld [vmem:[%s0 + $0x10] sm:$0xff]
    %v301 = vld [vmem:[%s0 + $0x18] sm:$0xff]
    %s302 = sld [smem:[#allocation4 + $0x301]]
    %v303 = vstv %s302
    %v304 = vmul.f32 %v300, %v303
    %v305 = vmul.f32 %v301, %v303
    %v306 = vadd.f32 %v298, %v304
    %v307 = vadd.f32 %v299, %v305
    %v308 = vld [vmem:[%s0 + $0x20] sm:$0xff]
    %v309 = vld [vmem:[%s0 + $0x28] sm:$0xff]
    %s310 = sld [smem:[#allocation4 + $0x302]]
    %v311 = vstv %s310
    %v312 = vmul.f32 %v308, %v311
    %v313 = vmul.f32 %v309, %v311
    %v314 = vadd.f32 %v306, %v312
    %v315 = vadd.f32 %v307, %v313
    %v316 = vld [vmem:[%s0 + $0x30] sm:$0xff]
    %v317 = vld [vmem:[%s0 + $0x38] sm:$0xff]
    %s318 = sld [smem:[#allocation4 + $0x303]]
    %v319 = vstv %s318
    %v320 = vmul.f32 %v316, %v319
    %v321 = vmul.f32 %v317, %v319
    %v322 = vadd.f32 %v314, %v320
    %v323 = vadd.f32 %v315, %v321
    %s324 = sld [smem:[#allocation6 + $0x6]]
    %v325 = vstv %s324
    %v326 = vadd.f32 %v322, %v325
    %v327 = vadd.f32 %v323, %v325
    %v328 = vmax.f32 %v326, 0.0
    %v329 = vmax.f32 %v327, 0.0
    %330 = vst [vmem:[#allocation2 + $0x60] sm:$0xff] %v328
    %331 = vst [vmem:[#allocation2 + $0x68] sm:$0xff] %v329
    %v332 = vld [vmem:[%s0] sm:$0xff]
    %v333 = vld [vmem:[%s0 + $0x8] sm:$0xff]
    %s334 = sld [smem:[#allocation4 + $0x380]]
    %v335 = vstv %s334
    %v336 = vmul.f32 %v332, %v335
    %v337 = vmul.f32 %v333, %v335
    %v338 = vld [vmem:[%s0 + $0x10] sm:$0xff]
    %v339 = vld [vmem:[%s0 + $0x18] sm:$0xff]
    %s340 = sld [smem:[#allocation4 + $0x381]]
    %v341 = vstv %s340
    %v342 = vmul.f32 %v338, %v341
    %v343 = vmul.f32 %v339, %v341
    %v344 = vadd.f32 %v336, %v342
    %v345 = vadd.f32 %v337, %v343
    %v346 = vld [vmem:[%s0 + $0x20] sm:$0xff]
    %v347 = vld [vmem:[%s0 + $0x28] sm:$0xff]
    %s348 = sld [smem:[#allocation4 + $0x382]]
    %v349 = vstv %s348
    %v350 = vmul.f32 %v346, %v349
    %v351 = vmul.f32 %v347, %v349
    %v352 = vadd.f32 %v344, %v350
    %v353 = vadd.f32 %v345, %v351
    %v354 = vld [vmem:[%s0 + $0x30] sm:$0xff]
    %v355 = vld [vmem:[%s0 + $0x38] sm:$0xff]
    %s356 = sld [smem:[#allocation4 + $0x383]]
    %v357 = vstv %s356
    %v358 = vmul.f32 %v354, %v357
    %v359 = vmul.f32 %v355, %v357
    %v360 = vadd.f32 %v352, %v358
    %v361 = vadd.f32 %v353, %v359
    %s362 = sld [smem:[#allocation6 + $0x7]]
    %v363 = vstv %s362
    %v364 = vadd.f32 %v360, %v363
    %v365 = vadd.f32 %v361, %v363
    %v366 = vmax.f32 %v364, 0.0
    %v367 = vmax.f32 %v365, 0.0
    %368 = vst [vmem:[#allocation2 + $0x70] sm:$0xff] %v366
    %369 = vst [vmem:[#allocation2 + $0x78] sm:$0xff] %v367
    %v370 = vld [vmem:[%s0] sm:$0xff]
    %v371 = vld [vmem:[%s0 + $0x8] sm:$0xff]
    %s372 = sld [smem:[#allocation4 + $0x400]]
    %v373 = vstv %s372
    %v374 = vmul.f32 %v370, %v373
    %v375 = vmul.f32 %v371, %v373
    %v376 = vld [vmem:[%s0 + $0x10] sm:$0xff]
    %v377 = vld [vmem:[%s0 + $0x18] sm:$0xff]
    %s378 = sld [smem:[#allocation4 + $0x401]]
    %v379 = vstv %s378
    %v380 = vmul.f32 %v376, %v379
    %v381 = vmul.f32 %v377, %v379
    %v382 = vadd.f32 %v374, %v380
    %v383 = vadd.f32 %v375, %v381
    %v384 = vld [vmem:[%s0 + $0x20] sm:$0xff]
    %v385 = vld [vmem:[%s0 + $0x28] sm:$0xff]
    %s386 = sld [smem:[#allocation4 + $0x402]]
    %v387 = vstv %s386
    %v388 = vmul.f32 %v384, %v387
    %v389 = vmul.f32 %v385, %v387
    %v390 = vadd.f32 %v382, %v388
    %v391 = vadd.f32 %v383, %v389
    %v392 = vld [vmem:[%s0 + $0x30] sm:$0xff]
    %v393 = vld [vmem:[%s0 + $0x38] sm:$0xff]
    %s394 = sld [smem:[#allocation4 + $0x403]]
    %v395 = vstv %s394
    %v396 = vmul.f32 %v392, %v395
    %v397 = vmul.f32 %v393, %v395
    %v398 = vadd.f32 %v390, %v396
    %v399 = vadd.f32 %v391, %v397
    %s400 = sld [smem:[#allocation6 + $0x8]]
    %v401 = vstv %s400
    %v402 = vadd.f32 %v398, %v401
    %v403 = vadd.f32 %v399, %v401
    %v404 = vmax.f32 %v402, 0.0
    %v405 = vmax.f32 %v403, 0.0
    %406 = vst [vmem:[#allocation2 + $0x80] sm:$0xff] %v404
    %407 = vst [vmem:[#allocation2 + $0x88] sm:$0xff] %v405
    %v408 = vld [vmem:[%s0] sm:$0xff]
    %v409 = vld [vmem:[%s0 + $0x8] sm:$0xff]
    %s410 = sld [smem:[#allocation4 + $0x480]]
    %v411 = vstv %s410
    %v412 = vmul.f32 %v408, %v411
    %v413 = vmul.f32 %v409, %v411
    %v414 = vld [vmem:[%s0 + $0x10] sm:$0xff]
    %v415 = vld [vmem:[%s0 + $0x18] sm:$0xff]
    %s416 = sld [smem:[#allocation4 + $0x481]]
    %v417 = vstv %s416
    %v418 = vmul.f32 %v414, %v417
    %v419 = vmul.f32 %v415, %v417
    %v420 = vadd.f32 %v412, %v418
    %v421 = vadd.f32 %v413, %v419
    %v422 = vld [vmem:[%s0 + $0x20] sm:$0xff]
    %v423 = vld [vmem:[%s0 + $0x28] sm:$0xff]
    %s424 = sld [smem:[#allocation4 + $0x482]]
    %v425 = vstv %s424
    %v426 = vmul.f32 %v422, %v425
    %v427 = vmul.f32 %v423, %v425
    %v428 = vadd.f32 %v420, %v426
    %v429 = vadd.f32 %v421, %v427
    %v430 = vld [vmem:[%s0 + $0x30] sm:$0xff]
    %v431 = vld [vmem:[%s0 + $0x38] sm:$0xff]
    %s432 = sld [smem:[#allocation4 + $0x483]]
    %v433 = vstv %s432
    %v434 = vmul.f32 %v430, %v433
    %v435 = vmul.f32 %v431, %v433
    %v436 = vadd.f32 %v428, %v434
    %v437 = vadd.f32 %v429, %v435
    %s438 = sld [smem:[#allocation6 + $0x9]]
    %v439 = vstv %s438
    %v440 = vadd.f32 %v436, %v439
    %v441 = vadd.f32 %v437, %v439
    %v442 = vmax.f32 %v440, 0.0
    %v443 = vmax.f32 %v441, 0.0
    %444 = vst [vmem:[#allocation2 + $0x90] sm:$0xff] %v442
    %445 = vst [vmem:[#allocation2 + $0x98] sm:$0xff] %v443
    %v446 = vld [vmem:[%s0] sm:$0xff]
    %v447 = vld [vmem:[%s0 + $0x8] sm:$0xff]
    %s448 = sld [smem:[#allocation4 + $0x500]]
    %v449 = vstv %s448
    %v450 = vmul.f32 %v446, %v449
    %v451 = vmul.f32 %v447, %v449
    %v452 = vld [vmem:[%s0 + $0x10] sm:$0xff]
    %v453 = vld [vmem:[%s0 + $0x18] sm:$0xff]
    %s454 = sld [smem:[#allocation4 + $0x501]]
    %v455 = vstv %s454
    %v456 = vmul.f32 %v452, %v455
    %v457 = vmul.f32 %v453, %v455
    %v458 = vadd.f32 %v450, %v456
    %v459 = vadd.f32 %v451, %v457
    %v460 = vld [vmem:[%s0 + $0x20] sm:$0xff]
    %v461 = vld [vmem:[%s0 + $0x28] sm:$0xff]
    %s462 = sld [smem:[#allocation4 + $0x502]]
    %v463 = vstv %s462
    %v464 = vmul.f32 %v460, %v463
    %v465 = vmul.f32 %v461, %v463
    %v466 = vadd.f32 %v458, %v464
    %v467 = vadd.f32 %v459, %v465
    %v468 = vld [vmem:[%s0 + $0x30] sm:$0xff]
    %v469 = vld [vmem:[%s0 + $0x38] sm:$0xff]
    %s470 = sld [smem:[#allocation4 + $0x503]]
    %v471 = vstv %s470
    %v472 = vmul.f32 %v468, %v471
    %v473 = vmul.f32 %v469, %v471
    %v474 = vadd.f32 %v466, %v472
    %v475 = vadd.f32 %v467, %v473
    %s476 = sld [smem:[#allocation6 + $0xa]]
    %v477 = vstv %s476
    %v478 = vadd.f32 %v474, %v477
    %v479 = vadd.f32 %v475, %v477
    %v480 = vmax.f32 %v478, 0.0
    %v481 = vmax.f32 %v479, 0.0
    %482 = vst [vmem:[#allocation2 + $0xa0] sm:$0xff] %v480
    %483 = vst [vmem:[#allocation2 + $0xa8] sm:$0xff] %v481
    %v484 = vld [vmem:[%s0] sm:$0xff]
    %v485 = vld [vmem:[%s0 + $0x8] sm:$0xff]
    %s486 = sld [smem:[#allocation4 + $0x580]]
    %v487 = vstv %s486
    %v488 = vmul.f32 %v484, %v487
    %v489 = vmul.f32 %v485, %v487
    %v490 = vld [vmem:[%s0 + $0x10] sm:$0xff]
    %v491 = vld [vmem:[%s0 + $0x18] sm:$0xff]
    %s492 = sld [smem:[#allocation4 + $0x581]]
    %v493 = vstv %s492
    %v494 = vmul.f32 %v490, %v493
    %v495 = vmul.f32 %v491, %v493
    %v496 = vadd.f32 %v488, %v494
    %v497 = vadd.f32 %v489, %v495
    %v498 = vld [vmem:[%s0 + $0x20] sm:$0xff]
    %v499 = vld [vmem:[%s0 + $0x28] sm:$0xff]
    %s500 = sld [smem:[#allocation4 + $0x582]]
    %v501 = vstv %s500
    %v502 = vmul.f32 %v498, %v501
    %v503 = vmul.f32 %v499, %v501
    %v504 = vadd.f32 %v496, %v502
    %v505 = vadd.f32 %v497, %v503
    %v506 = vld [vmem:[%s0 + $0x30] sm:$0xff]
    %v507 = vld [vmem:[%s0 + $0x38] sm:$0xff]
    %s508 = sld [smem:[#allocation4 + $0x583]]
    %v509 = vstv %s508
    %v510 = vmul.f32 %v506, %v509
    %v511 = vmul.f32 %v507, %v509
    %v512 = vadd.f32 %v504, %v510
    %v513 = vadd.f32 %v505, %v511
    %s514 = sld [smem:[#allocation6 + $0xb]]
    %v515 = vstv %s514
    %v516 = vadd.f32 %v512, %v515
    %v517 = vadd.f32 %v513, %v515
    %v518 = vmax.f32 %v516, 0.0
    %v519 = vmax.f32 %v517, 0.0
    %520 = vst [vmem:[#allocation2 + $0xb0] sm:$0xff] %v518
    %521 = vst [vmem:[#allocation2 + $0xb8] sm:$0xff] %v519
    %v522 = vld [vmem:[%s0] sm:$0xff]
    %v523 = vld [vmem:[%s0 + $0x8] sm:$0xff]
    %s524 = sld [smem:[#allocation4 + $0x600]]
    %v525 = vstv %s524
    %v526 = vmul.f32 %v522, %v525
    %v527 = vmul.f32 %v523, %v525
    %v528 = vld [vmem:[%s0 + $0x10] sm:$0xff]
    %v529 = vld [vmem:[%s0 + $0x18] sm:$0xff]
    %s530 = sld [smem:[#allocation4 + $0x601]]
    %v531 = vstv %s530
    %v532 = vmul.f32 %v528, %v531
    %v533 = vmul.f32 %v529, %v531
    %v534 = vadd.f32 %v526, %v532
    %v535 = vadd.f32 %v527, %v533
    %v536 = vld [vmem:[%s0 + $0x20] sm:$0xff]
    %v537 = vld [vmem:[%s0 + $0x28] sm:$0xff]
    %s538 = sld [smem:[#allocation4 + $0x602]]
    %v539 = vstv %s538
    %v540 = vmul.f32 %v536, %v539
    %v541 = vmul.f32 %v537, %v539
    %v542 = vadd.f32 %v534, %v540
    %v543 = vadd.f32 %v535, %v541
    %v544 = vld [vmem:[%s0 + $0x30] sm:$0xff]
    %v545 = vld [vmem:[%s0 + $0x38] sm:$0xff]
    %s546 = sld [smem:[#allocation4 + $0x603]]
    %v547 = vstv %s546
    %v548 = vmul.f32 %v544, %v547
    %v549 = vmul.f32 %v545, %v547
    %v550 = vadd.f32 %v542, %v548
    %v551 = vadd.f32 %v543, %v549
    %s552 = sld [smem:[#allocation6 + $0xc]]
    %v553 = vstv %s552
    %v554 = vadd.f32 %v550, %v553
    %v555 = vadd.f32 %v551, %v553
    %v556 = vmax.f32 %v554, 0.0
    %v557 = vmax.f32 %v555, 0.0
    %558 = vst [vmem:[#allocation2 + $0xc0] sm:$0xff] %v556
    %559 = vst [vmem:[#allocation2 + $0xc8] sm:$0xff] %v557
    %v560 = vld [vmem:[%s0] sm:$0xff]
    %v561 = vld [vmem:[%s0 + $0x8] sm:$0xff]
    %s562 = sld [smem:[#allocation4 + $0x680]]
    %v563 = vstv %s562
    %v564 = vmul.f32 %v560, %v563
    %v565 = vmul.f32 %v561, %v563
    %v566 = vld [vmem:[%s0 + $0x10] sm:$0xff]
    %v567 = vld [vmem:[%s0 + $0x18] sm:$0xff]
    %s568 = sld [smem:[#allocation4 + $0x681]]
    %v569 = vstv %s568
    %v570 = vmul.f32 %v566, %v569
    %v571 = vmul.f32 %v567, %v569
    %v572 = vadd.f32 %v564, %v570
    %v573 = vadd.f32 %v565, %v571
    %v574 = vld [vmem:[%s0 + $0x20] sm:$0xff]
    %v575 = vld [vmem:[%s0 + $0x28] sm:$0xff]
    %s576 = sld [smem:[#allocation4 + $0x682]]
    %v577 = vstv %s576
    %v578 = vmul.f32 %v574, %v577
    %v579 = vmul.f32 %v575, %v577
    %v580 = vadd.f32 %v572, %v578
    %v581 = vadd.f32 %v573, %v579
    %v582 = vld [vmem:[%s0 + $0x30] sm:$0xff]
    %v583 = vld [vmem:[%s0 + $0x38] sm:$0xff]
    %s584 = sld [smem:[#allocation4 + $0x683]]
    %v585 = vstv %s584
    %v586 = vmul.f32 %v582, %v585
    %v587 = vmul.f32 %v583, %v585
    %v588 = vadd.f32 %v580, %v586
    %v589 = vadd.f32 %v581, %v587
    %s590 = sld [smem:[#allocation6 + $0xd]]
    %v591 = vstv %s590
    %v592 = vadd.f32 %v588, %v591
    %v593 = vadd.f32 %v589, %v591
    %v594 = vmax.f32 %v592, 0.0
    %v595 = vmax.f32 %v593, 0.0
    %596 = vst [vmem:[#allocation2 + $0xd0] sm:$0xff] %v594
    %597 = vst [vmem:[#allocation2 + $0xd8] sm:$0xff] %v595
    %v598 = vld [vmem:[%s0] sm:$0xff]
    %v599 = vld [vmem:[%s0 + $0x8] sm:$0xff]
    %s600 = sld [smem:[#allocation4 + $0x700]]
    %v601 = vstv %s600
    %v602 = vmul.f32 %v598, %v601
    %v603 = vmul.f32 %v599, %v601
    %v604 = vld [vmem:[%s0 + $0x10] sm:$0xff]
    %v605 = vld [vmem:[%s0 + $0x18] sm:$0xff]
    %s606 = sld [smem:[#allocation4 + $0x701]]
    %v607 = vstv %s606
    %v608 = vmul.f32 %v604, %v607
    %v609 = vmul.f32 %v605, %v607
    %v610 = vadd.f32 %v602, %v608
    %v611 = vadd.f32 %v603, %v609
    %v612 = vld [vmem:[%s0 + $0x20] sm:$0xff]
    %v613 = vld [vmem:[%s0 + $0x28] sm:$0xff]
    %s614 = sld [smem:[#allocation4 + $0x702]]
    %v615 = vstv %s614
    %v616 = vmul.f32 %v612, %v615
    %v617 = vmul.f32 %v613, %v615
    %v618 = vadd.f32 %v610, %v616
    %v619 = vadd.f32 %v611, %v617
    %v620 = vld [vmem:[%s0 + $0x30] sm:$0xff]
    %v621 = vld [vmem:[%s0 + $0x38] sm:$0xff]
    %s622 = sld [smem:[#allocation4 + $0x703]]
    %v623 = vstv %s622
    %v624 = vmul.f32 %v620, %v623
    %v625 = vmul.f32 %v621, %v623
    %v626 = vadd.f32 %v618, %v624
    %v627 = vadd.f32 %v619, %v625
    %s628 = sld [smem:[#allocation6 + $0xe]]
    %v629 = vstv %s628
    %v630 = vadd.f32 %v626, %v629
    %v631 = vadd.f32 %v627, %v629
    %v632 = vmax.f32 %v630, 0.0
    %v633 = vmax.f32 %v631, 0.0
    %634 = vst [vmem:[#allocation2 + $0xe0] sm:$0xff] %v632
    %635 = vst [vmem:[#allocation2 + $0xe8] sm:$0xff] %v633
    %v636 = vld [vmem:[%s0] sm:$0xff]
    %v637 = vld [vmem:[%s0 + $0x8] sm:$0xff]
    %s638 = sld [smem:[#allocation4 + $0x780]]
    %v639 = vstv %s638
    %v640 = vmul.f32 %v636, %v639
    %v641 = vmul.f32 %v637, %v639
    %v642 = vld [vmem:[%s0 + $0x10] sm:$0xff]
    %v643 = vld [vmem:[%s0 + $0x18] sm:$0xff]
    %s644 = sld [smem:[#allocation4 + $0x781]]
    %v645 = vstv %s644
    %v646 = vmul.f32 %v642, %v645
    %v647 = vmul.f32 %v643, %v645
    %v648 = vadd.f32 %v640, %v646
    %v649 = vadd.f32 %v641, %v647
    %v650 = vld [vmem:[%s0 + $0x20] sm:$0xff]
    %v651 = vld [vmem:[%s0 + $0x28] sm:$0xff]
    %s652 = sld [smem:[#allocation4 + $0x782]]
    %v653 = vstv %s652
    %v654 = vmul.f32 %v650, %v653
    %v655 = vmul.f32 %v651, %v653
    %v656 = vadd.f32 %v648, %v654
    %v657 = vadd.f32 %v649, %v655
    %v658 = vld [vmem:[%s0 + $0x30] sm:$0xff]
    %v659 = vld [vmem:[%s0 + $0x38] sm:$0xff]
    %s660 = sld [smem:[#allocation4 + $0x783]]
    %v661 = vstv %s660
    %v662 = vmul.f32 %v658, %v661
    %v663 = vmul.f32 %v659, %v661
    %v664 = vadd.f32 %v656, %v662
    %v665 = vadd.f32 %v657, %v663
    %s666 = sld [smem:[#allocation6 + $0xf]]
    %v667 = vstv %s666
    %v668 = vadd.f32 %v664, %v667
    %v669 = vadd.f32 %v665, %v667
    %v670 = vmax.f32 %v668, 0.0
    %v671 = vmax.f32 %v669, 0.0
    %672 = vst [vmem:[#allocation2 + $0xf0] sm:$0xff] %v670
    %673 = vst [vmem:[#allocation2 + $0xf8] sm:$0xff] %v671
    %v674 = vld [vmem:[#allocation2] sm:$0xff]
    %v675 = vld [vmem:[#allocation2 + $0x8] sm:$0xff]
    %v676 = vld [vmem:[#allocation2 + $0x10] sm:$0xff]
    %v677 = vld [vmem:[#allocation2 + $0x18] sm:$0xff]
    %v678 = vld [vmem:[#allocation2 + $0x20] sm:$0xff]
    %v679 = vld [vmem:[#allocation2 + $0x28] sm:$0xff]
    %v680 = vld [vmem:[#allocation2 + $0x30] sm:$0xff]
    %v681 = vld [vmem:[#allocation2 + $0x38] sm:$0xff]
    %v682 = vld [vmem:[#allocation2 + $0x40] sm:$0xff]
    %v683 = vld [vmem:[#allocation2 + $0x48] sm:$0xff]
    %v684 = vld [vmem:[#allocation2 + $0x50] sm:$0xff]
    %v685 = vld [vmem:[#allocation2 + $0x58] sm:$0xff]
    %v686 = vld [vmem:[#allocation2 + $0x60] sm:$0xff]
    %v687 = vld [vmem:[#allocation2 + $0x68] sm:$0xff]
    %v688 = vld [vmem:[#allocation2 + $0x70] sm:$0xff]
    %v689 = vld [vmem:[#allocation2 + $0x78] sm:$0xff]
    %v690 = vld [vmem:[#allocation2 + $0x80] sm:$0xff]
    %v691 = vld [vmem:[#allocation2 + $0x88] sm:$0xff]
    %v692 = vld [vmem:[#allocation2 + $0x90] sm:$0xff]
    %v693 = vld [vmem:[#allocation2 + $0x98] sm:$0xff]
    %v694 = vld [vmem:[#allocation2 + $0xa0] sm:$0xff]
    %v695 = vld [vmem:[#allocation2 + $0xa8] sm:$0xff]
    %v696 = vld [vmem:[#allocation2 + $0xb0] sm:$0xff]
    %v697 = vld [vmem:[#allocation2 + $0xb8] sm:$0xff]
    %v698 = vld [vmem:[#allocation2 + $0xc0] sm:$0xff]
    %v699 = vld [vmem:[#allocation2 + $0xc8] sm:$0xff]
    %v700 = vld [vmem:[#allocation2 + $0xd0] sm:$0xff]
    %v701 = vld [vmem:[#allocation2 + $0xd8] sm:$0xff]
    %v702 = vld [vmem:[#allocation2 + $0xe0] sm:$0xff]
    %v703 = vld [vmem:[#allocation2 + $0xe8] sm:$0xff]
    %v704 = vld [vmem:[#allocation2 + $0xf0] sm:$0xff]
    %v705 = vld [vmem:[#allocation2 + $0xf8] sm:$0xff]
    %v706 = vld [vmem:[%s3] sm:$0xff]
    %v707 = vld [vmem:[%s3 + $0x8] sm:$0xff]
    %v708 = vld [vmem:[%s3 + $0x10] sm:$0xff]
    %v709 = vld [vmem:[%s3 + $0x18] sm:$0xff]
    %v710 = vld [vmem:[%s3 + $0x20] sm:$0xff]
    %v711 = vld [vmem:[%s3 + $0x28] sm:$0xff]
    %v712 = vld [vmem:[%s3 + $0x30] sm:$0xff]
    %v713 = vld [vmem:[%s3 + $0x38] sm:$0xff]
    %v714 = vld [vmem:[%s3 + $0x40] sm:$0xff]
    %v715 = vld [vmem:[%s3 + $0x48] sm:$0xff]
    %v716 = vld [vmem:[%s3 + $0x50] sm:$0xff]
    %v717 = vld [vmem:[%s3 + $0x58] sm:$0xff]
    %v718 = vld [vmem:[%s3 + $0x60] sm:$0xff]
    %v719 = vld [vmem:[%s3 + $0x68] sm:$0xff]
    %v720 = vld [vmem:[%s3 + $0x70] sm:$0xff]
    %v721 = vld [vmem:[%s3 + $0x78] sm:$0xff]
    %v722 = vld [vmem:[%s3 + $0x80] sm:$0xff]
    %v723 = vld [vmem:[%s3 + $0x88] sm:$0xff]
    %v724 = vld [vmem:[%s3 + $0x90] sm:$0xff]
    %v725 = vld [vmem:[%s3 + $0x98] sm:$0xff]
    %v726 = vld [vmem:[%s3 + $0xa0] sm:$0xff]
    %v727 = vld [vmem:[%s3 + $0xa8] sm:$0xff]
    %v728 = vld [vmem:[%s3 + $0xb0] sm:$0xff]
    %v729 = vld [vmem:[%s3 + $0xb8] sm:$0xff]
    %v730 = vld [vmem:[%s3 + $0xc0] sm:$0xff]
    %v731 = vld [vmem:[%s3 + $0xc8] sm:$0xff]
    %v732 = vld [vmem:[%s3 + $0xd0] sm:$0xff]
    %v733 = vld [vmem:[%s3 + $0xd8] sm:$0xff]
    %v734 = vld [vmem:[%s3 + $0xe0] sm:$0xff]
    %v735 = vld [vmem:[%s3 + $0xe8] sm:$0xff]
    %v736 = vld [vmem:[%s3 + $0xf0] sm:$0xff]
    %v737 = vld [vmem:[%s3 + $0xf8] sm:$0xff]
    %v738 = vld [vmem:[%s3 + $0x100] sm:$0xff]
    %v739 = vld [vmem:[%s3 + $0x108] sm:$0xff]
    %v740 = vld [vmem:[%s3 + $0x110] sm:$0xff]
    %v741 = vld [vmem:[%s3 + $0x118] sm:$0xff]
    %v742 = vld [vmem:[%s3 + $0x120] sm:$0xff]
    %v743 = vld [vmem:[%s3 + $0x128] sm:$0xff]
    %v744 = vld [vmem:[%s3 + $0x130] sm:$0xff]
    %v745 = vld [vmem:[%s3 + $0x138] sm:$0xff]
    %v746 = vld [vmem:[%s3 + $0x140] sm:$0xff]
    %v747 = vld [vmem:[%s3 + $0x148] sm:$0xff]
    %v748 = vld [vmem:[%s3 + $0x150] sm:$0xff]
    %v749 = vld [vmem:[%s3 + $0x158] sm:$0xff]
    %v750 = vld [vmem:[%s3 + $0x160] sm:$0xff]
    %v751 = vld [vmem:[%s3 + $0x168] sm:$0xff]
    %v752 = vld [vmem:[%s3 + $0x170] sm:$0xff]
    %v753 = vld [vmem:[%s3 + $0x178] sm:$0xff]
    %v754 = vld [vmem:[%s3 + $0x180] sm:$0xff]
    %v755 = vld [vmem:[%s3 + $0x188] sm:$0xff]
    %v756 = vld [vmem:[%s3 + $0x190] sm:$0xff]
    %v757 = vld [vmem:[%s3 + $0x198] sm:$0xff]
    %v758 = vld [vmem:[%s3 + $0x1a0] sm:$0xff]
    %v759 = vld [vmem:[%s3 + $0x1a8] sm:$0xff]
    %v760 = vld [vmem:[%s3 + $0x1b0] sm:$0xff]
    %v761 = vld [vmem:[%s3 + $0x1b8] sm:$0xff]
    %v762 = vld [vmem:[%s3 + $0x1c0] sm:$0xff]
    %v763 = vld [vmem:[%s3 + $0x1c8] sm:$0xff]
    %v764 = vld [vmem:[%s3 + $0x1d0] sm:$0xff]
    %v765 = vld [vmem:[%s3 + $0x1d8] sm:$0xff]
    %v766 = vld [vmem:[%s3 + $0x1e0] sm:$0xff]
    %v767 = vld [vmem:[%s3 + $0x1e8] sm:$0xff]
    %v768 = vld [vmem:[%s3 + $0x1f0] sm:$0xff]
    %v769 = vld [vmem:[%s3 + $0x1f8] sm:$0xff]
    %v770 = vld [vmem:[%s3 + $0x200] sm:$0xff]
    %v771 = vld [vmem:[%s3 + $0x208] sm:$0xff]
    %v772 = vld [vmem:[%s3 + $0x210] sm:$0xff]
    %v773 = vld [vmem:[%s3 + $0x218] sm:$0xff]
    %v774 = vld [vmem:[%s3 + $0x220] sm:$0xff]
    %v775 = vld [vmem:[%s3 + $0x228] sm:$0xff]
    %v776 = vld [vmem:[%s3 + $0x230] sm:$0xff]
    %v777 = vld [vmem:[%s3 + $0x238] sm:$0xff]
    %v778 = vld [vmem:[%s3 + $0x240] sm:$0xff]
    %v779 = vld [vmem:[%s3 + $0x248] sm:$0xff]
    %v780 = vld [vmem:[%s3 + $0x250] sm:$0xff]
    %v781 = vld [vmem:[%s3 + $0x258] sm:$0xff]
    %v782 = vld [vmem:[%s3 + $0x260] sm:$0xff]
    %v783 = vld [vmem:[%s3 + $0x268] sm:$0xff]
    %v784 = vld [vmem:[%s3 + $0x270] sm:$0xff]
    %v785 = vld [vmem:[%s3 + $0x278] sm:$0xff]
    %v786 = vld [vmem:[%s3 + $0x280] sm:$0xff]
    %v787 = vld [vmem:[%s3 + $0x288] sm:$0xff]
    %v788 = vld [vmem:[%s3 + $0x290] sm:$0xff]
    %v789 = vld [vmem:[%s3 + $0x298] sm:$0xff]
    %v790 = vld [vmem:[%s3 + $0x2a0] sm:$0xff]
    %v791 = vld [vmem:[%s3 + $0x2a8] sm:$0xff]
    %v792 = vld [vmem:[%s3 + $0x2b0] sm:$0xff]
    %v793 = vld [vmem:[%s3 + $0x2b8] sm:$0xff]
    %v794 = vld [vmem:[%s3 + $0x2c0] sm:$0xff]
    %v795 = vld [vmem:[%s3 + $0x2c8] sm:$0xff]
    %v796 = vld [vmem:[%s3 + $0x2d0] sm:$0xff]
    %v797 = vld [vmem:[%s3 + $0x2d8] sm:$0xff]
    %v798 = vld [vmem:[%s3 + $0x2e0] sm:$0xff]
    %v799 = vld [vmem:[%s3 + $0x2e8] sm:$0xff]
    %v800 = vld [vmem:[%s3 + $0x2f0] sm:$0xff]
    %v801 = vld [vmem:[%s3 + $0x2f8] sm:$0xff]
    %v802 = vld [vmem:[%s3 + $0x300] sm:$0xff]
    %v803 = vld [vmem:[%s3 + $0x308] sm:$0xff]
    %v804 = vld [vmem:[%s3 + $0x310] sm:$0xff]
    %v805 = vld [vmem:[%s3 + $0x318] sm:$0xff]
    %v806 = vld [vmem:[%s3 + $0x320] sm:$0xff]
    %v807 = vld [vmem:[%s3 + $0x328] sm:$0xff]
    %v808 = vld [vmem:[%s3 + $0x330] sm:$0xff]
    %v809 = vld [vmem:[%s3 + $0x338] sm:$0xff]
    %v810 = vld [vmem:[%s3 + $0x340] sm:$0xff]
    %v811 = vld [vmem:[%s3 + $0x348] sm:$0xff]
    %v812 = vld [vmem:[%s3 + $0x350] sm:$0xff]
    %v813 = vld [vmem:[%s3 + $0x358] sm:$0xff]
    %v814 = vld [vmem:[%s3 + $0x360] sm:$0xff]
    %v815 = vld [vmem:[%s3 + $0x368] sm:$0xff]
    %v816 = vld [vmem:[%s3 + $0x370] sm:$0xff]
    %v817 = vld [vmem:[%s3 + $0x378] sm:$0xff]
    %v818 = vld [vmem:[%s3 + $0x380] sm:$0xff]
    %v819 = vld [vmem:[%s3 + $0x388] sm:$0xff]
    %v820 = vld [vmem:[%s3 + $0x390] sm:$0xff]
    %v821 = vld [vmem:[%s3 + $0x398] sm:$0xff]
    %v822 = vld [vmem:[%s3 + $0x3a0] sm:$0xff]
    %v823 = vld [vmem:[%s3 + $0x3a8] sm:$0xff]
    %v824 = vld [vmem:[%s3 + $0x3b0] sm:$0xff]
    %v825 = vld [vmem:[%s3 + $0x3b8] sm:$0xff]
    %v826 = vld [vmem:[%s3 + $0x3c0] sm:$0xff]
    %v827 = vld [vmem:[%s3 + $0x3c8] sm:$0xff]
    %v828 = vld [vmem:[%s3 + $0x3d0] sm:$0xff]
    %v829 = vld [vmem:[%s3 + $0x3d8] sm:$0xff]
    %v830 = vld [vmem:[%s3 + $0x3e0] sm:$0xff]
    %v831 = vld [vmem:[%s3 + $0x3e8] sm:$0xff]
    %v832 = vld [vmem:[%s3 + $0x3f0] sm:$0xff]
    %v833 = vld [vmem:[%s3 + $0x3f8] sm:$0xff]
    %v834 = vld [vmem:[%s3 + $0x400] sm:$0xff]
    %v835 = vld [vmem:[%s3 + $0x408] sm:$0xff]
    %v836 = vld [vmem:[%s3 + $0x410] sm:$0xff]
    %v837 = vld [vmem:[%s3 + $0x418] sm:$0xff]
    %v838 = vld [vmem:[%s3 + $0x420] sm:$0xff]
    %v839 = vld [vmem:[%s3 + $0x428] sm:$0xff]
    %v840 = vld [vmem:[%s3 + $0x430] sm:$0xff]
    %v841 = vld [vmem:[%s3 + $0x438] sm:$0xff]
    %v842 = vld [vmem:[%s3 + $0x440] sm:$0xff]
    %v843 = vld [vmem:[%s3 + $0x448] sm:$0xff]
    %v844 = vld [vmem:[%s3 + $0x450] sm:$0xff]
    %v845 = vld [vmem:[%s3 + $0x458] sm:$0xff]
    %v846 = vld [vmem:[%s3 + $0x460] sm:$0xff]
    %v847 = vld [vmem:[%s3 + $0x468] sm:$0xff]
    %v848 = vld [vmem:[%s3 + $0x470] sm:$0xff]
    %v849 = vld [vmem:[%s3 + $0x478] sm:$0xff]
    %v850 = vld [vmem:[%s3 + $0x480] sm:$0xff]
    %v851 = vld [vmem:[%s3 + $0x488] sm:$0xff]
    %v852 = vld [vmem:[%s3 + $0x490] sm:$0xff]
    %v853 = vld [vmem:[%s3 + $0x498] sm:$0xff]
    %v854 = vld [vmem:[%s3 + $0x4a0] sm:$0xff]
    %v855 = vld [vmem:[%s3 + $0x4a8] sm:$0xff]
    %v856 = vld [vmem:[%s3 + $0x4b0] sm:$0xff]
    %v857 = vld [vmem:[%s3 + $0x4b8] sm:$0xff]
    %v858 = vld [vmem:[%s3 + $0x4c0] sm:$0xff]
    %v859 = vld [vmem:[%s3 + $0x4c8] sm:$0xff]
    %v860 = vld [vmem:[%s3 + $0x4d0] sm:$0xff]
    %v861 = vld [vmem:[%s3 + $0x4d8] sm:$0xff]
    %v862 = vld [vmem:[%s3 + $0x4e0] sm:$0xff]
    %v863 = vld [vmem:[%s3 + $0x4e8] sm:$0xff]
    %v864 = vld [vmem:[%s3 + $0x4f0] sm:$0xff]
    %v865 = vld [vmem:[%s3 + $0x4f8] sm:$0xff]
    %v866 = vld [vmem:[%s3 + $0x500] sm:$0xff]
    %v867 = vld [vmem:[%s3 + $0x508] sm:$0xff]
    %v868 = vld [vmem:[%s3 + $0x510] sm:$0xff]
    %v869 = vld [vmem:[%s3 + $0x518] sm:$0xff]
    %v870 = vld [vmem:[%s3 + $0x520] sm:$0xff]
    %v871 = vld [vmem:[%s3 + $0x528] sm:$0xff]
    %v872 = vld [vmem:[%s3 + $0x530] sm:$0xff]
    %v873 = vld [vmem:[%s3 + $0x538] sm:$0xff]
    %v874 = vld [vmem:[%s3 + $0x540] sm:$0xff]
    %v875 = vld [vmem:[%s3 + $0x548] sm:$0xff]
    %v876 = vld [vmem:[%s3 + $0x550] sm:$0xff]
    %v877 = vld [vmem:[%s3 + $0x558] sm:$0xff]
    %v878 = vld [vmem:[%s3 + $0x560] sm:$0xff]
    %v879 = vld [vmem:[%s3 + $0x568] sm:$0xff]
    %v880 = vld [vmem:[%s3 + $0x570] sm:$0xff]
    %v881 = vld [vmem:[%s3 + $0x578] sm:$0xff]
    %v882 = vld [vmem:[%s3 + $0x580] sm:$0xff]
    %v883 = vld [vmem:[%s3 + $0x588] sm:$0xff]
    %v884 = vld [vmem:[%s3 + $0x590] sm:$0xff]
    %v885 = vld [vmem:[%s3 + $0x598] sm:$0xff]
    %v886 = vld [vmem:[%s3 + $0x5a0] sm:$0xff]
    %v887 = vld [vmem:[%s3 + $0x5a8] sm:$0xff]
    %v888 = vld [vmem:[%s3 + $0x5b0] sm:$0xff]
    %v889 = vld [vmem:[%s3 + $0x5b8] sm:$0xff]
    %v890 = vld [vmem:[%s3 + $0x5c0] sm:$0xff]
    %v891 = vld [vmem:[%s3 + $0x5c8] sm:$0xff]
    %v892 = vld [vmem:[%s3 + $0x5d0] sm:$0xff]
    %v893 = vld [vmem:[%s3 + $0x5d8] sm:$0xff]
    %v894 = vld [vmem:[%s3 + $0x5e0] sm:$0xff]
    %v895 = vld [vmem:[%s3 + $0x5e8] sm:$0xff]
    %v896 = vld [vmem:[%s3 + $0x5f0] sm:$0xff]
    %v897 = vld [vmem:[%s3 + $0x5f8] sm:$0xff]
    %v898 = vld [vmem:[%s3 + $0x600] sm:$0xff]
    %v899 = vld [vmem:[%s3 + $0x608] sm:$0xff]
    %v900 = vld [vmem:[%s3 + $0x610] sm:$0xff]
    %v901 = vld [vmem:[%s3 + $0x618] sm:$0xff]
    %v902 = vld [vmem:[%s3 + $0x620] sm:$0xff]
    %v903 = vld [vmem:[%s3 + $0x628] sm:$0xff]
    %v904 = vld [vmem:[%s3 + $0x630] sm:$0xff]
    %v905 = vld [vmem:[%s3 + $0x638] sm:$0xff]
    %v906 = vld [vmem:[%s3 + $0x640] sm:$0xff]
    %v907 = vld [vmem:[%s3 + $0x648] sm:$0xff]
    %v908 = vld [vmem:[%s3 + $0x650] sm:$0xff]
    %v909 = vld [vmem:[%s3 + $0x658] sm:$0xff]
    %v910 = vld [vmem:[%s3 + $0x660] sm:$0xff]
    %v911 = vld [vmem:[%s3 + $0x668] sm:$0xff]
    %v912 = vld [vmem:[%s3 + $0x670] sm:$0xff]
    %v913 = vld [vmem:[%s3 + $0x678] sm:$0xff]
    %v914 = vld [vmem:[%s3 + $0x680] sm:$0xff]
    %v915 = vld [vmem:[%s3 + $0x688] sm:$0xff]
    %v916 = vld [vmem:[%s3 + $0x690] sm:$0xff]
    %v917 = vld [vmem:[%s3 + $0x698] sm:$0xff]
    %v918 = vld [vmem:[%s3 + $0x6a0] sm:$0xff]
    %v919 = vld [vmem:[%s3 + $0x6a8] sm:$0xff]
    %v920 = vld [vmem:[%s3 + $0x6b0] sm:$0xff]
    %v921 = vld [vmem:[%s3 + $0x6b8] sm:$0xff]
    %v922 = vld [vmem:[%s3 + $0x6c0] sm:$0xff]
    %v923 = vld [vmem:[%s3 + $0x6c8] sm:$0xff]
    %v924 = vld [vmem:[%s3 + $0x6d0] sm:$0xff]
    %v925 = vld [vmem:[%s3 + $0x6d8] sm:$0xff]
    %v926 = vld [vmem:[%s3 + $0x6e0] sm:$0xff]
    %v927 = vld [vmem:[%s3 + $0x6e8] sm:$0xff]
    %v928 = vld [vmem:[%s3 + $0x6f0] sm:$0xff]
    %v929 = vld [vmem:[%s3 + $0x6f8] sm:$0xff]
    %v930 = vld [vmem:[%s3 + $0x700] sm:$0xff]
    %v931 = vld [vmem:[%s3 + $0x708] sm:$0xff]
    %v932 = vld [vmem:[%s3 + $0x710] sm:$0xff]
    %v933 = vld [vmem:[%s3 + $0x718] sm:$0xff]
    %v934 = vld [vmem:[%s3 + $0x720] sm:$0xff]
    %v935 = vld [vmem:[%s3 + $0x728] sm:$0xff]
    %v936 = vld [vmem:[%s3 + $0x730] sm:$0xff]
    %v937 = vld [vmem:[%s3 + $0x738] sm:$0xff]
    %v938 = vld [vmem:[%s3 + $0x740] sm:$0xff]
    %v939 = vld [vmem:[%s3 + $0x748] sm:$0xff]
    %v940 = vld [vmem:[%s3 + $0x750] sm:$0xff]
    %v941 = vld [vmem:[%s3 + $0x758] sm:$0xff]
    %v942 = vld [vmem:[%s3 + $0x760] sm:$0xff]
    %v943 = vld [vmem:[%s3 + $0x768] sm:$0xff]
    %v944 = vld [vmem:[%s3 + $0x770] sm:$0xff]
    %v945 = vld [vmem:[%s3 + $0x778] sm:$0xff]
    %v946 = vld [vmem:[%s3 + $0x780] sm:$0xff]
    %v947 = vld [vmem:[%s3 + $0x788] sm:$0xff]
    %v948 = vld [vmem:[%s3 + $0x790] sm:$0xff]
    %v949 = vld [vmem:[%s3 + $0x798] sm:$0xff]
    %v950 = vld [vmem:[%s3 + $0x7a0] sm:$0xff]
    %v951 = vld [vmem:[%s3 + $0x7a8] sm:$0xff]
    %v952 = vld [vmem:[%s3 + $0x7b0] sm:$0xff]
    %v953 = vld [vmem:[%s3 + $0x7b8] sm:$0xff]
    %v954 = vld [vmem:[%s3 + $0x7c0] sm:$0xff]
    %v955 = vld [vmem:[%s3 + $0x7c8] sm:$0xff]
    %v956 = vld [vmem:[%s3 + $0x7d0] sm:$0xff]
    %v957 = vld [vmem:[%s3 + $0x7d8] sm:$0xff]
    %v958 = vld [vmem:[%s3 + $0x7e0] sm:$0xff]
    %v959 = vld [vmem:[%s3 + $0x7e8] sm:$0xff]
    %v960 = vld [vmem:[%s3 + $0x7f0] sm:$0xff]
    %v961 = vld [vmem:[%s3 + $0x7f8] sm:$0xff]
    %v962 = vld [vmem:[%s3 + $0x800] sm:$0xff]
    %v963 = vld [vmem:[%s3 + $0x808] sm:$0xff]
    %v964 = vld [vmem:[%s3 + $0x810] sm:$0xff]
    %v965 = vld [vmem:[%s3 + $0x818] sm:$0xff]
    %v966 = vld [vmem:[%s3 + $0x820] sm:$0xff]
    %v967 = vld [vmem:[%s3 + $0x828] sm:$0xff]
    %v968 = vld [vmem:[%s3 + $0x830] sm:$0xff]
    %v969 = vld [vmem:[%s3 + $0x838] sm:$0xff]
    %v970 = vld [vmem:[%s3 + $0x840] sm:$0xff]
    %v971 = vld [vmem:[%s3 + $0x848] sm:$0xff]
    %v972 = vld [vmem:[%s3 + $0x850] sm:$0xff]
    %v973 = vld [vmem:[%s3 + $0x858] sm:$0xff]
    %v974 = vld [vmem:[%s3 + $0x860] sm:$0xff]
    %v975 = vld [vmem:[%s3 + $0x868] sm:$0xff]
    %v976 = vld [vmem:[%s3 + $0x870] sm:$0xff]
    %v977 = vld [vmem:[%s3 + $0x878] sm:$0xff]
    %v978 = vld [vmem:[%s3 + $0x880] sm:$0xff]
    %v979 = vld [vmem:[%s3 + $0x888] sm:$0xff]
    %v980 = vld [vmem:[%s3 + $0x890] sm:$0xff]
    %v981 = vld [vmem:[%s3 + $0x898] sm:$0xff]
    %v982 = vld [vmem:[%s3 + $0x8a0] sm:$0xff]
    %v983 = vld [vmem:[%s3 + $0x8a8] sm:$0xff]
    %v984 = vld [vmem:[%s3 + $0x8b0] sm:$0xff]
    %v985 = vld [vmem:[%s3 + $0x8b8] sm:$0xff]
    %v986 = vld [vmem:[%s3 + $0x8c0] sm:$0xff]
    %v987 = vld [vmem:[%s3 + $0x8c8] sm:$0xff]
    %v988 = vld [vmem:[%s3 + $0x8d0] sm:$0xff]
    %v989 = vld [vmem:[%s3 + $0x8d8] sm:$0xff]
    %v990 = vld [vmem:[%s3 + $0x8e0] sm:$0xff]
    %v991 = vld [vmem:[%s3 + $0x8e8] sm:$0xff]
    %v992 = vld [vmem:[%s3 + $0x8f0] sm:$0xff]
    %v993 = vld [vmem:[%s3 + $0x8f8] sm:$0xff]
    %v994 = vld [vmem:[%s3 + $0x900] sm:$0xff]
    %v995 = vld [vmem:[%s3 + $0x908] sm:$0xff]
    %v996 = vld [vmem:[%s3 + $0x910] sm:$0xff]
    %v997 = vld [vmem:[%s3 + $0x918] sm:$0xff]
    %v998 = vld [vmem:[%s3 + $0x920] sm:$0xff]
    %v999 = vld [vmem:[%s3 + $0x928] sm:$0xff]
    %v1000 = vld [vmem:[%s3 + $0x930] sm:$0xff]
    %v1001 = vld [vmem:[%s3 + $0x938] sm:$0xff]
    %v1002 = vld [vmem:[%s3 + $0x940] sm:$0xff]
    %v1003 = vld [vmem:[%s3 + $0x948] sm:$0xff]
    %v1004 = vld [vmem:[%s3 + $0x950] sm:$0xff]
    %v1005 = vld [vmem:[%s3 + $0x958] sm:$0xff]
    %v1006 = vld [vmem:[%s3 + $0x960] sm:$0xff]
    %v1007 = vld [vmem:[%s3 + $0x968] sm:$0xff]
    %v1008 = vld [vmem:[%s3 + $0x970] sm:$0xff]
    %v1009 = vld [vmem:[%s3 + $0x978] sm:$0xff]
    %v1010 = vld [vmem:[%s3 + $0x980] sm:$0xff]
    %v1011 = vld [vmem:[%s3 + $0x988] sm:$0xff]
    %v1012 = vld [vmem:[%s3 + $0x990] sm:$0xff]
    %v1013 = vld [vmem:[%s3 + $0x998] sm:$0xff]
    %v1014 = vld [vmem:[%s3 + $0x9a0] sm:$0xff]
    %v1015 = vld [vmem:[%s3 + $0x9a8] sm:$0xff]
    %v1016 = vld [vmem:[%s3 + $0x9b0] sm:$0xff]
    %v1017 = vld [vmem:[%s3 + $0x9b8] sm:$0xff]
    %v1018 = vld [vmem:[%s3 + $0x9c0] sm:$0xff]
    %v1019 = vld [vmem:[%s3 + $0x9c8] sm:$0xff]
    %v1020 = vld [vmem:[%s3 + $0x9d0] sm:$0xff]
    %v1021 = vld [vmem:[%s3 + $0x9d8] sm:$0xff]
    %v1022 = vld [vmem:[%s3 + $0x9e0] sm:$0xff]
    %v1023 = vld [vmem:[%s3 + $0x9e8] sm:$0xff]
    %v1024 = vld [vmem:[%s3 + $0x9f0] sm:$0xff]
    %v1025 = vld [vmem:[%s3 + $0x9f8] sm:$0xff]
    %v1026 = vld [vmem:[%s3 + $0xa00] sm:$0xff]
    %v1027 = vld [vmem:[%s3 + $0xa08] sm:$0xff]
    %v1028 = vld [vmem:[%s3 + $0xa10] sm:$0xff]
    %v1029 = vld [vmem:[%s3 + $0xa18] sm:$0xff]
    %v1030 = vld [vmem:[%s3 + $0xa20] sm:$0xff]
    %v1031 = vld [vmem:[%s3 + $0xa28] sm:$0xff]
    %v1032 = vld [vmem:[%s3 + $0xa30] sm:$0xff]
    %v1033 = vld [vmem:[%s3 + $0xa38] sm:$0xff]
    %v1034 = vld [vmem:[%s3 + $0xa40] sm:$0xff]
    %v1035 = vld [vmem:[%s3 + $0xa48] sm:$0xff]
    %v1036 = vld [vmem:[%s3 + $0xa50] sm:$0xff]
    %v1037 = vld [vmem:[%s3 + $0xa58] sm:$0xff]
    %v1038 = vld [vmem:[%s3 + $0xa60] sm:$0xff]
    %v1039 = vld [vmem:[%s3 + $0xa68] sm:$0xff]
    %v1040 = vld [vmem:[%s3 + $0xa70] sm:$0xff]
    %v1041 = vld [vmem:[%s3 + $0xa78] sm:$0xff]
    %v1042 = vld [vmem:[%s3 + $0xa80] sm:$0xff]
    %v1043 = vld [vmem:[%s3 + $0xa88] sm:$0xff]
    %v1044 = vld [vmem:[%s3 + $0xa90] sm:$0xff]
    %v1045 = vld [vmem:[%s3 + $0xa98] sm:$0xff]
    %v1046 = vld [vmem:[%s3 + $0xaa0] sm:$0xff]
    %v1047 = vld [vmem:[%s3 + $0xaa8] sm:$0xff]
    %v1048 = vld [vmem:[%s3 + $0xab0] sm:$0xff]
    %v1049 = vld [vmem:[%s3 + $0xab8] sm:$0xff]
    %v1050 = vld [vmem:[%s3 + $0xac0] sm:$0xff]
    %v1051 = vld [vmem:[%s3 + $0xac8] sm:$0xff]
    %v1052 = vld [vmem:[%s3 + $0xad0] sm:$0xff]
    %v1053 = vld [vmem:[%s3 + $0xad8] sm:$0xff]
    %v1054 = vld [vmem:[%s3 + $0xae0] sm:$0xff]
    %v1055 = vld [vmem:[%s3 + $0xae8] sm:$0xff]
    %v1056 = vld [vmem:[%s3 + $0xaf0] sm:$0xff]
    %v1057 = vld [vmem:[%s3 + $0xaf8] sm:$0xff]
    %v1058 = vld [vmem:[%s3 + $0xb00] sm:$0xff]
    %v1059 = vld [vmem:[%s3 + $0xb08] sm:$0xff]
    %v1060 = vld [vmem:[%s3 + $0xb10] sm:$0xff]
    %v1061 = vld [vmem:[%s3 + $0xb18] sm:$0xff]
    %v1062 = vld [vmem:[%s3 + $0xb20] sm:$0xff]
    %v1063 = vld [vmem:[%s3 + $0xb28] sm:$0xff]
    %v1064 = vld [vmem:[%s3 + $0xb30] sm:$0xff]
    %v1065 = vld [vmem:[%s3 + $0xb38] sm:$0xff]
    %v1066 = vld [vmem:[%s3 + $0xb40] sm:$0xff]
    %v1067 = vld [vmem:[%s3 + $0xb48] sm:$0xff]
    %v1068 = vld [vmem:[%s3 + $0xb50] sm:$0xff]
    %v1069 = vld [vmem:[%s3 + $0xb58] sm:$0xff]
    %v1070 = vld [vmem:[%s3 + $0xb60] sm:$0xff]
    %v1071 = vld [vmem:[%s3 + $0xb68] sm:$0xff]
    %v1072 = vld [vmem:[%s3 + $0xb70] sm:$0xff]
    %v1073 = vld [vmem:[%s3 + $0xb78] sm:$0xff]
    %v1074 = vld [vmem:[%s3 + $0xb80] sm:$0xff]
    %v1075 = vld [vmem:[%s3 + $0xb88] sm:$0xff]
    %v1076 = vld [vmem:[%s3 + $0xb90] sm:$0xff]
    %v1077 = vld [vmem:[%s3 + $0xb98] sm:$0xff]
    %v1078 = vld [vmem:[%s3 + $0xba0] sm:$0xff]
    %v1079 = vld [vmem:[%s3 + $0xba8] sm:$0xff]
    %v1080 = vld [vmem:[%s3 + $0xbb0] sm:$0xff]
    %v1081 = vld [vmem:[%s3 + $0xbb8] sm:$0xff]
    %v1082 = vld [vmem:[%s3 + $0xbc0] sm:$0xff]
    %v1083 = vld [vmem:[%s3 + $0xbc8] sm:$0xff]
    %v1084 = vld [vmem:[%s3 + $0xbd0] sm:$0xff]
    %v1085 = vld [vmem:[%s3 + $0xbd8] sm:$0xff]
    %v1086 = vld [vmem:[%s3 + $0xbe0] sm:$0xff]
    %v1087 = vld [vmem:[%s3 + $0xbe8] sm:$0xff]
    %v1088 = vld [vmem:[%s3 + $0xbf0] sm:$0xff]
    %v1089 = vld [vmem:[%s3 + $0xbf8] sm:$0xff]
    %v1090 = vld [vmem:[%s3 + $0xc00] sm:$0xff]
    %v1091 = vld [vmem:[%s3 + $0xc08] sm:$0xff]
    %v1092 = vld [vmem:[%s3 + $0xc10] sm:$0xff]
    %v1093 = vld [vmem:[%s3 + $0xc18] sm:$0xff]
    %v1094 = vld [vmem:[%s3 + $0xc20] sm:$0xff]
    %v1095 = vld [vmem:[%s3 + $0xc28] sm:$0xff]
    %v1096 = vld [vmem:[%s3 + $0xc30] sm:$0xff]
    %v1097 = vld [vmem:[%s3 + $0xc38] sm:$0xff]
    %v1098 = vld [vmem:[%s3 + $0xc40] sm:$0xff]
    %v1099 = vld [vmem:[%s3 + $0xc48] sm:$0xff]
    %v1100 = vld [vmem:[%s3 + $0xc50] sm:$0xff]
    %v1101 = vld [vmem:[%s3 + $0xc58] sm:$0xff]
    %v1102 = vld [vmem:[%s3 + $0xc60] sm:$0xff]
    %v1103 = vld [vmem:[%s3 + $0xc68] sm:$0xff]
    %v1104 = vld [vmem:[%s3 + $0xc70] sm:$0xff]
    %v1105 = vld [vmem:[%s3 + $0xc78] sm:$0xff]
    %v1106 = vld [vmem:[%s3 + $0xc80] sm:$0xff]
    %v1107 = vld [vmem:[%s3 + $0xc88] sm:$0xff]
    %v1108 = vld [vmem:[%s3 + $0xc90] sm:$0xff]
    %v1109 = vld [vmem:[%s3 + $0xc98] sm:$0xff]
    %v1110 = vld [vmem:[%s3 + $0xca0] sm:$0xff]
    %v1111 = vld [vmem:[%s3 + $0xca8] sm:$0xff]
    %v1112 = vld [vmem:[%s3 + $0xcb0] sm:$0xff]
    %v1113 = vld [vmem:[%s3 + $0xcb8] sm:$0xff]
    %v1114 = vld [vmem:[%s3 + $0xcc0] sm:$0xff]
    %v1115 = vld [vmem:[%s3 + $0xcc8] sm:$0xff]
    %v1116 = vld [vmem:[%s3 + $0xcd0] sm:$0xff]
    %v1117 = vld [vmem:[%s3 + $0xcd8] sm:$0xff]
    %v1118 = vld [vmem:[%s3 + $0xce0] sm:$0xff]
    %v1119 = vld [vmem:[%s3 + $0xce8] sm:$0xff]
    %v1120 = vld [vmem:[%s3 + $0xcf0] sm:$0xff]
    %v1121 = vld [vmem:[%s3 + $0xcf8] sm:$0xff]
    %v1122 = vld [vmem:[%s3 + $0xd00] sm:$0xff]
    %v1123 = vld [vmem:[%s3 + $0xd08] sm:$0xff]
    %v1124 = vld [vmem:[%s3 + $0xd10] sm:$0xff]
    %v1125 = vld [vmem:[%s3 + $0xd18] sm:$0xff]
    %v1126 = vld [vmem:[%s3 + $0xd20] sm:$0xff]
    %v1127 = vld [vmem:[%s3 + $0xd28] sm:$0xff]
    %v1128 = vld [vmem:[%s3 + $0xd30] sm:$0xff]
    %v1129 = vld [vmem:[%s3 + $0xd38] sm:$0xff]
    %v1130 = vld [vmem:[%s3 + $0xd40] sm:$0xff]
    %v1131 = vld [vmem:[%s3 + $0xd48] sm:$0xff]
    %v1132 = vld [vmem:[%s3 + $0xd50] sm:$0xff]
    %v1133 = vld [vmem:[%s3 + $0xd58] sm:$0xff]
    %v1134 = vld [vmem:[%s3 + $0xd60] sm:$0xff]
    %v1135 = vld [vmem:[%s3 + $0xd68] sm:$0xff]
    %v1136 = vld [vmem:[%s3 + $0xd70] sm:$0xff]
    %v1137 = vld [vmem:[%s3 + $0xd78] sm:$0xff]
    %v1138 = vld [vmem:[%s3 + $0xd80] sm:$0xff]
    %v1139 = vld [vmem:[%s3 + $0xd88] sm:$0xff]
    %v1140 = vld [vmem:[%s3 + $0xd90] sm:$0xff]
    %v1141 = vld [vmem:[%s3 + $0xd98] sm:$0xff]
    %v1142 = vld [vmem:[%s3 + $0xda0] sm:$0xff]
    %v1143 = vld [vmem:[%s3 + $0xda8] sm:$0xff]
    %v1144 = vld [vmem:[%s3 + $0xdb0] sm:$0xff]
    %v1145 = vld [vmem:[%s3 + $0xdb8] sm:$0xff]
    %v1146 = vld [vmem:[%s3 + $0xdc0] sm:$0xff]
    %v1147 = vld [vmem:[%s3 + $0xdc8] sm:$0xff]
    %v1148 = vld [vmem:[%s3 + $0xdd0] sm:$0xff]
    %v1149 = vld [vmem:[%s3 + $0xdd8] sm:$0xff]
    %v1150 = vld [vmem:[%s3 + $0xde0] sm:$0xff]
    %v1151 = vld [vmem:[%s3 + $0xde8] sm:$0xff]
    %v1152 = vld [vmem:[%s3 + $0xdf0] sm:$0xff]
    %v1153 = vld [vmem:[%s3 + $0xdf8] sm:$0xff]
    %v1154 = vld [vmem:[%s3 + $0xe00] sm:$0xff]
    %v1155 = vld [vmem:[%s3 + $0xe08] sm:$0xff]
    %v1156 = vld [vmem:[%s3 + $0xe10] sm:$0xff]
    %v1157 = vld [vmem:[%s3 + $0xe18] sm:$0xff]
    %v1158 = vld [vmem:[%s3 + $0xe20] sm:$0xff]
    %v1159 = vld [vmem:[%s3 + $0xe28] sm:$0xff]
    %v1160 = vld [vmem:[%s3 + $0xe30] sm:$0xff]
    %v1161 = vld [vmem:[%s3 + $0xe38] sm:$0xff]
    %v1162 = vld [vmem:[%s3 + $0xe40] sm:$0xff]
    %v1163 = vld [vmem:[%s3 + $0xe48] sm:$0xff]
    %v1164 = vld [vmem:[%s3 + $0xe50] sm:$0xff]
    %v1165 = vld [vmem:[%s3 + $0xe58] sm:$0xff]
    %v1166 = vld [vmem:[%s3 + $0xe60] sm:$0xff]
    %v1167 = vld [vmem:[%s3 + $0xe68] sm:$0xff]
    %v1168 = vld [vmem:[%s3 + $0xe70] sm:$0xff]
    %v1169 = vld [vmem:[%s3 + $0xe78] sm:$0xff]
    %v1170 = vld [vmem:[%s3 + $0xe80] sm:$0xff]
    %v1171 = vld [vmem:[%s3 + $0xe88] sm:$0xff]
    %v1172 = vld [vmem:[%s3 + $0xe90] sm:$0xff]
    %v1173 = vld [vmem:[%s3 + $0xe98] sm:$0xff]
    %v1174 = vld [vmem:[%s3 + $0xea0] sm:$0xff]
    %v1175 = vld [vmem:[%s3 + $0xea8] sm:$0xff]
    %v1176 = vld [vmem:[%s3 + $0xeb0] sm:$0xff]
    %v1177 = vld [vmem:[%s3 + $0xeb8] sm:$0xff]
    %v1178 = vld [vmem:[%s3 + $0xec0] sm:$0xff]
    %v1179 = vld [vmem:[%s3 + $0xec8] sm:$0xff]
    %v1180 = vld [vmem:[%s3 + $0xed0] sm:$0xff]
    %v1181 = vld [vmem:[%s3 + $0xed8] sm:$0xff]
    %v1182 = vld [vmem:[%s3 + $0xee0] sm:$0xff]
    %v1183 = vld [vmem:[%s3 + $0xee8] sm:$0xff]
    %v1184 = vld [vmem:[%s3 + $0xef0] sm:$0xff]
    %v1185 = vld [vmem:[%s3 + $0xef8] sm:$0xff]
    %v1186 = vld [vmem:[%s3 + $0xf00] sm:$0xff]
    %v1187 = vld [vmem:[%s3 + $0xf08] sm:$0xff]
    %v1188 = vld [vmem:[%s3 + $0xf10] sm:$0xff]
    %v1189 = vld [vmem:[%s3 + $0xf18] sm:$0xff]
    %v1190 = vld [vmem:[%s3 + $0xf20] sm:$0xff]
    %v1191 = vld [vmem:[%s3 + $0xf28] sm:$0xff]
    %v1192 = vld [vmem:[%s3 + $0xf30] sm:$0xff]
    %v1193 = vld [vmem:[%s3 + $0xf38] sm:$0xff]
    %v1194 = vld [vmem:[%s3 + $0xf40] sm:$0xff]
    %v1195 = vld [vmem:[%s3 + $0xf48] sm:$0xff]
    %v1196 = vld [vmem:[%s3 + $0xf50] sm:$0xff]
    %v1197 = vld [vmem:[%s3 + $0xf58] sm:$0xff]
    %v1198 = vld [vmem:[%s3 + $0xf60] sm:$0xff]
    %v1199 = vld [vmem:[%s3 + $0xf68] sm:$0xff]
    %v1200 = vld [vmem:[%s3 + $0xf70] sm:$0xff]
    %v1201 = vld [vmem:[%s3 + $0xf78] sm:$0xff]
    %v1202 = vld [vmem:[%s3 + $0xf80] sm:$0xff]
    %v1203 = vld [vmem:[%s3 + $0xf88] sm:$0xff]
    %v1204 = vld [vmem:[%s3 + $0xf90] sm:$0xff]
    %v1205 = vld [vmem:[%s3 + $0xf98] sm:$0xff]
    %v1206 = vld [vmem:[%s3 + $0xfa0] sm:$0xff]
    %v1207 = vld [vmem:[%s3 + $0xfa8] sm:$0xff]
    %v1208 = vld [vmem:[%s3 + $0xfb0] sm:$0xff]
    %v1209 = vld [vmem:[%s3 + $0xfb8] sm:$0xff]
    %v1210 = vld [vmem:[%s3 + $0xfc0] sm:$0xff]
    %v1211 = vld [vmem:[%s3 + $0xfc8] sm:$0xff]
    %v1212 = vld [vmem:[%s3 + $0xfd0] sm:$0xff]
    %v1213 = vld [vmem:[%s3 + $0xfd8] sm:$0xff]
    %v1214 = vld [vmem:[%s3 + $0xfe0] sm:$0xff]
    %v1215 = vld [vmem:[%s3 + $0xfe8] sm:$0xff]
    %v1216 = vld [vmem:[%s3 + $0xff0] sm:$0xff]
    %v1217 = vld [vmem:[%s3 + $0xff8] sm:$0xff]
    %v1218 = vld [vmem:[%s3 + $0x1000] sm:$0xff]
    %v1219 = vld [vmem:[%s3 + $0x1008] sm:$0xff]
    %v1220 = vld [vmem:[%s3 + $0x1010] sm:$0xff]
    %v1221 = vld [vmem:[%s3 + $0x1018] sm:$0xff]
    %v1222 = vld [vmem:[%s3 + $0x1020] sm:$0xff]
    %v1223 = vld [vmem:[%s3 + $0x1028] sm:$0xff]
    %v1224 = vld [vmem:[%s3 + $0x1030] sm:$0xff]
    %v1225 = vld [vmem:[%s3 + $0x1038] sm:$0xff]
    %v1226 = vld [vmem:[%s3 + $0x1040] sm:$0xff]
    %v1227 = vld [vmem:[%s3 + $0x1048] sm:$0xff]
    %v1228 = vld [vmem:[%s3 + $0x1050] sm:$0xff]
    %v1229 = vld [vmem:[%s3 + $0x1058] sm:$0xff]
    %v1230 = vld [vmem:[%s3 + $0x1060] sm:$0xff]
    %v1231 = vld [vmem:[%s3 + $0x1068] sm:$0xff]
    %v1232 = vld [vmem:[%s3 + $0x1070] sm:$0xff]
    %v1233 = vld [vmem:[%s3 + $0x1078] sm:$0xff]
    %v1234 = vld [vmem:[%s3 + $0x1080] sm:$0xff]
    %v1235 = vld [vmem:[%s3 + $0x1088] sm:$0xff]
    %v1236 = vld [vmem:[%s3 + $0x1090] sm:$0xff]
    %v1237 = vld [vmem:[%s3 + $0x1098] sm:$0xff]
    %v1238 = vld [vmem:[%s3 + $0x10a0] sm:$0xff]
    %v1239 = vld [vmem:[%s3 + $0x10a8] sm:$0xff]
    %v1240 = vld [vmem:[%s3 + $0x10b0] sm:$0xff]
    %v1241 = vld [vmem:[%s3 + $0x10b8] sm:$0xff]
    %v1242 = vld [vmem:[%s3 + $0x10c0] sm:$0xff]
    %v1243 = vld [vmem:[%s3 + $0x10c8] sm:$0xff]
    %v1244 = vld [vmem:[%s3 + $0x10d0] sm:$0xff]
    %v1245 = vld [vmem:[%s3 + $0x10d8] sm:$0xff]
    %v1246 = vld [vmem:[%s3 + $0x10e0] sm:$0xff]
    %v1247 = vld [vmem:[%s3 + $0x10e8] sm:$0xff]
    %v1248 = vld [vmem:[%s3 + $0x10f0] sm:$0xff]
    %v1249 = vld [vmem:[%s3 + $0x10f8] sm:$0xff]
    %v1250 = vld [vmem:[%s3 + $0x1100] sm:$0xff]
    %v1251 = vld [vmem:[%s3 + $0x1108] sm:$0xff]
    %v1252 = vld [vmem:[%s3 + $0x1110] sm:$0xff]
    %v1253 = vld [vmem:[%s3 + $0x1118] sm:$0xff]
    %v1254 = vld [vmem:[%s3 + $0x1120] sm:$0xff]
    %v1255 = vld [vmem:[%s3 + $0x1128] sm:$0xff]
    %v1256 = vld [vmem:[%s3 + $0x1130] sm:$0xff]
    %v1257 = vld [vmem:[%s3 + $0x1138] sm:$0xff]
    %v1258 = vld [vmem:[%s3 + $0x1140] sm:$0xff]
    %v1259 = vld [vmem:[%s3 + $0x1148] sm:$0xff]
    %v1260 = vld [vmem:[%s3 + $0x1150] sm:$0xff]
    %v1261 = vld [vmem:[%s3 + $0x1158] sm:$0xff]
    %v1262 = vld [vmem:[%s3 + $0x1160] sm:$0xff]
    %v1263 = vld [vmem:[%s3 + $0x1168] sm:$0xff]
    %v1264 = vld [vmem:[%s3 + $0x1170] sm:$0xff]
    %v1265 = vld [vmem:[%s3 + $0x1178] sm:$0xff]
    %v1266 = vld [vmem:[%s3 + $0x1180] sm:$0xff]
    %v1267 = vld [vmem:[%s3 + $0x1188] sm:$0xff]
    %v1268 = vld [vmem:[%s3 + $0x1190] sm:$0xff]
    %v1269 = vld [vmem:[%s3 + $0x1198] sm:$0xff]
    %v1270 = vld [vmem:[%s3 + $0x11a0] sm:$0xff]
    %v1271 = vld [vmem:[%s3 + $0x11a8] sm:$0xff]
    %v1272 = vld [vmem:[%s3 + $0x11b0] sm:$0xff]
    %v1273 = vld [vmem:[%s3 + $0x11b8] sm:$0xff]
    %v1274 = vld [vmem:[%s3 + $0x11c0] sm:$0xff]
    %v1275 = vld [vmem:[%s3 + $0x11c8] sm:$0xff]
    %v1276 = vld [vmem:[%s3 + $0x11d0] sm:$0xff]
    %v1277 = vld [vmem:[%s3 + $0x11d8] sm:$0xff]
    %v1278 = vld [vmem:[%s3 + $0x11e0] sm:$0xff]
    %v1279 = vld [vmem:[%s3 + $0x11e8] sm:$0xff]
    %v1280 = vld [vmem:[%s3 + $0x11f0] sm:$0xff]
    %v1281 = vld [vmem:[%s3 + $0x11f8] sm:$0xff]
    %v1282 = vld [vmem:[%s3 + $0x1200] sm:$0xff]
    %v1283 = vld [vmem:[%s3 + $0x1208] sm:$0xff]
    %v1284 = vld [vmem:[%s3 + $0x1210] sm:$0xff]
    %v1285 = vld [vmem:[%s3 + $0x1218] sm:$0xff]
    %v1286 = vld [vmem:[%s3 + $0x1220] sm:$0xff]
    %v1287 = vld [vmem:[%s3 + $0x1228] sm:$0xff]
    %v1288 = vld [vmem:[%s3 + $0x1230] sm:$0xff]
    %v1289 = vld [vmem:[%s3 + $0x1238] sm:$0xff]
    %v1290 = vld [vmem:[%s3 + $0x1240] sm:$0xff]
    %v1291 = vld [vmem:[%s3 + $0x1248] sm:$0xff]
    %v1292 = vld [vmem:[%s3 + $0x1250] sm:$0xff]
    %v1293 = vld [vmem:[%s3 + $0x1258] sm:$0xff]
    %v1294 = vld [vmem:[%s3 + $0x1260] sm:$0xff]
    %v1295 = vld [vmem:[%s3 + $0x1268] sm:$0xff]
    %v1296 = vld [vmem:[%s3 + $0x1270] sm:$0xff]
    %v1297 = vld [vmem:[%s3 + $0x1278] sm:$0xff]
    %v1298 = vld [vmem:[%s3 + $0x1280] sm:$0xff]
    %v1299 = vld [vmem:[%s3 + $0x1288] sm:$0xff]
    %v1300 = vld [vmem:[%s3 + $0x1290] sm:$0xff]
    %v1301 = vld [vmem:[%s3 + $0x1298] sm:$0xff]
    %v1302 = vld [vmem:[%s3 + $0x12a0] sm:$0xff]
    %v1303 = vld [vmem:[%s3 + $0x12a8] sm:$0xff]
    %v1304 = vld [vmem:[%s3 + $0x12b0] sm:$0xff]
    %v1305 = vld [vmem:[%s3 + $0x12b8] sm:$0xff]
    %v1306 = vld [vmem:[%s3 + $0x12c0] sm:$0xff]
    %v1307 = vld [vmem:[%s3 + $0x12c8] sm:$0xff]
    %v1308 = vld [vmem:[%s3 + $0x12d0] sm:$0xff]
    %v1309 = vld [vmem:[%s3 + $0x12d8] sm:$0xff]
    %v1310 = vld [vmem:[%s3 + $0x12e0] sm:$0xff]
    %v1311 = vld [vmem:[%s3 + $0x12e8] sm:$0xff]
    %v1312 = vld [vmem:[%s3 + $0x12f0] sm:$0xff]
    %v1313 = vld [vmem:[%s3 + $0x12f8] sm:$0xff]
    %v1314 = vld [vmem:[%s3 + $0x1300] sm:$0xff]
    %v1315 = vld [vmem:[%s3 + $0x1308] sm:$0xff]
    %v1316 = vld [vmem:[%s3 + $0x1310] sm:$0xff]
    %v1317 = vld [vmem:[%s3 + $0x1318] sm:$0xff]
    %v1318 = vld [vmem:[%s3 + $0x1320] sm:$0xff]
    %v1319 = vld [vmem:[%s3 + $0x1328] sm:$0xff]
    %v1320 = vld [vmem:[%s3 + $0x1330] sm:$0xff]
    %v1321 = vld [vmem:[%s3 + $0x1338] sm:$0xff]
    %v1322 = vld [vmem:[%s3 + $0x1340] sm:$0xff]
    %v1323 = vld [vmem:[%s3 + $0x1348] sm:$0xff]
    %v1324 = vld [vmem:[%s3 + $0x1350] sm:$0xff]
    %v1325 = vld [vmem:[%s3 + $0x1358] sm:$0xff]
    %v1326 = vld [vmem:[%s3 + $0x1360] sm:$0xff]
    %v1327 = vld [vmem:[%s3 + $0x1368] sm:$0xff]
    %v1328 = vld [vmem:[%s3 + $0x1370] sm:$0xff]
    %v1329 = vld [vmem:[%s3 + $0x1378] sm:$0xff]
    %v1330 = vld [vmem:[%s3 + $0x1380] sm:$0xff]
    %v1331 = vld [vmem:[%s3 + $0x1388] sm:$0xff]
    %v1332 = vld [vmem:[%s3 + $0x1390] sm:$0xff]
    %v1333 = vld [vmem:[%s3 + $0x1398] sm:$0xff]
    %v1334 = vld [vmem:[%s3 + $0x13a0] sm:$0xff]
    %v1335 = vld [vmem:[%s3 + $0x13a8] sm:$0xff]
    %v1336 = vld [vmem:[%s3 + $0x13b0] sm:$0xff]
    %v1337 = vld [vmem:[%s3 + $0x13b8] sm:$0xff]
    %v1338 = vld [vmem:[%s3 + $0x13c0] sm:$0xff]
    %v1339 = vld [vmem:[%s3 + $0x13c8] sm:$0xff]
    %v1340 = vld [vmem:[%s3 + $0x13d0] sm:$0xff]
    %v1341 = vld [vmem:[%s3 + $0x13d8] sm:$0xff]
    %v1342 = vld [vmem:[%s3 + $0x13e0] sm:$0xff]
    %v1343 = vld [vmem:[%s3 + $0x13e8] sm:$0xff]
    %v1344 = vld [vmem:[%s3 + $0x13f0] sm:$0xff]
    %v1345 = vld [vmem:[%s3 + $0x13f8] sm:$0xff]
    %v1346 = vld [vmem:[%s3 + $0x1400] sm:$0xff]
    %v1347 = vld [vmem:[%s3 + $0x1408] sm:$0xff]
    %v1348 = vld [vmem:[%s3 + $0x1410] sm:$0xff]
    %v1349 = vld [vmem:[%s3 + $0x1418] sm:$0xff]
    %v1350 = vld [vmem:[%s3 + $0x1420] sm:$0xff]
    %v1351 = vld [vmem:[%s3 + $0x1428] sm:$0xff]
    %v1352 = vld [vmem:[%s3 + $0x1430] sm:$0xff]
    %v1353 = vld [vmem:[%s3 + $0x1438] sm:$0xff]
    %v1354 = vld [vmem:[%s3 + $0x1440] sm:$0xff]
    %v1355 = vld [vmem:[%s3 + $0x1448] sm:$0xff]
    %v1356 = vld [vmem:[%s3 + $0x1450] sm:$0xff]
    %v1357 = vld [vmem:[%s3 + $0x1458] sm:$0xff]
    %v1358 = vld [vmem:[%s3 + $0x1460] sm:$0xff]
    %v1359 = vld [vmem:[%s3 + $0x1468] sm:$0xff]
    %v1360 = vld [vmem:[%s3 + $0x1470] sm:$0xff]
    %v1361 = vld [vmem:[%s3 + $0x1478] sm:$0xff]
    %v1362 = vld [vmem:[%s3 + $0x1480] sm:$0xff]
    %v1363 = vld [vmem:[%s3 + $0x1488] sm:$0xff]
    %v1364 = vld [vmem:[%s3 + $0x1490] sm:$0xff]
    %v1365 = vld [vmem:[%s3 + $0x1498] sm:$0xff]
    %v1366 = vld [vmem:[%s3 + $0x14a0] sm:$0xff]
    %v1367 = vld [vmem:[%s3 + $0x14a8] sm:$0xff]
    %v1368 = vld [vmem:[%s3 + $0x14b0] sm:$0xff]
    %v1369 = vld [vmem:[%s3 + $0x14b8] sm:$0xff]
    %v1370 = vld [vmem:[%s3 + $0x14c0] sm:$0xff]
    %v1371 = vld [vmem:[%s3 + $0x14c8] sm:$0xff]
    %v1372 = vld [vmem:[%s3 + $0x14d0] sm:$0xff]
    %v1373 = vld [vmem:[%s3 + $0x14d8] sm:$0xff]
    %v1374 = vld [vmem:[%s3 + $0x14e0] sm:$0xff]
    %v1375 = vld [vmem:[%s3 + $0x14e8] sm:$0xff]
    %v1376 = vld [vmem:[%s3 + $0x14f0] sm:$0xff]
    %v1377 = vld [vmem:[%s3 + $0x14f8] sm:$0xff]
    %v1378 = vld [vmem:[%s3 + $0x1500] sm:$0xff]
    %v1379 = vld [vmem:[%s3 + $0x1508] sm:$0xff]
    %v1380 = vld [vmem:[%s3 + $0x1510] sm:$0xff]
    %v1381 = vld [vmem:[%s3 + $0x1518] sm:$0xff]
    %v1382 = vld [vmem:[%s3 + $0x1520] sm:$0xff]
    %v1383 = vld [vmem:[%s3 + $0x1528] sm:$0xff]
    %v1384 = vld [vmem:[%s3 + $0x1530] sm:$0xff]
    %v1385 = vld [vmem:[%s3 + $0x1538] sm:$0xff]
    %v1386 = vld [vmem:[%s3 + $0x1540] sm:$0xff]
    %v1387 = vld [vmem:[%s3 + $0x1548] sm:$0xff]
    %v1388 = vld [vmem:[%s3 + $0x1550] sm:$0xff]
    %v1389 = vld [vmem:[%s3 + $0x1558] sm:$0xff]
    %v1390 = vld [vmem:[%s3 + $0x1560] sm:$0xff]
    %v1391 = vld [vmem:[%s3 + $0x1568] sm:$0xff]
    %v1392 = vld [vmem:[%s3 + $0x1570] sm:$0xff]
    %v1393 = vld [vmem:[%s3 + $0x1578] sm:$0xff]
    %v1394 = vld [vmem:[%s3 + $0x1580] sm:$0xff]
    %v1395 = vld [vmem:[%s3 + $0x1588] sm:$0xff]
    %v1396 = vld [vmem:[%s3 + $0x1590] sm:$0xff]
    %v1397 = vld [vmem:[%s3 + $0x1598] sm:$0xff]
    %v1398 = vld [vmem:[%s3 + $0x15a0] sm:$0xff]
    %v1399 = vld [vmem:[%s3 + $0x15a8] sm:$0xff]
    %v1400 = vld [vmem:[%s3 + $0x15b0] sm:$0xff]
    %v1401 = vld [vmem:[%s3 + $0x15b8] sm:$0xff]
    %v1402 = vld [vmem:[%s3 + $0x15c0] sm:$0xff]
    %v1403 = vld [vmem:[%s3 + $0x15c8] sm:$0xff]
    %v1404 = vld [vmem:[%s3 + $0x15d0] sm:$0xff]
    %v1405 = vld [vmem:[%s3 + $0x15d8] sm:$0xff]
    %v1406 = vld [vmem:[%s3 + $0x15e0] sm:$0xff]
    %v1407 = vld [vmem:[%s3 + $0x15e8] sm:$0xff]
    %v1408 = vld [vmem:[%s3 + $0x15f0] sm:$0xff]
    %v1409 = vld [vmem:[%s3 + $0x15f8] sm:$0xff]
    %v1410 = vld [vmem:[%s3 + $0x1600] sm:$0xff]
    %v1411 = vld [vmem:[%s3 + $0x1608] sm:$0xff]
    %v1412 = vld [vmem:[%s3 + $0x1610] sm:$0xff]
    %v1413 = vld [vmem:[%s3 + $0x1618] sm:$0xff]
    %v1414 = vld [vmem:[%s3 + $0x1620] sm:$0xff]
    %v1415 = vld [vmem:[%s3 + $0x1628] sm:$0xff]
    %v1416 = vld [vmem:[%s3 + $0x1630] sm:$0xff]
    %v1417 = vld [vmem:[%s3 + $0x1638] sm:$0xff]
    %v1418 = vld [vmem:[%s3 + $0x1640] sm:$0xff]
    %v1419 = vld [vmem:[%s3 + $0x1648] sm:$0xff]
    %v1420 = vld [vmem:[%s3 + $0x1650] sm:$0xff]
    %v1421 = vld [vmem:[%s3 + $0x1658] sm:$0xff]
    %v1422 = vld [vmem:[%s3 + $0x1660] sm:$0xff]
    %v1423 = vld [vmem:[%s3 + $0x1668] sm:$0xff]
    %v1424 = vld [vmem:[%s3 + $0x1670] sm:$0xff]
    %v1425 = vld [vmem:[%s3 + $0x1678] sm:$0xff]
    %v1426 = vld [vmem:[%s3 + $0x1680] sm:$0xff]
    %v1427 = vld [vmem:[%s3 + $0x1688] sm:$0xff]
    %v1428 = vld [vmem:[%s3 + $0x1690] sm:$0xff]
    %v1429 = vld [vmem:[%s3 + $0x1698] sm:$0xff]
    %v1430 = vld [vmem:[%s3 + $0x16a0] sm:$0xff]
    %v1431 = vld [vmem:[%s3 + $0x16a8] sm:$0xff]
    %v1432 = vld [vmem:[%s3 + $0x16b0] sm:$0xff]
    %v1433 = vld [vmem:[%s3 + $0x16b8] sm:$0xff]
    %v1434 = vld [vmem:[%s3 + $0x16c0] sm:$0xff]
    %v1435 = vld [vmem:[%s3 + $0x16c8] sm:$0xff]
    %v1436 = vld [vmem:[%s3 + $0x16d0] sm:$0xff]
    %v1437 = vld [vmem:[%s3 + $0x16d8] sm:$0xff]
    %v1438 = vld [vmem:[%s3 + $0x16e0] sm:$0xff]
    %v1439 = vld [vmem:[%s3 + $0x16e8] sm:$0xff]
    %v1440 = vld [vmem:[%s3 + $0x16f0] sm:$0xff]
    %v1441 = vld [vmem:[%s3 + $0x16f8] sm:$0xff]
    %v1442 = vld [vmem:[%s3 + $0x1700] sm:$0xff]
    %v1443 = vld [vmem:[%s3 + $0x1708] sm:$0xff]
    %v1444 = vld [vmem:[%s3 + $0x1710] sm:$0xff]
    %v1445 = vld [vmem:[%s3 + $0x1718] sm:$0xff]
    %v1446 = vld [vmem:[%s3 + $0x1720] sm:$0xff]
    %v1447 = vld [vmem:[%s3 + $0x1728] sm:$0xff]
    %v1448 = vld [vmem:[%s3 + $0x1730] sm:$0xff]
    %v1449 = vld [vmem:[%s3 + $0x1738] sm:$0xff]
    %v1450 = vld [vmem:[%s3 + $0x1740] sm:$0xff]
    %v1451 = vld [vmem:[%s3 + $0x1748] sm:$0xff]
    %v1452 = vld [vmem:[%s3 + $0x1750] sm:$0xff]
    %v1453 = vld [vmem:[%s3 + $0x1758] sm:$0xff]
    %v1454 = vld [vmem:[%s3 + $0x1760] sm:$0xff]
    %v1455 = vld [vmem:[%s3 + $0x1768] sm:$0xff]
    %v1456 = vld [vmem:[%s3 + $0x1770] sm:$0xff]
    %v1457 = vld [vmem:[%s3 + $0x1778] sm:$0xff]
    %v1458 = vld [vmem:[%s3 + $0x1780] sm:$0xff]
    %v1459 = vld [vmem:[%s3 + $0x1788] sm:$0xff]
    %v1460 = vld [vmem:[%s3 + $0x1790] sm:$0xff]
    %v1461 = vld [vmem:[%s3 + $0x1798] sm:$0xff]
    %v1462 = vld [vmem:[%s3 + $0x17a0] sm:$0xff]
    %v1463 = vld [vmem:[%s3 + $0x17a8] sm:$0xff]
    %v1464 = vld [vmem:[%s3 + $0x17b0] sm:$0xff]
    %v1465 = vld [vmem:[%s3 + $0x17b8] sm:$0xff]
    %v1466 = vld [vmem:[%s3 + $0x17c0] sm:$0xff]
    %v1467 = vld [vmem:[%s3 + $0x17c8] sm:$0xff]
    %v1468 = vld [vmem:[%s3 + $0x17d0] sm:$0xff]
    %v1469 = vld [vmem:[%s3 + $0x17d8] sm:$0xff]
    %v1470 = vld [vmem:[%s3 + $0x17e0] sm:$0xff]
    %v1471 = vld [vmem:[%s3 + $0x17e8] sm:$0xff]
    %v1472 = vld [vmem:[%s3 + $0x17f0] sm:$0xff]
    %v1473 = vld [vmem:[%s3 + $0x17f8] sm:$0xff]
    %v1474 = vld [vmem:[%s3 + $0x1800] sm:$0xff]
    %v1475 = vld [vmem:[%s3 + $0x1808] sm:$0xff]
    %v1476 = vld [vmem:[%s3 + $0x1810] sm:$0xff]
    %v1477 = vld [vmem:[%s3 + $0x1818] sm:$0xff]
    %v1478 = vld [vmem:[%s3 + $0x1820] sm:$0xff]
    %v1479 = vld [vmem:[%s3 + $0x1828] sm:$0xff]
    %v1480 = vld [vmem:[%s3 + $0x1830] sm:$0xff]
    %v1481 = vld [vmem:[%s3 + $0x1838] sm:$0xff]
    %v1482 = vld [vmem:[%s3 + $0x1840] sm:$0xff]
    %v1483 = vld [vmem:[%s3 + $0x1848] sm:$0xff]
    %v1484 = vld [vmem:[%s3 + $0x1850] sm:$0xff]
    %v1485 = vld [vmem:[%s3 + $0x1858] sm:$0xff]
    %v1486 = vld [vmem:[%s3 + $0x1860] sm:$0xff]
    %v1487 = vld [vmem:[%s3 + $0x1868] sm:$0xff]
    %v1488 = vld [vmem:[%s3 + $0x1870] sm:$0xff]
    %v1489 = vld [vmem:[%s3 + $0x1878] sm:$0xff]
    %v1490 = vld [vmem:[%s3 + $0x1880] sm:$0xff]
    %v1491 = vld [vmem:[%s3 + $0x1888] sm:$0xff]
    %v1492 = vld [vmem:[%s3 + $0x1890] sm:$0xff]
    %v1493 = vld [vmem:[%s3 + $0x1898] sm:$0xff]
    %v1494 = vld [vmem:[%s3 + $0x18a0] sm:$0xff]
    %v1495 = vld [vmem:[%s3 + $0x18a8] sm:$0xff]
    %v1496 = vld [vmem:[%s3 + $0x18b0] sm:$0xff]
    %v1497 = vld [vmem:[%s3 + $0x18b8] sm:$0xff]
    %v1498 = vld [vmem:[%s3 + $0x18c0] sm:$0xff]
    %v1499 = vld [vmem:[%s3 + $0x18c8] sm:$0xff]
    %v1500 = vld [vmem:[%s3 + $0x18d0] sm:$0xff]
    %v1501 = vld [vmem:[%s3 + $0x18d8] sm:$0xff]
    %v1502 = vld [vmem:[%s3 + $0x18e0] sm:$0xff]
    %v1503 = vld [vmem:[%s3 + $0x18e8] sm:$0xff]
    %v1504 = vld [vmem:[%s3 + $0x18f0] sm:$0xff]
    %v1505 = vld [vmem:[%s3 + $0x18f8] sm:$0xff]
    %v1506 = vld [vmem:[%s3 + $0x1900] sm:$0xff]
    %v1507 = vld [vmem:[%s3 + $0x1908] sm:$0xff]
    %v1508 = vld [vmem:[%s3 + $0x1910] sm:$0xff]
    %v1509 = vld [vmem:[%s3 + $0x1918] sm:$0xff]
    %v1510 = vld [vmem:[%s3 + $0x1920] sm:$0xff]
    %v1511 = vld [vmem:[%s3 + $0x1928] sm:$0xff]
    %v1512 = vld [vmem:[%s3 + $0x1930] sm:$0xff]
    %v1513 = vld [vmem:[%s3 + $0x1938] sm:$0xff]
    %v1514 = vld [vmem:[%s3 + $0x1940] sm:$0xff]
    %v1515 = vld [vmem:[%s3 + $0x1948] sm:$0xff]
    %v1516 = vld [vmem:[%s3 + $0x1950] sm:$0xff]
    %v1517 = vld [vmem:[%s3 + $0x1958] sm:$0xff]
    %v1518 = vld [vmem:[%s3 + $0x1960] sm:$0xff]
    %v1519 = vld [vmem:[%s3 + $0x1968] sm:$0xff]
    %v1520 = vld [vmem:[%s3 + $0x1970] sm:$0xff]
    %v1521 = vld [vmem:[%s3 + $0x1978] sm:$0xff]
    %v1522 = vld [vmem:[%s3 + $0x1980] sm:$0xff]
    %v1523 = vld [vmem:[%s3 + $0x1988] sm:$0xff]
    %v1524 = vld [vmem:[%s3 + $0x1990] sm:$0xff]
    %v1525 = vld [vmem:[%s3 + $0x1998] sm:$0xff]
    %v1526 = vld [vmem:[%s3 + $0x19a0] sm:$0xff]
    %v1527 = vld [vmem:[%s3 + $0x19a8] sm:$0xff]
    %v1528 = vld [vmem:[%s3 + $0x19b0] sm:$0xff]
    %v1529 = vld [vmem:[%s3 + $0x19b8] sm:$0xff]
    %v1530 = vld [vmem:[%s3 + $0x19c0] sm:$0xff]
    %v1531 = vld [vmem:[%s3 + $0x19c8] sm:$0xff]
    %v1532 = vld [vmem:[%s3 + $0x19d0] sm:$0xff]
    %v1533 = vld [vmem:[%s3 + $0x19d8] sm:$0xff]
    %v1534 = vld [vmem:[%s3 + $0x19e0] sm:$0xff]
    %v1535 = vld [vmem:[%s3 + $0x19e8] sm:$0xff]
    %v1536 = vld [vmem:[%s3 + $0x19f0] sm:$0xff]
    %v1537 = vld [vmem:[%s3 + $0x19f8] sm:$0xff]
    %v1538 = vld [vmem:[%s3 + $0x1a00] sm:$0xff]
    %v1539 = vld [vmem:[%s3 + $0x1a08] sm:$0xff]
    %v1540 = vld [vmem:[%s3 + $0x1a10] sm:$0xff]
    %v1541 = vld [vmem:[%s3 + $0x1a18] sm:$0xff]
    %v1542 = vld [vmem:[%s3 + $0x1a20] sm:$0xff]
    %v1543 = vld [vmem:[%s3 + $0x1a28] sm:$0xff]
    %v1544 = vld [vmem:[%s3 + $0x1a30] sm:$0xff]
    %v1545 = vld [vmem:[%s3 + $0x1a38] sm:$0xff]
    %v1546 = vld [vmem:[%s3 + $0x1a40] sm:$0xff]
    %v1547 = vld [vmem:[%s3 + $0x1a48] sm:$0xff]
    %v1548 = vld [vmem:[%s3 + $0x1a50] sm:$0xff]
    %v1549 = vld [vmem:[%s3 + $0x1a58] sm:$0xff]
    %v1550 = vld [vmem:[%s3 + $0x1a60] sm:$0xff]
    %v1551 = vld [vmem:[%s3 + $0x1a68] sm:$0xff]
    %v1552 = vld [vmem:[%s3 + $0x1a70] sm:$0xff]
    %v1553 = vld [vmem:[%s3 + $0x1a78] sm:$0xff]
    %v1554 = vld [vmem:[%s3 + $0x1a80] sm:$0xff]
    %v1555 = vld [vmem:[%s3 + $0x1a88] sm:$0xff]
    %v1556 = vld [vmem:[%s3 + $0x1a90] sm:$0xff]
    %v1557 = vld [vmem:[%s3 + $0x1a98] sm:$0xff]
    %v1558 = vld [vmem:[%s3 + $0x1aa0] sm:$0xff]
    %v1559 = vld [vmem:[%s3 + $0x1aa8] sm:$0xff]
    %v1560 = vld [vmem:[%s3 + $0x1ab0] sm:$0xff]
    %v1561 = vld [vmem:[%s3 + $0x1ab8] sm:$0xff]
    %v1562 = vld [vmem:[%s3 + $0x1ac0] sm:$0xff]
    %v1563 = vld [vmem:[%s3 + $0x1ac8] sm:$0xff]
    %v1564 = vld [vmem:[%s3 + $0x1ad0] sm:$0xff]
    %v1565 = vld [vmem:[%s3 + $0x1ad8] sm:$0xff]
    %v1566 = vld [vmem:[%s3 + $0x1ae0] sm:$0xff]
    %v1567 = vld [vmem:[%s3 + $0x1ae8] sm:$0xff]
    %v1568 = vld [vmem:[%s3 + $0x1af0] sm:$0xff]
    %v1569 = vld [vmem:[%s3 + $0x1af8] sm:$0xff]
    %v1570 = vld [vmem:[%s3 + $0x1b00] sm:$0xff]
    %v1571 = vld [vmem:[%s3 + $0x1b08] sm:$0xff]
    %v1572 = vld [vmem:[%s3 + $0x1b10] sm:$0xff]
    %v1573 = vld [vmem:[%s3 + $0x1b18] sm:$0xff]
    %v1574 = vld [vmem:[%s3 + $0x1b20] sm:$0xff]
    %v1575 = vld [vmem:[%s3 + $0x1b28] sm:$0xff]
    %v1576 = vld [vmem:[%s3 + $0x1b30] sm:$0xff]
    %v1577 = vld [vmem:[%s3 + $0x1b38] sm:$0xff]
    %v1578 = vld [vmem:[%s3 + $0x1b40] sm:$0xff]
    %v1579 = vld [vmem:[%s3 + $0x1b48] sm:$0xff]
    %v1580 = vld [vmem:[%s3 + $0x1b50] sm:$0xff]
    %v1581 = vld [vmem:[%s3 + $0x1b58] sm:$0xff]
    %v1582 = vld [vmem:[%s3 + $0x1b60] sm:$0xff]
    %v1583 = vld [vmem:[%s3 + $0x1b68] sm:$0xff]
    %v1584 = vld [vmem:[%s3 + $0x1b70] sm:$0xff]
    %v1585 = vld [vmem:[%s3 + $0x1b78] sm:$0xff]
    %v1586 = vld [vmem:[%s3 + $0x1b80] sm:$0xff]
    %v1587 = vld [vmem:[%s3 + $0x1b88] sm:$0xff]
    %v1588 = vld [vmem:[%s3 + $0x1b90] sm:$0xff]
    %v1589 = vld [vmem:[%s3 + $0x1b98] sm:$0xff]
    %v1590 = vld [vmem:[%s3 + $0x1ba0] sm:$0xff]
    %v1591 = vld [vmem:[%s3 + $0x1ba8] sm:$0xff]
    %v1592 = vld [vmem:[%s3 + $0x1bb0] sm:$0xff]
    %v1593 = vld [vmem:[%s3 + $0x1bb8] sm:$0xff]
    %v1594 = vld [vmem:[%s3 + $0x1bc0] sm:$0xff]
    %v1595 = vld [vmem:[%s3 + $0x1bc8] sm:$0xff]
    %v1596 = vld [vmem:[%s3 + $0x1bd0] sm:$0xff]
    %v1597 = vld [vmem:[%s3 + $0x1bd8] sm:$0xff]
    %v1598 = vld [vmem:[%s3 + $0x1be0] sm:$0xff]
    %v1599 = vld [vmem:[%s3 + $0x1be8] sm:$0xff]
    %v1600 = vld [vmem:[%s3 + $0x1bf0] sm:$0xff]
    %v1601 = vld [vmem:[%s3 + $0x1bf8] sm:$0xff]
    %v1602 = vld [vmem:[%s3 + $0x1c00] sm:$0xff]
    %v1603 = vld [vmem:[%s3 + $0x1c08] sm:$0xff]
    %v1604 = vld [vmem:[%s3 + $0x1c10] sm:$0xff]
    %v1605 = vld [vmem:[%s3 + $0x1c18] sm:$0xff]
    %v1606 = vld [vmem:[%s3 + $0x1c20] sm:$0xff]
    %v1607 = vld [vmem:[%s3 + $0x1c28] sm:$0xff]
    %v1608 = vld [vmem:[%s3 + $0x1c30] sm:$0xff]
    %v1609 = vld [vmem:[%s3 + $0x1c38] sm:$0xff]
    %v1610 = vld [vmem:[%s3 + $0x1c40] sm:$0xff]
    %v1611 = vld [vmem:[%s3 + $0x1c48] sm:$0xff]
    %v1612 = vld [vmem:[%s3 + $0x1c50] sm:$0xff]
    %v1613 = vld [vmem:[%s3 + $0x1c58] sm:$0xff]
    %v1614 = vld [vmem:[%s3 + $0x1c60] sm:$0xff]
    %v1615 = vld [vmem:[%s3 + $0x1c68] sm:$0xff]
    %v1616 = vld [vmem:[%s3 + $0x1c70] sm:$0xff]
    %v1617 = vld [vmem:[%s3 + $0x1c78] sm:$0xff]
    %v1618 = vld [vmem:[%s3 + $0x1c80] sm:$0xff]
    %v1619 = vld [vmem:[%s3 + $0x1c88] sm:$0xff]
    %v1620 = vld [vmem:[%s3 + $0x1c90] sm:$0xff]
    %v1621 = vld [vmem:[%s3 + $0x1c98] sm:$0xff]
    %v1622 = vld [vmem:[%s3 + $0x1ca0] sm:$0xff]
    %v1623 = vld [vmem:[%s3 + $0x1ca8] sm:$0xff]
    %v1624 = vld [vmem:[%s3 + $0x1cb0] sm:$0xff]
    %v1625 = vld [vmem:[%s3 + $0x1cb8] sm:$0xff]
    %v1626 = vld [vmem:[%s3 + $0x1cc0] sm:$0xff]
    %v1627 = vld [vmem:[%s3 + $0x1cc8] sm:$0xff]
    %v1628 = vld [vmem:[%s3 + $0x1cd0] sm:$0xff]
    %v1629 = vld [vmem:[%s3 + $0x1cd8] sm:$0xff]
    %v1630 = vld [vmem:[%s3 + $0x1ce0] sm:$0xff]
    %v1631 = vld [vmem:[%s3 + $0x1ce8] sm:$0xff]
    %v1632 = vld [vmem:[%s3 + $0x1cf0] sm:$0xff]
    %v1633 = vld [vmem:[%s3 + $0x1cf8] sm:$0xff]
    %v1634 = vld [vmem:[%s3 + $0x1d00] sm:$0xff]
    %v1635 = vld [vmem:[%s3 + $0x1d08] sm:$0xff]
    %v1636 = vld [vmem:[%s3 + $0x1d10] sm:$0xff]
    %v1637 = vld [vmem:[%s3 + $0x1d18] sm:$0xff]
    %v1638 = vld [vmem:[%s3 + $0x1d20] sm:$0xff]
    %v1639 = vld [vmem:[%s3 + $0x1d28] sm:$0xff]
    %v1640 = vld [vmem:[%s3 + $0x1d30] sm:$0xff]
    %v1641 = vld [vmem:[%s3 + $0x1d38] sm:$0xff]
    %v1642 = vld [vmem:[%s3 + $0x1d40] sm:$0xff]
    %v1643 = vld [vmem:[%s3 + $0x1d48] sm:$0xff]
    %v1644 = vld [vmem:[%s3 + $0x1d50] sm:$0xff]
    %v1645 = vld [vmem:[%s3 + $0x1d58] sm:$0xff]
    %v1646 = vld [vmem:[%s3 + $0x1d60] sm:$0xff]
    %v1647 = vld [vmem:[%s3 + $0x1d68] sm:$0xff]
    %v1648 = vld [vmem:[%s3 + $0x1d70] sm:$0xff]
    %v1649 = vld [vmem:[%s3 + $0x1d78] sm:$0xff]
    %v1650 = vld [vmem:[%s3 + $0x1d80] sm:$0xff]
    %v1651 = vld [vmem:[%s3 + $0x1d88] sm:$0xff]
    %v1652 = vld [vmem:[%s3 + $0x1d90] sm:$0xff]
    %v1653 = vld [vmem:[%s3 + $0x1d98] sm:$0xff]
    %v1654 = vld [vmem:[%s3 + $0x1da0] sm:$0xff]
    %v1655 = vld [vmem:[%s3 + $0x1da8] sm:$0xff]
    %v1656 = vld [vmem:[%s3 + $0x1db0] sm:$0xff]
    %v1657 = vld [vmem:[%s3 + $0x1db8] sm:$0xff]
    %v1658 = vld [vmem:[%s3 + $0x1dc0] sm:$0xff]
    %v1659 = vld [vmem:[%s3 + $0x1dc8] sm:$0xff]
    %v1660 = vld [vmem:[%s3 + $0x1dd0] sm:$0xff]
    %v1661 = vld [vmem:[%s3 + $0x1dd8] sm:$0xff]
    %v1662 = vld [vmem:[%s3 + $0x1de0] sm:$0xff]
    %v1663 = vld [vmem:[%s3 + $0x1de8] sm:$0xff]
    %v1664 = vld [vmem:[%s3 + $0x1df0] sm:$0xff]
    %v1665 = vld [vmem:[%s3 + $0x1df8] sm:$0xff]
    %v1666 = vld [vmem:[%s3 + $0x1e00] sm:$0xff]
    %v1667 = vld [vmem:[%s3 + $0x1e08] sm:$0xff]
    %v1668 = vld [vmem:[%s3 + $0x1e10] sm:$0xff]
    %v1669 = vld [vmem:[%s3 + $0x1e18] sm:$0xff]
    %v1670 = vld [vmem:[%s3 + $0x1e20] sm:$0xff]
    %v1671 = vld [vmem:[%s3 + $0x1e28] sm:$0xff]
    %v1672 = vld [vmem:[%s3 + $0x1e30] sm:$0xff]
    %v1673 = vld [vmem:[%s3 + $0x1e38] sm:$0xff]
    %v1674 = vld [vmem:[%s3 + $0x1e40] sm:$0xff]
    %v1675 = vld [vmem:[%s3 + $0x1e48] sm:$0xff]
    %v1676 = vld [vmem:[%s3 + $0x1e50] sm:$0xff]
    %v1677 = vld [vmem:[%s3 + $0x1e58] sm:$0xff]
    %v1678 = vld [vmem:[%s3 + $0x1e60] sm:$0xff]
    %v1679 = vld [vmem:[%s3 + $0x1e68] sm:$0xff]
    %v1680 = vld [vmem:[%s3 + $0x1e70] sm:$0xff]
    %v1681 = vld [vmem:[%s3 + $0x1e78] sm:$0xff]
    %v1682 = vld [vmem:[%s3 + $0x1e80] sm:$0xff]
    %v1683 = vld [vmem:[%s3 + $0x1e88] sm:$0xff]
    %v1684 = vld [vmem:[%s3 + $0x1e90] sm:$0xff]
    %v1685 = vld [vmem:[%s3 + $0x1e98] sm:$0xff]
    %v1686 = vld [vmem:[%s3 + $0x1ea0] sm:$0xff]
    %v1687 = vld [vmem:[%s3 + $0x1ea8] sm:$0xff]
    %v1688 = vld [vmem:[%s3 + $0x1eb0] sm:$0xff]
    %v1689 = vld [vmem:[%s3 + $0x1eb8] sm:$0xff]
    %v1690 = vld [vmem:[%s3 + $0x1ec0] sm:$0xff]
    %v1691 = vld [vmem:[%s3 + $0x1ec8] sm:$0xff]
    %v1692 = vld [vmem:[%s3 + $0x1ed0] sm:$0xff]
    %v1693 = vld [vmem:[%s3 + $0x1ed8] sm:$0xff]
    %v1694 = vld [vmem:[%s3 + $0x1ee0] sm:$0xff]
    %v1695 = vld [vmem:[%s3 + $0x1ee8] sm:$0xff]
    %v1696 = vld [vmem:[%s3 + $0x1ef0] sm:$0xff]
    %v1697 = vld [vmem:[%s3 + $0x1ef8] sm:$0xff]
    %v1698 = vld [vmem:[%s3 + $0x1f00] sm:$0xff]
    %v1699 = vld [vmem:[%s3 + $0x1f08] sm:$0xff]
    %v1700 = vld [vmem:[%s3 + $0x1f10] sm:$0xff]
    %v1701 = vld [vmem:[%s3 + $0x1f18] sm:$0xff]
    %v1702 = vld [vmem:[%s3 + $0x1f20] sm:$0xff]
    %v1703 = vld [vmem:[%s3 + $0x1f28] sm:$0xff]
    %v1704 = vld [vmem:[%s3 + $0x1f30] sm:$0xff]
    %v1705 = vld [vmem:[%s3 + $0x1f38] sm:$0xff]
    %v1706 = vld [vmem:[%s3 + $0x1f40] sm:$0xff]
    %v1707 = vld [vmem:[%s3 + $0x1f48] sm:$0xff]
    %v1708 = vld [vmem:[%s3 + $0x1f50] sm:$0xff]
    %v1709 = vld [vmem:[%s3 + $0x1f58] sm:$0xff]
    %v1710 = vld [vmem:[%s3 + $0x1f60] sm:$0xff]
    %v1711 = vld [vmem:[%s3 + $0x1f68] sm:$0xff]
    %v1712 = vld [vmem:[%s3 + $0x1f70] sm:$0xff]
    %v1713 = vld [vmem:[%s3 + $0x1f78] sm:$0xff]
    %v1714 = vld [vmem:[%s3 + $0x1f80] sm:$0xff]
    %v1715 = vld [vmem:[%s3 + $0x1f88] sm:$0xff]
    %v1716 = vld [vmem:[%s3 + $0x1f90] sm:$0xff]
    %v1717 = vld [vmem:[%s3 + $0x1f98] sm:$0xff]
    %v1718 = vld [vmem:[%s3 + $0x1fa0] sm:$0xff]
    %v1719 = vld [vmem:[%s3 + $0x1fa8] sm:$0xff]
    %v1720 = vld [vmem:[%s3 + $0x1fb0] sm:$0xff]
    %v1721 = vld [vmem:[%s3 + $0x1fb8] sm:$0xff]
    %v1722 = vld [vmem:[%s3 + $0x1fc0] sm:$0xff]
    %v1723 = vld [vmem:[%s3 + $0x1fc8] sm:$0xff]
    %v1724 = vld [vmem:[%s3 + $0x1fd0] sm:$0xff]
    %v1725 = vld [vmem:[%s3 + $0x1fd8] sm:$0xff]
    %v1726 = vld [vmem:[%s3 + $0x1fe0] sm:$0xff]
    %v1727 = vld [vmem:[%s3 + $0x1fe8] sm:$0xff]
    %v1728 = vld [vmem:[%s3 + $0x1ff0] sm:$0xff]
    %v1729 = vld [vmem:[%s3 + $0x1ff8] sm:$0xff]
    %v1730 = vld [vmem:[%s3 + $0x2000] sm:$0xff]
    %v1731 = vld [vmem:[%s3 + $0x2008] sm:$0xff]
    %v1732 = vld [vmem:[%s3 + $0x2010] sm:$0xff]
    %v1733 = vld [vmem:[%s3 + $0x2018] sm:$0xff]
    %v1734 = vld [vmem:[%s3 + $0x2020] sm:$0xff]
    %v1735 = vld [vmem:[%s3 + $0x2028] sm:$0xff]
    %v1736 = vld [vmem:[%s3 + $0x2030] sm:$0xff]
    %v1737 = vld [vmem:[%s3 + $0x2038] sm:$0xff]
    %v1738 = vld [vmem:[%s3 + $0x2040] sm:$0xff]
    %v1739 = vld [vmem:[%s3 + $0x2048] sm:$0xff]
    %v1740 = vld [vmem:[%s3 + $0x2050] sm:$0xff]
    %v1741 = vld [vmem:[%s3 + $0x2058] sm:$0xff]
    %v1742 = vld [vmem:[%s3 + $0x2060] sm:$0xff]
    %v1743 = vld [vmem:[%s3 + $0x2068] sm:$0xff]
    %v1744 = vld [vmem:[%s3 + $0x2070] sm:$0xff]
    %v1745 = vld [vmem:[%s3 + $0x2078] sm:$0xff]
    %v1746 = vld [vmem:[%s3 + $0x2080] sm:$0xff]
    %v1747 = vld [vmem:[%s3 + $0x2088] sm:$0xff]
    %v1748 = vld [vmem:[%s3 + $0x2090] sm:$0xff]
    %v1749 = vld [vmem:[%s3 + $0x2098] sm:$0xff]
    %v1750 = vld [vmem:[%s3 + $0x20a0] sm:$0xff]
    %v1751 = vld [vmem:[%s3 + $0x20a8] sm:$0xff]
    %v1752 = vld [vmem:[%s3 + $0x20b0] sm:$0xff]
    %v1753 = vld [vmem:[%s3 + $0x20b8] sm:$0xff]
    %v1754 = vld [vmem:[%s3 + $0x20c0] sm:$0xff]
    %v1755 = vld [vmem:[%s3 + $0x20c8] sm:$0xff]
    %v1756 = vld [vmem:[%s3 + $0x20d0] sm:$0xff]
    %v1757 = vld [vmem:[%s3 + $0x20d8] sm:$0xff]
    %v1758 = vld [vmem:[%s3 + $0x20e0] sm:$0xff]
    %v1759 = vld [vmem:[%s3 + $0x20e8] sm:$0xff]
    %v1760 = vld [vmem:[%s3 + $0x20f0] sm:$0xff]
    %v1761 = vld [vmem:[%s3 + $0x20f8] sm:$0xff]
    %v1762 = vld [vmem:[%s3 + $0x2100] sm:$0xff]
    %v1763 = vld [vmem:[%s3 + $0x2108] sm:$0xff]
    %v1764 = vld [vmem:[%s3 + $0x2110] sm:$0xff]
    %v1765 = vld [vmem:[%s3 + $0x2118] sm:$0xff]
    %v1766 = vld [vmem:[%s3 + $0x2120] sm:$0xff]
    %v1767 = vld [vmem:[%s3 + $0x2128] sm:$0xff]
    %v1768 = vld [vmem:[%s3 + $0x2130] sm:$0xff]
    %v1769 = vld [vmem:[%s3 + $0x2138] sm:$0xff]
    %v1770 = vld [vmem:[%s3 + $0x2140] sm:$0xff]
    %v1771 = vld [vmem:[%s3 + $0x2148] sm:$0xff]
    %v1772 = vld [vmem:[%s3 + $0x2150] sm:$0xff]
    %v1773 = vld [vmem:[%s3 + $0x2158] sm:$0xff]
    %v1774 = vld [vmem:[%s3 + $0x2160] sm:$0xff]
    %v1775 = vld [vmem:[%s3 + $0x2168] sm:$0xff]
    %v1776 = vld [vmem:[%s3 + $0x2170] sm:$0xff]
    %v1777 = vld [vmem:[%s3 + $0x2178] sm:$0xff]
    %v1778 = vld [vmem:[%s3 + $0x2180] sm:$0xff]
    %v1779 = vld [vmem:[%s3 + $0x2188] sm:$0xff]
    %v1780 = vld [vmem:[%s3 + $0x2190] sm:$0xff]
    %v1781 = vld [vmem:[%s3 + $0x2198] sm:$0xff]
    %v1782 = vld [vmem:[%s3 + $0x21a0] sm:$0xff]
    %v1783 = vld [vmem:[%s3 + $0x21a8] sm:$0xff]
    %v1784 = vld [vmem:[%s3 + $0x21b0] sm:$0xff]
    %v1785 = vld [vmem:[%s3 + $0x21b8] sm:$0xff]
    %v1786 = vld [vmem:[%s3 + $0x21c0] sm:$0xff]
    %v1787 = vld [vmem:[%s3 + $0x21c8] sm:$0xff]
    %v1788 = vld [vmem:[%s3 + $0x21d0] sm:$0xff]
    %v1789 = vld [vmem:[%s3 + $0x21d8] sm:$0xff]
    %v1790 = vld [vmem:[%s3 + $0x21e0] sm:$0xff]
    %v1791 = vld [vmem:[%s3 + $0x21e8] sm:$0xff]
    %v1792 = vld [vmem:[%s3 + $0x21f0] sm:$0xff]
    %v1793 = vld [vmem:[%s3 + $0x21f8] sm:$0xff]
    %v1794 = vld [vmem:[%s3 + $0x2200] sm:$0xff]
    %v1795 = vld [vmem:[%s3 + $0x2208] sm:$0xff]
    %v1796 = vld [vmem:[%s3 + $0x2210] sm:$0xff]
    %v1797 = vld [vmem:[%s3 + $0x2218] sm:$0xff]
    %v1798 = vld [vmem:[%s3 + $0x2220] sm:$0xff]
    %v1799 = vld [vmem:[%s3 + $0x2228] sm:$0xff]
    %v1800 = vld [vmem:[%s3 + $0x2230] sm:$0xff]
    %v1801 = vld [vmem:[%s3 + $0x2238] sm:$0xff]
    %v1802 = vld [vmem:[%s3 + $0x2240] sm:$0xff]
    %v1803 = vld [vmem:[%s3 + $0x2248] sm:$0xff]
    %v1804 = vld [vmem:[%s3 + $0x2250] sm:$0xff]
    %v1805 = vld [vmem:[%s3 + $0x2258] sm:$0xff]
    %v1806 = vld [vmem:[%s3 + $0x2260] sm:$0xff]
    %v1807 = vld [vmem:[%s3 + $0x2268] sm:$0xff]
    %v1808 = vld [vmem:[%s3 + $0x2270] sm:$0xff]
    %v1809 = vld [vmem:[%s3 + $0x2278] sm:$0xff]
    %v1810 = vld [vmem:[%s3 + $0x2280] sm:$0xff]
    %v1811 = vld [vmem:[%s3 + $0x2288] sm:$0xff]
    %v1812 = vld [vmem:[%s3 + $0x2290] sm:$0xff]
    %v1813 = vld [vmem:[%s3 + $0x2298] sm:$0xff]
    %v1814 = vld [vmem:[%s3 + $0x22a0] sm:$0xff]
    %v1815 = vld [vmem:[%s3 + $0x22a8] sm:$0xff]
    %v1816 = vld [vmem:[%s3 + $0x22b0] sm:$0xff]
    %v1817 = vld [vmem:[%s3 + $0x22b8] sm:$0xff]
    %v1818 = vld [vmem:[%s3 + $0x22c0] sm:$0xff]
    %v1819 = vld [vmem:[%s3 + $0x22c8] sm:$0xff]
    %v1820 = vld [vmem:[%s3 + $0x22d0] sm:$0xff]
    %v1821 = vld [vmem:[%s3 + $0x22d8] sm:$0xff]
    %v1822 = vld [vmem:[%s3 + $0x22e0] sm:$0xff]
    %v1823 = vld [vmem:[%s3 + $0x22e8] sm:$0xff]
    %v1824 = vld [vmem:[%s3 + $0x22f0] sm:$0xff]
    %v1825 = vld [vmem:[%s3 + $0x22f8] sm:$0xff]
    %v1826 = vld [vmem:[%s3 + $0x2300] sm:$0xff]
    %v1827 = vld [vmem:[%s3 + $0x2308] sm:$0xff]
    %v1828 = vld [vmem:[%s3 + $0x2310] sm:$0xff]
    %v1829 = vld [vmem:[%s3 + $0x2318] sm:$0xff]
    %v1830 = vld [vmem:[%s3 + $0x2320] sm:$0xff]
    %v1831 = vld [vmem:[%s3 + $0x2328] sm:$0xff]
    %v1832 = vld [vmem:[%s3 + $0x2330] sm:$0xff]
    %v1833 = vld [vmem:[%s3 + $0x2338] sm:$0xff]
    %v1834 = vld [vmem:[%s3 + $0x2340] sm:$0xff]
    %v1835 = vld [vmem:[%s3 + $0x2348] sm:$0xff]
    %v1836 = vld [vmem:[%s3 + $0x2350] sm:$0xff]
    %v1837 = vld [vmem:[%s3 + $0x2358] sm:$0xff]
    %v1838 = vld [vmem:[%s3 + $0x2360] sm:$0xff]
    %v1839 = vld [vmem:[%s3 + $0x2368] sm:$0xff]
    %v1840 = vld [vmem:[%s3 + $0x2370] sm:$0xff]
    %v1841 = vld [vmem:[%s3 + $0x2378] sm:$0xff]
    %v1842 = vld [vmem:[%s3 + $0x2380] sm:$0xff]
    %v1843 = vld [vmem:[%s3 + $0x2388] sm:$0xff]
    %v1844 = vld [vmem:[%s3 + $0x2390] sm:$0xff]
    %v1845 = vld [vmem:[%s3 + $0x2398] sm:$0xff]
    %v1846 = vld [vmem:[%s3 + $0x23a0] sm:$0xff]
    %v1847 = vld [vmem:[%s3 + $0x23a8] sm:$0xff]
    %v1848 = vld [vmem:[%s3 + $0x23b0] sm:$0xff]
    %v1849 = vld [vmem:[%s3 + $0x23b8] sm:$0xff]
    %v1850 = vld [vmem:[%s3 + $0x23c0] sm:$0xff]
    %v1851 = vld [vmem:[%s3 + $0x23c8] sm:$0xff]
    %v1852 = vld [vmem:[%s3 + $0x23d0] sm:$0xff]
    %v1853 = vld [vmem:[%s3 + $0x23d8] sm:$0xff]
    %v1854 = vld [vmem:[%s3 + $0x23e0] sm:$0xff]
    %v1855 = vld [vmem:[%s3 + $0x23e8] sm:$0xff]
    %v1856 = vld [vmem:[%s3 + $0x23f0] sm:$0xff]
    %v1857 = vld [vmem:[%s3 + $0x23f8] sm:$0xff]
    %v1858 = vld [vmem:[%s3 + $0x2400] sm:$0xff]
    %v1859 = vld [vmem:[%s3 + $0x2408] sm:$0xff]
    %v1860 = vld [vmem:[%s3 + $0x2410] sm:$0xff]
    %v1861 = vld [vmem:[%s3 + $0x2418] sm:$0xff]
    %v1862 = vld [vmem:[%s3 + $0x2420] sm:$0xff]
    %v1863 = vld [vmem:[%s3 + $0x2428] sm:$0xff]
    %v1864 = vld [vmem:[%s3 + $0x2430] sm:$0xff]
    %v1865 = vld [vmem:[%s3 + $0x2438] sm:$0xff]
    %v1866 = vld [vmem:[%s3 + $0x2440] sm:$0xff]
    %v1867 = vld [vmem:[%s3 + $0x2448] sm:$0xff]
    %v1868 = vld [vmem:[%s3 + $0x2450] sm:$0xff]
    %v1869 = vld [vmem:[%s3 + $0x2458] sm:$0xff]
    %v1870 = vld [vmem:[%s3 + $0x2460] sm:$0xff]
    %v1871 = vld [vmem:[%s3 + $0x2468] sm:$0xff]
    %v1872 = vld [vmem:[%s3 + $0x2470] sm:$0xff]
    %v1873 = vld [vmem:[%s3 + $0x2478] sm:$0xff]
    %v1874 = vld [vmem:[%s3 + $0x2480] sm:$0xff]
    %v1875 = vld [vmem:[%s3 + $0x2488] sm:$0xff]
    %v1876 = vld [vmem:[%s3 + $0x2490] sm:$0xff]
    %v1877 = vld [vmem:[%s3 + $0x2498] sm:$0xff]
    %v1878 = vld [vmem:[%s3 + $0x24a0] sm:$0xff]
    %v1879 = vld [vmem:[%s3 + $0x24a8] sm:$0xff]
    %v1880 = vld [vmem:[%s3 + $0x24b0] sm:$0xff]
    %v1881 = vld [vmem:[%s3 + $0x24b8] sm:$0xff]
    %v1882 = vld [vmem:[%s3 + $0x24c0] sm:$0xff]
    %v1883 = vld [vmem:[%s3 + $0x24c8] sm:$0xff]
    %v1884 = vld [vmem:[%s3 + $0x24d0] sm:$0xff]
    %v1885 = vld [vmem:[%s3 + $0x24d8] sm:$0xff]
    %v1886 = vld [vmem:[%s3 + $0x24e0] sm:$0xff]
    %v1887 = vld [vmem:[%s3 + $0x24e8] sm:$0xff]
    %v1888 = vld [vmem:[%s3 + $0x24f0] sm:$0xff]
    %v1889 = vld [vmem:[%s3 + $0x24f8] sm:$0xff]
    %v1890 = vld [vmem:[%s3 + $0x2500] sm:$0xff]
    %v1891 = vld [vmem:[%s3 + $0x2508] sm:$0xff]
    %v1892 = vld [vmem:[%s3 + $0x2510] sm:$0xff]
    %v1893 = vld [vmem:[%s3 + $0x2518] sm:$0xff]
    %v1894 = vld [vmem:[%s3 + $0x2520] sm:$0xff]
    %v1895 = vld [vmem:[%s3 + $0x2528] sm:$0xff]
    %v1896 = vld [vmem:[%s3 + $0x2530] sm:$0xff]
    %v1897 = vld [vmem:[%s3 + $0x2538] sm:$0xff]
    %v1898 = vld [vmem:[%s3 + $0x2540] sm:$0xff]
    %v1899 = vld [vmem:[%s3 + $0x2548] sm:$0xff]
    %v1900 = vld [vmem:[%s3 + $0x2550] sm:$0xff]
    %v1901 = vld [vmem:[%s3 + $0x2558] sm:$0xff]
    %v1902 = vld [vmem:[%s3 + $0x2560] sm:$0xff]
    %v1903 = vld [vmem:[%s3 + $0x2568] sm:$0xff]
    %v1904 = vld [vmem:[%s3 + $0x2570] sm:$0xff]
    %v1905 = vld [vmem:[%s3 + $0x2578] sm:$0xff]
    %v1906 = vld [vmem:[%s3 + $0x2580] sm:$0xff]
    %v1907 = vld [vmem:[%s3 + $0x2588] sm:$0xff]
    %v1908 = vld [vmem:[%s3 + $0x2590] sm:$0xff]
    %v1909 = vld [vmem:[%s3 + $0x2598] sm:$0xff]
    %v1910 = vld [vmem:[%s3 + $0x25a0] sm:$0xff]
    %v1911 = vld [vmem:[%s3 + $0x25a8] sm:$0xff]
    %v1912 = vld [vmem:[%s3 + $0x25b0] sm:$0xff]
    %v1913 = vld [vmem:[%s3 + $0x25b8] sm:$0xff]
    %v1914 = vld [vmem:[%s3 + $0x25c0] sm:$0xff]
    %v1915 = vld [vmem:[%s3 + $0x25c8] sm:$0xff]
    %v1916 = vld [vmem:[%s3 + $0x25d0] sm:$0xff]
    %v1917 = vld [vmem:[%s3 + $0x25d8] sm:$0xff]
    %v1918 = vld [vmem:[%s3 + $0x25e0] sm:$0xff]
    %v1919 = vld [vmem:[%s3 + $0x25e8] sm:$0xff]
    %v1920 = vld [vmem:[%s3 + $0x25f0] sm:$0xff]
    %v1921 = vld [vmem:[%s3 + $0x25f8] sm:$0xff]
    %v1922 = vld [vmem:[%s3 + $0x2600] sm:$0xff]
    %v1923 = vld [vmem:[%s3 + $0x2608] sm:$0xff]
    %v1924 = vld [vmem:[%s3 + $0x2610] sm:$0xff]
    %v1925 = vld [vmem:[%s3 + $0x2618] sm:$0xff]
    %v1926 = vld [vmem:[%s3 + $0x2620] sm:$0xff]
    %v1927 = vld [vmem:[%s3 + $0x2628] sm:$0xff]
    %v1928 = vld [vmem:[%s3 + $0x2630] sm:$0xff]
    %v1929 = vld [vmem:[%s3 + $0x2638] sm:$0xff]
    %v1930 = vld [vmem:[%s3 + $0x2640] sm:$0xff]
    %v1931 = vld [vmem:[%s3 + $0x2648] sm:$0xff]
    %v1932 = vld [vmem:[%s3 + $0x2650] sm:$0xff]
    %v1933 = vld [vmem:[%s3 + $0x2658] sm:$0xff]
    %v1934 = vld [vmem:[%s3 + $0x2660] sm:$0xff]
    %v1935 = vld [vmem:[%s3 + $0x2668] sm:$0xff]
    %v1936 = vld [vmem:[%s3 + $0x2670] sm:$0xff]
    %v1937 = vld [vmem:[%s3 + $0x2678] sm:$0xff]
    %v1938 = vld [vmem:[%s3 + $0x2680] sm:$0xff]
    %v1939 = vld [vmem:[%s3 + $0x2688] sm:$0xff]
    %v1940 = vld [vmem:[%s3 + $0x2690] sm:$0xff]
    %v1941 = vld [vmem:[%s3 + $0x2698] sm:$0xff]
    %v1942 = vld [vmem:[%s3 + $0x26a0] sm:$0xff]
    %v1943 = vld [vmem:[%s3 + $0x26a8] sm:$0xff]
    %v1944 = vld [vmem:[%s3 + $0x26b0] sm:$0xff]
    %v1945 = vld [vmem:[%s3 + $0x26b8] sm:$0xff]
    %v1946 = vld [vmem:[%s3 + $0x26c0] sm:$0xff]
    %v1947 = vld [vmem:[%s3 + $0x26c8] sm:$0xff]
    %v1948 = vld [vmem:[%s3 + $0x26d0] sm:$0xff]
    %v1949 = vld [vmem:[%s3 + $0x26d8] sm:$0xff]
    %v1950 = vld [vmem:[%s3 + $0x26e0] sm:$0xff]
    %v1951 = vld [vmem:[%s3 + $0x26e8] sm:$0xff]
    %v1952 = vld [vmem:[%s3 + $0x26f0] sm:$0xff]
    %v1953 = vld [vmem:[%s3 + $0x26f8] sm:$0xff]
    %v1954 = vld [vmem:[%s3 + $0x2700] sm:$0xff]
    %v1955 = vld [vmem:[%s3 + $0x2708] sm:$0xff]
    %v1956 = vld [vmem:[%s3 + $0x2710] sm:$0xff]
    %v1957 = vld [vmem:[%s3 + $0x2718] sm:$0xff]
    %v1958 = vld [vmem:[%s3 + $0x2720] sm:$0xff]
    %v1959 = vld [vmem:[%s3 + $0x2728] sm:$0xff]
    %v1960 = vld [vmem:[%s3 + $0x2730] sm:$0xff]
    %v1961 = vld [vmem:[%s3 + $0x2738] sm:$0xff]
    %v1962 = vld [vmem:[%s3 + $0x2740] sm:$0xff]
    %v1963 = vld [vmem:[%s3 + $0x2748] sm:$0xff]
    %v1964 = vld [vmem:[%s3 + $0x2750] sm:$0xff]
    %v1965 = vld [vmem:[%s3 + $0x2758] sm:$0xff]
    %v1966 = vld [vmem:[%s3 + $0x2760] sm:$0xff]
    %v1967 = vld [vmem:[%s3 + $0x2768] sm:$0xff]
    %v1968 = vld [vmem:[%s3 + $0x2770] sm:$0xff]
    %v1969 = vld [vmem:[%s3 + $0x2778] sm:$0xff]
    %v1970 = vld [vmem:[%s3 + $0x2780] sm:$0xff]
    %v1971 = vld [vmem:[%s3 + $0x2788] sm:$0xff]
    %v1972 = vld [vmem:[%s3 + $0x2790] sm:$0xff]
    %v1973 = vld [vmem:[%s3 + $0x2798] sm:$0xff]
    %v1974 = vld [vmem:[%s3 + $0x27a0] sm:$0xff]
    %v1975 = vld [vmem:[%s3 + $0x27a8] sm:$0xff]
    %v1976 = vld [vmem:[%s3 + $0x27b0] sm:$0xff]
    %v1977 = vld [vmem:[%s3 + $0x27b8] sm:$0xff]
    %v1978 = vld [vmem:[%s3 + $0x27c0] sm:$0xff]
    %v1979 = vld [vmem:[%s3 + $0x27c8] sm:$0xff]
    %v1980 = vld [vmem:[%s3 + $0x27d0] sm:$0xff]
    %v1981 = vld [vmem:[%s3 + $0x27d8] sm:$0xff]
    %v1982 = vld [vmem:[%s3 + $0x27e0] sm:$0xff]
    %v1983 = vld [vmem:[%s3 + $0x27e8] sm:$0xff]
    %v1984 = vld [vmem:[%s3 + $0x27f0] sm:$0xff]
    %v1985 = vld [vmem:[%s3 + $0x27f8] sm:$0xff]
    %v1986 = vld [vmem:[%s3 + $0x2800] sm:$0xff]
    %v1987 = vld [vmem:[%s3 + $0x2808] sm:$0xff]
    %v1988 = vld [vmem:[%s3 + $0x2810] sm:$0xff]
    %v1989 = vld [vmem:[%s3 + $0x2818] sm:$0xff]
    %v1990 = vld [vmem:[%s3 + $0x2820] sm:$0xff]
    %v1991 = vld [vmem:[%s3 + $0x2828] sm:$0xff]
    %v1992 = vld [vmem:[%s3 + $0x2830] sm:$0xff]
    %v1993 = vld [vmem:[%s3 + $0x2838] sm:$0xff]
    %v1994 = vld [vmem:[%s3 + $0x2840] sm:$0xff]
    %v1995 = vld [vmem:[%s3 + $0x2848] sm:$0xff]
    %v1996 = vld [vmem:[%s3 + $0x2850] sm:$0xff]
    %v1997 = vld [vmem:[%s3 + $0x2858] sm:$0xff]
    %v1998 = vld [vmem:[%s3 + $0x2860] sm:$0xff]
    %v1999 = vld [vmem:[%s3 + $0x2868] sm:$0xff]
    %v2000 = vld [vmem:[%s3 + $0x2870] sm:$0xff]
    %v2001 = vld [vmem:[%s3 + $0x2878] sm:$0xff]
    %v2002 = vld [vmem:[%s3 + $0x2880] sm:$0xff]
    %v2003 = vld [vmem:[%s3 + $0x2888] sm:$0xff]
    %v2004 = vld [vmem:[%s3 + $0x2890] sm:$0xff]
    %v2005 = vld [vmem:[%s3 + $0x2898] sm:$0xff]
    %v2006 = vld [vmem:[%s3 + $0x28a0] sm:$0xff]
    %v2007 = vld [vmem:[%s3 + $0x28a8] sm:$0xff]
    %v2008 = vld [vmem:[%s3 + $0x28b0] sm:$0xff]
    %v2009 = vld [vmem:[%s3 + $0x28b8] sm:$0xff]
    %v2010 = vld [vmem:[%s3 + $0x28c0] sm:$0xff]
    %v2011 = vld [vmem:[%s3 + $0x28c8] sm:$0xff]
    %v2012 = vld [vmem:[%s3 + $0x28d0] sm:$0xff]
    %v2013 = vld [vmem:[%s3 + $0x28d8] sm:$0xff]
    %v2014 = vld [vmem:[%s3 + $0x28e0] sm:$0xff]
    %v2015 = vld [vmem:[%s3 + $0x28e8] sm:$0xff]
    %v2016 = vld [vmem:[%s3 + $0x28f0] sm:$0xff]
    %v2017 = vld [vmem:[%s3 + $0x28f8] sm:$0xff]
    %v2018 = vld [vmem:[%s3 + $0x2900] sm:$0xff]
    %v2019 = vld [vmem:[%s3 + $0x2908] sm:$0xff]
    %v2020 = vld [vmem:[%s3 + $0x2910] sm:$0xff]
    %v2021 = vld [vmem:[%s3 + $0x2918] sm:$0xff]
    %v2022 = vld [vmem:[%s3 + $0x2920] sm:$0xff]
    %v2023 = vld [vmem:[%s3 + $0x2928] sm:$0xff]
    %v2024 = vld [vmem:[%s3 + $0x2930] sm:$0xff]
    %v2025 = vld [vmem:[%s3 + $0x2938] sm:$0xff]
    %v2026 = vld [vmem:[%s3 + $0x2940] sm:$0xff]
    %v2027 = vld [vmem:[%s3 + $0x2948] sm:$0xff]
    %v2028 = vld [vmem:[%s3 + $0x2950] sm:$0xff]
    %v2029 = vld [vmem:[%s3 + $0x2958] sm:$0xff]
    %v2030 = vld [vmem:[%s3 + $0x2960] sm:$0xff]
    %v2031 = vld [vmem:[%s3 + $0x2968] sm:$0xff]
    %v2032 = vld [vmem:[%s3 + $0x2970] sm:$0xff]
    %v2033 = vld [vmem:[%s3 + $0x2978] sm:$0xff]
    %v2034 = vld [vmem:[%s3 + $0x2980] sm:$0xff]
    %v2035 = vld [vmem:[%s3 + $0x2988] sm:$0xff]
    %v2036 = vld [vmem:[%s3 + $0x2990] sm:$0xff]
    %v2037 = vld [vmem:[%s3 + $0x2998] sm:$0xff]
    %v2038 = vld [vmem:[%s3 + $0x29a0] sm:$0xff]
    %v2039 = vld [vmem:[%s3 + $0x29a8] sm:$0xff]
    %v2040 = vld [vmem:[%s3 + $0x29b0] sm:$0xff]
    %v2041 = vld [vmem:[%s3 + $0x29b8] sm:$0xff]
    %v2042 = vld [vmem:[%s3 + $0x29c0] sm:$0xff]
    %v2043 = vld [vmem:[%s3 + $0x29c8] sm:$0xff]
    %v2044 = vld [vmem:[%s3 + $0x29d0] sm:$0xff]
    %v2045 = vld [vmem:[%s3 + $0x29d8] sm:$0xff]
    %v2046 = vld [vmem:[%s3 + $0x29e0] sm:$0xff]
    %v2047 = vld [vmem:[%s3 + $0x29e8] sm:$0xff]
    %v2048 = vld [vmem:[%s3 + $0x29f0] sm:$0xff]
    %v2049 = vld [vmem:[%s3 + $0x29f8] sm:$0xff]
    %v2050 = vld [vmem:[%s3 + $0x2a00] sm:$0xff]
    %v2051 = vld [vmem:[%s3 + $0x2a08] sm:$0xff]
    %v2052 = vld [vmem:[%s3 + $0x2a10] sm:$0xff]
    %v2053 = vld [vmem:[%s3 + $0x2a18] sm:$0xff]
    %v2054 = vld [vmem:[%s3 + $0x2a20] sm:$0xff]
    %v2055 = vld [vmem:[%s3 + $0x2a28] sm:$0xff]
    %v2056 = vld [vmem:[%s3 + $0x2a30] sm:$0xff]
    %v2057 = vld [vmem:[%s3 + $0x2a38] sm:$0xff]
    %v2058 = vld [vmem:[%s3 + $0x2a40] sm:$0xff]
    %v2059 = vld [vmem:[%s3 + $0x2a48] sm:$0xff]
    %v2060 = vld [vmem:[%s3 + $0x2a50] sm:$0xff]
    %v2061 = vld [vmem:[%s3 + $0x2a58] sm:$0xff]
    %v2062 = vld [vmem:[%s3 + $0x2a60] sm:$0xff]
    %v2063 = vld [vmem:[%s3 + $0x2a68] sm:$0xff]
    %v2064 = vld [vmem:[%s3 + $0x2a70] sm:$0xff]
    %v2065 = vld [vmem:[%s3 + $0x2a78] sm:$0xff]
    %v2066 = vld [vmem:[%s3 + $0x2a80] sm:$0xff]
    %v2067 = vld [vmem:[%s3 + $0x2a88] sm:$0xff]
    %v2068 = vld [vmem:[%s3 + $0x2a90] sm:$0xff]
    %v2069 = vld [vmem:[%s3 + $0x2a98] sm:$0xff]
    %v2070 = vld [vmem:[%s3 + $0x2aa0] sm:$0xff]
    %v2071 = vld [vmem:[%s3 + $0x2aa8] sm:$0xff]
    %v2072 = vld [vmem:[%s3 + $0x2ab0] sm:$0xff]
    %v2073 = vld [vmem:[%s3 + $0x2ab8] sm:$0xff]
    %v2074 = vld [vmem:[%s3 + $0x2ac0] sm:$0xff]
    %v2075 = vld [vmem:[%s3 + $0x2ac8] sm:$0xff]
    %v2076 = vld [vmem:[%s3 + $0x2ad0] sm:$0xff]
    %v2077 = vld [vmem:[%s3 + $0x2ad8] sm:$0xff]
    %v2078 = vld [vmem:[%s3 + $0x2ae0] sm:$0xff]
    %v2079 = vld [vmem:[%s3 + $0x2ae8] sm:$0xff]
    %v2080 = vld [vmem:[%s3 + $0x2af0] sm:$0xff]
    %v2081 = vld [vmem:[%s3 + $0x2af8] sm:$0xff]
    %v2082 = vld [vmem:[%s3 + $0x2b00] sm:$0xff]
    %v2083 = vld [vmem:[%s3 + $0x2b08] sm:$0xff]
    %v2084 = vld [vmem:[%s3 + $0x2b10] sm:$0xff]
    %v2085 = vld [vmem:[%s3 + $0x2b18] sm:$0xff]
    %v2086 = vld [vmem:[%s3 + $0x2b20] sm:$0xff]
    %v2087 = vld [vmem:[%s3 + $0x2b28] sm:$0xff]
    %v2088 = vld [vmem:[%s3 + $0x2b30] sm:$0xff]
    %v2089 = vld [vmem:[%s3 + $0x2b38] sm:$0xff]
    %v2090 = vld [vmem:[%s3 + $0x2b40] sm:$0xff]
    %v2091 = vld [vmem:[%s3 + $0x2b48] sm:$0xff]
    %v2092 = vld [vmem:[%s3 + $0x2b50] sm:$0xff]
    %v2093 = vld [vmem:[%s3 + $0x2b58] sm:$0xff]
    %v2094 = vld [vmem:[%s3 + $0x2b60] sm:$0xff]
    %v2095 = vld [vmem:[%s3 + $0x2b68] sm:$0xff]
    %v2096 = vld [vmem:[%s3 + $0x2b70] sm:$0xff]
    %v2097 = vld [vmem:[%s3 + $0x2b78] sm:$0xff]
    %v2098 = vld [vmem:[%s3 + $0x2b80] sm:$0xff]
    %v2099 = vld [vmem:[%s3 + $0x2b88] sm:$0xff]
    %v2100 = vld [vmem:[%s3 + $0x2b90] sm:$0xff]
    %v2101 = vld [vmem:[%s3 + $0x2b98] sm:$0xff]
    %v2102 = vld [vmem:[%s3 + $0x2ba0] sm:$0xff]
    %v2103 = vld [vmem:[%s3 + $0x2ba8] sm:$0xff]
    %v2104 = vld [vmem:[%s3 + $0x2bb0] sm:$0xff]
    %v2105 = vld [vmem:[%s3 + $0x2bb8] sm:$0xff]
    %v2106 = vld [vmem:[%s3 + $0x2bc0] sm:$0xff]
    %v2107 = vld [vmem:[%s3 + $0x2bc8] sm:$0xff]
    %v2108 = vld [vmem:[%s3 + $0x2bd0] sm:$0xff]
    %v2109 = vld [vmem:[%s3 + $0x2bd8] sm:$0xff]
    %v2110 = vld [vmem:[%s3 + $0x2be0] sm:$0xff]
    %v2111 = vld [vmem:[%s3 + $0x2be8] sm:$0xff]
    %v2112 = vld [vmem:[%s3 + $0x2bf0] sm:$0xff]
    %v2113 = vld [vmem:[%s3 + $0x2bf8] sm:$0xff]
    %v2114 = vld [vmem:[%s3 + $0x2c00] sm:$0xff]
    %v2115 = vld [vmem:[%s3 + $0x2c08] sm:$0xff]
    %v2116 = vld [vmem:[%s3 + $0x2c10] sm:$0xff]
    %v2117 = vld [vmem:[%s3 + $0x2c18] sm:$0xff]
    %v2118 = vld [vmem:[%s3 + $0x2c20] sm:$0xff]
    %v2119 = vld [vmem:[%s3 + $0x2c28] sm:$0xff]
    %v2120 = vld [vmem:[%s3 + $0x2c30] sm:$0xff]
    %v2121 = vld [vmem:[%s3 + $0x2c38] sm:$0xff]
    %v2122 = vld [vmem:[%s3 + $0x2c40] sm:$0xff]
    %v2123 = vld [vmem:[%s3 + $0x2c48] sm:$0xff]
    %v2124 = vld [vmem:[%s3 + $0x2c50] sm:$0xff]
    %v2125 = vld [vmem:[%s3 + $0x2c58] sm:$0xff]
    %v2126 = vld [vmem:[%s3 + $0x2c60] sm:$0xff]
    %v2127 = vld [vmem:[%s3 + $0x2c68] sm:$0xff]
    %v2128 = vld [vmem:[%s3 + $0x2c70] sm:$0xff]
    %v2129 = vld [vmem:[%s3 + $0x2c78] sm:$0xff]
    %v2130 = vld [vmem:[%s3 + $0x2c80] sm:$0xff]
    %v2131 = vld [vmem:[%s3 + $0x2c88] sm:$0xff]
    %v2132 = vld [vmem:[%s3 + $0x2c90] sm:$0xff]
    %v2133 = vld [vmem:[%s3 + $0x2c98] sm:$0xff]
    %v2134 = vld [vmem:[%s3 + $0x2ca0] sm:$0xff]
    %v2135 = vld [vmem:[%s3 + $0x2ca8] sm:$0xff]
    %v2136 = vld [vmem:[%s3 + $0x2cb0] sm:$0xff]
    %v2137 = vld [vmem:[%s3 + $0x2cb8] sm:$0xff]
    %v2138 = vld [vmem:[%s3 + $0x2cc0] sm:$0xff]
    %v2139 = vld [vmem:[%s3 + $0x2cc8] sm:$0xff]
    %v2140 = vld [vmem:[%s3 + $0x2cd0] sm:$0xff]
    %v2141 = vld [vmem:[%s3 + $0x2cd8] sm:$0xff]
    %v2142 = vld [vmem:[%s3 + $0x2ce0] sm:$0xff]
    %v2143 = vld [vmem:[%s3 + $0x2ce8] sm:$0xff]
    %v2144 = vld [vmem:[%s3 + $0x2cf0] sm:$0xff]
    %v2145 = vld [vmem:[%s3 + $0x2cf8] sm:$0xff]
    %v2146 = vld [vmem:[%s3 + $0x2d00] sm:$0xff]
    %v2147 = vld [vmem:[%s3 + $0x2d08] sm:$0xff]
    %v2148 = vld [vmem:[%s3 + $0x2d10] sm:$0xff]
    %v2149 = vld [vmem:[%s3 + $0x2d18] sm:$0xff]
    %v2150 = vld [vmem:[%s3 + $0x2d20] sm:$0xff]
    %v2151 = vld [vmem:[%s3 + $0x2d28] sm:$0xff]
    %v2152 = vld [vmem:[%s3 + $0x2d30] sm:$0xff]
    %v2153 = vld [vmem:[%s3 + $0x2d38] sm:$0xff]
    %v2154 = vld [vmem:[%s3 + $0x2d40] sm:$0xff]
    %v2155 = vld [vmem:[%s3 + $0x2d48] sm:$0xff]
    %v2156 = vld [vmem:[%s3 + $0x2d50] sm:$0xff]
    %v2157 = vld [vmem:[%s3 + $0x2d58] sm:$0xff]
    %v2158 = vld [vmem:[%s3 + $0x2d60] sm:$0xff]
    %v2159 = vld [vmem:[%s3 + $0x2d68] sm:$0xff]
    %v2160 = vld [vmem:[%s3 + $0x2d70] sm:$0xff]
    %v2161 = vld [vmem:[%s3 + $0x2d78] sm:$0xff]
    %v2162 = vld [vmem:[%s3 + $0x2d80] sm:$0xff]
    %v2163 = vld [vmem:[%s3 + $0x2d88] sm:$0xff]
    %v2164 = vld [vmem:[%s3 + $0x2d90] sm:$0xff]
    %v2165 = vld [vmem:[%s3 + $0x2d98] sm:$0xff]
    %v2166 = vld [vmem:[%s3 + $0x2da0] sm:$0xff]
    %v2167 = vld [vmem:[%s3 + $0x2da8] sm:$0xff]
    %v2168 = vld [vmem:[%s3 + $0x2db0] sm:$0xff]
    %v2169 = vld [vmem:[%s3 + $0x2db8] sm:$0xff]
    %v2170 = vld [vmem:[%s3 + $0x2dc0] sm:$0xff]
    %v2171 = vld [vmem:[%s3 + $0x2dc8] sm:$0xff]
    %v2172 = vld [vmem:[%s3 + $0x2dd0] sm:$0xff]
    %v2173 = vld [vmem:[%s3 + $0x2dd8] sm:$0xff]
    %v2174 = vld [vmem:[%s3 + $0x2de0] sm:$0xff]
    %v2175 = vld [vmem:[%s3 + $0x2de8] sm:$0xff]
    %v2176 = vld [vmem:[%s3 + $0x2df0] sm:$0xff]
    %v2177 = vld [vmem:[%s3 + $0x2df8] sm:$0xff]
    %v2178 = vld [vmem:[%s3 + $0x2e00] sm:$0xff]
    %v2179 = vld [vmem:[%s3 + $0x2e08] sm:$0xff]
    %v2180 = vld [vmem:[%s3 + $0x2e10] sm:$0xff]
    %v2181 = vld [vmem:[%s3 + $0x2e18] sm:$0xff]
    %v2182 = vld [vmem:[%s3 + $0x2e20] sm:$0xff]
    %v2183 = vld [vmem:[%s3 + $0x2e28] sm:$0xff]
    %v2184 = vld [vmem:[%s3 + $0x2e30] sm:$0xff]
    %v2185 = vld [vmem:[%s3 + $0x2e38] sm:$0xff]
    %v2186 = vld [vmem:[%s3 + $0x2e40] sm:$0xff]
    %v2187 = vld [vmem:[%s3 + $0x2e48] sm:$0xff]
    %v2188 = vld [vmem:[%s3 + $0x2e50] sm:$0xff]
    %v2189 = vld [vmem:[%s3 + $0x2e58] sm:$0xff]
    %v2190 = vld [vmem:[%s3 + $0x2e60] sm:$0xff]
    %v2191 = vld [vmem:[%s3 + $0x2e68] sm:$0xff]
    %v2192 = vld [vmem:[%s3 + $0x2e70] sm:$0xff]
    %v2193 = vld [vmem:[%s3 + $0x2e78] sm:$0xff]
    %v2194 = vld [vmem:[%s3 + $0x2e80] sm:$0xff]
    %v2195 = vld [vmem:[%s3 + $0x2e88] sm:$0xff]
    %v2196 = vld [vmem:[%s3 + $0x2e90] sm:$0xff]
    %v2197 = vld [vmem:[%s3 + $0x2e98] sm:$0xff]
    %v2198 = vld [vmem:[%s3 + $0x2ea0] sm:$0xff]
    %v2199 = vld [vmem:[%s3 + $0x2ea8] sm:$0xff]
    %v2200 = vld [vmem:[%s3 + $0x2eb0] sm:$0xff]
    %v2201 = vld [vmem:[%s3 + $0x2eb8] sm:$0xff]
    %v2202 = vld [vmem:[%s3 + $0x2ec0] sm:$0xff]
    %v2203 = vld [vmem:[%s3 + $0x2ec8] sm:$0xff]
    %v2204 = vld [vmem:[%s3 + $0x2ed0] sm:$0xff]
    %v2205 = vld [vmem:[%s3 + $0x2ed8] sm:$0xff]
    %v2206 = vld [vmem:[%s3 + $0x2ee0] sm:$0xff]
    %v2207 = vld [vmem:[%s3 + $0x2ee8] sm:$0xff]
    %v2208 = vld [vmem:[%s3 + $0x2ef0] sm:$0xff]
    %v2209 = vld [vmem:[%s3 + $0x2ef8] sm:$0xff]
    %v2210 = vld [vmem:[%s3 + $0x2f00] sm:$0xff]
    %v2211 = vld [vmem:[%s3 + $0x2f08] sm:$0xff]
    %v2212 = vld [vmem:[%s3 + $0x2f10] sm:$0xff]
    %v2213 = vld [vmem:[%s3 + $0x2f18] sm:$0xff]
    %v2214 = vld [vmem:[%s3 + $0x2f20] sm:$0xff]
    %v2215 = vld [vmem:[%s3 + $0x2f28] sm:$0xff]
    %v2216 = vld [vmem:[%s3 + $0x2f30] sm:$0xff]
    %v2217 = vld [vmem:[%s3 + $0x2f38] sm:$0xff]
    %v2218 = vld [vmem:[%s3 + $0x2f40] sm:$0xff]
    %v2219 = vld [vmem:[%s3 + $0x2f48] sm:$0xff]
    %v2220 = vld [vmem:[%s3 + $0x2f50] sm:$0xff]
    %v2221 = vld [vmem:[%s3 + $0x2f58] sm:$0xff]
    %v2222 = vld [vmem:[%s3 + $0x2f60] sm:$0xff]
    %v2223 = vld [vmem:[%s3 + $0x2f68] sm:$0xff]
    %v2224 = vld [vmem:[%s3 + $0x2f70] sm:$0xff]
    %v2225 = vld [vmem:[%s3 + $0x2f78] sm:$0xff]
    %v2226 = vld [vmem:[%s3 + $0x2f80] sm:$0xff]
    %v2227 = vld [vmem:[%s3 + $0x2f88] sm:$0xff]
    %v2228 = vld [vmem:[%s3 + $0x2f90] sm:$0xff]
    %v2229 = vld [vmem:[%s3 + $0x2f98] sm:$0xff]
    %v2230 = vld [vmem:[%s3 + $0x2fa0] sm:$0xff]
    %v2231 = vld [vmem:[%s3 + $0x2fa8] sm:$0xff]
    %v2232 = vld [vmem:[%s3 + $0x2fb0] sm:$0xff]
    %v2233 = vld [vmem:[%s3 + $0x2fb8] sm:$0xff]
    %v2234 = vld [vmem:[%s3 + $0x2fc0] sm:$0xff]
    %v2235 = vld [vmem:[%s3 + $0x2fc8] sm:$0xff]
    %v2236 = vld [vmem:[%s3 + $0x2fd0] sm:$0xff]
    %v2237 = vld [vmem:[%s3 + $0x2fd8] sm:$0xff]
    %v2238 = vld [vmem:[%s3 + $0x2fe0] sm:$0xff]
    %v2239 = vld [vmem:[%s3 + $0x2fe8] sm:$0xff]
    %v2240 = vld [vmem:[%s3 + $0x2ff0] sm:$0xff]
    %v2241 = vld [vmem:[%s3 + $0x2ff8] sm:$0xff]
    %v2242 = vld [vmem:[%s3 + $0x3000] sm:$0xff]
    %v2243 = vld [vmem:[%s3 + $0x3008] sm:$0xff]
    %v2244 = vld [vmem:[%s3 + $0x3010] sm:$0xff]
    %v2245 = vld [vmem:[%s3 + $0x3018] sm:$0xff]
    %v2246 = vld [vmem:[%s3 + $0x3020] sm:$0xff]
    %v2247 = vld [vmem:[%s3 + $0x3028] sm:$0xff]
    %v2248 = vld [vmem:[%s3 + $0x3030] sm:$0xff]
    %v2249 = vld [vmem:[%s3 + $0x3038] sm:$0xff]
    %v2250 = vld [vmem:[%s3 + $0x3040] sm:$0xff]
    %v2251 = vld [vmem:[%s3 + $0x3048] sm:$0xff]
    %v2252 = vld [vmem:[%s3 + $0x3050] sm:$0xff]
    %v2253 = vld [vmem:[%s3 + $0x3058] sm:$0xff]
    %v2254 = vld [vmem:[%s3 + $0x3060] sm:$0xff]
    %v2255 = vld [vmem:[%s3 + $0x3068] sm:$0xff]
    %v2256 = vld [vmem:[%s3 + $0x3070] sm:$0xff]
    %v2257 = vld [vmem:[%s3 + $0x3078] sm:$0xff]
    %v2258 = vld [vmem:[%s3 + $0x3080] sm:$0xff]
    %v2259 = vld [vmem:[%s3 + $0x3088] sm:$0xff]
    %v2260 = vld [vmem:[%s3 + $0x3090] sm:$0xff]
    %v2261 = vld [vmem:[%s3 + $0x3098] sm:$0xff]
    %v2262 = vld [vmem:[%s3 + $0x30a0] sm:$0xff]
    %v2263 = vld [vmem:[%s3 + $0x30a8] sm:$0xff]
    %v2264 = vld [vmem:[%s3 + $0x30b0] sm:$0xff]
    %v2265 = vld [vmem:[%s3 + $0x30b8] sm:$0xff]
    %v2266 = vld [vmem:[%s3 + $0x30c0] sm:$0xff]
    %v2267 = vld [vmem:[%s3 + $0x30c8] sm:$0xff]
    %v2268 = vld [vmem:[%s3 + $0x30d0] sm:$0xff]
    %v2269 = vld [vmem:[%s3 + $0x30d8] sm:$0xff]
    %v2270 = vld [vmem:[%s3 + $0x30e0] sm:$0xff]
    %v2271 = vld [vmem:[%s3 + $0x30e8] sm:$0xff]
    %v2272 = vld [vmem:[%s3 + $0x30f0] sm:$0xff]
    %v2273 = vld [vmem:[%s3 + $0x30f8] sm:$0xff]
    %v2274 = vld [vmem:[%s3 + $0x3100] sm:$0xff]
    %v2275 = vld [vmem:[%s3 + $0x3108] sm:$0xff]
    %v2276 = vld [vmem:[%s3 + $0x3110] sm:$0xff]
    %v2277 = vld [vmem:[%s3 + $0x3118] sm:$0xff]
    %v2278 = vld [vmem:[%s3 + $0x3120] sm:$0xff]
    %v2279 = vld [vmem:[%s3 + $0x3128] sm:$0xff]
    %v2280 = vld [vmem:[%s3 + $0x3130] sm:$0xff]
    %v2281 = vld [vmem:[%s3 + $0x3138] sm:$0xff]
    %v2282 = vld [vmem:[%s3 + $0x3140] sm:$0xff]
    %v2283 = vld [vmem:[%s3 + $0x3148] sm:$0xff]
    %v2284 = vld [vmem:[%s3 + $0x3150] sm:$0xff]
    %v2285 = vld [vmem:[%s3 + $0x3158] sm:$0xff]
    %v2286 = vld [vmem:[%s3 + $0x3160] sm:$0xff]
    %v2287 = vld [vmem:[%s3 + $0x3168] sm:$0xff]
    %v2288 = vld [vmem:[%s3 + $0x3170] sm:$0xff]
    %v2289 = vld [vmem:[%s3 + $0x3178] sm:$0xff]
    %v2290 = vld [vmem:[%s3 + $0x3180] sm:$0xff]
    %v2291 = vld [vmem:[%s3 + $0x3188] sm:$0xff]
    %v2292 = vld [vmem:[%s3 + $0x3190] sm:$0xff]
    %v2293 = vld [vmem:[%s3 + $0x3198] sm:$0xff]
    %v2294 = vld [vmem:[%s3 + $0x31a0] sm:$0xff]
    %v2295 = vld [vmem:[%s3 + $0x31a8] sm:$0xff]
    %v2296 = vld [vmem:[%s3 + $0x31b0] sm:$0xff]
    %v2297 = vld [vmem:[%s3 + $0x31b8] sm:$0xff]
    %v2298 = vld [vmem:[%s3 + $0x31c0] sm:$0xff]
    %v2299 = vld [vmem:[%s3 + $0x31c8] sm:$0xff]
    %v2300 = vld [vmem:[%s3 + $0x31d0] sm:$0xff]
    %v2301 = vld [vmem:[%s3 + $0x31d8] sm:$0xff]
    %v2302 = vld [vmem:[%s3 + $0x31e0] sm:$0xff]
    %v2303 = vld [vmem:[%s3 + $0x31e8] sm:$0xff]
    %v2304 = vld [vmem:[%s3 + $0x31f0] sm:$0xff]
    %v2305 = vld [vmem:[%s3 + $0x31f8] sm:$0xff]
    %v2306 = vld [vmem:[%s3 + $0x3200] sm:$0xff]
    %v2307 = vld [vmem:[%s3 + $0x3208] sm:$0xff]
    %v2308 = vld [vmem:[%s3 + $0x3210] sm:$0xff]
    %v2309 = vld [vmem:[%s3 + $0x3218] sm:$0xff]
    %v2310 = vld [vmem:[%s3 + $0x3220] sm:$0xff]
    %v2311 = vld [vmem:[%s3 + $0x3228] sm:$0xff]
    %v2312 = vld [vmem:[%s3 + $0x3230] sm:$0xff]
    %v2313 = vld [vmem:[%s3 + $0x3238] sm:$0xff]
    %v2314 = vld [vmem:[%s3 + $0x3240] sm:$0xff]
    %v2315 = vld [vmem:[%s3 + $0x3248] sm:$0xff]
    %v2316 = vld [vmem:[%s3 + $0x3250] sm:$0xff]
    %v2317 = vld [vmem:[%s3 + $0x3258] sm:$0xff]
    %v2318 = vld [vmem:[%s3 + $0x3260] sm:$0xff]
    %v2319 = vld [vmem:[%s3 + $0x3268] sm:$0xff]
    %v2320 = vld [vmem:[%s3 + $0x3270] sm:$0xff]
    %v2321 = vld [vmem:[%s3 + $0x3278] sm:$0xff]
    %v2322 = vld [vmem:[%s3 + $0x3280] sm:$0xff]
    %v2323 = vld [vmem:[%s3 + $0x3288] sm:$0xff]
    %v2324 = vld [vmem:[%s3 + $0x3290] sm:$0xff]
    %v2325 = vld [vmem:[%s3 + $0x3298] sm:$0xff]
    %v2326 = vld [vmem:[%s3 + $0x32a0] sm:$0xff]
    %v2327 = vld [vmem:[%s3 + $0x32a8] sm:$0xff]
    %v2328 = vld [vmem:[%s3 + $0x32b0] sm:$0xff]
    %v2329 = vld [vmem:[%s3 + $0x32b8] sm:$0xff]
    %v2330 = vld [vmem:[%s3 + $0x32c0] sm:$0xff]
    %v2331 = vld [vmem:[%s3 + $0x32c8] sm:$0xff]
    %v2332 = vld [vmem:[%s3 + $0x32d0] sm:$0xff]
    %v2333 = vld [vmem:[%s3 + $0x32d8] sm:$0xff]
    %v2334 = vld [vmem:[%s3 + $0x32e0] sm:$0xff]
    %v2335 = vld [vmem:[%s3 + $0x32e8] sm:$0xff]
    %v2336 = vld [vmem:[%s3 + $0x32f0] sm:$0xff]
    %v2337 = vld [vmem:[%s3 + $0x32f8] sm:$0xff]
    %v2338 = vld [vmem:[%s3 + $0x3300] sm:$0xff]
    %v2339 = vld [vmem:[%s3 + $0x3308] sm:$0xff]
    %v2340 = vld [vmem:[%s3 + $0x3310] sm:$0xff]
    %v2341 = vld [vmem:[%s3 + $0x3318] sm:$0xff]
    %v2342 = vld [vmem:[%s3 + $0x3320] sm:$0xff]
    %v2343 = vld [vmem:[%s3 + $0x3328] sm:$0xff]
    %v2344 = vld [vmem:[%s3 + $0x3330] sm:$0xff]
    %v2345 = vld [vmem:[%s3 + $0x3338] sm:$0xff]
    %v2346 = vld [vmem:[%s3 + $0x3340] sm:$0xff]
    %v2347 = vld [vmem:[%s3 + $0x3348] sm:$0xff]
    %v2348 = vld [vmem:[%s3 + $0x3350] sm:$0xff]
    %v2349 = vld [vmem:[%s3 + $0x3358] sm:$0xff]
    %v2350 = vld [vmem:[%s3 + $0x3360] sm:$0xff]
    %v2351 = vld [vmem:[%s3 + $0x3368] sm:$0xff]
    %v2352 = vld [vmem:[%s3 + $0x3370] sm:$0xff]
    %v2353 = vld [vmem:[%s3 + $0x3378] sm:$0xff]
    %v2354 = vld [vmem:[%s3 + $0x3380] sm:$0xff]
    %v2355 = vld [vmem:[%s3 + $0x3388] sm:$0xff]
    %v2356 = vld [vmem:[%s3 + $0x3390] sm:$0xff]
    %v2357 = vld [vmem:[%s3 + $0x3398] sm:$0xff]
    %v2358 = vld [vmem:[%s3 + $0x33a0] sm:$0xff]
    %v2359 = vld [vmem:[%s3 + $0x33a8] sm:$0xff]
    %v2360 = vld [vmem:[%s3 + $0x33b0] sm:$0xff]
    %v2361 = vld [vmem:[%s3 + $0x33b8] sm:$0xff]
    %v2362 = vld [vmem:[%s3 + $0x33c0] sm:$0xff]
    %v2363 = vld [vmem:[%s3 + $0x33c8] sm:$0xff]
    %v2364 = vld [vmem:[%s3 + $0x33d0] sm:$0xff]
    %v2365 = vld [vmem:[%s3 + $0x33d8] sm:$0xff]
    %v2366 = vld [vmem:[%s3 + $0x33e0] sm:$0xff]
    %v2367 = vld [vmem:[%s3 + $0x33e8] sm:$0xff]
    %v2368 = vld [vmem:[%s3 + $0x33f0] sm:$0xff]
    %v2369 = vld [vmem:[%s3 + $0x33f8] sm:$0xff]
    %v2370 = vld [vmem:[%s3 + $0x3400] sm:$0xff]
    %v2371 = vld [vmem:[%s3 + $0x3408] sm:$0xff]
    %v2372 = vld [vmem:[%s3 + $0x3410] sm:$0xff]
    %v2373 = vld [vmem:[%s3 + $0x3418] sm:$0xff]
    %v2374 = vld [vmem:[%s3 + $0x3420] sm:$0xff]
    %v2375 = vld [vmem:[%s3 + $0x3428] sm:$0xff]
    %v2376 = vld [vmem:[%s3 + $0x3430] sm:$0xff]
    %v2377 = vld [vmem:[%s3 + $0x3438] sm:$0xff]
    %v2378 = vld [vmem:[%s3 + $0x3440] sm:$0xff]
    %v2379 = vld [vmem:[%s3 + $0x3448] sm:$0xff]
    %v2380 = vld [vmem:[%s3 + $0x3450] sm:$0xff]
    %v2381 = vld [vmem:[%s3 + $0x3458] sm:$0xff]
    %v2382 = vld [vmem:[%s3 + $0x3460] sm:$0xff]
    %v2383 = vld [vmem:[%s3 + $0x3468] sm:$0xff]
    %v2384 = vld [vmem:[%s3 + $0x3470] sm:$0xff]
    %v2385 = vld [vmem:[%s3 + $0x3478] sm:$0xff]
    %v2386 = vld [vmem:[%s3 + $0x3480] sm:$0xff]
    %v2387 = vld [vmem:[%s3 + $0x3488] sm:$0xff]
    %v2388 = vld [vmem:[%s3 + $0x3490] sm:$0xff]
    %v2389 = vld [vmem:[%s3 + $0x3498] sm:$0xff]
    %v2390 = vld [vmem:[%s3 + $0x34a0] sm:$0xff]
    %v2391 = vld [vmem:[%s3 + $0x34a8] sm:$0xff]
    %v2392 = vld [vmem:[%s3 + $0x34b0] sm:$0xff]
    %v2393 = vld [vmem:[%s3 + $0x34b8] sm:$0xff]
    %v2394 = vld [vmem:[%s3 + $0x34c0] sm:$0xff]
    %v2395 = vld [vmem:[%s3 + $0x34c8] sm:$0xff]
    %v2396 = vld [vmem:[%s3 + $0x34d0] sm:$0xff]
    %v2397 = vld [vmem:[%s3 + $0x34d8] sm:$0xff]
    %v2398 = vld [vmem:[%s3 + $0x34e0] sm:$0xff]
    %v2399 = vld [vmem:[%s3 + $0x34e8] sm:$0xff]
    %v2400 = vld [vmem:[%s3 + $0x34f0] sm:$0xff]
    %v2401 = vld [vmem:[%s3 + $0x34f8] sm:$0xff]
    %v2402 = vld [vmem:[%s3 + $0x3500] sm:$0xff]
    %v2403 = vld [vmem:[%s3 + $0x3508] sm:$0xff]
    %v2404 = vld [vmem:[%s3 + $0x3510] sm:$0xff]
    %v2405 = vld [vmem:[%s3 + $0x3518] sm:$0xff]
    %v2406 = vld [vmem:[%s3 + $0x3520] sm:$0xff]
    %v2407 = vld [vmem:[%s3 + $0x3528] sm:$0xff]
    %v2408 = vld [vmem:[%s3 + $0x3530] sm:$0xff]
    %v2409 = vld [vmem:[%s3 + $0x3538] sm:$0xff]
    %v2410 = vld [vmem:[%s3 + $0x3540] sm:$0xff]
    %v2411 = vld [vmem:[%s3 + $0x3548] sm:$0xff]
    %v2412 = vld [vmem:[%s3 + $0x3550] sm:$0xff]
    %v2413 = vld [vmem:[%s3 + $0x3558] sm:$0xff]
    %v2414 = vld [vmem:[%s3 + $0x3560] sm:$0xff]
    %v2415 = vld [vmem:[%s3 + $0x3568] sm:$0xff]
    %v2416 = vld [vmem:[%s3 + $0x3570] sm:$0xff]
    %v2417 = vld [vmem:[%s3 + $0x3578] sm:$0xff]
    %v2418 = vld [vmem:[%s3 + $0x3580] sm:$0xff]
    %v2419 = vld [vmem:[%s3 + $0x3588] sm:$0xff]
    %v2420 = vld [vmem:[%s3 + $0x3590] sm:$0xff]
    %v2421 = vld [vmem:[%s3 + $0x3598] sm:$0xff]
    %v2422 = vld [vmem:[%s3 + $0x35a0] sm:$0xff]
    %v2423 = vld [vmem:[%s3 + $0x35a8] sm:$0xff]
    %v2424 = vld [vmem:[%s3 + $0x35b0] sm:$0xff]
    %v2425 = vld [vmem:[%s3 + $0x35b8] sm:$0xff]
    %v2426 = vld [vmem:[%s3 + $0x35c0] sm:$0xff]
    %v2427 = vld [vmem:[%s3 + $0x35c8] sm:$0xff]
    %v2428 = vld [vmem:[%s3 + $0x35d0] sm:$0xff]
    %v2429 = vld [vmem:[%s3 + $0x35d8] sm:$0xff]
    %v2430 = vld [vmem:[%s3 + $0x35e0] sm:$0xff]
    %v2431 = vld [vmem:[%s3 + $0x35e8] sm:$0xff]
    %v2432 = vld [vmem:[%s3 + $0x35f0] sm:$0xff]
    %v2433 = vld [vmem:[%s3 + $0x35f8] sm:$0xff]
    %v2434 = vld [vmem:[%s3 + $0x3600] sm:$0xff]
    %v2435 = vld [vmem:[%s3 + $0x3608] sm:$0xff]
    %v2436 = vld [vmem:[%s3 + $0x3610] sm:$0xff]
    %v2437 = vld [vmem:[%s3 + $0x3618] sm:$0xff]
    %v2438 = vld [vmem:[%s3 + $0x3620] sm:$0xff]
    %v2439 = vld [vmem:[%s3 + $0x3628] sm:$0xff]
    %v2440 = vld [vmem:[%s3 + $0x3630] sm:$0xff]
    %v2441 = vld [vmem:[%s3 + $0x3638] sm:$0xff]
    %v2442 = vld [vmem:[%s3 + $0x3640] sm:$0xff]
    %v2443 = vld [vmem:[%s3 + $0x3648] sm:$0xff]
    %v2444 = vld [vmem:[%s3 + $0x3650] sm:$0xff]
    %v2445 = vld [vmem:[%s3 + $0x3658] sm:$0xff]
    %v2446 = vld [vmem:[%s3 + $0x3660] sm:$0xff]
    %v2447 = vld [vmem:[%s3 + $0x3668] sm:$0xff]
    %v2448 = vld [vmem:[%s3 + $0x3670] sm:$0xff]
    %v2449 = vld [vmem:[%s3 + $0x3678] sm:$0xff]
    %v2450 = vld [vmem:[%s3 + $0x3680] sm:$0xff]
    %v2451 = vld [vmem:[%s3 + $0x3688] sm:$0xff]
    %v2452 = vld [vmem:[%s3 + $0x3690] sm:$0xff]
    %v2453 = vld [vmem:[%s3 + $0x3698] sm:$0xff]
    %v2454 = vld [vmem:[%s3 + $0x36a0] sm:$0xff]
    %v2455 = vld [vmem:[%s3 + $0x36a8] sm:$0xff]
    %v2456 = vld [vmem:[%s3 + $0x36b0] sm:$0xff]
    %v2457 = vld [vmem:[%s3 + $0x36b8] sm:$0xff]
    %v2458 = vld [vmem:[%s3 + $0x36c0] sm:$0xff]
    %v2459 = vld [vmem:[%s3 + $0x36c8] sm:$0xff]
    %v2460 = vld [vmem:[%s3 + $0x36d0] sm:$0xff]
    %v2461 = vld [vmem:[%s3 + $0x36d8] sm:$0xff]
    %v2462 = vld [vmem:[%s3 + $0x36e0] sm:$0xff]
    %v2463 = vld [vmem:[%s3 + $0x36e8] sm:$0xff]
    %v2464 = vld [vmem:[%s3 + $0x36f0] sm:$0xff]
    %v2465 = vld [vmem:[%s3 + $0x36f8] sm:$0xff]
    %v2466 = vld [vmem:[%s3 + $0x3700] sm:$0xff]
    %v2467 = vld [vmem:[%s3 + $0x3708] sm:$0xff]
    %v2468 = vld [vmem:[%s3 + $0x3710] sm:$0xff]
    %v2469 = vld [vmem:[%s3 + $0x3718] sm:$0xff]
    %v2470 = vld [vmem:[%s3 + $0x3720] sm:$0xff]
    %v2471 = vld [vmem:[%s3 + $0x3728] sm:$0xff]
    %v2472 = vld [vmem:[%s3 + $0x3730] sm:$0xff]
    %v2473 = vld [vmem:[%s3 + $0x3738] sm:$0xff]
    %v2474 = vld [vmem:[%s3 + $0x3740] sm:$0xff]
    %v2475 = vld [vmem:[%s3 + $0x3748] sm:$0xff]
    %v2476 = vld [vmem:[%s3 + $0x3750] sm:$0xff]
    %v2477 = vld [vmem:[%s3 + $0x3758] sm:$0xff]
    %v2478 = vld [vmem:[%s3 + $0x3760] sm:$0xff]
    %v2479 = vld [vmem:[%s3 + $0x3768] sm:$0xff]
    %v2480 = vld [vmem:[%s3 + $0x3770] sm:$0xff]
    %v2481 = vld [vmem:[%s3 + $0x3778] sm:$0xff]
    %v2482 = vld [vmem:[%s3 + $0x3780] sm:$0xff]
    %v2483 = vld [vmem:[%s3 + $0x3788] sm:$0xff]
    %v2484 = vld [vmem:[%s3 + $0x3790] sm:$0xff]
    %v2485 = vld [vmem:[%s3 + $0x3798] sm:$0xff]
    %v2486 = vld [vmem:[%s3 + $0x37a0] sm:$0xff]
    %v2487 = vld [vmem:[%s3 + $0x37a8] sm:$0xff]
    %v2488 = vld [vmem:[%s3 + $0x37b0] sm:$0xff]
    %v2489 = vld [vmem:[%s3 + $0x37b8] sm:$0xff]
    %v2490 = vld [vmem:[%s3 + $0x37c0] sm:$0xff]
    %v2491 = vld [vmem:[%s3 + $0x37c8] sm:$0xff]
    %v2492 = vld [vmem:[%s3 + $0x37d0] sm:$0xff]
    %v2493 = vld [vmem:[%s3 + $0x37d8] sm:$0xff]
    %v2494 = vld [vmem:[%s3 + $0x37e0] sm:$0xff]
    %v2495 = vld [vmem:[%s3 + $0x37e8] sm:$0xff]
    %v2496 = vld [vmem:[%s3 + $0x37f0] sm:$0xff]
    %v2497 = vld [vmem:[%s3 + $0x37f8] sm:$0xff]
    %v2498 = vld [vmem:[%s3 + $0x3800] sm:$0xff]
    %v2499 = vld [vmem:[%s3 + $0x3808] sm:$0xff]
    %v2500 = vld [vmem:[%s3 + $0x3810] sm:$0xff]
    %v2501 = vld [vmem:[%s3 + $0x3818] sm:$0xff]
    %v2502 = vld [vmem:[%s3 + $0x3820] sm:$0xff]
    %v2503 = vld [vmem:[%s3 + $0x3828] sm:$0xff]
    %v2504 = vld [vmem:[%s3 + $0x3830] sm:$0xff]
    %v2505 = vld [vmem:[%s3 + $0x3838] sm:$0xff]
    %v2506 = vld [vmem:[%s3 + $0x3840] sm:$0xff]
    %v2507 = vld [vmem:[%s3 + $0x3848] sm:$0xff]
    %v2508 = vld [vmem:[%s3 + $0x3850] sm:$0xff]
    %v2509 = vld [vmem:[%s3 + $0x3858] sm:$0xff]
    %v2510 = vld [vmem:[%s3 + $0x3860] sm:$0xff]
    %v2511 = vld [vmem:[%s3 + $0x3868] sm:$0xff]
    %v2512 = vld [vmem:[%s3 + $0x3870] sm:$0xff]
    %v2513 = vld [vmem:[%s3 + $0x3878] sm:$0xff]
    %v2514 = vld [vmem:[%s3 + $0x3880] sm:$0xff]
    %v2515 = vld [vmem:[%s3 + $0x3888] sm:$0xff]
    %v2516 = vld [vmem:[%s3 + $0x3890] sm:$0xff]
    %v2517 = vld [vmem:[%s3 + $0x3898] sm:$0xff]
    %v2518 = vld [vmem:[%s3 + $0x38a0] sm:$0xff]
    %v2519 = vld [vmem:[%s3 + $0x38a8] sm:$0xff]
    %v2520 = vld [vmem:[%s3 + $0x38b0] sm:$0xff]
    %v2521 = vld [vmem:[%s3 + $0x38b8] sm:$0xff]
    %v2522 = vld [vmem:[%s3 + $0x38c0] sm:$0xff]
    %v2523 = vld [vmem:[%s3 + $0x38c8] sm:$0xff]
    %v2524 = vld [vmem:[%s3 + $0x38d0] sm:$0xff]
    %v2525 = vld [vmem:[%s3 + $0x38d8] sm:$0xff]
    %v2526 = vld [vmem:[%s3 + $0x38e0] sm:$0xff]
    %v2527 = vld [vmem:[%s3 + $0x38e8] sm:$0xff]
    %v2528 = vld [vmem:[%s3 + $0x38f0] sm:$0xff]
    %v2529 = vld [vmem:[%s3 + $0x38f8] sm:$0xff]
    %v2530 = vld [vmem:[%s3 + $0x3900] sm:$0xff]
    %v2531 = vld [vmem:[%s3 + $0x3908] sm:$0xff]
    %v2532 = vld [vmem:[%s3 + $0x3910] sm:$0xff]
    %v2533 = vld [vmem:[%s3 + $0x3918] sm:$0xff]
    %v2534 = vld [vmem:[%s3 + $0x3920] sm:$0xff]
    %v2535 = vld [vmem:[%s3 + $0x3928] sm:$0xff]
    %v2536 = vld [vmem:[%s3 + $0x3930] sm:$0xff]
    %v2537 = vld [vmem:[%s3 + $0x3938] sm:$0xff]
    %v2538 = vld [vmem:[%s3 + $0x3940] sm:$0xff]
    %v2539 = vld [vmem:[%s3 + $0x3948] sm:$0xff]
    %v2540 = vld [vmem:[%s3 + $0x3950] sm:$0xff]
    %v2541 = vld [vmem:[%s3 + $0x3958] sm:$0xff]
    %v2542 = vld [vmem:[%s3 + $0x3960] sm:$0xff]
    %v2543 = vld [vmem:[%s3 + $0x3968] sm:$0xff]
    %v2544 = vld [vmem:[%s3 + $0x3970] sm:$0xff]
    %v2545 = vld [vmem:[%s3 + $0x3978] sm:$0xff]
    %v2546 = vld [vmem:[%s3 + $0x3980] sm:$0xff]
    %v2547 = vld [vmem:[%s3 + $0x3988] sm:$0xff]
    %v2548 = vld [vmem:[%s3 + $0x3990] sm:$0xff]
    %v2549 = vld [vmem:[%s3 + $0x3998] sm:$0xff]
    %v2550 = vld [vmem:[%s3 + $0x39a0] sm:$0xff]
    %v2551 = vld [vmem:[%s3 + $0x39a8] sm:$0xff]
    %v2552 = vld [vmem:[%s3 + $0x39b0] sm:$0xff]
    %v2553 = vld [vmem:[%s3 + $0x39b8] sm:$0xff]
    %v2554 = vld [vmem:[%s3 + $0x39c0] sm:$0xff]
    %v2555 = vld [vmem:[%s3 + $0x39c8] sm:$0xff]
    %v2556 = vld [vmem:[%s3 + $0x39d0] sm:$0xff]
    %v2557 = vld [vmem:[%s3 + $0x39d8] sm:$0xff]
    %v2558 = vld [vmem:[%s3 + $0x39e0] sm:$0xff]
    %v2559 = vld [vmem:[%s3 + $0x39e8] sm:$0xff]
    %v2560 = vld [vmem:[%s3 + $0x39f0] sm:$0xff]
    %v2561 = vld [vmem:[%s3 + $0x39f8] sm:$0xff]
    %v2562 = vld [vmem:[%s3 + $0x3a00] sm:$0xff]
    %v2563 = vld [vmem:[%s3 + $0x3a08] sm:$0xff]
    %v2564 = vld [vmem:[%s3 + $0x3a10] sm:$0xff]
    %v2565 = vld [vmem:[%s3 + $0x3a18] sm:$0xff]
    %v2566 = vld [vmem:[%s3 + $0x3a20] sm:$0xff]
    %v2567 = vld [vmem:[%s3 + $0x3a28] sm:$0xff]
    %v2568 = vld [vmem:[%s3 + $0x3a30] sm:$0xff]
    %v2569 = vld [vmem:[%s3 + $0x3a38] sm:$0xff]
    %v2570 = vld [vmem:[%s3 + $0x3a40] sm:$0xff]
    %v2571 = vld [vmem:[%s3 + $0x3a48] sm:$0xff]
    %v2572 = vld [vmem:[%s3 + $0x3a50] sm:$0xff]
    %v2573 = vld [vmem:[%s3 + $0x3a58] sm:$0xff]
    %v2574 = vld [vmem:[%s3 + $0x3a60] sm:$0xff]
    %v2575 = vld [vmem:[%s3 + $0x3a68] sm:$0xff]
    %v2576 = vld [vmem:[%s3 + $0x3a70] sm:$0xff]
    %v2577 = vld [vmem:[%s3 + $0x3a78] sm:$0xff]
    %v2578 = vld [vmem:[%s3 + $0x3a80] sm:$0xff]
    %v2579 = vld [vmem:[%s3 + $0x3a88] sm:$0xff]
    %v2580 = vld [vmem:[%s3 + $0x3a90] sm:$0xff]
    %v2581 = vld [vmem:[%s3 + $0x3a98] sm:$0xff]
    %v2582 = vld [vmem:[%s3 + $0x3aa0] sm:$0xff]
    %v2583 = vld [vmem:[%s3 + $0x3aa8] sm:$0xff]
    %v2584 = vld [vmem:[%s3 + $0x3ab0] sm:$0xff]
    %v2585 = vld [vmem:[%s3 + $0x3ab8] sm:$0xff]
    %v2586 = vld [vmem:[%s3 + $0x3ac0] sm:$0xff]
    %v2587 = vld [vmem:[%s3 + $0x3ac8] sm:$0xff]
    %v2588 = vld [vmem:[%s3 + $0x3ad0] sm:$0xff]
    %v2589 = vld [vmem:[%s3 + $0x3ad8] sm:$0xff]
    %v2590 = vld [vmem:[%s3 + $0x3ae0] sm:$0xff]
    %v2591 = vld [vmem:[%s3 + $0x3ae8] sm:$0xff]
    %v2592 = vld [vmem:[%s3 + $0x3af0] sm:$0xff]
    %v2593 = vld [vmem:[%s3 + $0x3af8] sm:$0xff]
    %v2594 = vld [vmem:[%s3 + $0x3b00] sm:$0xff]
    %v2595 = vld [vmem:[%s3 + $0x3b08] sm:$0xff]
    %v2596 = vld [vmem:[%s3 + $0x3b10] sm:$0xff]
    %v2597 = vld [vmem:[%s3 + $0x3b18] sm:$0xff]
    %v2598 = vld [vmem:[%s3 + $0x3b20] sm:$0xff]
    %v2599 = vld [vmem:[%s3 + $0x3b28] sm:$0xff]
    %v2600 = vld [vmem:[%s3 + $0x3b30] sm:$0xff]
    %v2601 = vld [vmem:[%s3 + $0x3b38] sm:$0xff]
    %v2602 = vld [vmem:[%s3 + $0x3b40] sm:$0xff]
    %v2603 = vld [vmem:[%s3 + $0x3b48] sm:$0xff]
    %v2604 = vld [vmem:[%s3 + $0x3b50] sm:$0xff]
    %v2605 = vld [vmem:[%s3 + $0x3b58] sm:$0xff]
    %v2606 = vld [vmem:[%s3 + $0x3b60] sm:$0xff]
    %v2607 = vld [vmem:[%s3 + $0x3b68] sm:$0xff]
    %v2608 = vld [vmem:[%s3 + $0x3b70] sm:$0xff]
    %v2609 = vld [vmem:[%s3 + $0x3b78] sm:$0xff]
    %v2610 = vld [vmem:[%s3 + $0x3b80] sm:$0xff]
    %v2611 = vld [vmem:[%s3 + $0x3b88] sm:$0xff]
    %v2612 = vld [vmem:[%s3 + $0x3b90] sm:$0xff]
    %v2613 = vld [vmem:[%s3 + $0x3b98] sm:$0xff]
    %v2614 = vld [vmem:[%s3 + $0x3ba0] sm:$0xff]
    %v2615 = vld [vmem:[%s3 + $0x3ba8] sm:$0xff]
    %v2616 = vld [vmem:[%s3 + $0x3bb0] sm:$0xff]
    %v2617 = vld [vmem:[%s3 + $0x3bb8] sm:$0xff]
    %v2618 = vld [vmem:[%s3 + $0x3bc0] sm:$0xff]
    %v2619 = vld [vmem:[%s3 + $0x3bc8] sm:$0xff]
    %v2620 = vld [vmem:[%s3 + $0x3bd0] sm:$0xff]
    %v2621 = vld [vmem:[%s3 + $0x3bd8] sm:$0xff]
    %v2622 = vld [vmem:[%s3 + $0x3be0] sm:$0xff]
    %v2623 = vld [vmem:[%s3 + $0x3be8] sm:$0xff]
    %v2624 = vld [vmem:[%s3 + $0x3bf0] sm:$0xff]
    %v2625 = vld [vmem:[%s3 + $0x3bf8] sm:$0xff]
    %v2626 = vld [vmem:[%s3 + $0x3c00] sm:$0xff]
    %v2627 = vld [vmem:[%s3 + $0x3c08] sm:$0xff]
    %v2628 = vld [vmem:[%s3 + $0x3c10] sm:$0xff]
    %v2629 = vld [vmem:[%s3 + $0x3c18] sm:$0xff]
    %v2630 = vld [vmem:[%s3 + $0x3c20] sm:$0xff]
    %v2631 = vld [vmem:[%s3 + $0x3c28] sm:$0xff]
    %v2632 = vld [vmem:[%s3 + $0x3c30] sm:$0xff]
    %v2633 = vld [vmem:[%s3 + $0x3c38] sm:$0xff]
    %v2634 = vld [vmem:[%s3 + $0x3c40] sm:$0xff]
    %v2635 = vld [vmem:[%s3 + $0x3c48] sm:$0xff]
    %v2636 = vld [vmem:[%s3 + $0x3c50] sm:$0xff]
    %v2637 = vld [vmem:[%s3 + $0x3c58] sm:$0xff]
    %v2638 = vld [vmem:[%s3 + $0x3c60] sm:$0xff]
    %v2639 = vld [vmem:[%s3 + $0x3c68] sm:$0xff]
    %v2640 = vld [vmem:[%s3 + $0x3c70] sm:$0xff]
    %v2641 = vld [vmem:[%s3 + $0x3c78] sm:$0xff]
    %v2642 = vld [vmem:[%s3 + $0x3c80] sm:$0xff]
    %v2643 = vld [vmem:[%s3 + $0x3c88] sm:$0xff]
    %v2644 = vld [vmem:[%s3 + $0x3c90] sm:$0xff]
    %v2645 = vld [vmem:[%s3 + $0x3c98] sm:$0xff]
    %v2646 = vld [vmem:[%s3 + $0x3ca0] sm:$0xff]
    %v2647 = vld [vmem:[%s3 + $0x3ca8] sm:$0xff]
    %v2648 = vld [vmem:[%s3 + $0x3cb0] sm:$0xff]
    %v2649 = vld [vmem:[%s3 + $0x3cb8] sm:$0xff]
    %v2650 = vld [vmem:[%s3 + $0x3cc0] sm:$0xff]
    %v2651 = vld [vmem:[%s3 + $0x3cc8] sm:$0xff]
    %v2652 = vld [vmem:[%s3 + $0x3cd0] sm:$0xff]
    %v2653 = vld [vmem:[%s3 + $0x3cd8] sm:$0xff]
    %v2654 = vld [vmem:[%s3 + $0x3ce0] sm:$0xff]
    %v2655 = vld [vmem:[%s3 + $0x3ce8] sm:$0xff]
    %v2656 = vld [vmem:[%s3 + $0x3cf0] sm:$0xff]
    %v2657 = vld [vmem:[%s3 + $0x3cf8] sm:$0xff]
    %v2658 = vld [vmem:[%s3 + $0x3d00] sm:$0xff]
    %v2659 = vld [vmem:[%s3 + $0x3d08] sm:$0xff]
    %v2660 = vld [vmem:[%s3 + $0x3d10] sm:$0xff]
    %v2661 = vld [vmem:[%s3 + $0x3d18] sm:$0xff]
    %v2662 = vld [vmem:[%s3 + $0x3d20] sm:$0xff]
    %v2663 = vld [vmem:[%s3 + $0x3d28] sm:$0xff]
    %v2664 = vld [vmem:[%s3 + $0x3d30] sm:$0xff]
    %v2665 = vld [vmem:[%s3 + $0x3d38] sm:$0xff]
    %v2666 = vld [vmem:[%s3 + $0x3d40] sm:$0xff]
    %v2667 = vld [vmem:[%s3 + $0x3d48] sm:$0xff]
    %v2668 = vld [vmem:[%s3 + $0x3d50] sm:$0xff]
    %v2669 = vld [vmem:[%s3 + $0x3d58] sm:$0xff]
    %v2670 = vld [vmem:[%s3 + $0x3d60] sm:$0xff]
    %v2671 = vld [vmem:[%s3 + $0x3d68] sm:$0xff]
    %v2672 = vld [vmem:[%s3 + $0x3d70] sm:$0xff]
    %v2673 = vld [vmem:[%s3 + $0x3d78] sm:$0xff]
    %v2674 = vld [vmem:[%s3 + $0x3d80] sm:$0xff]
    %v2675 = vld [vmem:[%s3 + $0x3d88] sm:$0xff]
    %v2676 = vld [vmem:[%s3 + $0x3d90] sm:$0xff]
    %v2677 = vld [vmem:[%s3 + $0x3d98] sm:$0xff]
    %v2678 = vld [vmem:[%s3 + $0x3da0] sm:$0xff]
    %v2679 = vld [vmem:[%s3 + $0x3da8] sm:$0xff]
    %v2680 = vld [vmem:[%s3 + $0x3db0] sm:$0xff]
    %v2681 = vld [vmem:[%s3 + $0x3db8] sm:$0xff]
    %v2682 = vld [vmem:[%s3 + $0x3dc0] sm:$0xff]
    %v2683 = vld [vmem:[%s3 + $0x3dc8] sm:$0xff]
    %v2684 = vld [vmem:[%s3 + $0x3dd0] sm:$0xff]
    %v2685 = vld [vmem:[%s3 + $0x3dd8] sm:$0xff]
    %v2686 = vld [vmem:[%s3 + $0x3de0] sm:$0xff]
    %v2687 = vld [vmem:[%s3 + $0x3de8] sm:$0xff]
    %v2688 = vld [vmem:[%s3 + $0x3df0] sm:$0xff]
    %v2689 = vld [vmem:[%s3 + $0x3df8] sm:$0xff]
    %v2690 = vld [vmem:[%s3 + $0x3e00] sm:$0xff]
    %v2691 = vld [vmem:[%s3 + $0x3e08] sm:$0xff]
    %v2692 = vld [vmem:[%s3 + $0x3e10] sm:$0xff]
    %v2693 = vld [vmem:[%s3 + $0x3e18] sm:$0xff]
    %v2694 = vld [vmem:[%s3 + $0x3e20] sm:$0xff]
    %v2695 = vld [vmem:[%s3 + $0x3e28] sm:$0xff]
    %v2696 = vld [vmem:[%s3 + $0x3e30] sm:$0xff]
    %v2697 = vld [vmem:[%s3 + $0x3e38] sm:$0xff]
    %v2698 = vld [vmem:[%s3 + $0x3e40] sm:$0xff]
    %v2699 = vld [vmem:[%s3 + $0x3e48] sm:$0xff]
    %v2700 = vld [vmem:[%s3 + $0x3e50] sm:$0xff]
    %v2701 = vld [vmem:[%s3 + $0x3e58] sm:$0xff]
    %v2702 = vld [vmem:[%s3 + $0x3e60] sm:$0xff]
    %v2703 = vld [vmem:[%s3 + $0x3e68] sm:$0xff]
    %v2704 = vld [vmem:[%s3 + $0x3e70] sm:$0xff]
    %v2705 = vld [vmem:[%s3 + $0x3e78] sm:$0xff]
    %v2706 = vld [vmem:[%s3 + $0x3e80] sm:$0xff]
    %v2707 = vld [vmem:[%s3 + $0x3e88] sm:$0xff]
    %v2708 = vld [vmem:[%s3 + $0x3e90] sm:$0xff]
    %v2709 = vld [vmem:[%s3 + $0x3e98] sm:$0xff]
    %v2710 = vld [vmem:[%s3 + $0x3ea0] sm:$0xff]
    %v2711 = vld [vmem:[%s3 + $0x3ea8] sm:$0xff]
    %v2712 = vld [vmem:[%s3 + $0x3eb0] sm:$0xff]
    %v2713 = vld [vmem:[%s3 + $0x3eb8] sm:$0xff]
    %v2714 = vld [vmem:[%s3 + $0x3ec0] sm:$0xff]
    %v2715 = vld [vmem:[%s3 + $0x3ec8] sm:$0xff]
    %v2716 = vld [vmem:[%s3 + $0x3ed0] sm:$0xff]
    %v2717 = vld [vmem:[%s3 + $0x3ed8] sm:$0xff]
    %v2718 = vld [vmem:[%s3 + $0x3ee0] sm:$0xff]
    %v2719 = vld [vmem:[%s3 + $0x3ee8] sm:$0xff]
    %v2720 = vld [vmem:[%s3 + $0x3ef0] sm:$0xff]
    %v2721 = vld [vmem:[%s3 + $0x3ef8] sm:$0xff]
    %v2722 = vld [vmem:[%s3 + $0x3f00] sm:$0xff]
    %v2723 = vld [vmem:[%s3 + $0x3f08] sm:$0xff]
    %v2724 = vld [vmem:[%s3 + $0x3f10] sm:$0xff]
    %v2725 = vld [vmem:[%s3 + $0x3f18] sm:$0xff]
    %v2726 = vld [vmem:[%s3 + $0x3f20] sm:$0xff]
    %v2727 = vld [vmem:[%s3 + $0x3f28] sm:$0xff]
    %v2728 = vld [vmem:[%s3 + $0x3f30] sm:$0xff]
    %v2729 = vld [vmem:[%s3 + $0x3f38] sm:$0xff]
    %v2730 = vld [vmem:[%s3 + $0x3f40] sm:$0xff]
    %v2731 = vld [vmem:[%s3 + $0x3f48] sm:$0xff]
    %v2732 = vld [vmem:[%s3 + $0x3f50] sm:$0xff]
    %v2733 = vld [vmem:[%s3 + $0x3f58] sm:$0xff]
    %v2734 = vld [vmem:[%s3 + $0x3f60] sm:$0xff]
    %v2735 = vld [vmem:[%s3 + $0x3f68] sm:$0xff]
    %v2736 = vld [vmem:[%s3 + $0x3f70] sm:$0xff]
    %v2737 = vld [vmem:[%s3 + $0x3f78] sm:$0xff]
    %v2738 = vld [vmem:[%s3 + $0x3f80] sm:$0xff]
    %v2739 = vld [vmem:[%s3 + $0x3f88] sm:$0xff]
    %v2740 = vld [vmem:[%s3 + $0x3f90] sm:$0xff]
    %v2741 = vld [vmem:[%s3 + $0x3f98] sm:$0xff]
    %v2742 = vld [vmem:[%s3 + $0x3fa0] sm:$0xff]
    %v2743 = vld [vmem:[%s3 + $0x3fa8] sm:$0xff]
    %v2744 = vld [vmem:[%s3 + $0x3fb0] sm:$0xff]
    %v2745 = vld [vmem:[%s3 + $0x3fb8] sm:$0xff]
    %v2746 = vld [vmem:[%s3 + $0x3fc0] sm:$0xff]
    %v2747 = vld [vmem:[%s3 + $0x3fc8] sm:$0xff]
    %v2748 = vld [vmem:[%s3 + $0x3fd0] sm:$0xff]
    %v2749 = vld [vmem:[%s3 + $0x3fd8] sm:$0xff]
    %v2750 = vld [vmem:[%s3 + $0x3fe0] sm:$0xff]
    %v2751 = vld [vmem:[%s3 + $0x3fe8] sm:$0xff]
    %v2752 = vld [vmem:[%s3 + $0x3ff0] sm:$0xff]
    %v2753 = vld [vmem:[%s3 + $0x3ff8] sm:$0xff]
    %v2754 = vld [vmem:[%s4] sm:$0xf]
    %v2756 = vlaneseq
    %v2757 = vshrl.u32 %v2756, 7
    %v2758 = vsub.s32 0, %v2757
    %v2759 = vrot.slane %v2754, %v2758
    %v2760 = vlaneseq
    %v2761 = vshrl.u32 %v2760, 7
    %v2762 = vsub.s32 1, %v2761
    %v2763 = vrot.slane %v2754, %v2762
    %v2764 = vlaneseq
    %v2765 = vshrl.u32 %v2764, 7
    %v2766 = vsub.s32 2, %v2765
    %v2767 = vrot.slane %v2754, %v2766
    %v2768 = vlaneseq
    %v2769 = vshrl.u32 %v2768, 7
    %v2770 = vsub.s32 3, %v2769
    %v2771 = vrot.slane %v2754, %v2770
    %2776 = vmatprep.subr.mxu0 %v767
    %2777 = vmatpush1.msra.mxu0 %v766
    %2778 = vmatprep.subr.mxu0 %v763
    %2779 = vmatpush1.msra.mxu0 %v762
    %2780 = vmatprep.subr.mxu0 %v759
    %2781 = vmatpush1.msra.mxu0 %v758
    %2782 = vmatprep.subr.mxu0 %v755
    %2783 = vmatpush1.msra.mxu0 %v754
    %2784 = vmatprep.subr.mxu0 %v751
    %2785 = vmatpush1.msra.mxu0 %v750
    %2786 = vmatprep.subr.mxu0 %v747
    %2787 = vmatpush1.msra.mxu0 %v746
    %2788 = vmatprep.subr.mxu0 %v743
    %2789 = vmatpush1.msra.mxu0 %v742
    %2790 = vmatprep.subr.mxu0 %v739
    %2791 = vmatpush1.msra.mxu0 %v738
    %2792 = vmatprep.subr.mxu0 %v735
    %2793 = vmatpush1.msra.mxu0 %v734
    %2794 = vmatprep.subr.mxu0 %v731
    %2795 = vmatpush1.msra.mxu0 %v730
    %2796 = vmatprep.subr.mxu0 %v727
    %2797 = vmatpush1.msra.mxu0 %v726
    %2798 = vmatprep.subr.mxu0 %v723
    %2799 = vmatpush1.msra.mxu0 %v722
    %2800 = vmatprep.subr.mxu0 %v719
    %2801 = vmatpush1.msra.mxu0 %v718
    %2802 = vmatprep.subr.mxu0 %v715
    %2803 = vmatpush1.msra.mxu0 %v714
    %2804 = vmatprep.subr.mxu0 %v711
    %2805 = vmatpush1.msra.mxu0 %v710
    %2806 = vmatprep.subr.mxu0 %v707
    %2807 = vmatpush1.msra.mxu0 %v706
    %2808 = vmatprep.subr.mxu0 %v831
    %2809 = vmatpush2.msra.mxu0 %v830
    %2810 = vmatprep.subr.mxu0 %v827
    %2811 = vmatpush2.msra.mxu0 %v826
    %2812 = vmatprep.subr.mxu0 %v823
    %2813 = vmatpush2.msra.mxu0 %v822
    %2814 = vmatprep.subr.mxu0 %v819
    %2815 = vmatpush2.msra.mxu0 %v818
    %2816 = vmatprep.subr.mxu0 %v815
    %2817 = vmatpush2.msra.mxu0 %v814
    %2818 = vmatprep.subr.mxu0 %v811
    %2819 = vmatpush2.msra.mxu0 %v810
    %2820 = vmatprep.subr.mxu0 %v807
    %2821 = vmatpush2.msra.mxu0 %v806
    %2822 = vmatprep.subr.mxu0 %v803
    %2823 = vmatpush2.msra.mxu0 %v802
    %2824 = vmatprep.subr.mxu0 %v799
    %2825 = vmatpush2.msra.mxu0 %v798
    %2826 = vmatprep.subr.mxu0 %v795
    %2827 = vmatpush2.msra.mxu0 %v794
    %2828 = vmatprep.subr.mxu0 %v791
    %2829 = vmatpush2.msra.mxu0 %v790
    %2830 = vmatprep.subr.mxu0 %v787
    %2831 = vmatpush2.msra.mxu0 %v786
    %2832 = vmatprep.subr.mxu0 %v783
    %2833 = vmatpush2.msra.mxu0 %v782
    %2834 = vmatprep.subr.mxu0 %v779
    %2835 = vmatpush2.msra.mxu0 %v778
    %2836 = vmatprep.subr.mxu0 %v775
    %2837 = vmatpush2.msra.mxu0 %v774
    %2838 = vmatprep.subr.mxu0 %v771
    %2839 = vmatpush2.msra.mxu0 %v770
    %2840 = vmatprep.mubr.f32.mxu0 %v675
    %2841 = vmatmul.mubr.f32.gmra.mxu0 %v674
    %v2842 = vpop.f32.mrf.mxu0
    %v2843 = vadd.f32 %v2759, %v2842
    %v2844 = vpop.f32.mrf.mxu0
    %v2845 = vadd.f32 %v2763, %v2844
    %2846 = vdwg.mxu0
    %2847 = vmatprep.subr.mxu0 %v895
    %2848 = vmatpush1.msra.mxu0 %v894
    %2849 = vmatprep.subr.mxu0 %v891
    %2850 = vmatpush1.msra.mxu0 %v890
    %2851 = vmatprep.subr.mxu0 %v887
    %2852 = vmatpush1.msra.mxu0 %v886
    %2853 = vmatprep.subr.mxu0 %v883
    %2854 = vmatpush1.msra.mxu0 %v882
    %2855 = vmatprep.subr.mxu0 %v879
    %2856 = vmatpush1.msra.mxu0 %v878
    %2857 = vmatprep.subr.mxu0 %v875
    %2858 = vmatpush1.msra.mxu0 %v874
    %2859 = vmatprep.subr.mxu0 %v871
    %2860 = vmatpush1.msra.mxu0 %v870
    %2861 = vmatprep.subr.mxu0 %v867
    %2862 = vmatpush1.msra.mxu0 %v866
    %2863 = vmatprep.subr.mxu0 %v863
    %2864 = vmatpush1.msra.mxu0 %v862
    %2865 = vmatprep.subr.mxu0 %v859
    %2866 = vmatpush1.msra.mxu0 %v858
    %2867 = vmatprep.subr.mxu0 %v855
    %2868 = vmatpush1.msra.mxu0 %v854
    %2869 = vmatprep.subr.mxu0 %v851
    %2870 = vmatpush1.msra.mxu0 %v850
    %2871 = vmatprep.subr.mxu0 %v847
    %2872 = vmatpush1.msra.mxu0 %v846
    %2873 = vmatprep.subr.mxu0 %v843
    %2874 = vmatpush1.msra.mxu0 %v842
    %2875 = vmatprep.subr.mxu0 %v839
    %2876 = vmatpush1.msra.mxu0 %v838
    %2877 = vmatprep.subr.mxu0 %v835
    %2878 = vmatpush1.msra.mxu0 %v834
    %2879 = vmatprep.subr.mxu0 %v959
    %2880 = vmatpush2.msra.mxu0 %v958
    %2881 = vmatprep.subr.mxu0 %v955
    %2882 = vmatpush2.msra.mxu0 %v954
    %2883 = vmatprep.subr.mxu0 %v951
    %2884 = vmatpush2.msra.mxu0 %v950
    %2885 = vmatprep.subr.mxu0 %v947
    %2886 = vmatpush2.msra.mxu0 %v946
    %2887 = vmatprep.subr.mxu0 %v943
    %2888 = vmatpush2.msra.mxu0 %v942
    %2889 = vmatprep.subr.mxu0 %v939
    %2890 = vmatpush2.msra.mxu0 %v938
    %2891 = vmatprep.subr.mxu0 %v935
    %2892 = vmatpush2.msra.mxu0 %v934
    %2893 = vmatprep.subr.mxu0 %v931
    %2894 = vmatpush2.msra.mxu0 %v930
    %2895 = vmatprep.subr.mxu0 %v927
    %2896 = vmatpush2.msra.mxu0 %v926
    %2897 = vmatprep.subr.mxu0 %v923
    %2898 = vmatpush2.msra.mxu0 %v922
    %2899 = vmatprep.subr.mxu0 %v919
    %2900 = vmatpush2.msra.mxu0 %v918
    %2901 = vmatprep.subr.mxu0 %v915
    %2902 = vmatpush2.msra.mxu0 %v914
    %2903 = vmatprep.subr.mxu0 %v911
    %2904 = vmatpush2.msra.mxu0 %v910
    %2905 = vmatprep.subr.mxu0 %v907
    %2906 = vmatpush2.msra.mxu0 %v906
    %2907 = vmatprep.subr.mxu0 %v903
    %2908 = vmatpush2.msra.mxu0 %v902
    %2909 = vmatprep.subr.mxu0 %v899
    %2910 = vmatpush2.msra.mxu0 %v898
    %2911 = vmatprep.mubr.f32.mxu0 %v677
    %2912 = vmatmul.mubr.f32.gmra.mxu0 %v676
    %v2913 = vpop.f32.mrf.mxu0
    %v2914 = vadd.f32 %v2843, %v2913
    %v2915 = vpop.f32.mrf.mxu0
    %v2916 = vadd.f32 %v2845, %v2915
    %2917 = vdwg.mxu0
    %2918 = vmatprep.subr.mxu0 %v1023
    %2919 = vmatpush1.msra.mxu0 %v1022
    %2920 = vmatprep.subr.mxu0 %v1019
    %2921 = vmatpush1.msra.mxu0 %v1018
    %2922 = vmatprep.subr.mxu0 %v1015
    %2923 = vmatpush1.msra.mxu0 %v1014
    %2924 = vmatprep.subr.mxu0 %v1011
    %2925 = vmatpush1.msra.mxu0 %v1010
    %2926 = vmatprep.subr.mxu0 %v1007
    %2927 = vmatpush1.msra.mxu0 %v1006
    %2928 = vmatprep.subr.mxu0 %v1003
    %2929 = vmatpush1.msra.mxu0 %v1002
    %2930 = vmatprep.subr.mxu0 %v999
    %2931 = vmatpush1.msra.mxu0 %v998
    %2932 = vmatprep.subr.mxu0 %v995
    %2933 = vmatpush1.msra.mxu0 %v994
    %2934 = vmatprep.subr.mxu0 %v991
    %2935 = vmatpush1.msra.mxu0 %v990
    %2936 = vmatprep.subr.mxu0 %v987
    %2937 = vmatpush1.msra.mxu0 %v986
    %2938 = vmatprep.subr.mxu0 %v983
    %2939 = vmatpush1.msra.mxu0 %v982
    %2940 = vmatprep.subr.mxu0 %v979
    %2941 = vmatpush1.msra.mxu0 %v978
    %2942 = vmatprep.subr.mxu0 %v975
    %2943 = vmatpush1.msra.mxu0 %v974
    %2944 = vmatprep.subr.mxu0 %v971
    %2945 = vmatpush1.msra.mxu0 %v970
    %2946 = vmatprep.subr.mxu0 %v967
    %2947 = vmatpush1.msra.mxu0 %v966
    %2948 = vmatprep.subr.mxu0 %v963
    %2949 = vmatpush1.msra.mxu0 %v962
    %2950 = vmatprep.subr.mxu0 %v1087
    %2951 = vmatpush2.msra.mxu0 %v1086
    %2952 = vmatprep.subr.mxu0 %v1083
    %2953 = vmatpush2.msra.mxu0 %v1082
    %2954 = vmatprep.subr.mxu0 %v1079
    %2955 = vmatpush2.msra.mxu0 %v1078
    %2956 = vmatprep.subr.mxu0 %v1075
    %2957 = vmatpush2.msra.mxu0 %v1074
    %2958 = vmatprep.subr.mxu0 %v1071
    %2959 = vmatpush2.msra.mxu0 %v1070
    %2960 = vmatprep.subr.mxu0 %v1067
    %2961 = vmatpush2.msra.mxu0 %v1066
    %2962 = vmatprep.subr.mxu0 %v1063
    %2963 = vmatpush2.msra.mxu0 %v1062
    %2964 = vmatprep.subr.mxu0 %v1059
    %2965 = vmatpush2.msra.mxu0 %v1058
    %2966 = vmatprep.subr.mxu0 %v1055
    %2967 = vmatpush2.msra.mxu0 %v1054
    %2968 = vmatprep.subr.mxu0 %v1051
    %2969 = vmatpush2.msra.mxu0 %v1050
    %2970 = vmatprep.subr.mxu0 %v1047
    %2971 = vmatpush2.msra.mxu0 %v1046
    %2972 = vmatprep.subr.mxu0 %v1043
    %2973 = vmatpush2.msra.mxu0 %v1042
    %2974 = vmatprep.subr.mxu0 %v1039
    %2975 = vmatpush2.msra.mxu0 %v1038
    %2976 = vmatprep.subr.mxu0 %v1035
    %2977 = vmatpush2.msra.mxu0 %v1034
    %2978 = vmatprep.subr.mxu0 %v1031
    %2979 = vmatpush2.msra.mxu0 %v1030
    %2980 = vmatprep.subr.mxu0 %v1027
    %2981 = vmatpush2.msra.mxu0 %v1026
    %2982 = vmatprep.mubr.f32.mxu0 %v679
    %2983 = vmatmul.mubr.f32.gmra.mxu0 %v678
    %v2984 = vpop.f32.mrf.mxu0
    %v2985 = vadd.f32 %v2914, %v2984
    %v2986 = vpop.f32.mrf.mxu0
    %v2987 = vadd.f32 %v2916, %v2986
    %2988 = vdwg.mxu0
    %2989 = vmatprep.subr.mxu0 %v1151
    %2990 = vmatpush1.msra.mxu0 %v1150
    %2991 = vmatprep.subr.mxu0 %v1147
    %2992 = vmatpush1.msra.mxu0 %v1146
    %2993 = vmatprep.subr.mxu0 %v1143
    %2994 = vmatpush1.msra.mxu0 %v1142
    %2995 = vmatprep.subr.mxu0 %v1139
    %2996 = vmatpush1.msra.mxu0 %v1138
    %2997 = vmatprep.subr.mxu0 %v1135
    %2998 = vmatpush1.msra.mxu0 %v1134
    %2999 = vmatprep.subr.mxu0 %v1131
    %3000 = vmatpush1.msra.mxu0 %v1130
    %3001 = vmatprep.subr.mxu0 %v1127
    %3002 = vmatpush1.msra.mxu0 %v1126
    %3003 = vmatprep.subr.mxu0 %v1123
    %3004 = vmatpush1.msra.mxu0 %v1122
    %3005 = vmatprep.subr.mxu0 %v1119
    %3006 = vmatpush1.msra.mxu0 %v1118
    %3007 = vmatprep.subr.mxu0 %v1115
    %3008 = vmatpush1.msra.mxu0 %v1114
    %3009 = vmatprep.subr.mxu0 %v1111
    %3010 = vmatpush1.msra.mxu0 %v1110
    %3011 = vmatprep.subr.mxu0 %v1107
    %3012 = vmatpush1.msra.mxu0 %v1106
    %3013 = vmatprep.subr.mxu0 %v1103
    %3014 = vmatpush1.msra.mxu0 %v1102
    %3015 = vmatprep.subr.mxu0 %v1099
    %3016 = vmatpush1.msra.mxu0 %v1098
    %3017 = vmatprep.subr.mxu0 %v1095
    %3018 = vmatpush1.msra.mxu0 %v1094
    %3019 = vmatprep.subr.mxu0 %v1091
    %3020 = vmatpush1.msra.mxu0 %v1090
    %3021 = vmatprep.subr.mxu0 %v1215
    %3022 = vmatpush2.msra.mxu0 %v1214
    %3023 = vmatprep.subr.mxu0 %v1211
    %3024 = vmatpush2.msra.mxu0 %v1210
    %3025 = vmatprep.subr.mxu0 %v1207
    %3026 = vmatpush2.msra.mxu0 %v1206
    %3027 = vmatprep.subr.mxu0 %v1203
    %3028 = vmatpush2.msra.mxu0 %v1202
    %3029 = vmatprep.subr.mxu0 %v1199
    %3030 = vmatpush2.msra.mxu0 %v1198
    %3031 = vmatprep.subr.mxu0 %v1195
    %3032 = vmatpush2.msra.mxu0 %v1194
    %3033 = vmatprep.subr.mxu0 %v1191
    %3034 = vmatpush2.msra.mxu0 %v1190
    %3035 = vmatprep.subr.mxu0 %v1187
    %3036 = vmatpush2.msra.mxu0 %v1186
    %3037 = vmatprep.subr.mxu0 %v1183
    %3038 = vmatpush2.msra.mxu0 %v1182
    %3039 = vmatprep.subr.mxu0 %v1179
    %3040 = vmatpush2.msra.mxu0 %v1178
    %3041 = vmatprep.subr.mxu0 %v1175
    %3042 = vmatpush2.msra.mxu0 %v1174
    %3043 = vmatprep.subr.mxu0 %v1171
    %3044 = vmatpush2.msra.mxu0 %v1170
    %3045 = vmatprep.subr.mxu0 %v1167
    %3046 = vmatpush2.msra.mxu0 %v1166
    %3047 = vmatprep.subr.mxu0 %v1163
    %3048 = vmatpush2.msra.mxu0 %v1162
    %3049 = vmatprep.subr.mxu0 %v1159
    %3050 = vmatpush2.msra.mxu0 %v1158
    %3051 = vmatprep.subr.mxu0 %v1155
    %3052 = vmatpush2.msra.mxu0 %v1154
    %3053 = vmatprep.mubr.f32.mxu0 %v681
    %3054 = vmatmul.mubr.f32.gmra.mxu0 %v680
    %v3055 = vpop.f32.mrf.mxu0
    %v3056 = vadd.f32 %v2985, %v3055
    %v3057 = vpop.f32.mrf.mxu0
    %v3058 = vadd.f32 %v2987, %v3057
    %3059 = vdwg.mxu0
    %3060 = vmatprep.subr.mxu0 %v1279
    %3061 = vmatpush1.msra.mxu0 %v1278
    %3062 = vmatprep.subr.mxu0 %v1275
    %3063 = vmatpush1.msra.mxu0 %v1274
    %3064 = vmatprep.subr.mxu0 %v1271
    %3065 = vmatpush1.msra.mxu0 %v1270
    %3066 = vmatprep.subr.mxu0 %v1267
    %3067 = vmatpush1.msra.mxu0 %v1266
    %3068 = vmatprep.subr.mxu0 %v1263
    %3069 = vmatpush1.msra.mxu0 %v1262
    %3070 = vmatprep.subr.mxu0 %v1259
    %3071 = vmatpush1.msra.mxu0 %v1258
    %3072 = vmatprep.subr.mxu0 %v1255
    %3073 = vmatpush1.msra.mxu0 %v1254
    %3074 = vmatprep.subr.mxu0 %v1251
    %3075 = vmatpush1.msra.mxu0 %v1250
    %3076 = vmatprep.subr.mxu0 %v1247
    %3077 = vmatpush1.msra.mxu0 %v1246
    %3078 = vmatprep.subr.mxu0 %v1243
    %3079 = vmatpush1.msra.mxu0 %v1242
    %3080 = vmatprep.subr.mxu0 %v1239
    %3081 = vmatpush1.msra.mxu0 %v1238
    %3082 = vmatprep.subr.mxu0 %v1235
    %3083 = vmatpush1.msra.mxu0 %v1234
    %3084 = vmatprep.subr.mxu0 %v1231
    %3085 = vmatpush1.msra.mxu0 %v1230
    %3086 = vmatprep.subr.mxu0 %v1227
    %3087 = vmatpush1.msra.mxu0 %v1226
    %3088 = vmatprep.subr.mxu0 %v1223
    %3089 = vmatpush1.msra.mxu0 %v1222
    %3090 = vmatprep.subr.mxu0 %v1219
    %3091 = vmatpush1.msra.mxu0 %v1218
    %3092 = vmatprep.subr.mxu0 %v1343
    %3093 = vmatpush2.msra.mxu0 %v1342
    %3094 = vmatprep.subr.mxu0 %v1339
    %3095 = vmatpush2.msra.mxu0 %v1338
    %3096 = vmatprep.subr.mxu0 %v1335
    %3097 = vmatpush2.msra.mxu0 %v1334
    %3098 = vmatprep.subr.mxu0 %v1331
    %3099 = vmatpush2.msra.mxu0 %v1330
    %3100 = vmatprep.subr.mxu0 %v1327
    %3101 = vmatpush2.msra.mxu0 %v1326
    %3102 = vmatprep.subr.mxu0 %v1323
    %3103 = vmatpush2.msra.mxu0 %v1322
    %3104 = vmatprep.subr.mxu0 %v1319
    %3105 = vmatpush2.msra.mxu0 %v1318
    %3106 = vmatprep.subr.mxu0 %v1315
    %3107 = vmatpush2.msra.mxu0 %v1314
    %3108 = vmatprep.subr.mxu0 %v1311
    %3109 = vmatpush2.msra.mxu0 %v1310
    %3110 = vmatprep.subr.mxu0 %v1307
    %3111 = vmatpush2.msra.mxu0 %v1306
    %3112 = vmatprep.subr.mxu0 %v1303
    %3113 = vmatpush2.msra.mxu0 %v1302
    %3114 = vmatprep.subr.mxu0 %v1299
    %3115 = vmatpush2.msra.mxu0 %v1298
    %3116 = vmatprep.subr.mxu0 %v1295
    %3117 = vmatpush2.msra.mxu0 %v1294
    %3118 = vmatprep.subr.mxu0 %v1291
    %3119 = vmatpush2.msra.mxu0 %v1290
    %3120 = vmatprep.subr.mxu0 %v1287
    %3121 = vmatpush2.msra.mxu0 %v1286
    %3122 = vmatprep.subr.mxu0 %v1283
    %3123 = vmatpush2.msra.mxu0 %v1282
    %3124 = vmatprep.mubr.f32.mxu0 %v683
    %3125 = vmatmul.mubr.f32.gmra.mxu0 %v682
    %v3126 = vpop.f32.mrf.mxu0
    %v3127 = vadd.f32 %v3056, %v3126
    %v3128 = vpop.f32.mrf.mxu0
    %v3129 = vadd.f32 %v3058, %v3128
    %3130 = vdwg.mxu0
    %3131 = vmatprep.subr.mxu0 %v1407
    %3132 = vmatpush1.msra.mxu0 %v1406
    %3133 = vmatprep.subr.mxu0 %v1403
    %3134 = vmatpush1.msra.mxu0 %v1402
    %3135 = vmatprep.subr.mxu0 %v1399
    %3136 = vmatpush1.msra.mxu0 %v1398
    %3137 = vmatprep.subr.mxu0 %v1395
    %3138 = vmatpush1.msra.mxu0 %v1394
    %3139 = vmatprep.subr.mxu0 %v1391
    %3140 = vmatpush1.msra.mxu0 %v1390
    %3141 = vmatprep.subr.mxu0 %v1387
    %3142 = vmatpush1.msra.mxu0 %v1386
    %3143 = vmatprep.subr.mxu0 %v1383
    %3144 = vmatpush1.msra.mxu0 %v1382
    %3145 = vmatprep.subr.mxu0 %v1379
    %3146 = vmatpush1.msra.mxu0 %v1378
    %3147 = vmatprep.subr.mxu0 %v1375
    %3148 = vmatpush1.msra.mxu0 %v1374
    %3149 = vmatprep.subr.mxu0 %v1371
    %3150 = vmatpush1.msra.mxu0 %v1370
    %3151 = vmatprep.subr.mxu0 %v1367
    %3152 = vmatpush1.msra.mxu0 %v1366
    %3153 = vmatprep.subr.mxu0 %v1363
    %3154 = vmatpush1.msra.mxu0 %v1362
    %3155 = vmatprep.subr.mxu0 %v1359
    %3156 = vmatpush1.msra.mxu0 %v1358
    %3157 = vmatprep.subr.mxu0 %v1355
    %3158 = vmatpush1.msra.mxu0 %v1354
    %3159 = vmatprep.subr.mxu0 %v1351
    %3160 = vmatpush1.msra.mxu0 %v1350
    %3161 = vmatprep.subr.mxu0 %v1347
    %3162 = vmatpush1.msra.mxu0 %v1346
    %3163 = vmatprep.subr.mxu0 %v1471
    %3164 = vmatpush2.msra.mxu0 %v1470
    %3165 = vmatprep.subr.mxu0 %v1467
    %3166 = vmatpush2.msra.mxu0 %v1466
    %3167 = vmatprep.subr.mxu0 %v1463
    %3168 = vmatpush2.msra.mxu0 %v1462
    %3169 = vmatprep.subr.mxu0 %v1459
    %3170 = vmatpush2.msra.mxu0 %v1458
    %3171 = vmatprep.subr.mxu0 %v1455
    %3172 = vmatpush2.msra.mxu0 %v1454
    %3173 = vmatprep.subr.mxu0 %v1451
    %3174 = vmatpush2.msra.mxu0 %v1450
    %3175 = vmatprep.subr.mxu0 %v1447
    %3176 = vmatpush2.msra.mxu0 %v1446
    %3177 = vmatprep.subr.mxu0 %v1443
    %3178 = vmatpush2.msra.mxu0 %v1442
    %3179 = vmatprep.subr.mxu0 %v1439
    %3180 = vmatpush2.msra.mxu0 %v1438
    %3181 = vmatprep.subr.mxu0 %v1435
    %3182 = vmatpush2.msra.mxu0 %v1434
    %3183 = vmatprep.subr.mxu0 %v1431
    %3184 = vmatpush2.msra.mxu0 %v1430
    %3185 = vmatprep.subr.mxu0 %v1427
    %3186 = vmatpush2.msra.mxu0 %v1426
    %3187 = vmatprep.subr.mxu0 %v1423
    %3188 = vmatpush2.msra.mxu0 %v1422
    %3189 = vmatprep.subr.mxu0 %v1419
    %3190 = vmatpush2.msra.mxu0 %v1418
    %3191 = vmatprep.subr.mxu0 %v1415
    %3192 = vmatpush2.msra.mxu0 %v1414
    %3193 = vmatprep.subr.mxu0 %v1411
    %3194 = vmatpush2.msra.mxu0 %v1410
    %3195 = vmatprep.mubr.f32.mxu0 %v685
    %3196 = vmatmul.mubr.f32.gmra.mxu0 %v684
    %v3197 = vpop.f32.mrf.mxu0
    %v3198 = vadd.f32 %v3127, %v3197
    %v3199 = vpop.f32.mrf.mxu0
    %v3200 = vadd.f32 %v3129, %v3199
    %3201 = vdwg.mxu0
    %3202 = vmatprep.subr.mxu0 %v1535
    %3203 = vmatpush1.msra.mxu0 %v1534
    %3204 = vmatprep.subr.mxu0 %v1531
    %3205 = vmatpush1.msra.mxu0 %v1530
    %3206 = vmatprep.subr.mxu0 %v1527
    %3207 = vmatpush1.msra.mxu0 %v1526
    %3208 = vmatprep.subr.mxu0 %v1523
    %3209 = vmatpush1.msra.mxu0 %v1522
    %3210 = vmatprep.subr.mxu0 %v1519
    %3211 = vmatpush1.msra.mxu0 %v1518
    %3212 = vmatprep.subr.mxu0 %v1515
    %3213 = vmatpush1.msra.mxu0 %v1514
    %3214 = vmatprep.subr.mxu0 %v1511
    %3215 = vmatpush1.msra.mxu0 %v1510
    %3216 = vmatprep.subr.mxu0 %v1507
    %3217 = vmatpush1.msra.mxu0 %v1506
    %3218 = vmatprep.subr.mxu0 %v1503
    %3219 = vmatpush1.msra.mxu0 %v1502
    %3220 = vmatprep.subr.mxu0 %v1499
    %3221 = vmatpush1.msra.mxu0 %v1498
    %3222 = vmatprep.subr.mxu0 %v1495
    %3223 = vmatpush1.msra.mxu0 %v1494
    %3224 = vmatprep.subr.mxu0 %v1491
    %3225 = vmatpush1.msra.mxu0 %v1490
    %3226 = vmatprep.subr.mxu0 %v1487
    %3227 = vmatpush1.msra.mxu0 %v1486
    %3228 = vmatprep.subr.mxu0 %v1483
    %3229 = vmatpush1.msra.mxu0 %v1482
    %3230 = vmatprep.subr.mxu0 %v1479
    %3231 = vmatpush1.msra.mxu0 %v1478
    %3232 = vmatprep.subr.mxu0 %v1475
    %3233 = vmatpush1.msra.mxu0 %v1474
    %3234 = vmatprep.subr.mxu0 %v1599
    %3235 = vmatpush2.msra.mxu0 %v1598
    %3236 = vmatprep.subr.mxu0 %v1595
    %3237 = vmatpush2.msra.mxu0 %v1594
    %3238 = vmatprep.subr.mxu0 %v1591
    %3239 = vmatpush2.msra.mxu0 %v1590
    %3240 = vmatprep.subr.mxu0 %v1587
    %3241 = vmatpush2.msra.mxu0 %v1586
    %3242 = vmatprep.subr.mxu0 %v1583
    %3243 = vmatpush2.msra.mxu0 %v1582
    %3244 = vmatprep.subr.mxu0 %v1579
    %3245 = vmatpush2.msra.mxu0 %v1578
    %3246 = vmatprep.subr.mxu0 %v1575
    %3247 = vmatpush2.msra.mxu0 %v1574
    %3248 = vmatprep.subr.mxu0 %v1571
    %3249 = vmatpush2.msra.mxu0 %v1570
    %3250 = vmatprep.subr.mxu0 %v1567
    %3251 = vmatpush2.msra.mxu0 %v1566
    %3252 = vmatprep.subr.mxu0 %v1563
    %3253 = vmatpush2.msra.mxu0 %v1562
    %3254 = vmatprep.subr.mxu0 %v1559
    %3255 = vmatpush2.msra.mxu0 %v1558
    %3256 = vmatprep.subr.mxu0 %v1555
    %3257 = vmatpush2.msra.mxu0 %v1554
    %3258 = vmatprep.subr.mxu0 %v1551
    %3259 = vmatpush2.msra.mxu0 %v1550
    %3260 = vmatprep.subr.mxu0 %v1547
    %3261 = vmatpush2.msra.mxu0 %v1546
    %3262 = vmatprep.subr.mxu0 %v1543
    %3263 = vmatpush2.msra.mxu0 %v1542
    %3264 = vmatprep.subr.mxu0 %v1539
    %3265 = vmatpush2.msra.mxu0 %v1538
    %3266 = vmatprep.mubr.f32.mxu0 %v687
    %3267 = vmatmul.mubr.f32.gmra.mxu0 %v686
    %v3268 = vpop.f32.mrf.mxu0
    %v3269 = vadd.f32 %v3198, %v3268
    %v3270 = vpop.f32.mrf.mxu0
    %v3271 = vadd.f32 %v3200, %v3270
    %3272 = vdwg.mxu0
    %3273 = vmatprep.subr.mxu0 %v1663
    %3274 = vmatpush1.msra.mxu0 %v1662
    %3275 = vmatprep.subr.mxu0 %v1659
    %3276 = vmatpush1.msra.mxu0 %v1658
    %3277 = vmatprep.subr.mxu0 %v1655
    %3278 = vmatpush1.msra.mxu0 %v1654
    %3279 = vmatprep.subr.mxu0 %v1651
    %3280 = vmatpush1.msra.mxu0 %v1650
    %3281 = vmatprep.subr.mxu0 %v1647
    %3282 = vmatpush1.msra.mxu0 %v1646
    %3283 = vmatprep.subr.mxu0 %v1643
    %3284 = vmatpush1.msra.mxu0 %v1642
    %3285 = vmatprep.subr.mxu0 %v1639
    %3286 = vmatpush1.msra.mxu0 %v1638
    %3287 = vmatprep.subr.mxu0 %v1635
    %3288 = vmatpush1.msra.mxu0 %v1634
    %3289 = vmatprep.subr.mxu0 %v1631
    %3290 = vmatpush1.msra.mxu0 %v1630
    %3291 = vmatprep.subr.mxu0 %v1627
    %3292 = vmatpush1.msra.mxu0 %v1626
    %3293 = vmatprep.subr.mxu0 %v1623
    %3294 = vmatpush1.msra.mxu0 %v1622
    %3295 = vmatprep.subr.mxu0 %v1619
    %3296 = vmatpush1.msra.mxu0 %v1618
    %3297 = vmatprep.subr.mxu0 %v1615
    %3298 = vmatpush1.msra.mxu0 %v1614
    %3299 = vmatprep.subr.mxu0 %v1611
    %3300 = vmatpush1.msra.mxu0 %v1610
    %3301 = vmatprep.subr.mxu0 %v1607
    %3302 = vmatpush1.msra.mxu0 %v1606
    %3303 = vmatprep.subr.mxu0 %v1603
    %3304 = vmatpush1.msra.mxu0 %v1602
    %3305 = vmatprep.subr.mxu0 %v1727
    %3306 = vmatpush2.msra.mxu0 %v1726
    %3307 = vmatprep.subr.mxu0 %v1723
    %3308 = vmatpush2.msra.mxu0 %v1722
    %3309 = vmatprep.subr.mxu0 %v1719
    %3310 = vmatpush2.msra.mxu0 %v1718
    %3311 = vmatprep.subr.mxu0 %v1715
    %3312 = vmatpush2.msra.mxu0 %v1714
    %3313 = vmatprep.subr.mxu0 %v1711
    %3314 = vmatpush2.msra.mxu0 %v1710
    %3315 = vmatprep.subr.mxu0 %v1707
    %3316 = vmatpush2.msra.mxu0 %v1706
    %3317 = vmatprep.subr.mxu0 %v1703
    %3318 = vmatpush2.msra.mxu0 %v1702
    %3319 = vmatprep.subr.mxu0 %v1699
    %3320 = vmatpush2.msra.mxu0 %v1698
    %3321 = vmatprep.subr.mxu0 %v1695
    %3322 = vmatpush2.msra.mxu0 %v1694
    %3323 = vmatprep.subr.mxu0 %v1691
    %3324 = vmatpush2.msra.mxu0 %v1690
    %3325 = vmatprep.subr.mxu0 %v1687
    %3326 = vmatpush2.msra.mxu0 %v1686
    %3327 = vmatprep.subr.mxu0 %v1683
    %3328 = vmatpush2.msra.mxu0 %v1682
    %3329 = vmatprep.subr.mxu0 %v1679
    %3330 = vmatpush2.msra.mxu0 %v1678
    %3331 = vmatprep.subr.mxu0 %v1675
    %3332 = vmatpush2.msra.mxu0 %v1674
    %3333 = vmatprep.subr.mxu0 %v1671
    %3334 = vmatpush2.msra.mxu0 %v1670
    %3335 = vmatprep.subr.mxu0 %v1667
    %3336 = vmatpush2.msra.mxu0 %v1666
    %3337 = vmatprep.mubr.f32.mxu0 %v689
    %3338 = vmatmul.mubr.f32.gmra.mxu0 %v688
    %v3339 = vpop.f32.mrf.mxu0
    %v3340 = vadd.f32 %v3269, %v3339
    %v3341 = vpop.f32.mrf.mxu0
    %v3342 = vadd.f32 %v3271, %v3341
    %3343 = vdwg.mxu0
    %3344 = vmatprep.subr.mxu0 %v1791
    %3345 = vmatpush1.msra.mxu0 %v1790
    %3346 = vmatprep.subr.mxu0 %v1787
    %3347 = vmatpush1.msra.mxu0 %v1786
    %3348 = vmatprep.subr.mxu0 %v1783
    %3349 = vmatpush1.msra.mxu0 %v1782
    %3350 = vmatprep.subr.mxu0 %v1779
    %3351 = vmatpush1.msra.mxu0 %v1778
    %3352 = vmatprep.subr.mxu0 %v1775
    %3353 = vmatpush1.msra.mxu0 %v1774
    %3354 = vmatprep.subr.mxu0 %v1771
    %3355 = vmatpush1.msra.mxu0 %v1770
    %3356 = vmatprep.subr.mxu0 %v1767
    %3357 = vmatpush1.msra.mxu0 %v1766
    %3358 = vmatprep.subr.mxu0 %v1763
    %3359 = vmatpush1.msra.mxu0 %v1762
    %3360 = vmatprep.subr.mxu0 %v1759
    %3361 = vmatpush1.msra.mxu0 %v1758
    %3362 = vmatprep.subr.mxu0 %v1755
    %3363 = vmatpush1.msra.mxu0 %v1754
    %3364 = vmatprep.subr.mxu0 %v1751
    %3365 = vmatpush1.msra.mxu0 %v1750
    %3366 = vmatprep.subr.mxu0 %v1747
    %3367 = vmatpush1.msra.mxu0 %v1746
    %3368 = vmatprep.subr.mxu0 %v1743
    %3369 = vmatpush1.msra.mxu0 %v1742
    %3370 = vmatprep.subr.mxu0 %v1739
    %3371 = vmatpush1.msra.mxu0 %v1738
    %3372 = vmatprep.subr.mxu0 %v1735
    %3373 = vmatpush1.msra.mxu0 %v1734
    %3374 = vmatprep.subr.mxu0 %v1731
    %3375 = vmatpush1.msra.mxu0 %v1730
    %3376 = vmatprep.subr.mxu0 %v1855
    %3377 = vmatpush2.msra.mxu0 %v1854
    %3378 = vmatprep.subr.mxu0 %v1851
    %3379 = vmatpush2.msra.mxu0 %v1850
    %3380 = vmatprep.subr.mxu0 %v1847
    %3381 = vmatpush2.msra.mxu0 %v1846
    %3382 = vmatprep.subr.mxu0 %v1843
    %3383 = vmatpush2.msra.mxu0 %v1842
    %3384 = vmatprep.subr.mxu0 %v1839
    %3385 = vmatpush2.msra.mxu0 %v1838
    %3386 = vmatprep.subr.mxu0 %v1835
    %3387 = vmatpush2.msra.mxu0 %v1834
    %3388 = vmatprep.subr.mxu0 %v1831
    %3389 = vmatpush2.msra.mxu0 %v1830
    %3390 = vmatprep.subr.mxu0 %v1827
    %3391 = vmatpush2.msra.mxu0 %v1826
    %3392 = vmatprep.subr.mxu0 %v1823
    %3393 = vmatpush2.msra.mxu0 %v1822
    %3394 = vmatprep.subr.mxu0 %v1819
    %3395 = vmatpush2.msra.mxu0 %v1818
    %3396 = vmatprep.subr.mxu0 %v1815
    %3397 = vmatpush2.msra.mxu0 %v1814
    %3398 = vmatprep.subr.mxu0 %v1811
    %3399 = vmatpush2.msra.mxu0 %v1810
    %3400 = vmatprep.subr.mxu0 %v1807
    %3401 = vmatpush2.msra.mxu0 %v1806
    %3402 = vmatprep.subr.mxu0 %v1803
    %3403 = vmatpush2.msra.mxu0 %v1802
    %3404 = vmatprep.subr.mxu0 %v1799
    %3405 = vmatpush2.msra.mxu0 %v1798
    %3406 = vmatprep.subr.mxu0 %v1795
    %3407 = vmatpush2.msra.mxu0 %v1794
    %3408 = vmatprep.mubr.f32.mxu0 %v691
    %3409 = vmatmul.mubr.f32.gmra.mxu0 %v690
    %v3410 = vpop.f32.mrf.mxu0
    %v3411 = vadd.f32 %v3340, %v3410
    %v3412 = vpop.f32.mrf.mxu0
    %v3413 = vadd.f32 %v3342, %v3412
    %3414 = vdwg.mxu0
    %3415 = vmatprep.subr.mxu0 %v1919
    %3416 = vmatpush1.msra.mxu0 %v1918
    %3417 = vmatprep.subr.mxu0 %v1915
    %3418 = vmatpush1.msra.mxu0 %v1914
    %3419 = vmatprep.subr.mxu0 %v1911
    %3420 = vmatpush1.msra.mxu0 %v1910
    %3421 = vmatprep.subr.mxu0 %v1907
    %3422 = vmatpush1.msra.mxu0 %v1906
    %3423 = vmatprep.subr.mxu0 %v1903
    %3424 = vmatpush1.msra.mxu0 %v1902
    %3425 = vmatprep.subr.mxu0 %v1899
    %3426 = vmatpush1.msra.mxu0 %v1898
    %3427 = vmatprep.subr.mxu0 %v1895
    %3428 = vmatpush1.msra.mxu0 %v1894
    %3429 = vmatprep.subr.mxu0 %v1891
    %3430 = vmatpush1.msra.mxu0 %v1890
    %3431 = vmatprep.subr.mxu0 %v1887
    %3432 = vmatpush1.msra.mxu0 %v1886
    %3433 = vmatprep.subr.mxu0 %v1883
    %3434 = vmatpush1.msra.mxu0 %v1882
    %3435 = vmatprep.subr.mxu0 %v1879
    %3436 = vmatpush1.msra.mxu0 %v1878
    %3437 = vmatprep.subr.mxu0 %v1875
    %3438 = vmatpush1.msra.mxu0 %v1874
    %3439 = vmatprep.subr.mxu0 %v1871
    %3440 = vmatpush1.msra.mxu0 %v1870
    %3441 = vmatprep.subr.mxu0 %v1867
    %3442 = vmatpush1.msra.mxu0 %v1866
    %3443 = vmatprep.subr.mxu0 %v1863
    %3444 = vmatpush1.msra.mxu0 %v1862
    %3445 = vmatprep.subr.mxu0 %v1859
    %3446 = vmatpush1.msra.mxu0 %v1858
    %3447 = vmatprep.subr.mxu0 %v1983
    %3448 = vmatpush2.msra.mxu0 %v1982
    %3449 = vmatprep.subr.mxu0 %v1979
    %3450 = vmatpush2.msra.mxu0 %v1978
    %3451 = vmatprep.subr.mxu0 %v1975
    %3452 = vmatpush2.msra.mxu0 %v1974
    %3453 = vmatprep.subr.mxu0 %v1971
    %3454 = vmatpush2.msra.mxu0 %v1970
    %3455 = vmatprep.subr.mxu0 %v1967
    %3456 = vmatpush2.msra.mxu0 %v1966
    %3457 = vmatprep.subr.mxu0 %v1963
    %3458 = vmatpush2.msra.mxu0 %v1962
    %3459 = vmatprep.subr.mxu0 %v1959
    %3460 = vmatpush2.msra.mxu0 %v1958
    %3461 = vmatprep.subr.mxu0 %v1955
    %3462 = vmatpush2.msra.mxu0 %v1954
    %3463 = vmatprep.subr.mxu0 %v1951
    %3464 = vmatpush2.msra.mxu0 %v1950
    %3465 = vmatprep.subr.mxu0 %v1947
    %3466 = vmatpush2.msra.mxu0 %v1946
    %3467 = vmatprep.subr.mxu0 %v1943
    %3468 = vmatpush2.msra.mxu0 %v1942
    %3469 = vmatprep.subr.mxu0 %v1939
    %3470 = vmatpush2.msra.mxu0 %v1938
    %3471 = vmatprep.subr.mxu0 %v1935
    %3472 = vmatpush2.msra.mxu0 %v1934
    %3473 = vmatprep.subr.mxu0 %v1931
    %3474 = vmatpush2.msra.mxu0 %v1930
    %3475 = vmatprep.subr.mxu0 %v1927
    %3476 = vmatpush2.msra.mxu0 %v1926
    %3477 = vmatprep.subr.mxu0 %v1923
    %3478 = vmatpush2.msra.mxu0 %v1922
    %3479 = vmatprep.mubr.f32.mxu0 %v693
    %3480 = vmatmul.mubr.f32.gmra.mxu0 %v692
    %v3481 = vpop.f32.mrf.mxu0
    %v3482 = vadd.f32 %v3411, %v3481
    %v3483 = vpop.f32.mrf.mxu0
    %v3484 = vadd.f32 %v3413, %v3483
    %3485 = vdwg.mxu0
    %3486 = vmatprep.subr.mxu0 %v2047
    %3487 = vmatpush1.msra.mxu0 %v2046
    %3488 = vmatprep.subr.mxu0 %v2043
    %3489 = vmatpush1.msra.mxu0 %v2042
    %3490 = vmatprep.subr.mxu0 %v2039
    %3491 = vmatpush1.msra.mxu0 %v2038
    %3492 = vmatprep.subr.mxu0 %v2035
    %3493 = vmatpush1.msra.mxu0 %v2034
    %3494 = vmatprep.subr.mxu0 %v2031
    %3495 = vmatpush1.msra.mxu0 %v2030
    %3496 = vmatprep.subr.mxu0 %v2027
    %3497 = vmatpush1.msra.mxu0 %v2026
    %3498 = vmatprep.subr.mxu0 %v2023
    %3499 = vmatpush1.msra.mxu0 %v2022
    %3500 = vmatprep.subr.mxu0 %v2019
    %3501 = vmatpush1.msra.mxu0 %v2018
    %3502 = vmatprep.subr.mxu0 %v2015
    %3503 = vmatpush1.msra.mxu0 %v2014
    %3504 = vmatprep.subr.mxu0 %v2011
    %3505 = vmatpush1.msra.mxu0 %v2010
    %3506 = vmatprep.subr.mxu0 %v2007
    %3507 = vmatpush1.msra.mxu0 %v2006
    %3508 = vmatprep.subr.mxu0 %v2003
    %3509 = vmatpush1.msra.mxu0 %v2002
    %3510 = vmatprep.subr.mxu0 %v1999
    %3511 = vmatpush1.msra.mxu0 %v1998
    %3512 = vmatprep.subr.mxu0 %v1995
    %3513 = vmatpush1.msra.mxu0 %v1994
    %3514 = vmatprep.subr.mxu0 %v1991
    %3515 = vmatpush1.msra.mxu0 %v1990
    %3516 = vmatprep.subr.mxu0 %v1987
    %3517 = vmatpush1.msra.mxu0 %v1986
    %3518 = vmatprep.subr.mxu0 %v2111
    %3519 = vmatpush2.msra.mxu0 %v2110
    %3520 = vmatprep.subr.mxu0 %v2107
    %3521 = vmatpush2.msra.mxu0 %v2106
    %3522 = vmatprep.subr.mxu0 %v2103
    %3523 = vmatpush2.msra.mxu0 %v2102
    %3524 = vmatprep.subr.mxu0 %v2099
    %3525 = vmatpush2.msra.mxu0 %v2098
    %3526 = vmatprep.subr.mxu0 %v2095
    %3527 = vmatpush2.msra.mxu0 %v2094
    %3528 = vmatprep.subr.mxu0 %v2091
    %3529 = vmatpush2.msra.mxu0 %v2090
    %3530 = vmatprep.subr.mxu0 %v2087
    %3531 = vmatpush2.msra.mxu0 %v2086
    %3532 = vmatprep.subr.mxu0 %v2083
    %3533 = vmatpush2.msra.mxu0 %v2082
    %3534 = vmatprep.subr.mxu0 %v2079
    %3535 = vmatpush2.msra.mxu0 %v2078
    %3536 = vmatprep.subr.mxu0 %v2075
    %3537 = vmatpush2.msra.mxu0 %v2074
    %3538 = vmatprep.subr.mxu0 %v2071
    %3539 = vmatpush2.msra.mxu0 %v2070
    %3540 = vmatprep.subr.mxu0 %v2067
    %3541 = vmatpush2.msra.mxu0 %v2066
    %3542 = vmatprep.subr.mxu0 %v2063
    %3543 = vmatpush2.msra.mxu0 %v2062
    %3544 = vmatprep.subr.mxu0 %v2059
    %3545 = vmatpush2.msra.mxu0 %v2058
    %3546 = vmatprep.subr.mxu0 %v2055
    %3547 = vmatpush2.msra.mxu0 %v2054
    %3548 = vmatprep.subr.mxu0 %v2051
    %3549 = vmatpush2.msra.mxu0 %v2050
    %3550 = vmatprep.mubr.f32.mxu0 %v695
    %3551 = vmatmul.mubr.f32.gmra.mxu0 %v694
    %v3552 = vpop.f32.mrf.mxu0
    %v3553 = vadd.f32 %v3482, %v3552
    %v3554 = vpop.f32.mrf.mxu0
    %v3555 = vadd.f32 %v3484, %v3554
    %3556 = vdwg.mxu0
    %3557 = vmatprep.subr.mxu0 %v2175
    %3558 = vmatpush1.msra.mxu0 %v2174
    %3559 = vmatprep.subr.mxu0 %v2171
    %3560 = vmatpush1.msra.mxu0 %v2170
    %3561 = vmatprep.subr.mxu0 %v2167
    %3562 = vmatpush1.msra.mxu0 %v2166
    %3563 = vmatprep.subr.mxu0 %v2163
    %3564 = vmatpush1.msra.mxu0 %v2162
    %3565 = vmatprep.subr.mxu0 %v2159
    %3566 = vmatpush1.msra.mxu0 %v2158
    %3567 = vmatprep.subr.mxu0 %v2155
    %3568 = vmatpush1.msra.mxu0 %v2154
    %3569 = vmatprep.subr.mxu0 %v2151
    %3570 = vmatpush1.msra.mxu0 %v2150
    %3571 = vmatprep.subr.mxu0 %v2147
    %3572 = vmatpush1.msra.mxu0 %v2146
    %3573 = vmatprep.subr.mxu0 %v2143
    %3574 = vmatpush1.msra.mxu0 %v2142
    %3575 = vmatprep.subr.mxu0 %v2139
    %3576 = vmatpush1.msra.mxu0 %v2138
    %3577 = vmatprep.subr.mxu0 %v2135
    %3578 = vmatpush1.msra.mxu0 %v2134
    %3579 = vmatprep.subr.mxu0 %v2131
    %3580 = vmatpush1.msra.mxu0 %v2130
    %3581 = vmatprep.subr.mxu0 %v2127
    %3582 = vmatpush1.msra.mxu0 %v2126
    %3583 = vmatprep.subr.mxu0 %v2123
    %3584 = vmatpush1.msra.mxu0 %v2122
    %3585 = vmatprep.subr.mxu0 %v2119
    %3586 = vmatpush1.msra.mxu0 %v2118
    %3587 = vmatprep.subr.mxu0 %v2115
    %3588 = vmatpush1.msra.mxu0 %v2114
    %3589 = vmatprep.subr.mxu0 %v2239
    %3590 = vmatpush2.msra.mxu0 %v2238
    %3591 = vmatprep.subr.mxu0 %v2235
    %3592 = vmatpush2.msra.mxu0 %v2234
    %3593 = vmatprep.subr.mxu0 %v2231
    %3594 = vmatpush2.msra.mxu0 %v2230
    %3595 = vmatprep.subr.mxu0 %v2227
    %3596 = vmatpush2.msra.mxu0 %v2226
    %3597 = vmatprep.subr.mxu0 %v2223
    %3598 = vmatpush2.msra.mxu0 %v2222
    %3599 = vmatprep.subr.mxu0 %v2219
    %3600 = vmatpush2.msra.mxu0 %v2218
    %3601 = vmatprep.subr.mxu0 %v2215
    %3602 = vmatpush2.msra.mxu0 %v2214
    %3603 = vmatprep.subr.mxu0 %v2211
    %3604 = vmatpush2.msra.mxu0 %v2210
    %3605 = vmatprep.subr.mxu0 %v2207
    %3606 = vmatpush2.msra.mxu0 %v2206
    %3607 = vmatprep.subr.mxu0 %v2203
    %3608 = vmatpush2.msra.mxu0 %v2202
    %3609 = vmatprep.subr.mxu0 %v2199
    %3610 = vmatpush2.msra.mxu0 %v2198
    %3611 = vmatprep.subr.mxu0 %v2195
    %3612 = vmatpush2.msra.mxu0 %v2194
    %3613 = vmatprep.subr.mxu0 %v2191
    %3614 = vmatpush2.msra.mxu0 %v2190
    %3615 = vmatprep.subr.mxu0 %v2187
    %3616 = vmatpush2.msra.mxu0 %v2186
    %3617 = vmatprep.subr.mxu0 %v2183
    %3618 = vmatpush2.msra.mxu0 %v2182
    %3619 = vmatprep.subr.mxu0 %v2179
    %3620 = vmatpush2.msra.mxu0 %v2178
    %3621 = vmatprep.mubr.f32.mxu0 %v697
    %3622 = vmatmul.mubr.f32.gmra.mxu0 %v696
    %v3623 = vpop.f32.mrf.mxu0
    %v3624 = vadd.f32 %v3553, %v3623
    %v3625 = vpop.f32.mrf.mxu0
    %v3626 = vadd.f32 %v3555, %v3625
    %3627 = vdwg.mxu0
    %3628 = vmatprep.subr.mxu0 %v2303
    %3629 = vmatpush1.msra.mxu0 %v2302
    %3630 = vmatprep.subr.mxu0 %v2299
    %3631 = vmatpush1.msra.mxu0 %v2298
    %3632 = vmatprep.subr.mxu0 %v2295
    %3633 = vmatpush1.msra.mxu0 %v2294
    %3634 = vmatprep.subr.mxu0 %v2291
    %3635 = vmatpush1.msra.mxu0 %v2290
    %3636 = vmatprep.subr.mxu0 %v2287
    %3637 = vmatpush1.msra.mxu0 %v2286
    %3638 = vmatprep.subr.mxu0 %v2283
    %3639 = vmatpush1.msra.mxu0 %v2282
    %3640 = vmatprep.subr.mxu0 %v2279
    %3641 = vmatpush1.msra.mxu0 %v2278
    %3642 = vmatprep.subr.mxu0 %v2275
    %3643 = vmatpush1.msra.mxu0 %v2274
    %3644 = vmatprep.subr.mxu0 %v2271
    %3645 = vmatpush1.msra.mxu0 %v2270
    %3646 = vmatprep.subr.mxu0 %v2267
    %3647 = vmatpush1.msra.mxu0 %v2266
    %3648 = vmatprep.subr.mxu0 %v2263
    %3649 = vmatpush1.msra.mxu0 %v2262
    %3650 = vmatprep.subr.mxu0 %v2259
    %3651 = vmatpush1.msra.mxu0 %v2258
    %3652 = vmatprep.subr.mxu0 %v2255
    %3653 = vmatpush1.msra.mxu0 %v2254
    %3654 = vmatprep.subr.mxu0 %v2251
    %3655 = vmatpush1.msra.mxu0 %v2250
    %3656 = vmatprep.subr.mxu0 %v2247
    %3657 = vmatpush1.msra.mxu0 %v2246
    %3658 = vmatprep.subr.mxu0 %v2243
    %3659 = vmatpush1.msra.mxu0 %v2242
    %3660 = vmatprep.subr.mxu0 %v2367
    %3661 = vmatpush2.msra.mxu0 %v2366
    %3662 = vmatprep.subr.mxu0 %v2363
    %3663 = vmatpush2.msra.mxu0 %v2362
    %3664 = vmatprep.subr.mxu0 %v2359
    %3665 = vmatpush2.msra.mxu0 %v2358
    %3666 = vmatprep.subr.mxu0 %v2355
    %3667 = vmatpush2.msra.mxu0 %v2354
    %3668 = vmatprep.subr.mxu0 %v2351
    %3669 = vmatpush2.msra.mxu0 %v2350
    %3670 = vmatprep.subr.mxu0 %v2347
    %3671 = vmatpush2.msra.mxu0 %v2346
    %3672 = vmatprep.subr.mxu0 %v2343
    %3673 = vmatpush2.msra.mxu0 %v2342
    %3674 = vmatprep.subr.mxu0 %v2339
    %3675 = vmatpush2.msra.mxu0 %v2338
    %3676 = vmatprep.subr.mxu0 %v2335
    %3677 = vmatpush2.msra.mxu0 %v2334
    %3678 = vmatprep.subr.mxu0 %v2331
    %3679 = vmatpush2.msra.mxu0 %v2330
    %3680 = vmatprep.subr.mxu0 %v2327
    %3681 = vmatpush2.msra.mxu0 %v2326
    %3682 = vmatprep.subr.mxu0 %v2323
    %3683 = vmatpush2.msra.mxu0 %v2322
    %3684 = vmatprep.subr.mxu0 %v2319
    %3685 = vmatpush2.msra.mxu0 %v2318
    %3686 = vmatprep.subr.mxu0 %v2315
    %3687 = vmatpush2.msra.mxu0 %v2314
    %3688 = vmatprep.subr.mxu0 %v2311
    %3689 = vmatpush2.msra.mxu0 %v2310
    %3690 = vmatprep.subr.mxu0 %v2307
    %3691 = vmatpush2.msra.mxu0 %v2306
    %3692 = vmatprep.mubr.f32.mxu0 %v699
    %3693 = vmatmul.mubr.f32.gmra.mxu0 %v698
    %v3694 = vpop.f32.mrf.mxu0
    %v3695 = vadd.f32 %v3624, %v3694
    %v3696 = vpop.f32.mrf.mxu0
    %v3697 = vadd.f32 %v3626, %v3696
    %3698 = vdwg.mxu0
    %3699 = vmatprep.subr.mxu0 %v2431
    %3700 = vmatpush1.msra.mxu0 %v2430
    %3701 = vmatprep.subr.mxu0 %v2427
    %3702 = vmatpush1.msra.mxu0 %v2426
    %3703 = vmatprep.subr.mxu0 %v2423
    %3704 = vmatpush1.msra.mxu0 %v2422
    %3705 = vmatprep.subr.mxu0 %v2419
    %3706 = vmatpush1.msra.mxu0 %v2418
    %3707 = vmatprep.subr.mxu0 %v2415
    %3708 = vmatpush1.msra.mxu0 %v2414
    %3709 = vmatprep.subr.mxu0 %v2411
    %3710 = vmatpush1.msra.mxu0 %v2410
    %3711 = vmatprep.subr.mxu0 %v2407
    %3712 = vmatpush1.msra.mxu0 %v2406
    %3713 = vmatprep.subr.mxu0 %v2403
    %3714 = vmatpush1.msra.mxu0 %v2402
    %3715 = vmatprep.subr.mxu0 %v2399
    %3716 = vmatpush1.msra.mxu0 %v2398
    %3717 = vmatprep.subr.mxu0 %v2395
    %3718 = vmatpush1.msra.mxu0 %v2394
    %3719 = vmatprep.subr.mxu0 %v2391
    %3720 = vmatpush1.msra.mxu0 %v2390
    %3721 = vmatprep.subr.mxu0 %v2387
    %3722 = vmatpush1.msra.mxu0 %v2386
    %3723 = vmatprep.subr.mxu0 %v2383
    %3724 = vmatpush1.msra.mxu0 %v2382
    %3725 = vmatprep.subr.mxu0 %v2379
    %3726 = vmatpush1.msra.mxu0 %v2378
    %3727 = vmatprep.subr.mxu0 %v2375
    %3728 = vmatpush1.msra.mxu0 %v2374
    %3729 = vmatprep.subr.mxu0 %v2371
    %3730 = vmatpush1.msra.mxu0 %v2370
    %3731 = vmatprep.subr.mxu0 %v2495
    %3732 = vmatpush2.msra.mxu0 %v2494
    %3733 = vmatprep.subr.mxu0 %v2491
    %3734 = vmatpush2.msra.mxu0 %v2490
    %3735 = vmatprep.subr.mxu0 %v2487
    %3736 = vmatpush2.msra.mxu0 %v2486
    %3737 = vmatprep.subr.mxu0 %v2483
    %3738 = vmatpush2.msra.mxu0 %v2482
    %3739 = vmatprep.subr.mxu0 %v2479
    %3740 = vmatpush2.msra.mxu0 %v2478
    %3741 = vmatprep.subr.mxu0 %v2475
    %3742 = vmatpush2.msra.mxu0 %v2474
    %3743 = vmatprep.subr.mxu0 %v2471
    %3744 = vmatpush2.msra.mxu0 %v2470
    %3745 = vmatprep.subr.mxu0 %v2467
    %3746 = vmatpush2.msra.mxu0 %v2466
    %3747 = vmatprep.subr.mxu0 %v2463
    %3748 = vmatpush2.msra.mxu0 %v2462
    %3749 = vmatprep.subr.mxu0 %v2459
    %3750 = vmatpush2.msra.mxu0 %v2458
    %3751 = vmatprep.subr.mxu0 %v2455
    %3752 = vmatpush2.msra.mxu0 %v2454
    %3753 = vmatprep.subr.mxu0 %v2451
    %3754 = vmatpush2.msra.mxu0 %v2450
    %3755 = vmatprep.subr.mxu0 %v2447
    %3756 = vmatpush2.msra.mxu0 %v2446
    %3757 = vmatprep.subr.mxu0 %v2443
    %3758 = vmatpush2.msra.mxu0 %v2442
    %3759 = vmatprep.subr.mxu0 %v2439
    %3760 = vmatpush2.msra.mxu0 %v2438
    %3761 = vmatprep.subr.mxu0 %v2435
    %3762 = vmatpush2.msra.mxu0 %v2434
    %3763 = vmatprep.mubr.f32.mxu0 %v701
    %3764 = vmatmul.mubr.f32.gmra.mxu0 %v700
    %v3765 = vpop.f32.mrf.mxu0
    %v3766 = vadd.f32 %v3695, %v3765
    %v3767 = vpop.f32.mrf.mxu0
    %v3768 = vadd.f32 %v3697, %v3767
    %3769 = vdwg.mxu0
    %3770 = vmatprep.subr.mxu0 %v2559
    %3771 = vmatpush1.msra.mxu0 %v2558
    %3772 = vmatprep.subr.mxu0 %v2555
    %3773 = vmatpush1.msra.mxu0 %v2554
    %3774 = vmatprep.subr.mxu0 %v2551
    %3775 = vmatpush1.msra.mxu0 %v2550
    %3776 = vmatprep.subr.mxu0 %v2547
    %3777 = vmatpush1.msra.mxu0 %v2546
    %3778 = vmatprep.subr.mxu0 %v2543
    %3779 = vmatpush1.msra.mxu0 %v2542
    %3780 = vmatprep.subr.mxu0 %v2539
    %3781 = vmatpush1.msra.mxu0 %v2538
    %3782 = vmatprep.subr.mxu0 %v2535
    %3783 = vmatpush1.msra.mxu0 %v2534
    %3784 = vmatprep.subr.mxu0 %v2531
    %3785 = vmatpush1.msra.mxu0 %v2530
    %3786 = vmatprep.subr.mxu0 %v2527
    %3787 = vmatpush1.msra.mxu0 %v2526
    %3788 = vmatprep.subr.mxu0 %v2523
    %3789 = vmatpush1.msra.mxu0 %v2522
    %3790 = vmatprep.subr.mxu0 %v2519
    %3791 = vmatpush1.msra.mxu0 %v2518
    %3792 = vmatprep.subr.mxu0 %v2515
    %3793 = vmatpush1.msra.mxu0 %v2514
    %3794 = vmatprep.subr.mxu0 %v2511
    %3795 = vmatpush1.msra.mxu0 %v2510
    %3796 = vmatprep.subr.mxu0 %v2507
    %3797 = vmatpush1.msra.mxu0 %v2506
    %3798 = vmatprep.subr.mxu0 %v2503
    %3799 = vmatpush1.msra.mxu0 %v2502
    %3800 = vmatprep.subr.mxu0 %v2499
    %3801 = vmatpush1.msra.mxu0 %v2498
    %3802 = vmatprep.subr.mxu0 %v2623
    %3803 = vmatpush2.msra.mxu0 %v2622
    %3804 = vmatprep.subr.mxu0 %v2619
    %3805 = vmatpush2.msra.mxu0 %v2618
    %3806 = vmatprep.subr.mxu0 %v2615
    %3807 = vmatpush2.msra.mxu0 %v2614
    %3808 = vmatprep.subr.mxu0 %v2611
    %3809 = vmatpush2.msra.mxu0 %v2610
    %3810 = vmatprep.subr.mxu0 %v2607
    %3811 = vmatpush2.msra.mxu0 %v2606
    %3812 = vmatprep.subr.mxu0 %v2603
    %3813 = vmatpush2.msra.mxu0 %v2602
    %3814 = vmatprep.subr.mxu0 %v2599
    %3815 = vmatpush2.msra.mxu0 %v2598
    %3816 = vmatprep.subr.mxu0 %v2595
    %3817 = vmatpush2.msra.mxu0 %v2594
    %3818 = vmatprep.subr.mxu0 %v2591
    %3819 = vmatpush2.msra.mxu0 %v2590
    %3820 = vmatprep.subr.mxu0 %v2587
    %3821 = vmatpush2.msra.mxu0 %v2586
    %3822 = vmatprep.subr.mxu0 %v2583
    %3823 = vmatpush2.msra.mxu0 %v2582
    %3824 = vmatprep.subr.mxu0 %v2579
    %3825 = vmatpush2.msra.mxu0 %v2578
    %3826 = vmatprep.subr.mxu0 %v2575
    %3827 = vmatpush2.msra.mxu0 %v2574
    %3828 = vmatprep.subr.mxu0 %v2571
    %3829 = vmatpush2.msra.mxu0 %v2570
    %3830 = vmatprep.subr.mxu0 %v2567
    %3831 = vmatpush2.msra.mxu0 %v2566
    %3832 = vmatprep.subr.mxu0 %v2563
    %3833 = vmatpush2.msra.mxu0 %v2562
    %3834 = vmatprep.mubr.f32.mxu0 %v703
    %3835 = vmatmul.mubr.f32.gmra.mxu0 %v702
    %v3836 = vpop.f32.mrf.mxu0
    %v3837 = vadd.f32 %v3766, %v3836
    %v3838 = vpop.f32.mrf.mxu0
    %v3839 = vadd.f32 %v3768, %v3838
    %3840 = vdwg.mxu0
    %3841 = vmatprep.subr.mxu0 %v2687
    %3842 = vmatpush1.msra.mxu0 %v2686
    %3843 = vmatprep.subr.mxu0 %v2683
    %3844 = vmatpush1.msra.mxu0 %v2682
    %3845 = vmatprep.subr.mxu0 %v2679
    %3846 = vmatpush1.msra.mxu0 %v2678
    %3847 = vmatprep.subr.mxu0 %v2675
    %3848 = vmatpush1.msra.mxu0 %v2674
    %3849 = vmatprep.subr.mxu0 %v2671
    %3850 = vmatpush1.msra.mxu0 %v2670
    %3851 = vmatprep.subr.mxu0 %v2667
    %3852 = vmatpush1.msra.mxu0 %v2666
    %3853 = vmatprep.subr.mxu0 %v2663
    %3854 = vmatpush1.msra.mxu0 %v2662
    %3855 = vmatprep.subr.mxu0 %v2659
    %3856 = vmatpush1.msra.mxu0 %v2658
    %3857 = vmatprep.subr.mxu0 %v2655
    %3858 = vmatpush1.msra.mxu0 %v2654
    %3859 = vmatprep.subr.mxu0 %v2651
    %3860 = vmatpush1.msra.mxu0 %v2650
    %3861 = vmatprep.subr.mxu0 %v2647
    %3862 = vmatpush1.msra.mxu0 %v2646
    %3863 = vmatprep.subr.mxu0 %v2643
    %3864 = vmatpush1.msra.mxu0 %v2642
    %3865 = vmatprep.subr.mxu0 %v2639
    %3866 = vmatpush1.msra.mxu0 %v2638
    %3867 = vmatprep.subr.mxu0 %v2635
    %3868 = vmatpush1.msra.mxu0 %v2634
    %3869 = vmatprep.subr.mxu0 %v2631
    %3870 = vmatpush1.msra.mxu0 %v2630
    %3871 = vmatprep.subr.mxu0 %v2627
    %3872 = vmatpush1.msra.mxu0 %v2626
    %3873 = vmatprep.subr.mxu0 %v2751
    %3874 = vmatpush2.msra.mxu0 %v2750
    %3875 = vmatprep.subr.mxu0 %v2747
    %3876 = vmatpush2.msra.mxu0 %v2746
    %3877 = vmatprep.subr.mxu0 %v2743
    %3878 = vmatpush2.msra.mxu0 %v2742
    %3879 = vmatprep.subr.mxu0 %v2739
    %3880 = vmatpush2.msra.mxu0 %v2738
    %3881 = vmatprep.subr.mxu0 %v2735
    %3882 = vmatpush2.msra.mxu0 %v2734
    %3883 = vmatprep.subr.mxu0 %v2731
    %3884 = vmatpush2.msra.mxu0 %v2730
    %3885 = vmatprep.subr.mxu0 %v2727
    %3886 = vmatpush2.msra.mxu0 %v2726
    %3887 = vmatprep.subr.mxu0 %v2723
    %3888 = vmatpush2.msra.mxu0 %v2722
    %3889 = vmatprep.subr.mxu0 %v2719
    %3890 = vmatpush2.msra.mxu0 %v2718
    %3891 = vmatprep.subr.mxu0 %v2715
    %3892 = vmatpush2.msra.mxu0 %v2714
    %3893 = vmatprep.subr.mxu0 %v2711
    %3894 = vmatpush2.msra.mxu0 %v2710
    %3895 = vmatprep.subr.mxu0 %v2707
    %3896 = vmatpush2.msra.mxu0 %v2706
    %3897 = vmatprep.subr.mxu0 %v2703
    %3898 = vmatpush2.msra.mxu0 %v2702
    %3899 = vmatprep.subr.mxu0 %v2699
    %3900 = vmatpush2.msra.mxu0 %v2698
    %3901 = vmatprep.subr.mxu0 %v2695
    %3902 = vmatpush2.msra.mxu0 %v2694
    %3903 = vmatprep.subr.mxu0 %v2691
    %3904 = vmatpush2.msra.mxu0 %v2690
    %3905 = vmatprep.mubr.f32.mxu0 %v705
    %3906 = vmatmul.mubr.f32.gmra.mxu0 %v704
    %v3907 = vpop.f32.mrf.mxu0
    %v3908 = vadd.f32 %v3837, %v3907
    %v3909 = vpop.f32.mrf.mxu0
    %v3910 = vadd.f32 %v3839, %v3909
    %3911 = vdwg.mxu0
    %3912 = vmatprep.subr.mxu0 %v769
    %3913 = vmatpush1.msra.mxu0 %v768
    %3914 = vmatprep.subr.mxu0 %v765
    %3915 = vmatpush1.msra.mxu0 %v764
    %3916 = vmatprep.subr.mxu0 %v761
    %3917 = vmatpush1.msra.mxu0 %v760
    %3918 = vmatprep.subr.mxu0 %v757
    %3919 = vmatpush1.msra.mxu0 %v756
    %3920 = vmatprep.subr.mxu0 %v753
    %3921 = vmatpush1.msra.mxu0 %v752
    %3922 = vmatprep.subr.mxu0 %v749
    %3923 = vmatpush1.msra.mxu0 %v748
    %3924 = vmatprep.subr.mxu0 %v745
    %3925 = vmatpush1.msra.mxu0 %v744
    %3926 = vmatprep.subr.mxu0 %v741
    %3927 = vmatpush1.msra.mxu0 %v740
    %3928 = vmatprep.subr.mxu0 %v737
    %3929 = vmatpush1.msra.mxu0 %v736
    %3930 = vmatprep.subr.mxu0 %v733
    %3931 = vmatpush1.msra.mxu0 %v732
    %3932 = vmatprep.subr.mxu0 %v729
    %3933 = vmatpush1.msra.mxu0 %v728
    %3934 = vmatprep.subr.mxu0 %v725
    %3935 = vmatpush1.msra.mxu0 %v724
    %3936 = vmatprep.subr.mxu0 %v721
    %3937 = vmatpush1.msra.mxu0 %v720
    %3938 = vmatprep.subr.mxu0 %v717
    %3939 = vmatpush1.msra.mxu0 %v716
    %3940 = vmatprep.subr.mxu0 %v713
    %3941 = vmatpush1.msra.mxu0 %v712
    %3942 = vmatprep.subr.mxu0 %v709
    %3943 = vmatpush1.msra.mxu0 %v708
    %3944 = vmatprep.subr.mxu0 %v833
    %3945 = vmatpush2.msra.mxu0 %v832
    %3946 = vmatprep.subr.mxu0 %v829
    %3947 = vmatpush2.msra.mxu0 %v828
    %3948 = vmatprep.subr.mxu0 %v825
    %3949 = vmatpush2.msra.mxu0 %v824
    %3950 = vmatprep.subr.mxu0 %v821
    %3951 = vmatpush2.msra.mxu0 %v820
    %3952 = vmatprep.subr.mxu0 %v817
    %3953 = vmatpush2.msra.mxu0 %v816
    %3954 = vmatprep.subr.mxu0 %v813
    %3955 = vmatpush2.msra.mxu0 %v812
    %3956 = vmatprep.subr.mxu0 %v809
    %3957 = vmatpush2.msra.mxu0 %v808
    %3958 = vmatprep.subr.mxu0 %v805
    %3959 = vmatpush2.msra.mxu0 %v804
    %3960 = vmatprep.subr.mxu0 %v801
    %3961 = vmatpush2.msra.mxu0 %v800
    %3962 = vmatprep.subr.mxu0 %v797
    %3963 = vmatpush2.msra.mxu0 %v796
    %3964 = vmatprep.subr.mxu0 %v793
    %3965 = vmatpush2.msra.mxu0 %v792
    %3966 = vmatprep.subr.mxu0 %v789
    %3967 = vmatpush2.msra.mxu0 %v788
    %3968 = vmatprep.subr.mxu0 %v785
    %3969 = vmatpush2.msra.mxu0 %v784
    %3970 = vmatprep.subr.mxu0 %v781
    %3971 = vmatpush2.msra.mxu0 %v780
    %3972 = vmatprep.subr.mxu0 %v777
    %3973 = vmatpush2.msra.mxu0 %v776
    %3974 = vmatprep.subr.mxu0 %v773
    %3975 = vmatpush2.msra.mxu0 %v772
    %3976 = vmatprep.mubr.f32.mxu0 %v675
    %3977 = vmatmul.mubr.f32.gmra.mxu0 %v674
    %v3978 = vpop.f32.mrf.mxu0
    %v3979 = vadd.f32 %v2767, %v3978
    %v3980 = vpop.f32.mrf.mxu0
    %v3981 = vadd.f32 %v2771, %v3980
    %3982 = vdwg.mxu0
    %3983 = vmatprep.subr.mxu0 %v897
    %3984 = vmatpush1.msra.mxu0 %v896
    %3985 = vmatprep.subr.mxu0 %v893
    %3986 = vmatpush1.msra.mxu0 %v892
    %3987 = vmatprep.subr.mxu0 %v889
    %3988 = vmatpush1.msra.mxu0 %v888
    %3989 = vmatprep.subr.mxu0 %v885
    %3990 = vmatpush1.msra.mxu0 %v884
    %3991 = vmatprep.subr.mxu0 %v881
    %3992 = vmatpush1.msra.mxu0 %v880
    %3993 = vmatprep.subr.mxu0 %v877
    %3994 = vmatpush1.msra.mxu0 %v876
    %3995 = vmatprep.subr.mxu0 %v873
    %3996 = vmatpush1.msra.mxu0 %v872
    %3997 = vmatprep.subr.mxu0 %v869
    %3998 = vmatpush1.msra.mxu0 %v868
    %3999 = vmatprep.subr.mxu0 %v865
    %4000 = vmatpush1.msra.mxu0 %v864
    %4001 = vmatprep.subr.mxu0 %v861
    %4002 = vmatpush1.msra.mxu0 %v860
    %4003 = vmatprep.subr.mxu0 %v857
    %4004 = vmatpush1.msra.mxu0 %v856
    %4005 = vmatprep.subr.mxu0 %v853
    %4006 = vmatpush1.msra.mxu0 %v852
    %4007 = vmatprep.subr.mxu0 %v849
    %4008 = vmatpush1.msra.mxu0 %v848
    %4009 = vmatprep.subr.mxu0 %v845
    %4010 = vmatpush1.msra.mxu0 %v844
    %4011 = vmatprep.subr.mxu0 %v841
    %4012 = vmatpush1.msra.mxu0 %v840
    %4013 = vmatprep.subr.mxu0 %v837
    %4014 = vmatpush1.msra.mxu0 %v836
    %4015 = vmatprep.subr.mxu0 %v961
    %4016 = vmatpush2.msra.mxu0 %v960
    %4017 = vmatprep.subr.mxu0 %v957
    %4018 = vmatpush2.msra.mxu0 %v956
    %4019 = vmatprep.subr.mxu0 %v953
    %4020 = vmatpush2.msra.mxu0 %v952
    %4021 = vmatprep.subr.mxu0 %v949
    %4022 = vmatpush2.msra.mxu0 %v948
    %4023 = vmatprep.subr.mxu0 %v945
    %4024 = vmatpush2.msra.mxu0 %v944
    %4025 = vmatprep.subr.mxu0 %v941
    %4026 = vmatpush2.msra.mxu0 %v940
    %4027 = vmatprep.subr.mxu0 %v937
    %4028 = vmatpush2.msra.mxu0 %v936
    %4029 = vmatprep.subr.mxu0 %v933
    %4030 = vmatpush2.msra.mxu0 %v932
    %4031 = vmatprep.subr.mxu0 %v929
    %4032 = vmatpush2.msra.mxu0 %v928
    %4033 = vmatprep.subr.mxu0 %v925
    %4034 = vmatpush2.msra.mxu0 %v924
    %4035 = vmatprep.subr.mxu0 %v921
    %4036 = vmatpush2.msra.mxu0 %v920
    %4037 = vmatprep.subr.mxu0 %v917
    %4038 = vmatpush2.msra.mxu0 %v916
    %4039 = vmatprep.subr.mxu0 %v913
    %4040 = vmatpush2.msra.mxu0 %v912
    %4041 = vmatprep.subr.mxu0 %v909
    %4042 = vmatpush2.msra.mxu0 %v908
    %4043 = vmatprep.subr.mxu0 %v905
    %4044 = vmatpush2.msra.mxu0 %v904
    %4045 = vmatprep.subr.mxu0 %v901
    %4046 = vmatpush2.msra.mxu0 %v900
    %4047 = vmatprep.mubr.f32.mxu0 %v677
    %4048 = vmatmul.mubr.f32.gmra.mxu0 %v676
    %v4049 = vpop.f32.mrf.mxu0
    %v4050 = vadd.f32 %v3979, %v4049
    %v4051 = vpop.f32.mrf.mxu0
    %v4052 = vadd.f32 %v3981, %v4051
    %4053 = vdwg.mxu0
    %4054 = vmatprep.subr.mxu0 %v1025
    %4055 = vmatpush1.msra.mxu0 %v1024
    %4056 = vmatprep.subr.mxu0 %v1021
    %4057 = vmatpush1.msra.mxu0 %v1020
    %4058 = vmatprep.subr.mxu0 %v1017
    %4059 = vmatpush1.msra.mxu0 %v1016
    %4060 = vmatprep.subr.mxu0 %v1013
    %4061 = vmatpush1.msra.mxu0 %v1012
    %4062 = vmatprep.subr.mxu0 %v1009
    %4063 = vmatpush1.msra.mxu0 %v1008
    %4064 = vmatprep.subr.mxu0 %v1005
    %4065 = vmatpush1.msra.mxu0 %v1004
    %4066 = vmatprep.subr.mxu0 %v1001
    %4067 = vmatpush1.msra.mxu0 %v1000
    %4068 = vmatprep.subr.mxu0 %v997
    %4069 = vmatpush1.msra.mxu0 %v996
    %4070 = vmatprep.subr.mxu0 %v993
    %4071 = vmatpush1.msra.mxu0 %v992
    %4072 = vmatprep.subr.mxu0 %v989
    %4073 = vmatpush1.msra.mxu0 %v988
    %4074 = vmatprep.subr.mxu0 %v985
    %4075 = vmatpush1.msra.mxu0 %v984
    %4076 = vmatprep.subr.mxu0 %v981
    %4077 = vmatpush1.msra.mxu0 %v980
    %4078 = vmatprep.subr.mxu0 %v977
    %4079 = vmatpush1.msra.mxu0 %v976
    %4080 = vmatprep.subr.mxu0 %v973
    %4081 = vmatpush1.msra.mxu0 %v972
    %4082 = vmatprep.subr.mxu0 %v969
    %4083 = vmatpush1.msra.mxu0 %v968
    %4084 = vmatprep.subr.mxu0 %v965
    %4085 = vmatpush1.msra.mxu0 %v964
    %4086 = vmatprep.subr.mxu0 %v1089
    %4087 = vmatpush2.msra.mxu0 %v1088
    %4088 = vmatprep.subr.mxu0 %v1085
    %4089 = vmatpush2.msra.mxu0 %v1084
    %4090 = vmatprep.subr.mxu0 %v1081
    %4091 = vmatpush2.msra.mxu0 %v1080
    %4092 = vmatprep.subr.mxu0 %v1077
    %4093 = vmatpush2.msra.mxu0 %v1076
    %4094 = vmatprep.subr.mxu0 %v1073
    %4095 = vmatpush2.msra.mxu0 %v1072
    %4096 = vmatprep.subr.mxu0 %v1069
    %4097 = vmatpush2.msra.mxu0 %v1068
    %4098 = vmatprep.subr.mxu0 %v1065
    %4099 = vmatpush2.msra.mxu0 %v1064
    %4100 = vmatprep.subr.mxu0 %v1061
    %4101 = vmatpush2.msra.mxu0 %v1060
    %4102 = vmatprep.subr.mxu0 %v1057
    %4103 = vmatpush2.msra.mxu0 %v1056
    %4104 = vmatprep.subr.mxu0 %v1053
    %4105 = vmatpush2.msra.mxu0 %v1052
    %4106 = vmatprep.subr.mxu0 %v1049
    %4107 = vmatpush2.msra.mxu0 %v1048
    %4108 = vmatprep.subr.mxu0 %v1045
    %4109 = vmatpush2.msra.mxu0 %v1044
    %4110 = vmatprep.subr.mxu0 %v1041
    %4111 = vmatpush2.msra.mxu0 %v1040
    %4112 = vmatprep.subr.mxu0 %v1037
    %4113 = vmatpush2.msra.mxu0 %v1036
    %4114 = vmatprep.subr.mxu0 %v1033
    %4115 = vmatpush2.msra.mxu0 %v1032
    %4116 = vmatprep.subr.mxu0 %v1029
    %4117 = vmatpush2.msra.mxu0 %v1028
    %4118 = vmatprep.mubr.f32.mxu0 %v679
    %4119 = vmatmul.mubr.f32.gmra.mxu0 %v678
    %v4120 = vpop.f32.mrf.mxu0
    %v4121 = vadd.f32 %v4050, %v4120
    %v4122 = vpop.f32.mrf.mxu0
    %v4123 = vadd.f32 %v4052, %v4122
    %4124 = vdwg.mxu0
    %4125 = vmatprep.subr.mxu0 %v1153
    %4126 = vmatpush1.msra.mxu0 %v1152
    %4127 = vmatprep.subr.mxu0 %v1149
    %4128 = vmatpush1.msra.mxu0 %v1148
    %4129 = vmatprep.subr.mxu0 %v1145
    %4130 = vmatpush1.msra.mxu0 %v1144
    %4131 = vmatprep.subr.mxu0 %v1141
    %4132 = vmatpush1.msra.mxu0 %v1140
    %4133 = vmatprep.subr.mxu0 %v1137
    %4134 = vmatpush1.msra.mxu0 %v1136
    %4135 = vmatprep.subr.mxu0 %v1133
    %4136 = vmatpush1.msra.mxu0 %v1132
    %4137 = vmatprep.subr.mxu0 %v1129
    %4138 = vmatpush1.msra.mxu0 %v1128
    %4139 = vmatprep.subr.mxu0 %v1125
    %4140 = vmatpush1.msra.mxu0 %v1124
    %4141 = vmatprep.subr.mxu0 %v1121
    %4142 = vmatpush1.msra.mxu0 %v1120
    %4143 = vmatprep.subr.mxu0 %v1117
    %4144 = vmatpush1.msra.mxu0 %v1116
    %4145 = vmatprep.subr.mxu0 %v1113
    %4146 = vmatpush1.msra.mxu0 %v1112
    %4147 = vmatprep.subr.mxu0 %v1109
    %4148 = vmatpush1.msra.mxu0 %v1108
    %4149 = vmatprep.subr.mxu0 %v1105
    %4150 = vmatpush1.msra.mxu0 %v1104
    %4151 = vmatprep.subr.mxu0 %v1101
    %4152 = vmatpush1.msra.mxu0 %v1100
    %4153 = vmatprep.subr.mxu0 %v1097
    %4154 = vmatpush1.msra.mxu0 %v1096
    %4155 = vmatprep.subr.mxu0 %v1093
    %4156 = vmatpush1.msra.mxu0 %v1092
    %4157 = vmatprep.subr.mxu0 %v1217
    %4158 = vmatpush2.msra.mxu0 %v1216
    %4159 = vmatprep.subr.mxu0 %v1213
    %4160 = vmatpush2.msra.mxu0 %v1212
    %4161 = vmatprep.subr.mxu0 %v1209
    %4162 = vmatpush2.msra.mxu0 %v1208
    %4163 = vmatprep.subr.mxu0 %v1205
    %4164 = vmatpush2.msra.mxu0 %v1204
    %4165 = vmatprep.subr.mxu0 %v1201
    %4166 = vmatpush2.msra.mxu0 %v1200
    %4167 = vmatprep.subr.mxu0 %v1197
    %4168 = vmatpush2.msra.mxu0 %v1196
    %4169 = vmatprep.subr.mxu0 %v1193
    %4170 = vmatpush2.msra.mxu0 %v1192
    %4171 = vmatprep.subr.mxu0 %v1189
    %4172 = vmatpush2.msra.mxu0 %v1188
    %4173 = vmatprep.subr.mxu0 %v1185
    %4174 = vmatpush2.msra.mxu0 %v1184
    %4175 = vmatprep.subr.mxu0 %v1181
    %4176 = vmatpush2.msra.mxu0 %v1180
    %4177 = vmatprep.subr.mxu0 %v1177
    %4178 = vmatpush2.msra.mxu0 %v1176
    %4179 = vmatprep.subr.mxu0 %v1173
    %4180 = vmatpush2.msra.mxu0 %v1172
    %4181 = vmatprep.subr.mxu0 %v1169
    %4182 = vmatpush2.msra.mxu0 %v1168
    %4183 = vmatprep.subr.mxu0 %v1165
    %4184 = vmatpush2.msra.mxu0 %v1164
    %4185 = vmatprep.subr.mxu0 %v1161
    %4186 = vmatpush2.msra.mxu0 %v1160
    %4187 = vmatprep.subr.mxu0 %v1157
    %4188 = vmatpush2.msra.mxu0 %v1156
    %4189 = vmatprep.mubr.f32.mxu0 %v681
    %4190 = vmatmul.mubr.f32.gmra.mxu0 %v680
    %v4191 = vpop.f32.mrf.mxu0
    %v4192 = vadd.f32 %v4121, %v4191
    %v4193 = vpop.f32.mrf.mxu0
    %v4194 = vadd.f32 %v4123, %v4193
    %4195 = vdwg.mxu0
    %4196 = vmatprep.subr.mxu0 %v1281
    %4197 = vmatpush1.msra.mxu0 %v1280
    %4198 = vmatprep.subr.mxu0 %v1277
    %4199 = vmatpush1.msra.mxu0 %v1276
    %4200 = vmatprep.subr.mxu0 %v1273
    %4201 = vmatpush1.msra.mxu0 %v1272
    %4202 = vmatprep.subr.mxu0 %v1269
    %4203 = vmatpush1.msra.mxu0 %v1268
    %4204 = vmatprep.subr.mxu0 %v1265
    %4205 = vmatpush1.msra.mxu0 %v1264
    %4206 = vmatprep.subr.mxu0 %v1261
    %4207 = vmatpush1.msra.mxu0 %v1260
    %4208 = vmatprep.subr.mxu0 %v1257
    %4209 = vmatpush1.msra.mxu0 %v1256
    %4210 = vmatprep.subr.mxu0 %v1253
    %4211 = vmatpush1.msra.mxu0 %v1252
    %4212 = vmatprep.subr.mxu0 %v1249
    %4213 = vmatpush1.msra.mxu0 %v1248
    %4214 = vmatprep.subr.mxu0 %v1245
    %4215 = vmatpush1.msra.mxu0 %v1244
    %4216 = vmatprep.subr.mxu0 %v1241
    %4217 = vmatpush1.msra.mxu0 %v1240
    %4218 = vmatprep.subr.mxu0 %v1237
    %4219 = vmatpush1.msra.mxu0 %v1236
    %4220 = vmatprep.subr.mxu0 %v1233
    %4221 = vmatpush1.msra.mxu0 %v1232
    %4222 = vmatprep.subr.mxu0 %v1229
    %4223 = vmatpush1.msra.mxu0 %v1228
    %4224 = vmatprep.subr.mxu0 %v1225
    %4225 = vmatpush1.msra.mxu0 %v1224
    %4226 = vmatprep.subr.mxu0 %v1221
    %4227 = vmatpush1.msra.mxu0 %v1220
    %4228 = vmatprep.subr.mxu0 %v1345
    %4229 = vmatpush2.msra.mxu0 %v1344
    %4230 = vmatprep.subr.mxu0 %v1341
    %4231 = vmatpush2.msra.mxu0 %v1340
    %4232 = vmatprep.subr.mxu0 %v1337
    %4233 = vmatpush2.msra.mxu0 %v1336
    %4234 = vmatprep.subr.mxu0 %v1333
    %4235 = vmatpush2.msra.mxu0 %v1332
    %4236 = vmatprep.subr.mxu0 %v1329
    %4237 = vmatpush2.msra.mxu0 %v1328
    %4238 = vmatprep.subr.mxu0 %v1325
    %4239 = vmatpush2.msra.mxu0 %v1324
    %4240 = vmatprep.subr.mxu0 %v1321
    %4241 = vmatpush2.msra.mxu0 %v1320
    %4242 = vmatprep.subr.mxu0 %v1317
    %4243 = vmatpush2.msra.mxu0 %v1316
    %4244 = vmatprep.subr.mxu0 %v1313
    %4245 = vmatpush2.msra.mxu0 %v1312
    %4246 = vmatprep.subr.mxu0 %v1309
    %4247 = vmatpush2.msra.mxu0 %v1308
    %4248 = vmatprep.subr.mxu0 %v1305
    %4249 = vmatpush2.msra.mxu0 %v1304
    %4250 = vmatprep.subr.mxu0 %v1301
    %4251 = vmatpush2.msra.mxu0 %v1300
    %4252 = vmatprep.subr.mxu0 %v1297
    %4253 = vmatpush2.msra.mxu0 %v1296
    %4254 = vmatprep.subr.mxu0 %v1293
    %4255 = vmatpush2.msra.mxu0 %v1292
    %4256 = vmatprep.subr.mxu0 %v1289
    %4257 = vmatpush2.msra.mxu0 %v1288
    %4258 = vmatprep.subr.mxu0 %v1285
    %4259 = vmatpush2.msra.mxu0 %v1284
    %4260 = vmatprep.mubr.f32.mxu0 %v683
    %4261 = vmatmul.mubr.f32.gmra.mxu0 %v682
    %v4262 = vpop.f32.mrf.mxu0
    %v4263 = vadd.f32 %v4192, %v4262
    %v4264 = vpop.f32.mrf.mxu0
    %v4265 = vadd.f32 %v4194, %v4264
    %4266 = vdwg.mxu0
    %4267 = vmatprep.subr.mxu0 %v1409
    %4268 = vmatpush1.msra.mxu0 %v1408
    %4269 = vmatprep.subr.mxu0 %v1405
    %4270 = vmatpush1.msra.mxu0 %v1404
    %4271 = vmatprep.subr.mxu0 %v1401
    %4272 = vmatpush1.msra.mxu0 %v1400
    %4273 = vmatprep.subr.mxu0 %v1397
    %4274 = vmatpush1.msra.mxu0 %v1396
    %4275 = vmatprep.subr.mxu0 %v1393
    %4276 = vmatpush1.msra.mxu0 %v1392
    %4277 = vmatprep.subr.mxu0 %v1389
    %4278 = vmatpush1.msra.mxu0 %v1388
    %4279 = vmatprep.subr.mxu0 %v1385
    %4280 = vmatpush1.msra.mxu0 %v1384
    %4281 = vmatprep.subr.mxu0 %v1381
    %4282 = vmatpush1.msra.mxu0 %v1380
    %4283 = vmatprep.subr.mxu0 %v1377
    %4284 = vmatpush1.msra.mxu0 %v1376
    %4285 = vmatprep.subr.mxu0 %v1373
    %4286 = vmatpush1.msra.mxu0 %v1372
    %4287 = vmatprep.subr.mxu0 %v1369
    %4288 = vmatpush1.msra.mxu0 %v1368
    %4289 = vmatprep.subr.mxu0 %v1365
    %4290 = vmatpush1.msra.mxu0 %v1364
    %4291 = vmatprep.subr.mxu0 %v1361
    %4292 = vmatpush1.msra.mxu0 %v1360
    %4293 = vmatprep.subr.mxu0 %v1357
    %4294 = vmatpush1.msra.mxu0 %v1356
    %4295 = vmatprep.subr.mxu0 %v1353
    %4296 = vmatpush1.msra.mxu0 %v1352
    %4297 = vmatprep.subr.mxu0 %v1349
    %4298 = vmatpush1.msra.mxu0 %v1348
    %4299 = vmatprep.subr.mxu0 %v1473
    %4300 = vmatpush2.msra.mxu0 %v1472
    %4301 = vmatprep.subr.mxu0 %v1469
    %4302 = vmatpush2.msra.mxu0 %v1468
    %4303 = vmatprep.subr.mxu0 %v1465
    %4304 = vmatpush2.msra.mxu0 %v1464
    %4305 = vmatprep.subr.mxu0 %v1461
    %4306 = vmatpush2.msra.mxu0 %v1460
    %4307 = vmatprep.subr.mxu0 %v1457
    %4308 = vmatpush2.msra.mxu0 %v1456
    %4309 = vmatprep.subr.mxu0 %v1453
    %4310 = vmatpush2.msra.mxu0 %v1452
    %4311 = vmatprep.subr.mxu0 %v1449
    %4312 = vmatpush2.msra.mxu0 %v1448
    %4313 = vmatprep.subr.mxu0 %v1445
    %4314 = vmatpush2.msra.mxu0 %v1444
    %4315 = vmatprep.subr.mxu0 %v1441
    %4316 = vmatpush2.msra.mxu0 %v1440
    %4317 = vmatprep.subr.mxu0 %v1437
    %4318 = vmatpush2.msra.mxu0 %v1436
    %4319 = vmatprep.subr.mxu0 %v1433
    %4320 = vmatpush2.msra.mxu0 %v1432
    %4321 = vmatprep.subr.mxu0 %v1429
    %4322 = vmatpush2.msra.mxu0 %v1428
    %4323 = vmatprep.subr.mxu0 %v1425
    %4324 = vmatpush2.msra.mxu0 %v1424
    %4325 = vmatprep.subr.mxu0 %v1421
    %4326 = vmatpush2.msra.mxu0 %v1420
    %4327 = vmatprep.subr.mxu0 %v1417
    %4328 = vmatpush2.msra.mxu0 %v1416
    %4329 = vmatprep.subr.mxu0 %v1413
    %4330 = vmatpush2.msra.mxu0 %v1412
    %4331 = vmatprep.mubr.f32.mxu0 %v685
    %4332 = vmatmul.mubr.f32.gmra.mxu0 %v684
    %v4333 = vpop.f32.mrf.mxu0
    %v4334 = vadd.f32 %v4263, %v4333
    %v4335 = vpop.f32.mrf.mxu0
    %v4336 = vadd.f32 %v4265, %v4335
    %4337 = vdwg.mxu0
    %4338 = vmatprep.subr.mxu0 %v1537
    %4339 = vmatpush1.msra.mxu0 %v1536
    %4340 = vmatprep.subr.mxu0 %v1533
    %4341 = vmatpush1.msra.mxu0 %v1532
    %4342 = vmatprep.subr.mxu0 %v1529
    %4343 = vmatpush1.msra.mxu0 %v1528
    %4344 = vmatprep.subr.mxu0 %v1525
    %4345 = vmatpush1.msra.mxu0 %v1524
    %4346 = vmatprep.subr.mxu0 %v1521
    %4347 = vmatpush1.msra.mxu0 %v1520
    %4348 = vmatprep.subr.mxu0 %v1517
    %4349 = vmatpush1.msra.mxu0 %v1516
    %4350 = vmatprep.subr.mxu0 %v1513
    %4351 = vmatpush1.msra.mxu0 %v1512
    %4352 = vmatprep.subr.mxu0 %v1509
    %4353 = vmatpush1.msra.mxu0 %v1508
    %4354 = vmatprep.subr.mxu0 %v1505
    %4355 = vmatpush1.msra.mxu0 %v1504
    %4356 = vmatprep.subr.mxu0 %v1501
    %4357 = vmatpush1.msra.mxu0 %v1500
    %4358 = vmatprep.subr.mxu0 %v1497
    %4359 = vmatpush1.msra.mxu0 %v1496
    %4360 = vmatprep.subr.mxu0 %v1493
    %4361 = vmatpush1.msra.mxu0 %v1492
    %4362 = vmatprep.subr.mxu0 %v1489
    %4363 = vmatpush1.msra.mxu0 %v1488
    %4364 = vmatprep.subr.mxu0 %v1485
    %4365 = vmatpush1.msra.mxu0 %v1484
    %4366 = vmatprep.subr.mxu0 %v1481
    %4367 = vmatpush1.msra.mxu0 %v1480
    %4368 = vmatprep.subr.mxu0 %v1477
    %4369 = vmatpush1.msra.mxu0 %v1476
    %4370 = vmatprep.subr.mxu0 %v1601
    %4371 = vmatpush2.msra.mxu0 %v1600
    %4372 = vmatprep.subr.mxu0 %v1597
    %4373 = vmatpush2.msra.mxu0 %v1596
    %4374 = vmatprep.subr.mxu0 %v1593
    %4375 = vmatpush2.msra.mxu0 %v1592
    %4376 = vmatprep.subr.mxu0 %v1589
    %4377 = vmatpush2.msra.mxu0 %v1588
    %4378 = vmatprep.subr.mxu0 %v1585
    %4379 = vmatpush2.msra.mxu0 %v1584
    %4380 = vmatprep.subr.mxu0 %v1581
    %4381 = vmatpush2.msra.mxu0 %v1580
    %4382 = vmatprep.subr.mxu0 %v1577
    %4383 = vmatpush2.msra.mxu0 %v1576
    %4384 = vmatprep.subr.mxu0 %v1573
    %4385 = vmatpush2.msra.mxu0 %v1572
    %4386 = vmatprep.subr.mxu0 %v1569
    %4387 = vmatpush2.msra.mxu0 %v1568
    %4388 = vmatprep.subr.mxu0 %v1565
    %4389 = vmatpush2.msra.mxu0 %v1564
    %4390 = vmatprep.subr.mxu0 %v1561
    %4391 = vmatpush2.msra.mxu0 %v1560
    %4392 = vmatprep.subr.mxu0 %v1557
    %4393 = vmatpush2.msra.mxu0 %v1556
    %4394 = vmatprep.subr.mxu0 %v1553
    %4395 = vmatpush2.msra.mxu0 %v1552
    %4396 = vmatprep.subr.mxu0 %v1549
    %4397 = vmatpush2.msra.mxu0 %v1548
    %4398 = vmatprep.subr.mxu0 %v1545
    %4399 = vmatpush2.msra.mxu0 %v1544
    %4400 = vmatprep.subr.mxu0 %v1541
    %4401 = vmatpush2.msra.mxu0 %v1540
    %4402 = vmatprep.mubr.f32.mxu0 %v687
    %4403 = vmatmul.mubr.f32.gmra.mxu0 %v686
    %v4404 = vpop.f32.mrf.mxu0
    %v4405 = vadd.f32 %v4334, %v4404
    %v4406 = vpop.f32.mrf.mxu0
    %v4407 = vadd.f32 %v4336, %v4406
    %4408 = vdwg.mxu0
    %4409 = vmatprep.subr.mxu0 %v1665
    %4410 = vmatpush1.msra.mxu0 %v1664
    %4411 = vmatprep.subr.mxu0 %v1661
    %4412 = vmatpush1.msra.mxu0 %v1660
    %4413 = vmatprep.subr.mxu0 %v1657
    %4414 = vmatpush1.msra.mxu0 %v1656
    %4415 = vmatprep.subr.mxu0 %v1653
    %4416 = vmatpush1.msra.mxu0 %v1652
    %4417 = vmatprep.subr.mxu0 %v1649
    %4418 = vmatpush1.msra.mxu0 %v1648
    %4419 = vmatprep.subr.mxu0 %v1645
    %4420 = vmatpush1.msra.mxu0 %v1644
    %4421 = vmatprep.subr.mxu0 %v1641
    %4422 = vmatpush1.msra.mxu0 %v1640
    %4423 = vmatprep.subr.mxu0 %v1637
    %4424 = vmatpush1.msra.mxu0 %v1636
    %4425 = vmatprep.subr.mxu0 %v1633
    %4426 = vmatpush1.msra.mxu0 %v1632
    %4427 = vmatprep.subr.mxu0 %v1629
    %4428 = vmatpush1.msra.mxu0 %v1628
    %4429 = vmatprep.subr.mxu0 %v1625
    %4430 = vmatpush1.msra.mxu0 %v1624
    %4431 = vmatprep.subr.mxu0 %v1621
    %4432 = vmatpush1.msra.mxu0 %v1620
    %4433 = vmatprep.subr.mxu0 %v1617
    %4434 = vmatpush1.msra.mxu0 %v1616
    %4435 = vmatprep.subr.mxu0 %v1613
    %4436 = vmatpush1.msra.mxu0 %v1612
    %4437 = vmatprep.subr.mxu0 %v1609
    %4438 = vmatpush1.msra.mxu0 %v1608
    %4439 = vmatprep.subr.mxu0 %v1605
    %4440 = vmatpush1.msra.mxu0 %v1604
    %4441 = vmatprep.subr.mxu0 %v1729
    %4442 = vmatpush2.msra.mxu0 %v1728
    %4443 = vmatprep.subr.mxu0 %v1725
    %4444 = vmatpush2.msra.mxu0 %v1724
    %4445 = vmatprep.subr.mxu0 %v1721
    %4446 = vmatpush2.msra.mxu0 %v1720
    %4447 = vmatprep.subr.mxu0 %v1717
    %4448 = vmatpush2.msra.mxu0 %v1716
    %4449 = vmatprep.subr.mxu0 %v1713
    %4450 = vmatpush2.msra.mxu0 %v1712
    %4451 = vmatprep.subr.mxu0 %v1709
    %4452 = vmatpush2.msra.mxu0 %v1708
    %4453 = vmatprep.subr.mxu0 %v1705
    %4454 = vmatpush2.msra.mxu0 %v1704
    %4455 = vmatprep.subr.mxu0 %v1701
    %4456 = vmatpush2.msra.mxu0 %v1700
    %4457 = vmatprep.subr.mxu0 %v1697
    %4458 = vmatpush2.msra.mxu0 %v1696
    %4459 = vmatprep.subr.mxu0 %v1693
    %4460 = vmatpush2.msra.mxu0 %v1692
    %4461 = vmatprep.subr.mxu0 %v1689
    %4462 = vmatpush2.msra.mxu0 %v1688
    %4463 = vmatprep.subr.mxu0 %v1685
    %4464 = vmatpush2.msra.mxu0 %v1684
    %4465 = vmatprep.subr.mxu0 %v1681
    %4466 = vmatpush2.msra.mxu0 %v1680
    %4467 = vmatprep.subr.mxu0 %v1677
    %4468 = vmatpush2.msra.mxu0 %v1676
    %4469 = vmatprep.subr.mxu0 %v1673
    %4470 = vmatpush2.msra.mxu0 %v1672
    %4471 = vmatprep.subr.mxu0 %v1669
    %4472 = vmatpush2.msra.mxu0 %v1668
    %4473 = vmatprep.mubr.f32.mxu0 %v689
    %4474 = vmatmul.mubr.f32.gmra.mxu0 %v688
    %v4475 = vpop.f32.mrf.mxu0
    %v4476 = vadd.f32 %v4405, %v4475
    %v4477 = vpop.f32.mrf.mxu0
    %v4478 = vadd.f32 %v4407, %v4477
    %4479 = vdwg.mxu0
    %4480 = vmatprep.subr.mxu0 %v1793
    %4481 = vmatpush1.msra.mxu0 %v1792
    %4482 = vmatprep.subr.mxu0 %v1789
    %4483 = vmatpush1.msra.mxu0 %v1788
    %4484 = vmatprep.subr.mxu0 %v1785
    %4485 = vmatpush1.msra.mxu0 %v1784
    %4486 = vmatprep.subr.mxu0 %v1781
    %4487 = vmatpush1.msra.mxu0 %v1780
    %4488 = vmatprep.subr.mxu0 %v1777
    %4489 = vmatpush1.msra.mxu0 %v1776
    %4490 = vmatprep.subr.mxu0 %v1773
    %4491 = vmatpush1.msra.mxu0 %v1772
    %4492 = vmatprep.subr.mxu0 %v1769
    %4493 = vmatpush1.msra.mxu0 %v1768
    %4494 = vmatprep.subr.mxu0 %v1765
    %4495 = vmatpush1.msra.mxu0 %v1764
    %4496 = vmatprep.subr.mxu0 %v1761
    %4497 = vmatpush1.msra.mxu0 %v1760
    %4498 = vmatprep.subr.mxu0 %v1757
    %4499 = vmatpush1.msra.mxu0 %v1756
    %4500 = vmatprep.subr.mxu0 %v1753
    %4501 = vmatpush1.msra.mxu0 %v1752
    %4502 = vmatprep.subr.mxu0 %v1749
    %4503 = vmatpush1.msra.mxu0 %v1748
    %4504 = vmatprep.subr.mxu0 %v1745
    %4505 = vmatpush1.msra.mxu0 %v1744
    %4506 = vmatprep.subr.mxu0 %v1741
    %4507 = vmatpush1.msra.mxu0 %v1740
    %4508 = vmatprep.subr.mxu0 %v1737
    %4509 = vmatpush1.msra.mxu0 %v1736
    %4510 = vmatprep.subr.mxu0 %v1733
    %4511 = vmatpush1.msra.mxu0 %v1732
    %4512 = vmatprep.subr.mxu0 %v1857
    %4513 = vmatpush2.msra.mxu0 %v1856
    %4514 = vmatprep.subr.mxu0 %v1853
    %4515 = vmatpush2.msra.mxu0 %v1852
    %4516 = vmatprep.subr.mxu0 %v1849
    %4517 = vmatpush2.msra.mxu0 %v1848
    %4518 = vmatprep.subr.mxu0 %v1845
    %4519 = vmatpush2.msra.mxu0 %v1844
    %4520 = vmatprep.subr.mxu0 %v1841
    %4521 = vmatpush2.msra.mxu0 %v1840
    %4522 = vmatprep.subr.mxu0 %v1837
    %4523 = vmatpush2.msra.mxu0 %v1836
    %4524 = vmatprep.subr.mxu0 %v1833
    %4525 = vmatpush2.msra.mxu0 %v1832
    %4526 = vmatprep.subr.mxu0 %v1829
    %4527 = vmatpush2.msra.mxu0 %v1828
    %4528 = vmatprep.subr.mxu0 %v1825
    %4529 = vmatpush2.msra.mxu0 %v1824
    %4530 = vmatprep.subr.mxu0 %v1821
    %4531 = vmatpush2.msra.mxu0 %v1820
    %4532 = vmatprep.subr.mxu0 %v1817
    %4533 = vmatpush2.msra.mxu0 %v1816
    %4534 = vmatprep.subr.mxu0 %v1813
    %4535 = vmatpush2.msra.mxu0 %v1812
    %4536 = vmatprep.subr.mxu0 %v1809
    %4537 = vmatpush2.msra.mxu0 %v1808
    %4538 = vmatprep.subr.mxu0 %v1805
    %4539 = vmatpush2.msra.mxu0 %v1804
    %4540 = vmatprep.subr.mxu0 %v1801
    %4541 = vmatpush2.msra.mxu0 %v1800
    %4542 = vmatprep.subr.mxu0 %v1797
    %4543 = vmatpush2.msra.mxu0 %v1796
    %4544 = vmatprep.mubr.f32.mxu0 %v691
    %4545 = vmatmul.mubr.f32.gmra.mxu0 %v690
    %v4546 = vpop.f32.mrf.mxu0
    %v4547 = vadd.f32 %v4476, %v4546
    %v4548 = vpop.f32.mrf.mxu0
    %v4549 = vadd.f32 %v4478, %v4548
    %4550 = vdwg.mxu0
    %4551 = vmatprep.subr.mxu0 %v1921
    %4552 = vmatpush1.msra.mxu0 %v1920
    %4553 = vmatprep.subr.mxu0 %v1917
    %4554 = vmatpush1.msra.mxu0 %v1916
    %4555 = vmatprep.subr.mxu0 %v1913
    %4556 = vmatpush1.msra.mxu0 %v1912
    %4557 = vmatprep.subr.mxu0 %v1909
    %4558 = vmatpush1.msra.mxu0 %v1908
    %4559 = vmatprep.subr.mxu0 %v1905
    %4560 = vmatpush1.msra.mxu0 %v1904
    %4561 = vmatprep.subr.mxu0 %v1901
    %4562 = vmatpush1.msra.mxu0 %v1900
    %4563 = vmatprep.subr.mxu0 %v1897
    %4564 = vmatpush1.msra.mxu0 %v1896
    %4565 = vmatprep.subr.mxu0 %v1893
    %4566 = vmatpush1.msra.mxu0 %v1892
    %4567 = vmatprep.subr.mxu0 %v1889
    %4568 = vmatpush1.msra.mxu0 %v1888
    %4569 = vmatprep.subr.mxu0 %v1885
    %4570 = vmatpush1.msra.mxu0 %v1884
    %4571 = vmatprep.subr.mxu0 %v1881
    %4572 = vmatpush1.msra.mxu0 %v1880
    %4573 = vmatprep.subr.mxu0 %v1877
    %4574 = vmatpush1.msra.mxu0 %v1876
    %4575 = vmatprep.subr.mxu0 %v1873
    %4576 = vmatpush1.msra.mxu0 %v1872
    %4577 = vmatprep.subr.mxu0 %v1869
    %4578 = vmatpush1.msra.mxu0 %v1868
    %4579 = vmatprep.subr.mxu0 %v1865
    %4580 = vmatpush1.msra.mxu0 %v1864
    %4581 = vmatprep.subr.mxu0 %v1861
    %4582 = vmatpush1.msra.mxu0 %v1860
    %4583 = vmatprep.subr.mxu0 %v1985
    %4584 = vmatpush2.msra.mxu0 %v1984
    %4585 = vmatprep.subr.mxu0 %v1981
    %4586 = vmatpush2.msra.mxu0 %v1980
    %4587 = vmatprep.subr.mxu0 %v1977
    %4588 = vmatpush2.msra.mxu0 %v1976
    %4589 = vmatprep.subr.mxu0 %v1973
    %4590 = vmatpush2.msra.mxu0 %v1972
    %4591 = vmatprep.subr.mxu0 %v1969
    %4592 = vmatpush2.msra.mxu0 %v1968
    %4593 = vmatprep.subr.mxu0 %v1965
    %4594 = vmatpush2.msra.mxu0 %v1964
    %4595 = vmatprep.subr.mxu0 %v1961
    %4596 = vmatpush2.msra.mxu0 %v1960
    %4597 = vmatprep.subr.mxu0 %v1957
    %4598 = vmatpush2.msra.mxu0 %v1956
    %4599 = vmatprep.subr.mxu0 %v1953
    %4600 = vmatpush2.msra.mxu0 %v1952
    %4601 = vmatprep.subr.mxu0 %v1949
    %4602 = vmatpush2.msra.mxu0 %v1948
    %4603 = vmatprep.subr.mxu0 %v1945
    %4604 = vmatpush2.msra.mxu0 %v1944
    %4605 = vmatprep.subr.mxu0 %v1941
    %4606 = vmatpush2.msra.mxu0 %v1940
    %4607 = vmatprep.subr.mxu0 %v1937
    %4608 = vmatpush2.msra.mxu0 %v1936
    %4609 = vmatprep.subr.mxu0 %v1933
    %4610 = vmatpush2.msra.mxu0 %v1932
    %4611 = vmatprep.subr.mxu0 %v1929
    %4612 = vmatpush2.msra.mxu0 %v1928
    %4613 = vmatprep.subr.mxu0 %v1925
    %4614 = vmatpush2.msra.mxu0 %v1924
    %4615 = vmatprep.mubr.f32.mxu0 %v693
    %4616 = vmatmul.mubr.f32.gmra.mxu0 %v692
    %v4617 = vpop.f32.mrf.mxu0
    %v4618 = vadd.f32 %v4547, %v4617
    %v4619 = vpop.f32.mrf.mxu0
    %v4620 = vadd.f32 %v4549, %v4619
    %4621 = vdwg.mxu0
    %4622 = vmatprep.subr.mxu0 %v2049
    %4623 = vmatpush1.msra.mxu0 %v2048
    %4624 = vmatprep.subr.mxu0 %v2045
    %4625 = vmatpush1.msra.mxu0 %v2044
    %4626 = vmatprep.subr.mxu0 %v2041
    %4627 = vmatpush1.msra.mxu0 %v2040
    %4628 = vmatprep.subr.mxu0 %v2037
    %4629 = vmatpush1.msra.mxu0 %v2036
    %4630 = vmatprep.subr.mxu0 %v2033
    %4631 = vmatpush1.msra.mxu0 %v2032
    %4632 = vmatprep.subr.mxu0 %v2029
    %4633 = vmatpush1.msra.mxu0 %v2028
    %4634 = vmatprep.subr.mxu0 %v2025
    %4635 = vmatpush1.msra.mxu0 %v2024
    %4636 = vmatprep.subr.mxu0 %v2021
    %4637 = vmatpush1.msra.mxu0 %v2020
    %4638 = vmatprep.subr.mxu0 %v2017
    %4639 = vmatpush1.msra.mxu0 %v2016
    %4640 = vmatprep.subr.mxu0 %v2013
    %4641 = vmatpush1.msra.mxu0 %v2012
    %4642 = vmatprep.subr.mxu0 %v2009
    %4643 = vmatpush1.msra.mxu0 %v2008
    %4644 = vmatprep.subr.mxu0 %v2005
    %4645 = vmatpush1.msra.mxu0 %v2004
    %4646 = vmatprep.subr.mxu0 %v2001
    %4647 = vmatpush1.msra.mxu0 %v2000
    %4648 = vmatprep.subr.mxu0 %v1997
    %4649 = vmatpush1.msra.mxu0 %v1996
    %4650 = vmatprep.subr.mxu0 %v1993
    %4651 = vmatpush1.msra.mxu0 %v1992
    %4652 = vmatprep.subr.mxu0 %v1989
    %4653 = vmatpush1.msra.mxu0 %v1988
    %4654 = vmatprep.subr.mxu0 %v2113
    %4655 = vmatpush2.msra.mxu0 %v2112
    %4656 = vmatprep.subr.mxu0 %v2109
    %4657 = vmatpush2.msra.mxu0 %v2108
    %4658 = vmatprep.subr.mxu0 %v2105
    %4659 = vmatpush2.msra.mxu0 %v2104
    %4660 = vmatprep.subr.mxu0 %v2101
    %4661 = vmatpush2.msra.mxu0 %v2100
    %4662 = vmatprep.subr.mxu0 %v2097
    %4663 = vmatpush2.msra.mxu0 %v2096
    %4664 = vmatprep.subr.mxu0 %v2093
    %4665 = vmatpush2.msra.mxu0 %v2092
    %4666 = vmatprep.subr.mxu0 %v2089
    %4667 = vmatpush2.msra.mxu0 %v2088
    %4668 = vmatprep.subr.mxu0 %v2085
    %4669 = vmatpush2.msra.mxu0 %v2084
    %4670 = vmatprep.subr.mxu0 %v2081
    %4671 = vmatpush2.msra.mxu0 %v2080
    %4672 = vmatprep.subr.mxu0 %v2077
    %4673 = vmatpush2.msra.mxu0 %v2076
    %4674 = vmatprep.subr.mxu0 %v2073
    %4675 = vmatpush2.msra.mxu0 %v2072
    %4676 = vmatprep.subr.mxu0 %v2069
    %4677 = vmatpush2.msra.mxu0 %v2068
    %4678 = vmatprep.subr.mxu0 %v2065
    %4679 = vmatpush2.msra.mxu0 %v2064
    %4680 = vmatprep.subr.mxu0 %v2061
    %4681 = vmatpush2.msra.mxu0 %v2060
    %4682 = vmatprep.subr.mxu0 %v2057
    %4683 = vmatpush2.msra.mxu0 %v2056
    %4684 = vmatprep.subr.mxu0 %v2053
    %4685 = vmatpush2.msra.mxu0 %v2052
    %4686 = vmatprep.mubr.f32.mxu0 %v695
    %4687 = vmatmul.mubr.f32.gmra.mxu0 %v694
    %v4688 = vpop.f32.mrf.mxu0
    %v4689 = vadd.f32 %v4618, %v4688
    %v4690 = vpop.f32.mrf.mxu0
    %v4691 = vadd.f32 %v4620, %v4690
    %4692 = vdwg.mxu0
    %4693 = vmatprep.subr.mxu0 %v2177
    %4694 = vmatpush1.msra.mxu0 %v2176
    %4695 = vmatprep.subr.mxu0 %v2173
    %4696 = vmatpush1.msra.mxu0 %v2172
    %4697 = vmatprep.subr.mxu0 %v2169
    %4698 = vmatpush1.msra.mxu0 %v2168
    %4699 = vmatprep.subr.mxu0 %v2165
    %4700 = vmatpush1.msra.mxu0 %v2164
    %4701 = vmatprep.subr.mxu0 %v2161
    %4702 = vmatpush1.msra.mxu0 %v2160
    %4703 = vmatprep.subr.mxu0 %v2157
    %4704 = vmatpush1.msra.mxu0 %v2156
    %4705 = vmatprep.subr.mxu0 %v2153
    %4706 = vmatpush1.msra.mxu0 %v2152
    %4707 = vmatprep.subr.mxu0 %v2149
    %4708 = vmatpush1.msra.mxu0 %v2148
    %4709 = vmatprep.subr.mxu0 %v2145
    %4710 = vmatpush1.msra.mxu0 %v2144
    %4711 = vmatprep.subr.mxu0 %v2141
    %4712 = vmatpush1.msra.mxu0 %v2140
    %4713 = vmatprep.subr.mxu0 %v2137
    %4714 = vmatpush1.msra.mxu0 %v2136
    %4715 = vmatprep.subr.mxu0 %v2133
    %4716 = vmatpush1.msra.mxu0 %v2132
    %4717 = vmatprep.subr.mxu0 %v2129
    %4718 = vmatpush1.msra.mxu0 %v2128
    %4719 = vmatprep.subr.mxu0 %v2125
    %4720 = vmatpush1.msra.mxu0 %v2124
    %4721 = vmatprep.subr.mxu0 %v2121
    %4722 = vmatpush1.msra.mxu0 %v2120
    %4723 = vmatprep.subr.mxu0 %v2117
    %4724 = vmatpush1.msra.mxu0 %v2116
    %4725 = vmatprep.subr.mxu0 %v2241
    %4726 = vmatpush2.msra.mxu0 %v2240
    %4727 = vmatprep.subr.mxu0 %v2237
    %4728 = vmatpush2.msra.mxu0 %v2236
    %4729 = vmatprep.subr.mxu0 %v2233
    %4730 = vmatpush2.msra.mxu0 %v2232
    %4731 = vmatprep.subr.mxu0 %v2229
    %4732 = vmatpush2.msra.mxu0 %v2228
    %4733 = vmatprep.subr.mxu0 %v2225
    %4734 = vmatpush2.msra.mxu0 %v2224
    %4735 = vmatprep.subr.mxu0 %v2221
    %4736 = vmatpush2.msra.mxu0 %v2220
    %4737 = vmatprep.subr.mxu0 %v2217
    %4738 = vmatpush2.msra.mxu0 %v2216
    %4739 = vmatprep.subr.mxu0 %v2213
    %4740 = vmatpush2.msra.mxu0 %v2212
    %4741 = vmatprep.subr.mxu0 %v2209
    %4742 = vmatpush2.msra.mxu0 %v2208
    %4743 = vmatprep.subr.mxu0 %v2205
    %4744 = vmatpush2.msra.mxu0 %v2204
    %4745 = vmatprep.subr.mxu0 %v2201
    %4746 = vmatpush2.msra.mxu0 %v2200
    %4747 = vmatprep.subr.mxu0 %v2197
    %4748 = vmatpush2.msra.mxu0 %v2196
    %4749 = vmatprep.subr.mxu0 %v2193
    %4750 = vmatpush2.msra.mxu0 %v2192
    %4751 = vmatprep.subr.mxu0 %v2189
    %4752 = vmatpush2.msra.mxu0 %v2188
    %4753 = vmatprep.subr.mxu0 %v2185
    %4754 = vmatpush2.msra.mxu0 %v2184
    %4755 = vmatprep.subr.mxu0 %v2181
    %4756 = vmatpush2.msra.mxu0 %v2180
    %4757 = vmatprep.mubr.f32.mxu0 %v697
    %4758 = vmatmul.mubr.f32.gmra.mxu0 %v696
    %v4759 = vpop.f32.mrf.mxu0
    %v4760 = vadd.f32 %v4689, %v4759
    %v4761 = vpop.f32.mrf.mxu0
    %v4762 = vadd.f32 %v4691, %v4761
    %4763 = vdwg.mxu0
    %4764 = vmatprep.subr.mxu0 %v2305
    %4765 = vmatpush1.msra.mxu0 %v2304
    %4766 = vmatprep.subr.mxu0 %v2301
    %4767 = vmatpush1.msra.mxu0 %v2300
    %4768 = vmatprep.subr.mxu0 %v2297
    %4769 = vmatpush1.msra.mxu0 %v2296
    %4770 = vmatprep.subr.mxu0 %v2293
    %4771 = vmatpush1.msra.mxu0 %v2292
    %4772 = vmatprep.subr.mxu0 %v2289
    %4773 = vmatpush1.msra.mxu0 %v2288
    %4774 = vmatprep.subr.mxu0 %v2285
    %4775 = vmatpush1.msra.mxu0 %v2284
    %4776 = vmatprep.subr.mxu0 %v2281
    %4777 = vmatpush1.msra.mxu0 %v2280
    %4778 = vmatprep.subr.mxu0 %v2277
    %4779 = vmatpush1.msra.mxu0 %v2276
    %4780 = vmatprep.subr.mxu0 %v2273
    %4781 = vmatpush1.msra.mxu0 %v2272
    %4782 = vmatprep.subr.mxu0 %v2269
    %4783 = vmatpush1.msra.mxu0 %v2268
    %4784 = vmatprep.subr.mxu0 %v2265
    %4785 = vmatpush1.msra.mxu0 %v2264
    %4786 = vmatprep.subr.mxu0 %v2261
    %4787 = vmatpush1.msra.mxu0 %v2260
    %4788 = vmatprep.subr.mxu0 %v2257
    %4789 = vmatpush1.msra.mxu0 %v2256
    %4790 = vmatprep.subr.mxu0 %v2253
    %4791 = vmatpush1.msra.mxu0 %v2252
    %4792 = vmatprep.subr.mxu0 %v2249
    %4793 = vmatpush1.msra.mxu0 %v2248
    %4794 = vmatprep.subr.mxu0 %v2245
    %4795 = vmatpush1.msra.mxu0 %v2244
    %4796 = vmatprep.subr.mxu0 %v2369
    %4797 = vmatpush2.msra.mxu0 %v2368
    %4798 = vmatprep.subr.mxu0 %v2365
    %4799 = vmatpush2.msra.mxu0 %v2364
    %4800 = vmatprep.subr.mxu0 %v2361
    %4801 = vmatpush2.msra.mxu0 %v2360
    %4802 = vmatprep.subr.mxu0 %v2357
    %4803 = vmatpush2.msra.mxu0 %v2356
    %4804 = vmatprep.subr.mxu0 %v2353
    %4805 = vmatpush2.msra.mxu0 %v2352
    %4806 = vmatprep.subr.mxu0 %v2349
    %4807 = vmatpush2.msra.mxu0 %v2348
    %4808 = vmatprep.subr.mxu0 %v2345
    %4809 = vmatpush2.msra.mxu0 %v2344
    %4810 = vmatprep.subr.mxu0 %v2341
    %4811 = vmatpush2.msra.mxu0 %v2340
    %4812 = vmatprep.subr.mxu0 %v2337
    %4813 = vmatpush2.msra.mxu0 %v2336
    %4814 = vmatprep.subr.mxu0 %v2333
    %4815 = vmatpush2.msra.mxu0 %v2332
    %4816 = vmatprep.subr.mxu0 %v2329
    %4817 = vmatpush2.msra.mxu0 %v2328
    %4818 = vmatprep.subr.mxu0 %v2325
    %4819 = vmatpush2.msra.mxu0 %v2324
    %4820 = vmatprep.subr.mxu0 %v2321
    %4821 = vmatpush2.msra.mxu0 %v2320
    %4822 = vmatprep.subr.mxu0 %v2317
    %4823 = vmatpush2.msra.mxu0 %v2316
    %4824 = vmatprep.subr.mxu0 %v2313
    %4825 = vmatpush2.msra.mxu0 %v2312
    %4826 = vmatprep.subr.mxu0 %v2309
    %4827 = vmatpush2.msra.mxu0 %v2308
    %4828 = vmatprep.mubr.f32.mxu0 %v699
    %4829 = vmatmul.mubr.f32.gmra.mxu0 %v698
    %v4830 = vpop.f32.mrf.mxu0
    %v4831 = vadd.f32 %v4760, %v4830
    %v4832 = vpop.f32.mrf.mxu0
    %v4833 = vadd.f32 %v4762, %v4832
    %4834 = vdwg.mxu0
    %4835 = vmatprep.subr.mxu0 %v2433
    %4836 = vmatpush1.msra.mxu0 %v2432
    %4837 = vmatprep.subr.mxu0 %v2429
    %4838 = vmatpush1.msra.mxu0 %v2428
    %4839 = vmatprep.subr.mxu0 %v2425
    %4840 = vmatpush1.msra.mxu0 %v2424
    %4841 = vmatprep.subr.mxu0 %v2421
    %4842 = vmatpush1.msra.mxu0 %v2420
    %4843 = vmatprep.subr.mxu0 %v2417
    %4844 = vmatpush1.msra.mxu0 %v2416
    %4845 = vmatprep.subr.mxu0 %v2413
    %4846 = vmatpush1.msra.mxu0 %v2412
    %4847 = vmatprep.subr.mxu0 %v2409
    %4848 = vmatpush1.msra.mxu0 %v2408
    %4849 = vmatprep.subr.mxu0 %v2405
    %4850 = vmatpush1.msra.mxu0 %v2404
    %4851 = vmatprep.subr.mxu0 %v2401
    %4852 = vmatpush1.msra.mxu0 %v2400
    %4853 = vmatprep.subr.mxu0 %v2397
    %4854 = vmatpush1.msra.mxu0 %v2396
    %4855 = vmatprep.subr.mxu0 %v2393
    %4856 = vmatpush1.msra.mxu0 %v2392
    %4857 = vmatprep.subr.mxu0 %v2389
    %4858 = vmatpush1.msra.mxu0 %v2388
    %4859 = vmatprep.subr.mxu0 %v2385
    %4860 = vmatpush1.msra.mxu0 %v2384
    %4861 = vmatprep.subr.mxu0 %v2381
    %4862 = vmatpush1.msra.mxu0 %v2380
    %4863 = vmatprep.subr.mxu0 %v2377
    %4864 = vmatpush1.msra.mxu0 %v2376
    %4865 = vmatprep.subr.mxu0 %v2373
    %4866 = vmatpush1.msra.mxu0 %v2372
    %4867 = vmatprep.subr.mxu0 %v2497
    %4868 = vmatpush2.msra.mxu0 %v2496
    %4869 = vmatprep.subr.mxu0 %v2493
    %4870 = vmatpush2.msra.mxu0 %v2492
    %4871 = vmatprep.subr.mxu0 %v2489
    %4872 = vmatpush2.msra.mxu0 %v2488
    %4873 = vmatprep.subr.mxu0 %v2485
    %4874 = vmatpush2.msra.mxu0 %v2484
    %4875 = vmatprep.subr.mxu0 %v2481
    %4876 = vmatpush2.msra.mxu0 %v2480
    %4877 = vmatprep.subr.mxu0 %v2477
    %4878 = vmatpush2.msra.mxu0 %v2476
    %4879 = vmatprep.subr.mxu0 %v2473
    %4880 = vmatpush2.msra.mxu0 %v2472
    %4881 = vmatprep.subr.mxu0 %v2469
    %4882 = vmatpush2.msra.mxu0 %v2468
    %4883 = vmatprep.subr.mxu0 %v2465
    %4884 = vmatpush2.msra.mxu0 %v2464
    %4885 = vmatprep.subr.mxu0 %v2461
    %4886 = vmatpush2.msra.mxu0 %v2460
    %4887 = vmatprep.subr.mxu0 %v2457
    %4888 = vmatpush2.msra.mxu0 %v2456
    %4889 = vmatprep.subr.mxu0 %v2453
    %4890 = vmatpush2.msra.mxu0 %v2452
    %4891 = vmatprep.subr.mxu0 %v2449
    %4892 = vmatpush2.msra.mxu0 %v2448
    %4893 = vmatprep.subr.mxu0 %v2445
    %4894 = vmatpush2.msra.mxu0 %v2444
    %4895 = vmatprep.subr.mxu0 %v2441
    %4896 = vmatpush2.msra.mxu0 %v2440
    %4897 = vmatprep.subr.mxu0 %v2437
    %4898 = vmatpush2.msra.mxu0 %v2436
    %4899 = vmatprep.mubr.f32.mxu0 %v701
    %4900 = vmatmul.mubr.f32.gmra.mxu0 %v700
    %v4901 = vpop.f32.mrf.mxu0
    %v4902 = vadd.f32 %v4831, %v4901
    %v4903 = vpop.f32.mrf.mxu0
    %v4904 = vadd.f32 %v4833, %v4903
    %4905 = vdwg.mxu0
    %4906 = vmatprep.subr.mxu0 %v2561
    %4907 = vmatpush1.msra.mxu0 %v2560
    %4908 = vmatprep.subr.mxu0 %v2557
    %4909 = vmatpush1.msra.mxu0 %v2556
    %4910 = vmatprep.subr.mxu0 %v2553
    %4911 = vmatpush1.msra.mxu0 %v2552
    %4912 = vmatprep.subr.mxu0 %v2549
    %4913 = vmatpush1.msra.mxu0 %v2548
    %4914 = vmatprep.subr.mxu0 %v2545
    %4915 = vmatpush1.msra.mxu0 %v2544
    %4916 = vmatprep.subr.mxu0 %v2541
    %4917 = vmatpush1.msra.mxu0 %v2540
    %4918 = vmatprep.subr.mxu0 %v2537
    %4919 = vmatpush1.msra.mxu0 %v2536
    %4920 = vmatprep.subr.mxu0 %v2533
    %4921 = vmatpush1.msra.mxu0 %v2532
    %4922 = vmatprep.subr.mxu0 %v2529
    %4923 = vmatpush1.msra.mxu0 %v2528
    %4924 = vmatprep.subr.mxu0 %v2525
    %4925 = vmatpush1.msra.mxu0 %v2524
    %4926 = vmatprep.subr.mxu0 %v2521
    %4927 = vmatpush1.msra.mxu0 %v2520
    %4928 = vmatprep.subr.mxu0 %v2517
    %4929 = vmatpush1.msra.mxu0 %v2516
    %4930 = vmatprep.subr.mxu0 %v2513
    %4931 = vmatpush1.msra.mxu0 %v2512
    %4932 = vmatprep.subr.mxu0 %v2509
    %4933 = vmatpush1.msra.mxu0 %v2508
    %4934 = vmatprep.subr.mxu0 %v2505
    %4935 = vmatpush1.msra.mxu0 %v2504
    %4936 = vmatprep.subr.mxu0 %v2501
    %4937 = vmatpush1.msra.mxu0 %v2500
    %4938 = vmatprep.subr.mxu0 %v2625
    %4939 = vmatpush2.msra.mxu0 %v2624
    %4940 = vmatprep.subr.mxu0 %v2621
    %4941 = vmatpush2.msra.mxu0 %v2620
    %4942 = vmatprep.subr.mxu0 %v2617
    %4943 = vmatpush2.msra.mxu0 %v2616
    %4944 = vmatprep.subr.mxu0 %v2613
    %4945 = vmatpush2.msra.mxu0 %v2612
    %4946 = vmatprep.subr.mxu0 %v2609
    %4947 = vmatpush2.msra.mxu0 %v2608
    %4948 = vmatprep.subr.mxu0 %v2605
    %4949 = vmatpush2.msra.mxu0 %v2604
    %4950 = vmatprep.subr.mxu0 %v2601
    %4951 = vmatpush2.msra.mxu0 %v2600
    %4952 = vmatprep.subr.mxu0 %v2597
    %4953 = vmatpush2.msra.mxu0 %v2596
    %4954 = vmatprep.subr.mxu0 %v2593
    %4955 = vmatpush2.msra.mxu0 %v2592
    %4956 = vmatprep.subr.mxu0 %v2589
    %4957 = vmatpush2.msra.mxu0 %v2588
    %4958 = vmatprep.subr.mxu0 %v2585
    %4959 = vmatpush2.msra.mxu0 %v2584
    %4960 = vmatprep.subr.mxu0 %v2581
    %4961 = vmatpush2.msra.mxu0 %v2580
    %4962 = vmatprep.subr.mxu0 %v2577
    %4963 = vmatpush2.msra.mxu0 %v2576
    %4964 = vmatprep.subr.mxu0 %v2573
    %4965 = vmatpush2.msra.mxu0 %v2572
    %4966 = vmatprep.subr.mxu0 %v2569
    %4967 = vmatpush2.msra.mxu0 %v2568
    %4968 = vmatprep.subr.mxu0 %v2565
    %4969 = vmatpush2.msra.mxu0 %v2564
    %4970 = vmatprep.mubr.f32.mxu0 %v703
    %4971 = vmatmul.mubr.f32.gmra.mxu0 %v702
    %v4972 = vpop.f32.mrf.mxu0
    %v4973 = vadd.f32 %v4902, %v4972
    %v4974 = vpop.f32.mrf.mxu0
    %v4975 = vadd.f32 %v4904, %v4974
    %4976 = vdwg.mxu0
    %4977 = vmatprep.subr.mxu0 %v2689
    %4978 = vmatpush1.msra.mxu0 %v2688
    %4979 = vmatprep.subr.mxu0 %v2685
    %4980 = vmatpush1.msra.mxu0 %v2684
    %4981 = vmatprep.subr.mxu0 %v2681
    %4982 = vmatpush1.msra.mxu0 %v2680
    %4983 = vmatprep.subr.mxu0 %v2677
    %4984 = vmatpush1.msra.mxu0 %v2676
    %4985 = vmatprep.subr.mxu0 %v2673
    %4986 = vmatpush1.msra.mxu0 %v2672
    %4987 = vmatprep.subr.mxu0 %v2669
    %4988 = vmatpush1.msra.mxu0 %v2668
    %4989 = vmatprep.subr.mxu0 %v2665
    %4990 = vmatpush1.msra.mxu0 %v2664
    %4991 = vmatprep.subr.mxu0 %v2661
    %4992 = vmatpush1.msra.mxu0 %v2660
    %4993 = vmatprep.subr.mxu0 %v2657
    %4994 = vmatpush1.msra.mxu0 %v2656
    %4995 = vmatprep.subr.mxu0 %v2653
    %4996 = vmatpush1.msra.mxu0 %v2652
    %4997 = vmatprep.subr.mxu0 %v2649
    %4998 = vmatpush1.msra.mxu0 %v2648
    %4999 = vmatprep.subr.mxu0 %v2645
    %5000 = vmatpush1.msra.mxu0 %v2644
    %5001 = vmatprep.subr.mxu0 %v2641
    %5002 = vmatpush1.msra.mxu0 %v2640
    %5003 = vmatprep.subr.mxu0 %v2637
    %5004 = vmatpush1.msra.mxu0 %v2636
    %5005 = vmatprep.subr.mxu0 %v2633
    %5006 = vmatpush1.msra.mxu0 %v2632
    %5007 = vmatprep.subr.mxu0 %v2629
    %5008 = vmatpush1.msra.mxu0 %v2628
    %5009 = vmatprep.subr.mxu0 %v2753
    %5010 = vmatpush2.msra.mxu0 %v2752
    %5011 = vmatprep.subr.mxu0 %v2749
    %5012 = vmatpush2.msra.mxu0 %v2748
    %5013 = vmatprep.subr.mxu0 %v2745
    %5014 = vmatpush2.msra.mxu0 %v2744
    %5015 = vmatprep.subr.mxu0 %v2741
    %5016 = vmatpush2.msra.mxu0 %v2740
    %5017 = vmatprep.subr.mxu0 %v2737
    %5018 = vmatpush2.msra.mxu0 %v2736
    %5019 = vmatprep.subr.mxu0 %v2733
    %5020 = vmatpush2.msra.mxu0 %v2732
    %5021 = vmatprep.subr.mxu0 %v2729
    %5022 = vmatpush2.msra.mxu0 %v2728
    %5023 = vmatprep.subr.mxu0 %v2725
    %5024 = vmatpush2.msra.mxu0 %v2724
    %5025 = vmatprep.subr.mxu0 %v2721
    %5026 = vmatpush2.msra.mxu0 %v2720
    %5027 = vmatprep.subr.mxu0 %v2717
    %5028 = vmatpush2.msra.mxu0 %v2716
    %5029 = vmatprep.subr.mxu0 %v2713
    %5030 = vmatpush2.msra.mxu0 %v2712
    %5031 = vmatprep.subr.mxu0 %v2709
    %5032 = vmatpush2.msra.mxu0 %v2708
    %5033 = vmatprep.subr.mxu0 %v2705
    %5034 = vmatpush2.msra.mxu0 %v2704
    %5035 = vmatprep.subr.mxu0 %v2701
    %5036 = vmatpush2.msra.mxu0 %v2700
    %5037 = vmatprep.subr.mxu0 %v2697
    %5038 = vmatpush2.msra.mxu0 %v2696
    %5039 = vmatprep.subr.mxu0 %v2693
    %5040 = vmatpush2.msra.mxu0 %v2692
    %5041 = vmatprep.mubr.f32.mxu0 %v705
    %5042 = vmatmul.mubr.f32.gmra.mxu0 %v704
    %v5043 = vpop.f32.mrf.mxu0
    %v5044 = vadd.f32 %v4973, %v5043
    %v5045 = vpop.f32.mrf.mxu0
    %v5046 = vadd.f32 %v4975, %v5045
    %5047 = vdwg.mxu0
    %v5048 = vmax.f32 %v3908, 0.0
    %v5049 = vmax.f32 %v3910, 0.0
    %v5050 = vmax.f32 %v5044, 0.0
    %v5051 = vmax.f32 %v5046, 0.0
    %v5052 = vld [vmem:[%s5] sm:$0xff]
    %v5053 = vld [vmem:[%s5 + $0x8] sm:$0xff]
    %v5054 = vld [vmem:[%s5 + $0x10] sm:$0xff]
    %v5055 = vld [vmem:[%s5 + $0x18] sm:$0xff]
    %v5056 = vld [vmem:[%s5 + $0x20] sm:$0xff]
    %v5057 = vld [vmem:[%s5 + $0x28] sm:$0xff]
    %v5058 = vld [vmem:[%s5 + $0x30] sm:$0xff]
    %v5059 = vld [vmem:[%s5 + $0x38] sm:$0xff]
    %v5060 = vld [vmem:[%s5 + $0x40] sm:$0xff]
    %v5061 = vld [vmem:[%s5 + $0x48] sm:$0xff]
    %v5062 = vld [vmem:[%s5 + $0x50] sm:$0xff]
    %v5063 = vld [vmem:[%s5 + $0x58] sm:$0xff]
    %v5064 = vld [vmem:[%s5 + $0x60] sm:$0xff]
    %v5065 = vld [vmem:[%s5 + $0x68] sm:$0xff]
    %v5066 = vld [vmem:[%s5 + $0x70] sm:$0xff]
    %v5067 = vld [vmem:[%s5 + $0x78] sm:$0xff]
    %v5068 = vld [vmem:[%s5 + $0x80] sm:$0xff]
    %v5069 = vld [vmem:[%s5 + $0x88] sm:$0xff]
    %v5070 = vld [vmem:[%s5 + $0x90] sm:$0xff]
    %v5071 = vld [vmem:[%s5 + $0x98] sm:$0xff]
    %v5072 = vld [vmem:[%s5 + $0xa0] sm:$0xff]
    %v5073 = vld [vmem:[%s5 + $0xa8] sm:$0xff]
    %v5074 = vld [vmem:[%s5 + $0xb0] sm:$0xff]
    %v5075 = vld [vmem:[%s5 + $0xb8] sm:$0xff]
    %v5076 = vld [vmem:[%s5 + $0xc0] sm:$0xff]
    %v5077 = vld [vmem:[%s5 + $0xc8] sm:$0xff]
    %v5078 = vld [vmem:[%s5 + $0xd0] sm:$0xff]
    %v5079 = vld [vmem:[%s5 + $0xd8] sm:$0xff]
    %v5080 = vld [vmem:[%s5 + $0xe0] sm:$0xff]
    %v5081 = vld [vmem:[%s5 + $0xe8] sm:$0xff]
    %v5082 = vld [vmem:[%s5 + $0xf0] sm:$0xff]
    %v5083 = vld [vmem:[%s5 + $0xf8] sm:$0xff]
    %v5084 = vld [vmem:[%s5 + $0x100] sm:$0xff]
    %v5085 = vld [vmem:[%s5 + $0x108] sm:$0xff]
    %v5086 = vld [vmem:[%s5 + $0x110] sm:$0xff]
    %v5087 = vld [vmem:[%s5 + $0x118] sm:$0xff]
    %v5088 = vld [vmem:[%s5 + $0x120] sm:$0xff]
    %v5089 = vld [vmem:[%s5 + $0x128] sm:$0xff]
    %v5090 = vld [vmem:[%s5 + $0x130] sm:$0xff]
    %v5091 = vld [vmem:[%s5 + $0x138] sm:$0xff]
    %v5092 = vld [vmem:[%s5 + $0x140] sm:$0xff]
    %v5093 = vld [vmem:[%s5 + $0x148] sm:$0xff]
    %v5094 = vld [vmem:[%s5 + $0x150] sm:$0xff]
    %v5095 = vld [vmem:[%s5 + $0x158] sm:$0xff]
    %v5096 = vld [vmem:[%s5 + $0x160] sm:$0xff]
    %v5097 = vld [vmem:[%s5 + $0x168] sm:$0xff]
    %v5098 = vld [vmem:[%s5 + $0x170] sm:$0xff]
    %v5099 = vld [vmem:[%s5 + $0x178] sm:$0xff]
    %v5100 = vld [vmem:[%s5 + $0x180] sm:$0xff]
    %v5101 = vld [vmem:[%s6] sm:$0x1]
    %v5103 = vlaneseq
    %v5104 = vshrl.u32 %v5103, 7
    %v5105 = vsub.s32 0, %v5104
    %v5106 = vrot.slane %v5101, %v5105
    %vm5108 = vcmask 64512
    %v5110 = vsel %vm5108, %v5051, 0
    %5112 = vmatprep.subr.mxu0 0.0
    %5113 = vmatpush1.msra.mxu0 %v5067
    %5114 = vmatprep.subr.mxu0 0.0
    %5115 = vmatpush1.msra.mxu0 %v5066
    %5116 = vmatprep.subr.mxu0 0.0
    %5117 = vmatpush1.msra.mxu0 %v5065
    %5118 = vmatprep.subr.mxu0 0.0
    %5119 = vmatpush1.msra.mxu0 %v5064
    %5120 = vmatprep.subr.mxu0 0.0
    %5121 = vmatpush1.msra.mxu0 %v5063
    %5122 = vmatprep.subr.mxu0 0.0
    %5123 = vmatpush1.msra.mxu0 %v5062
    %5124 = vmatprep.subr.mxu0 0.0
    %5125 = vmatpush1.msra.mxu0 %v5061
    %5126 = vmatprep.subr.mxu0 0.0
    %5127 = vmatpush1.msra.mxu0 %v5060
    %5128 = vmatprep.subr.mxu0 0.0
    %5129 = vmatpush1.msra.mxu0 %v5059
    %5130 = vmatprep.subr.mxu0 0.0
    %5131 = vmatpush1.msra.mxu0 %v5058
    %5132 = vmatprep.subr.mxu0 0.0
    %5133 = vmatpush1.msra.mxu0 %v5057
    %5134 = vmatprep.subr.mxu0 0.0
    %5135 = vmatpush1.msra.mxu0 %v5056
    %5136 = vmatprep.subr.mxu0 0.0
    %5137 = vmatpush1.msra.mxu0 %v5055
    %5138 = vmatprep.subr.mxu0 0.0
    %5139 = vmatpush1.msra.mxu0 %v5054
    %5140 = vmatprep.subr.mxu0 0.0
    %5141 = vmatpush1.msra.mxu0 %v5053
    %5142 = vmatprep.subr.mxu0 0.0
    %5143 = vmatpush1.msra.mxu0 %v5052
    %5144 = vmatprep.subr.mxu0 0.0
    %5145 = vmatpush2.msra.mxu0 %v5083
    %5146 = vmatprep.subr.mxu0 0.0
    %5147 = vmatpush2.msra.mxu0 %v5082
    %5148 = vmatprep.subr.mxu0 0.0
    %5149 = vmatpush2.msra.mxu0 %v5081
    %5150 = vmatprep.subr.mxu0 0.0
    %5151 = vmatpush2.msra.mxu0 %v5080
    %5152 = vmatprep.subr.mxu0 0.0
    %5153 = vmatpush2.msra.mxu0 %v5079
    %5154 = vmatprep.subr.mxu0 0.0
    %5155 = vmatpush2.msra.mxu0 %v5078
    %5156 = vmatprep.subr.mxu0 0.0
    %5157 = vmatpush2.msra.mxu0 %v5077
    %5158 = vmatprep.subr.mxu0 0.0
    %5159 = vmatpush2.msra.mxu0 %v5076
    %5160 = vmatprep.subr.mxu0 0.0
    %5161 = vmatpush2.msra.mxu0 %v5075
    %5162 = vmatprep.subr.mxu0 0.0
    %5163 = vmatpush2.msra.mxu0 %v5074
    %5164 = vmatprep.subr.mxu0 0.0
    %5165 = vmatpush2.msra.mxu0 %v5073
    %5166 = vmatprep.subr.mxu0 0.0
    %5167 = vmatpush2.msra.mxu0 %v5072
    %5168 = vmatprep.subr.mxu0 0.0
    %5169 = vmatpush2.msra.mxu0 %v5071
    %5170 = vmatprep.subr.mxu0 0.0
    %5171 = vmatpush2.msra.mxu0 %v5070
    %5172 = vmatprep.subr.mxu0 0.0
    %5173 = vmatpush2.msra.mxu0 %v5069
    %5174 = vmatprep.subr.mxu0 0.0
    %5175 = vmatpush2.msra.mxu0 %v5068
    %5176 = vmatprep.mubr.f32.mxu0 %v5049
    %5177 = vmatmul.mubr.f32.gmra.mxu0 %v5048
    %v5178 = vpop.f32.mrf.mxu0
    %v5179 = vadd.f32 %v5106, %v5178
    %v5180 = vpop.f32.mrf.mxu0
    %5181 = vdwg.mxu0
    %5182 = vmatprep.subr.mxu0 0.0
    %5183 = vmatpush1.msra.mxu0 %v5099
    %5184 = vmatprep.subr.mxu0 0.0
    %5185 = vmatpush1.msra.mxu0 %v5098
    %5186 = vmatprep.subr.mxu0 0.0
    %5187 = vmatpush1.msra.mxu0 %v5097
    %5188 = vmatprep.subr.mxu0 0.0
    %5189 = vmatpush1.msra.mxu0 %v5096
    %5190 = vmatprep.subr.mxu0 0.0
    %5191 = vmatpush1.msra.mxu0 %v5095
    %5192 = vmatprep.subr.mxu0 0.0
    %5193 = vmatpush1.msra.mxu0 %v5094
    %5194 = vmatprep.subr.mxu0 0.0
    %5195 = vmatpush1.msra.mxu0 %v5093
    %5196 = vmatprep.subr.mxu0 0.0
    %5197 = vmatpush1.msra.mxu0 %v5092
    %5198 = vmatprep.subr.mxu0 0.0
    %5199 = vmatpush1.msra.mxu0 %v5091
    %5200 = vmatprep.subr.mxu0 0.0
    %5201 = vmatpush1.msra.mxu0 %v5090
    %5202 = vmatprep.subr.mxu0 0.0
    %5203 = vmatpush1.msra.mxu0 %v5089
    %5204 = vmatprep.subr.mxu0 0.0
    %5205 = vmatpush1.msra.mxu0 %v5088
    %5206 = vmatprep.subr.mxu0 0.0
    %5207 = vmatpush1.msra.mxu0 %v5087
    %5208 = vmatprep.subr.mxu0 0.0
    %5209 = vmatpush1.msra.mxu0 %v5086
    %5210 = vmatprep.subr.mxu0 0.0
    %5211 = vmatpush1.msra.mxu0 %v5085
    %5212 = vmatprep.subr.mxu0 0.0
    %5213 = vmatpush1.msra.mxu0 %v5084
    %5214 = vmatprep.subr.mxu0 0.0
    %5215 = vmatpush2.msra.mxu0 0.0
    %5216 = vmatprep.subr.mxu0 0.0
    %5217 = vmatpush2.msra.mxu0 0.0
    %5218 = vmatprep.subr.mxu0 0.0
    %5219 = vmatpush2.msra.mxu0 0.0
    %5220 = vmatprep.subr.mxu0 0.0
    %5221 = vmatpush2.msra.mxu0 0.0
    %5222 = vmatprep.subr.mxu0 0.0
    %5223 = vmatpush2.msra.mxu0 0.0
    %5224 = vmatprep.subr.mxu0 0.0
    %5225 = vmatpush2.msra.mxu0 0.0
    %5226 = vmatprep.subr.mxu0 0.0
    %5227 = vmatpush2.msra.mxu0 0.0
    %5228 = vmatprep.subr.mxu0 0.0
    %5229 = vmatpush2.msra.mxu0 0.0
    %5230 = vmatprep.subr.mxu0 0.0
    %5231 = vmatpush2.msra.mxu0 0.0
    %5232 = vmatprep.subr.mxu0 0.0
    %5233 = vmatpush2.msra.mxu0 0.0
    %5234 = vmatprep.subr.mxu0 0.0
    %5235 = vmatpush2.msra.mxu0 0.0
    %5236 = vmatprep.subr.mxu0 0.0
    %5237 = vmatpush2.msra.mxu0 0.0
    %5238 = vmatprep.subr.mxu0 0.0
    %5239 = vmatpush2.msra.mxu0 0.0
    %5240 = vmatprep.subr.mxu0 0.0
    %5241 = vmatpush2.msra.mxu0 0.0
    %5242 = vmatprep.subr.mxu0 0.0
    %5243 = vmatpush2.msra.mxu0 0.0
    %5244 = vmatprep.subr.mxu0 0.0
    %5245 = vmatpush2.msra.mxu0 %v5100
    %5246 = vmatprep.mubr.f32.mxu0 %v5110
    %5247 = vmatmul.mubr.f32.gmra.mxu0 %v5050
    %v5248 = vpop.f32.mrf.mxu0
    %v5249 = vadd.f32 %v5179, %v5248
    %v5250 = vpop.f32.mrf.mxu0
    %5251 = vdwg.mxu0
    %v5252 = vmax.f32 %v5249, 0.0
    %v5253 = vld [vmem:[%s7] sm:$0xff]
    %v5254 = vld [vmem:[%s7 + $0x8] sm:$0xff]
    %v5255 = vld [vmem:[%s7 + $0x10] sm:$0xff]
    %v5256 = vld [vmem:[%s7 + $0x18] sm:$0xff]
    %v5257 = vld [vmem:[%s7 + $0x20] sm:$0xff]
    %v5258 = vld [vmem:[%s7 + $0x28] sm:$0xff]
    %v5259 = vld [vmem:[%s7 + $0x30] sm:$0xff]
    %v5260 = vld [vmem:[%s7 + $0x38] sm:$0xff]
    %v5261 = vld [vmem:[%s7 + $0x40] sm:$0xff]
    %v5262 = vld [vmem:[%s8] sm:$0x1]
    %v5264 = vlaneseq
    %v5265 = vshrl.u32 %v5264, 7
    %v5266 = vsub.s32 0, %v5265
    %v5267 = vrot.slane %v5262, %v5266
    %vm5269 = vcmask 588800
    %v5271 = vsel %vm5269, %v5252, 0
    %5273 = vmatprep.subr.mxu0 0.0
    %5274 = vmatpush1.msra.mxu0 0.0
    %5275 = vmatprep.subr.mxu0 0.0
    %5276 = vmatpush1.msra.mxu0 0.0
    %5277 = vmatprep.subr.mxu0 0.0
    %5278 = vmatpush1.msra.mxu0 0.0
    %5279 = vmatprep.subr.mxu0 0.0
    %5280 = vmatpush1.msra.mxu0 0.0
    %5281 = vmatprep.subr.mxu0 0.0
    %5282 = vmatpush1.msra.mxu0 0.0
    %5283 = vmatprep.subr.mxu0 0.0
    %5284 = vmatpush1.msra.mxu0 0.0
    %5285 = vmatprep.subr.mxu0 0.0
    %5286 = vmatpush1.msra.mxu0 0.0
    %5287 = vmatprep.subr.mxu0 0.0
    %5288 = vmatpush1.msra.mxu0 %v5261
    %5289 = vmatprep.subr.mxu0 0.0
    %5290 = vmatpush1.msra.mxu0 %v5260
    %5291 = vmatprep.subr.mxu0 0.0
    %5292 = vmatpush1.msra.mxu0 %v5259
    %5293 = vmatprep.subr.mxu0 0.0
    %5294 = vmatpush1.msra.mxu0 %v5258
    %5295 = vmatprep.subr.mxu0 0.0
    %5296 = vmatpush1.msra.mxu0 %v5257
    %5297 = vmatprep.subr.mxu0 0.0
    %5298 = vmatpush1.msra.mxu0 %v5256
    %5299 = vmatprep.subr.mxu0 0.0
    %5300 = vmatpush1.msra.mxu0 %v5255
    %5301 = vmatprep.subr.mxu0 0.0
    %5302 = vmatpush1.msra.mxu0 %v5254
    %5303 = vmatprep.subr.mxu0 0.0
    %5304 = vmatpush1.msra.mxu0 %v5253
    %5305 = vmatprep.subr.mxu0 0.0
    %5306 = vmatpush2.msra.mxu0 0.0
    %5307 = vmatprep.subr.mxu0 0.0
    %5308 = vmatpush2.msra.mxu0 0.0
    %5309 = vmatprep.subr.mxu0 0.0
    %5310 = vmatpush2.msra.mxu0 0.0
    %5311 = vmatprep.subr.mxu0 0.0
    %5312 = vmatpush2.msra.mxu0 0.0
    %5313 = vmatprep.subr.mxu0 0.0
    %5314 = vmatpush2.msra.mxu0 0.0
    %5315 = vmatprep.subr.mxu0 0.0
    %5316 = vmatpush2.msra.mxu0 0.0
    %5317 = vmatprep.subr.mxu0 0.0
    %5318 = vmatpush2.msra.mxu0 0.0
    %5319 = vmatprep.subr.mxu0 0.0
    %5320 = vmatpush2.msra.mxu0 0.0
    %5321 = vmatprep.subr.mxu0 0.0
    %5322 = vmatpush2.msra.mxu0 0.0
    %5323 = vmatprep.subr.mxu0 0.0
    %5324 = vmatpush2.msra.mxu0 0.0
    %5325 = vmatprep.subr.mxu0 0.0
    %5326 = vmatpush2.msra.mxu0 0.0
    %5327 = vmatprep.subr.mxu0 0.0
    %5328 = vmatpush2.msra.mxu0 0.0
    %5329 = vmatprep.subr.mxu0 0.0
    %5330 = vmatpush2.msra.mxu0 0.0
    %5331 = vmatprep.subr.mxu0 0.0
    %5332 = vmatpush2.msra.mxu0 0.0
    %5333 = vmatprep.subr.mxu0 0.0
    %5334 = vmatpush2.msra.mxu0 0.0
    %5335 = vmatprep.subr.mxu0 0.0
    %5336 = vmatpush2.msra.mxu0 0.0
    %5337 = vmatprep.mubr.f32.mxu0 0.0
    %5338 = vmatmul.mubr.f32.gmra.mxu0 %v5271
    %v5339 = vpop.f32.mrf.mxu0
    %v5340 = vadd.f32 %v5267, %v5339
    %v5341 = vpop.f32.mrf.mxu0
    %5342 = vdwg.mxu0
    %v5343 = vmax.f32 %v5340, 0.0
    %v5344 = vld [vmem:[%s9] sm:$0x1]
    %s5345 = sld [smem:[#allocation3]]
    %v5346 = vstv %s5345
    %v5348 = vsel %vm5108, %v5344, 0
    %v5351 = vsel %vm5108, %v5343, 0
    %5353 = vmatprep.subr.mxu0 0.0
    %5354 = vmatpush1.xpose.msra.mxu0 0.0
    %5355 = vmatprep.subr.mxu0 0.0
    %5356 = vmatpush1.xpose.msra.mxu0 0.0
    %5357 = vmatprep.subr.mxu0 0.0
    %5358 = vmatpush1.xpose.msra.mxu0 0.0
    %5359 = vmatprep.subr.mxu0 0.0
    %5360 = vmatpush1.xpose.msra.mxu0 0.0
    %5361 = vmatprep.subr.mxu0 0.0
    %5362 = vmatpush1.xpose.msra.mxu0 0.0
    %5363 = vmatprep.subr.mxu0 0.0
    %5364 = vmatpush1.xpose.msra.mxu0 0.0
    %5365 = vmatprep.subr.mxu0 0.0
    %5366 = vmatpush1.xpose.msra.mxu0 0.0
    %5367 = vmatprep.subr.mxu0 0.0
    %5368 = vmatpush1.xpose.msra.mxu0 0.0
    %5369 = vmatprep.subr.mxu0 0.0
    %5370 = vmatpush1.xpose.msra.mxu0 0.0
    %5371 = vmatprep.subr.mxu0 0.0
    %5372 = vmatpush1.xpose.msra.mxu0 0.0
    %5373 = vmatprep.subr.mxu0 0.0
    %5374 = vmatpush1.xpose.msra.mxu0 0.0
    %5375 = vmatprep.subr.mxu0 0.0
    %5376 = vmatpush1.xpose.msra.mxu0 0.0
    %5377 = vmatprep.subr.mxu0 0.0
    %5378 = vmatpush1.xpose.msra.mxu0 0.0
    %5379 = vmatprep.subr.mxu0 0.0
    %5380 = vmatpush1.xpose.msra.mxu0 0.0
    %5381 = vmatprep.subr.mxu0 0.0
    %5382 = vmatpush1.xpose.msra.mxu0 0.0
    %5383 = vmatprep.subr.mxu0 0.0
    %5384 = vmatpush1.xpose.msra.mxu0 %v5351
    %5385 = vmatprep.subr.mxu0 0.0
    %5386 = vmatpush2.xpose.msra.mxu0 0.0
    %5387 = vmatprep.subr.mxu0 0.0
    %5388 = vmatpush2.xpose.msra.mxu0 0.0
    %5389 = vmatprep.subr.mxu0 0.0
    %5390 = vmatpush2.xpose.msra.mxu0 0.0
    %5391 = vmatprep.subr.mxu0 0.0
    %5392 = vmatpush2.xpose.msra.mxu0 0.0
    %5393 = vmatprep.subr.mxu0 0.0
    %5394 = vmatpush2.xpose.msra.mxu0 0.0
    %5395 = vmatprep.subr.mxu0 0.0
    %5396 = vmatpush2.xpose.msra.mxu0 0.0
    %5397 = vmatprep.subr.mxu0 0.0
    %5398 = vmatpush2.xpose.msra.mxu0 0.0
    %5399 = vmatprep.subr.mxu0 0.0
    %5400 = vmatpush2.xpose.msra.mxu0 0.0
    %5401 = vmatprep.subr.mxu0 0.0
    %5402 = vmatpush2.xpose.msra.mxu0 0.0
    %5403 = vmatprep.subr.mxu0 0.0
    %5404 = vmatpush2.xpose.msra.mxu0 0.0
    %5405 = vmatprep.subr.mxu0 0.0
    %5406 = vmatpush2.xpose.msra.mxu0 0.0
    %5407 = vmatprep.subr.mxu0 0.0
    %5408 = vmatpush2.xpose.msra.mxu0 0.0
    %5409 = vmatprep.subr.mxu0 0.0
    %5410 = vmatpush2.xpose.msra.mxu0 0.0
    %5411 = vmatprep.subr.mxu0 0.0
    %5412 = vmatpush2.xpose.msra.mxu0 0.0
    %5413 = vmatprep.subr.mxu0 0.0
    %5414 = vmatpush2.xpose.msra.mxu0 0.0
    %5415 = vmatprep.subr.mxu0 0.0
    %5416 = vmatpush2.xpose.msra.mxu0 0.0
    %5417 = vmatprep.mubr.f32.mxu0 0.0
    %5418 = vmatmul.mubr.f32.gmra.mxu0 %v5348
    %v5419 = vpop.f32.mrf.mxu0
    %v5420 = vadd.f32 %v5346, %v5419
    %v5421 = vpop.f32.mrf.mxu0
    %5422 = vdwg.mxu0
    %vm5423 = vcmask 57344
    %5424 = vst.msk [vmem:[%s11] sm:$0x1] %vm5423, %v5420
    // Predicated region
    $region54: #{simple_cnn_forward.1} parent=1 // pred_check
      _
    $region55: #{simple_cnn_forward.1} parent=1 // pred_check_branch
      %5426 = sbr.rel (0) target = $region57
    $region56: #{simple_cnn_forward.1} parent=1 // pred_region
      _
    $region57: #{simple_cnn_forward.1} parent=1 // pred_fallthru
      _
    // Predicated region
    $region58: #{simple_cnn_forward.1} parent=1 // pred_check
      _
    $region59: #{simple_cnn_forward.1} parent=1 // pred_check_branch
      %5428 = sbr.rel (0) target = $region61
    $region60: #{simple_cnn_forward.1} parent=1 // pred_region
      _
    $region61: #{simple_cnn_forward.1} parent=1 // pred_fallthru
      _
    %5429 = vsyncpa [#allocation5], 1
    %5430 = vsyncpa [#allocation7], 1

</llo_original>
